<compile_context>
chip_gen: v6e
topology: v6e:2x2x1
jax: 0.10.0
libtpu: 0.0.40
codegen_flags: <defaults>
</compile_context>

<pallas_src>
import numpy as np
import jax
import jax.numpy as jnp
from jax import lax
from jax.experimental import pallas as pl
from jax.experimental.pallas import tpu as pltpu  # noqa: F401


def _up8(v):
    return (v + 7) // 8 * 8


# ----------------------------------------------------------------------------
# Constants for the statevector simulation (wire 0 = most significant bit)
# ----------------------------------------------------------------------------
def _bit_table(nq):
    dim = 1 << nq
    idx = np.arange(dim)
    bits = np.stack([(idx >> (nq - 1 - w)) & 1 for w in range(nq)], axis=0)
    return bits.astype(np.float32)                      # (nq, dim)


def _ansatz_unitary_t(qw, nq, n_qlayers, n_esteps):
    """Exact unitary of the (data-independent) ansatz, transposed for row-states."""
    dim = 1 << nq

    def kron_at(g, w):
        op = np.array([[1.0 + 0j]])
        for q in range(nq):
            op = np.kron(op, g if q == w else np.eye(2, dtype=complex))
        return op

    def cnot(c, t):
        M = np.zeros((dim, dim), complex)
        mt = 1 << (nq - 1 - t)
        for idx in range(dim):
            src = idx ^ mt if (idx >> (nq - 1 - c)) & 1 else idx
            M[idx, src] = 1.0
        return M

    def rx(th):
        c, s = np.cos(th / 2), np.sin(th / 2)
        return np.array([[c, -1j * s], [-1j * s, c]])

    def ry(th):
        c, s = np.cos(th / 2), np.sin(th / 2)
        return np.array([[c, -s], [s, c]], dtype=complex)

    def rz(th):
        return np.array([[np.exp(-1j * th / 2), 0], [0, np.exp(1j * th / 2)]])

    U = np.eye(dim, dtype=complex)
    for l in range(n_qlayers):
        Ul = np.eye(dim, dtype=complex)
        for k in range(n_esteps):
            for i in range(nq):
                Ul = cnot(i, (i + k + 1) % nq) @ Ul
        for i in range(nq):
            rot = rz(qw[l, 2, i]) @ ry(qw[l, 1, i]) @ rx(qw[l, 0, i])
            Ul = kron_at(rot, i) @ Ul
        U = Ul @ U
    return U.T  # row-state convention: state_new = state_row @ U.T


# ----------------------------------------------------------------------------
# Weight/constant slab layout (single DMA; every row offset is 8-aligned)
# ----------------------------------------------------------------------------
def _slab_layout(F, H, nq):
    dim = 1 << nq
    off = {}
    r = 0
    off["whcat"] = r; r += _up8(H)          # (H, 4H+nq)  [w_h@Wexit | w_h]
    off["wxo"]   = r; r += _up8(nq)         # (nq, 4H)    Wexit^T
    off["bxo"]   = r; r += 8                # (1, 4H)     exit bias
    off["zw2"]   = r; r += _up8(2 * dim)    # (2dim, 4H)  [zmat@Wexit^T ; same]
    off["ua"]    = r; r += _up8(dim)        # (dim, 2dim) [Re U^T | Im U^T]
    off["ub"]    = r; r += _up8(dim)        # (dim, 2dim) [-Im U^T | Re U^T]
    off["wx"]    = r; r += _up8(F)          # (F, nq)     entry x-weight (fw folded)
    off["be"]    = r; r += 8                # (1, nq)     entry bias
    off["abits"] = r; r += _up8(nq)         # (nq, dim)   bit of wire w at basis idx
    rows = _up8(r)
    width = 4 * H + nq
    return off, rows, width


# ----------------------------------------------------------------------------
# Pallas kernel
# ----------------------------------------------------------------------------
def make_cqlstm_kernel(Bp, S, F, H, nq, decay_rate, off):
    dim = 1 << nq
    G = 4 * H
    inv_sqrt2 = 0.7071067811865476
    f32 = jnp.float32

    def kernel(x_ref, w_ref, out_ref, hN_ref, cN_ref):
        # ---------------- hoisted constant loads (outside the t-loop) ----------
        whcat = w_ref[off["whcat"]:off["whcat"] + H, :]            # (H, G+nq)
        wxo   = w_ref[off["wxo"]:off["wxo"] + nq, 0:G]             # (nq, G)
        bxo   = w_ref[off["bxo"]:off["bxo"] + 1, 0:G]              # (1, G)
        zw2   = w_ref[off["zw2"]:off["zw2"] + 2 * dim, 0:G]        # (2dim, G)
        ua    = w_ref[off["ua"]:off["ua"] + dim, 0:2 * dim]        # (dim, 2dim)
        ub    = w_ref[off["ub"]:off["ub"] + dim, 0:2 * dim]        # (dim, 2dim)
        wx    = w_ref[off["wx"]:off["wx"] + F, 0:nq]               # (F, nq)
        be    = w_ref[off["be"]:off["be"] + 1, 0:nq]               # (1, nq)
        abits = w_ref[off["abits"]:off["abits"] + nq, 0:dim]       # (nq, dim)
        ab = [abits[w:w + 1, :] for w in range(nq)]                # per-wire bit rows

        # per-lane constants for the fused gate activation:
        #   sigmoid(x) = 0.5*tanh(0.5*x) + 0.5 ; tanh(x) stays as-is for g lanes;
        #   the (1 - decay) factor of the f gate is folded into the affine.
        lane = lax.broadcasted_iota(jnp.int32, (1, G), 1)
        is_f = lane < H
        is_g = (lane >= 2 * H) & (lane < 3 * H)
        keep = np.float32(1.0 - decay_rate)
        scale = jnp.where(is_g, f32(1.0), f32(0.5))
        pa = jnp.where(is_f, f32(0.5) * keep, scale)
        pb = jnp.where(is_f, f32(0.5) * keep,
                       jnp.where(is_g, f32(0.0), f32(0.5)))
        czero = jnp.zeros((Bp, 3 * H), f32)

        # -------- whole-sequence x-side precomputes: 2 MXU calls, pre-loop -----
        x_all = x_ref[...]                                          # (S*Bp, F)
        xw_all = jnp.dot(x_all, wx, preferred_element_type=f32) + be     # entry x-part
        xg_all = jnp.dot(xw_all, wxo, preferred_element_type=f32) + bxo  # gates x-part

        h = jnp.zeros((Bp, H), f32)
        c = jnp.zeros((Bp, H), f32)

        for t in range(S):   # strictly serial recurrence; static unroll (S small)
            # fused h projection -> [gates_h (lanes 0:G) | entry_h (lanes G:G+nq)]
            hp = jnp.dot(h, whcat, preferred_element_type=f32)      # (Bp, G+nq)
            entry = xw_all[t * Bp:(t + 1) * Bp, :] + hp[:, G:G + nq]

            # ---- VQC prep: H, RY(arctan u), RZ(arctan u^2) on disjoint wires ----
            # Product state via half-angle identities (sqrt/rsqrt only, no recip).
            u = entry
            u2 = u * u
            r = lax.rsqrt(1.0 + u2)                    # cos(theta)
            ch = jnp.sqrt((1.0 + r) * 0.5)             # cos(theta/2)
            sh = jnp.where(u >= 0, f32(1.0), f32(-1.0)) * jnp.sqrt((1.0 - r) * 0.5)
            r2 = lax.rsqrt(1.0 + u2 * u2)              # cos(phi)
            c2 = jnp.sqrt((1.0 + r2) * 0.5)            # cos(phi/2)
            s2 = jnp.sqrt((1.0 - r2) * 0.5)            # sin(phi/2) >= 0
            p0 = (ch - sh) * inv_sqrt2                 # |0> magnitude
            p1 = (ch + sh) * inv_sqrt2                 # |1> magnitude
            a0r, a0i = p0 * c2, -(p0 * s2)             # (Bp, nq)
            a1r, a1i = p1 * c2, p1 * s2

            # Kronecker expansion to the (Bp, dim) statevector (VPU only).
            def wamp(w):
                b = ab[w]                              # (1, dim)
                wr = a0r[:, w:w + 1] + (a1r[:, w:w + 1] - a0r[:, w:w + 1]) * b
                wi = a0i[:, w:w + 1] + (a1i[:, w:w + 1] - a0i[:, w:w + 1]) * b
                return wr, wi

            sr, si = wamp(0)
            for w in range(1, nq):
                wr, wi = wamp(w)
                sr, si = sr * wr - si * wi, sr * wi + si * wr

            # ---- fixed ansatz unitary + folded <Z>/exit readout ----
            # [nr | ni] directly: no lane-offset slices, no rolls.
            comb = (jnp.dot(sr, ua, preferred_element_type=f32)
                    + jnp.dot(si, ub, preferred_element_type=f32))   # (Bp, 2dim)
            sq = comb * comb                                          # [nr^2 | ni^2]
            gq = jnp.dot(sq, zw2, preferred_element_type=f32)         # qubits@Wexit^T

            gates = xg_all[t * Bp:(t + 1) * Bp, :] + hp[:, 0:G] + gq  # (Bp, G)

            # -------- fused activations: one tanh over the full gates vreg -----
            z = gates + jnp.concatenate([c, czero], axis=-1)   # add c into f lanes
            act = jnp.tanh(z * scale) * pa + pb
            f_t = act[:, 0:H]                # = sigmoid(f + c) * (1 - decay)
            i_t = act[:, H:2 * H]            # = sigmoid(i)
            g_t = act[:, 2 * H:3 * H]        # = tanh(g)
            o_t = act[:, 3 * H:4 * H]        # = sigmoid(o)

            c = f_t * c + i_t * g_t
            h = o_t * jnp.tanh(c)
            out_ref[t] = h                   # VMEM store; HBM writeback at the end

        hN_ref[...] = h
        cN_ref[...] = c

    return kernel


# ----------------------------------------------------------------------------
# Wrapper
# ----------------------------------------------------------------------------
def cqlstm_forward(x, params, *, nq, n_qlayers, n_esteps, decay_rate):
    fw, We, be, Wx, bx, qw = params
    B, S, F = x.shape
    H = Wx.shape[0] // 4
    dim = 1 << nq
    G = 4 * H
    Bp = _up8(B)

    # ---- fold all data-independent preprocessing into one constant slab ----
    WeT = jnp.asarray(We, jnp.float32).T                        # (F+H, nq)
    fw_exp = jnp.exp(jnp.asarray(fw, jnp.float32).reshape(F, 1))
    w_x = fw_exp * WeT[:F]                                      # (F, nq)
    w_h = WeT[F:]                                               # (H, nq)
    be2 = jnp.asarray(be, jnp.float32).reshape(1, nq)

    wxo = jnp.asarray(Wx, jnp.float32).T                        # (nq, G)
    bxo = jnp.asarray(bx, jnp.float32).reshape(1, G)

    whxo = w_h @ wxo                                            # (H, G)
    whcat = jnp.concatenate([whxo, w_h], axis=1)                # (H, G+nq)

    abits = _bit_table(nq)                                      # (nq, dim) np
    zmat = (1.0 - 2.0 * abits).T.astype(np.float32)             # (dim, nq) np
    zw = jnp.asarray(zmat) @ wxo                                # (dim, G)
    zw2 = jnp.concatenate([zw, zw], axis=0)                     # (2dim, G)

    uat = _ansatz_unitary_t(np.asarray(qw), nq, n_qlayers, n_esteps)  # (dim, dim)
    ua = np.concatenate([uat.real, uat.imag], axis=1).astype(np.float32)
    ub = np.concatenate([-uat.imag, uat.real], axis=1).astype(np.float32)

    off, rows, width = _slab_layout(F, H, nq)
    wslab = jnp.zeros((rows, width), jnp.float32)
    wslab = wslab.at[off["whcat"]:off["whcat"] + H, :G + nq].set(whcat)
    wslab = wslab.at[off["wxo"]:off["wxo"] + nq, :G].set(wxo)
    wslab = wslab.at[off["bxo"]:off["bxo"] + 1, :G].set(bxo)
    wslab = wslab.at[off["zw2"]:off["zw2"] + 2 * dim, :G].set(zw2)
    wslab = wslab.at[off["ua"]:off["ua"] + dim, :2 * dim].set(jnp.asarray(ua))
    wslab = wslab.at[off["ub"]:off["ub"] + dim, :2 * dim].set(jnp.asarray(ub))
    wslab = wslab.at[off["wx"]:off["wx"] + F, :nq].set(w_x)
    wslab = wslab.at[off["be"]:off["be"] + 1, :nq].set(be2)
    wslab = wslab.at[off["abits"]:off["abits"] + nq, :dim].set(jnp.asarray(abits))

    # (B, S, F) -> (S*Bp, F): batch padded to a full 8-sublane group so every
    # per-timestep row slice inside the kernel is vreg-aligned.
    xt = jnp.transpose(x, (1, 0, 2)).astype(jnp.float32)        # (S, B, F)
    xp = jnp.zeros((S, Bp, F), jnp.float32).at[:, :B, :].set(xt)
    x2d = xp.reshape(S * Bp, F)

    kernel = make_cqlstm_kernel(Bp, S, F, H, nq, decay_rate, off)

    # Whole working set (<100 KiB) fits in VMEM: no grid, no pipelining -- the
    # time recurrence is fully serial, so grid steps would only add overhead.
    out_sbh, h_n, c_n = pl.pallas_call(
        kernel,
        out_shape=(jax.ShapeDtypeStruct((S, Bp, H), jnp.float32),
                   jax.ShapeDtypeStruct((Bp, H), jnp.float32),
                   jax.ShapeDtypeStruct((Bp, H), jnp.float32)),
    )(x2d, wslab)

    out = jnp.transpose(out_sbh[:, :B, :], (1, 0, 2))           # (B, S, H)
    return out, (h_n[:B], c_n[:B])


# ----------------------------------------------------------------------------
# Deterministic parameter init (matches the module's shapes)
# ----------------------------------------------------------------------------
def init_params(key, F, H, nq, n_qlayers):
    k1, k2, k3, k4, k5 = jax.random.split(key, 5)
    fw = jnp.ones((1, 1, F), jnp.float32)                       # feature_weighting
    lim_e = 1.0 / np.sqrt(F + H)
    We = jax.random.uniform(k1, (nq, F + H), jnp.float32, -lim_e, lim_e)
    be = jax.random.uniform(k2, (nq,), jnp.float32, -lim_e, lim_e)
    lim_x = 1.0 / np.sqrt(nq)
    Wx = jax.random.uniform(k3, (4 * H, nq), jnp.float32, -lim_x, lim_x)
    bx = jax.random.uniform(k4, (4 * H,), jnp.float32, -lim_x, lim_x)
    qw = jax.random.uniform(k5, (n_qlayers, 3, nq), jnp.float32, 0.0, 2.0 * np.pi)
    return fw, We, be, Wx, bx, qw


# ----------------------------------------------------------------------------
# Pure-JAX reference (per-gate complex statevector), for a correctness check
# ----------------------------------------------------------------------------
def reference_forward(x, params, nq, n_qlayers, n_esteps, decay_rate):
    fw, We, be, Wx, bx, qw = params
    B, S, F = x.shape
    H = Wx.shape[0] // 4
    dim = 1 << nq
    bits_f = np.array([[(idx >> (nq - 1 - w)) & 1 for idx in range(dim)]
                       for w in range(nq)], np.float32)
    flip_perm = np.array([[idx ^ (1 << (nq - 1 - w)) for idx in range(dim)]
                          for w in range(nq)])
    Hg = jnp.asarray(np.array([[1, 1], [1, -1]]) / np.sqrt(2), jnp.complex64)

    def ry_g(th):
        c = jnp.cos(th / 2).astype(jnp.complex64)
        s = jnp.sin(th / 2).astype(jnp.complex64)
        return jnp.stack([jnp.stack([c, -s], -1), jnp.stack([s, c], -1)], -2)

    def rz_g(th):
        thc = jnp.asarray(th, jnp.float32).astype(jnp.complex64)
        e0, e1 = jnp.exp(-1j * thc / 2), jnp.exp(1j * thc / 2)
        z = jnp.zeros_like(e0)
        return jnp.stack([jnp.stack([e0, z], -1), jnp.stack([z, e1], -1)], -2)

    def rx_g(th):
        c = jnp.cos(th / 2).astype(jnp.complex64)
        s = (-1j) * jnp.sin(th / 2).astype(jnp.complex64)
        return jnp.stack([jnp.stack([c, s], -1), jnp.stack([s, c], -1)], -2)

    def apply_1q(state, g, w):
        flip = state[:, flip_perm[w]]
        a = jnp.asarray(bits_f[w])
        if g.ndim == 2:
            g = g[None]
        d = g[:, 0, 0][:, None] * (1 - a) + g[:, 1, 1][:, None] * a
        o = g[:, 0, 1][:, None] * (1 - a) + g[:, 1, 0][:, None] * a
        return d * state + o * flip

    def apply_cnot(state, c, t):
        flip = state[:, flip_perm[t]]
        a = jnp.asarray(bits_f[c])
        return (1 - a) * state + a * flip

    def vqc(entry):
        state = jnp.zeros((B, dim), jnp.complex64).at[:, 0].set(1.0)
        for i in range(nq):
            state = apply_1q(state, Hg, i)
            u = entry[:, i]
            state = apply_1q(state, ry_g(jnp.arctan(u)), i)
            state = apply_1q(state, rz_g(jnp.arctan(u * u)), i)
        for l in range(n_qlayers):
            for k in range(n_esteps):
                for i in range(nq):
                    state = apply_cnot(state, i, (i + k + 1) % nq)
            for i in range(nq):
                state = apply_1q(state, rx_g(qw[l, 0, i]), i)
                state = apply_1q(state, ry_g(qw[l, 1, i]), i)
                state = apply_1q(state, rz_g(qw[l, 2, i]), i)
        probs = jnp.abs(state) ** 2
        return probs @ jnp.asarray((1.0 - 2.0 * bits_f).T)

    xw = x * jnp.exp(fw)
    h = jnp.zeros((B, H), jnp.float32)
    c = jnp.zeros((B, H), jnp.float32)
    outs = []
    for t in range(S):
        x_t = xw[:, t, :]
        combined = jnp.concatenate([x_t, h], axis=1)
        entry = combined @ We.T + be
        q = vqc(entry)
        gates = (entry + q) @ Wx.T + bx
        f_g, i_g, g_g, o_g = jnp.split(gates, 4, axis=1)
        f_t = jax.nn.sigmoid(f_g + c) * (1 - decay_rate)
        i_t = jax.nn.sigmoid(i_g)
        g_t = jnp.tanh(g_g)
        o_t = jax.nn.sigmoid(o_g)
        c = f_t * c + i_t * g_t
        h = o_t * jnp.tanh(c)
        outs.append(h)
    return jnp.stack(outs, axis=1), (h, c)


if __name__ == "__main__":
    B, S, F, H = 2, 8, 16, 32
    nq, n_qlayers, n_esteps = 4, 1, 1
    decay_rate = 0.1

    key = jax.random.PRNGKey(0)
    kx, kp = jax.random.split(key)
    x = jax.random.normal(kx, (B, S, F), jnp.float32)
    params = init_params(kp, F, H, nq, n_qlayers)

    out, (h_n, c_n) = cqlstm_forward(x, params, nq=nq, n_qlayers=n_qlayers,
                                     n_esteps=n_esteps, decay_rate=decay_rate)
    jax.block_until_ready((out, h_n, c_n))

    assert out.shape == (B, S, H) and h_n.shape == (B, H) and c_n.shape == (B, H)

    ref_out, (ref_h, ref_c) = reference_forward(x, params, nq, n_qlayers,
                                                n_esteps, decay_rate)
    err = max(float(jnp.max(jnp.abs(out - ref_out))),
              float(jnp.max(jnp.abs(h_n - ref_h))),
              float(jnp.max(jnp.abs(c_n - ref_c))))
    if err > 5e-2:
        raise AssertionError(f"kernel/reference mismatch, max abs err = {err}")

    print("KERNEL_OK")
</pallas_src>

<mosaic_0001>
module attributes {stable_mosaic.version = 11 : i64} {
  func.func @kernel(%arg0: memref<64x16xf32, #tpu.memory_space<vmem>>, %arg1: memref<144x132xf32, #tpu.memory_space<vmem>>, %arg2: memref<8x8x32xf32, #tpu.memory_space<vmem>>, %arg3: memref<8x32xf32, #tpu.memory_space<vmem>>, %arg4: memref<8x32xf32, #tpu.memory_space<vmem>>) attributes {dimension_semantics = [], scalar_prefetch = 0 : i64, scratch_operands = 0 : i64, tpu.core_type = #tpu.core_type<tc>} {
    %c0 = arith.constant 0 : index
    %c0_0 = arith.constant 0 : index
    %0 = vector.load %arg1[%c0, %c0_0] : memref<144x132xf32, #tpu.memory_space<vmem>>, vector<32x132xf32>
    %c32 = arith.constant 32 : index
    %c0_1 = arith.constant 0 : index
    %1 = vector.load %arg1[%c32, %c0_1] : memref<144x132xf32, #tpu.memory_space<vmem>>, vector<4x128xf32>
    %c40 = arith.constant 40 : index
    %c0_2 = arith.constant 0 : index
    %2 = vector.load %arg1[%c40, %c0_2] : memref<144x132xf32, #tpu.memory_space<vmem>>, vector<1x128xf32>
    %c48 = arith.constant 48 : index
    %c0_3 = arith.constant 0 : index
    %3 = vector.load %arg1[%c48, %c0_3] : memref<144x132xf32, #tpu.memory_space<vmem>>, vector<32x128xf32>
    %c80 = arith.constant 80 : index
    %c0_4 = arith.constant 0 : index
    %4 = vector.load %arg1[%c80, %c0_4] : memref<144x132xf32, #tpu.memory_space<vmem>>, vector<16x32xf32>
    %c96 = arith.constant 96 : index
    %c0_5 = arith.constant 0 : index
    %5 = vector.load %arg1[%c96, %c0_5] : memref<144x132xf32, #tpu.memory_space<vmem>>, vector<16x32xf32>
    %c112 = arith.constant 112 : index
    %c0_6 = arith.constant 0 : index
    %6 = vector.load %arg1[%c112, %c0_6] : memref<144x132xf32, #tpu.memory_space<vmem>>, vector<16x4xf32>
    %c128 = arith.constant 128 : index
    %c0_7 = arith.constant 0 : index
    %7 = vector.load %arg1[%c128, %c0_7] : memref<144x132xf32, #tpu.memory_space<vmem>>, vector<1x4xf32>
    %c136 = arith.constant 136 : index
    %c0_8 = arith.constant 0 : index
    %8 = vector.load %arg1[%c136, %c0_8] : memref<144x132xf32, #tpu.memory_space<vmem>>, vector<4x16xf32>
    %9 = vector.extract_strided_slice %8 {offsets = [0, 0], sizes = [1, 16], strides = [1, 1]} : vector<4x16xf32> to vector<1x16xf32>
    %10 = vector.extract_strided_slice %8 {offsets = [1, 0], sizes = [1, 16], strides = [1, 1]} : vector<4x16xf32> to vector<1x16xf32>
    %11 = vector.extract_strided_slice %8 {offsets = [2, 0], sizes = [1, 16], strides = [1, 1]} : vector<4x16xf32> to vector<1x16xf32>
    %12 = vector.extract_strided_slice %8 {offsets = [3, 0], sizes = [1, 16], strides = [1, 1]} : vector<4x16xf32> to vector<1x16xf32>
    %13 = tpu.iota {dimensions = array<i32: 1>} : vector<1x128xi32>
    %c32_i32 = arith.constant 32 : i32
    %14 = vector.broadcast %c32_i32 : i32 to vector<1x128xi32>
    %15 = arith.cmpi slt, %13, %14 : vector<1x128xi32>
    %c64_i32 = arith.constant 64 : i32
    %16 = vector.broadcast %c64_i32 : i32 to vector<1x128xi32>
    %17 = arith.cmpi sge, %13, %16 : vector<1x128xi32>
    %c96_i32 = arith.constant 96 : i32
    %18 = vector.broadcast %c96_i32 : i32 to vector<1x128xi32>
    %19 = arith.cmpi slt, %13, %18 : vector<1x128xi32>
    %20 = arith.andi %17, %19 : vector<1x128xi1>
    %cst = arith.constant 1.000000e+00 : f32
    %cst_9 = arith.constant 5.000000e-01 : f32
    %21 = vector.broadcast %cst : f32 to vector<1x128xf32>
    %22 = vector.broadcast %cst_9 : f32 to vector<1x128xf32>
    %23 = arith.select %20, %21, %22 : vector<1x128xi1>, vector<1x128xf32>
    %cst_10 = arith.constant 5.000000e-01 : f32
    %cst_11 = arith.constant 0.899999976 : f32
    %24 = arith.mulf %cst_10, %cst_11 : f32
    %25 = vector.broadcast %24 : f32 to vector<1x128xf32>
    %26 = arith.select %15, %25, %23 : vector<1x128xi1>, vector<1x128xf32>
    %cst_12 = arith.constant 5.000000e-01 : f32
    %cst_13 = arith.constant 0.899999976 : f32
    %27 = arith.mulf %cst_12, %cst_13 : f32
    %cst_14 = arith.constant 0.000000e+00 : f32
    %cst_15 = arith.constant 5.000000e-01 : f32
    %28 = vector.broadcast %cst_14 : f32 to vector<1x128xf32>
    %29 = vector.broadcast %cst_15 : f32 to vector<1x128xf32>
    %30 = arith.select %20, %28, %29 : vector<1x128xi1>, vector<1x128xf32>
    %31 = vector.broadcast %27 : f32 to vector<1x128xf32>
    %32 = arith.select %15, %31, %30 : vector<1x128xi1>, vector<1x128xf32>
    %cst_16 = arith.constant 0.000000e+00 : f32
    %33 = vector.broadcast %cst_16 : f32 to vector<8x96xf32>
    %c0_17 = arith.constant 0 : index
    %c0_18 = arith.constant 0 : index
    %34 = vector.load %arg0[%c0_17, %c0_18] : memref<64x16xf32, #tpu.memory_space<vmem>>, vector<64x16xf32>
    %cst_19 = arith.constant dense<0.000000e+00> : vector<64x4xf32>
    %35 = tpu.matmul %34, %6, %cst_19 {dimension_numbers = #tpu.dot_dimension_numbers<[1], [0], [0], [1], [0, 0, 1, 1], [], []>} : vector<64x16xf32>, vector<16x4xf32>, vector<64x4xf32> -> vector<64x4xf32>
    %36 = vector.broadcast %7 : vector<1x4xf32> to vector<64x4xf32>
    %37 = arith.addf %35, %36 : vector<64x4xf32>
    %cst_20 = arith.constant dense<0.000000e+00> : vector<64x128xf32>
    %38 = tpu.matmul %37, %1, %cst_20 {dimension_numbers = #tpu.dot_dimension_numbers<[1], [0], [0], [1], [0, 0, 1, 1], [], []>} : vector<64x4xf32>, vector<4x128xf32>, vector<64x128xf32> -> vector<64x128xf32>
    %39 = vector.broadcast %2 : vector<1x128xf32> to vector<64x128xf32>
    %40 = arith.addf %38, %39 : vector<64x128xf32>
    %cst_21 = arith.constant 0.000000e+00 : f32
    %41 = vector.broadcast %cst_21 : f32 to vector<8x32xf32>
    %cst_22 = arith.constant 0.000000e+00 : f32
    %42 = vector.broadcast %cst_22 : f32 to vector<8x32xf32>
    %cst_23 = arith.constant dense<0.000000e+00> : vector<8x132xf32>
    %43 = tpu.matmul %41, %0, %cst_23 {dimension_numbers = #tpu.dot_dimension_numbers<[1], [0], [0], [1], [0, 0, 1, 1], [], []>} : vector<8x32xf32>, vector<32x132xf32>, vector<8x132xf32> -> vector<8x132xf32>
    %44 = vector.extract_strided_slice %37 {offsets = [0, 0], sizes = [8, 4], strides = [1, 1]} : vector<64x4xf32> to vector<8x4xf32>
    %45 = vector.extract_strided_slice %43 {offsets = [0, 128], sizes = [8, 4], strides = [1, 1]} : vector<8x132xf32> to vector<8x4xf32>
    %46 = arith.addf %44, %45 : vector<8x4xf32>
    %47 = arith.mulf %46, %46 : vector<8x4xf32>
    %cst_24 = arith.constant 1.000000e+00 : f32
    %48 = vector.broadcast %cst_24 : f32 to vector<8x4xf32>
    %49 = arith.addf %48, %47 : vector<8x4xf32>
    %50 = math.rsqrt %49 : vector<8x4xf32>
    %cst_25 = arith.constant 1.000000e+00 : f32
    %51 = vector.broadcast %cst_25 : f32 to vector<8x4xf32>
    %52 = arith.addf %51, %50 : vector<8x4xf32>
    %cst_26 = arith.constant 5.000000e-01 : f32
    %53 = vector.broadcast %cst_26 : f32 to vector<8x4xf32>
    %54 = arith.mulf %52, %53 : vector<8x4xf32>
    %55 = math.sqrt %54 : vector<8x4xf32>
    %cst_27 = arith.constant 0.000000e+00 : f32
    %56 = vector.broadcast %cst_27 : f32 to vector<8x4xf32>
    %57 = arith.cmpf oge, %46, %56 : vector<8x4xf32>
    %cst_28 = arith.constant 1.000000e+00 : f32
    %cst_29 = arith.constant -1.000000e+00 : f32
    %58 = vector.broadcast %cst_28 : f32 to vector<8x4xf32>
    %59 = vector.broadcast %cst_29 : f32 to vector<8x4xf32>
    %60 = arith.select %57, %58, %59 : vector<8x4xi1>, vector<8x4xf32>
    %cst_30 = arith.constant 1.000000e+00 : f32
    %61 = vector.broadcast %cst_30 : f32 to vector<8x4xf32>
    %62 = arith.subf %61, %50 : vector<8x4xf32>
    %cst_31 = arith.constant 5.000000e-01 : f32
    %63 = vector.broadcast %cst_31 : f32 to vector<8x4xf32>
    %64 = arith.mulf %62, %63 : vector<8x4xf32>
    %65 = math.sqrt %64 : vector<8x4xf32>
    %66 = arith.mulf %60, %65 : vector<8x4xf32>
    %67 = arith.mulf %47, %47 : vector<8x4xf32>
    %cst_32 = arith.constant 1.000000e+00 : f32
    %68 = vector.broadcast %cst_32 : f32 to vector<8x4xf32>
    %69 = arith.addf %68, %67 : vector<8x4xf32>
    %70 = math.rsqrt %69 : vector<8x4xf32>
    %cst_33 = arith.constant 1.000000e+00 : f32
    %71 = vector.broadcast %cst_33 : f32 to vector<8x4xf32>
    %72 = arith.addf %71, %70 : vector<8x4xf32>
    %cst_34 = arith.constant 5.000000e-01 : f32
    %73 = vector.broadcast %cst_34 : f32 to vector<8x4xf32>
    %74 = arith.mulf %72, %73 : vector<8x4xf32>
    %75 = math.sqrt %74 : vector<8x4xf32>
    %cst_35 = arith.constant 1.000000e+00 : f32
    %76 = vector.broadcast %cst_35 : f32 to vector<8x4xf32>
    %77 = arith.subf %76, %70 : vector<8x4xf32>
    %cst_36 = arith.constant 5.000000e-01 : f32
    %78 = vector.broadcast %cst_36 : f32 to vector<8x4xf32>
    %79 = arith.mulf %77, %78 : vector<8x4xf32>
    %80 = math.sqrt %79 : vector<8x4xf32>
    %81 = arith.subf %55, %66 : vector<8x4xf32>
    %cst_37 = arith.constant 0.707106769 : f32
    %82 = vector.broadcast %cst_37 : f32 to vector<8x4xf32>
    %83 = arith.mulf %81, %82 : vector<8x4xf32>
    %84 = arith.addf %55, %66 : vector<8x4xf32>
    %cst_38 = arith.constant 0.707106769 : f32
    %85 = vector.broadcast %cst_38 : f32 to vector<8x4xf32>
    %86 = arith.mulf %84, %85 : vector<8x4xf32>
    %87 = arith.mulf %83, %75 : vector<8x4xf32>
    %88 = arith.mulf %83, %80 : vector<8x4xf32>
    %cst_39 = arith.constant 0.000000e+00 : f32
    %89 = vector.broadcast %cst_39 : f32 to vector<8x4xf32>
    %90 = arith.subf %89, %88 : vector<8x4xf32>
    %91 = arith.mulf %86, %75 : vector<8x4xf32>
    %92 = arith.mulf %86, %80 : vector<8x4xf32>
    %93 = vector.extract_strided_slice %87 {offsets = [0, 0], sizes = [8, 1], strides = [1, 1]} : vector<8x4xf32> to vector<8x1xf32>
    %94 = vector.extract_strided_slice %91 {offsets = [0, 0], sizes = [8, 1], strides = [1, 1]} : vector<8x4xf32> to vector<8x1xf32>
    %95 = vector.extract_strided_slice %87 {offsets = [0, 0], sizes = [8, 1], strides = [1, 1]} : vector<8x4xf32> to vector<8x1xf32>
    %96 = arith.subf %94, %95 : vector<8x1xf32>
    %97 = vector.broadcast %96 : vector<8x1xf32> to vector<8x16xf32>
    %98 = vector.broadcast %9 : vector<1x16xf32> to vector<8x16xf32>
    %99 = arith.mulf %97, %98 : vector<8x16xf32>
    %100 = vector.broadcast %93 : vector<8x1xf32> to vector<8x16xf32>
    %101 = arith.addf %100, %99 : vector<8x16xf32>
    %102 = vector.extract_strided_slice %90 {offsets = [0, 0], sizes = [8, 1], strides = [1, 1]} : vector<8x4xf32> to vector<8x1xf32>
    %103 = vector.extract_strided_slice %92 {offsets = [0, 0], sizes = [8, 1], strides = [1, 1]} : vector<8x4xf32> to vector<8x1xf32>
    %104 = vector.extract_strided_slice %90 {offsets = [0, 0], sizes = [8, 1], strides = [1, 1]} : vector<8x4xf32> to vector<8x1xf32>
    %105 = arith.subf %103, %104 : vector<8x1xf32>
    %106 = vector.broadcast %105 : vector<8x1xf32> to vector<8x16xf32>
    %107 = vector.broadcast %9 : vector<1x16xf32> to vector<8x16xf32>
    %108 = arith.mulf %106, %107 : vector<8x16xf32>
    %109 = vector.broadcast %102 : vector<8x1xf32> to vector<8x16xf32>
    %110 = arith.addf %109, %108 : vector<8x16xf32>
    %111 = vector.extract_strided_slice %87 {offsets = [0, 1], sizes = [8, 1], strides = [1, 1]} : vector<8x4xf32> to vector<8x1xf32>
    %112 = vector.extract_strided_slice %91 {offsets = [0, 1], sizes = [8, 1], strides = [1, 1]} : vector<8x4xf32> to vector<8x1xf32>
    %113 = vector.extract_strided_slice %87 {offsets = [0, 1], sizes = [8, 1], strides = [1, 1]} : vector<8x4xf32> to vector<8x1xf32>
    %114 = arith.subf %112, %113 : vector<8x1xf32>
    %115 = vector.broadcast %114 : vector<8x1xf32> to vector<8x16xf32>
    %116 = vector.broadcast %10 : vector<1x16xf32> to vector<8x16xf32>
    %117 = arith.mulf %115, %116 : vector<8x16xf32>
    %118 = vector.broadcast %111 : vector<8x1xf32> to vector<8x16xf32>
    %119 = arith.addf %118, %117 : vector<8x16xf32>
    %120 = vector.extract_strided_slice %90 {offsets = [0, 1], sizes = [8, 1], strides = [1, 1]} : vector<8x4xf32> to vector<8x1xf32>
    %121 = vector.extract_strided_slice %92 {offsets = [0, 1], sizes = [8, 1], strides = [1, 1]} : vector<8x4xf32> to vector<8x1xf32>
    %122 = vector.extract_strided_slice %90 {offsets = [0, 1], sizes = [8, 1], strides = [1, 1]} : vector<8x4xf32> to vector<8x1xf32>
    %123 = arith.subf %121, %122 : vector<8x1xf32>
    %124 = vector.broadcast %123 : vector<8x1xf32> to vector<8x16xf32>
    %125 = vector.broadcast %10 : vector<1x16xf32> to vector<8x16xf32>
    %126 = arith.mulf %124, %125 : vector<8x16xf32>
    %127 = vector.broadcast %120 : vector<8x1xf32> to vector<8x16xf32>
    %128 = arith.addf %127, %126 : vector<8x16xf32>
    %129 = arith.mulf %101, %119 : vector<8x16xf32>
    %130 = arith.mulf %110, %128 : vector<8x16xf32>
    %131 = arith.subf %129, %130 : vector<8x16xf32>
    %132 = arith.mulf %101, %128 : vector<8x16xf32>
    %133 = arith.mulf %110, %119 : vector<8x16xf32>
    %134 = arith.addf %132, %133 : vector<8x16xf32>
    %135 = vector.extract_strided_slice %87 {offsets = [0, 2], sizes = [8, 1], strides = [1, 1]} : vector<8x4xf32> to vector<8x1xf32>
    %136 = vector.extract_strided_slice %91 {offsets = [0, 2], sizes = [8, 1], strides = [1, 1]} : vector<8x4xf32> to vector<8x1xf32>
    %137 = vector.extract_strided_slice %87 {offsets = [0, 2], sizes = [8, 1], strides = [1, 1]} : vector<8x4xf32> to vector<8x1xf32>
    %138 = arith.subf %136, %137 : vector<8x1xf32>
    %139 = vector.broadcast %138 : vector<8x1xf32> to vector<8x16xf32>
    %140 = vector.broadcast %11 : vector<1x16xf32> to vector<8x16xf32>
    %141 = arith.mulf %139, %140 : vector<8x16xf32>
    %142 = vector.broadcast %135 : vector<8x1xf32> to vector<8x16xf32>
    %143 = arith.addf %142, %141 : vector<8x16xf32>
    %144 = vector.extract_strided_slice %90 {offsets = [0, 2], sizes = [8, 1], strides = [1, 1]} : vector<8x4xf32> to vector<8x1xf32>
    %145 = vector.extract_strided_slice %92 {offsets = [0, 2], sizes = [8, 1], strides = [1, 1]} : vector<8x4xf32> to vector<8x1xf32>
    %146 = vector.extract_strided_slice %90 {offsets = [0, 2], sizes = [8, 1], strides = [1, 1]} : vector<8x4xf32> to vector<8x1xf32>
    %147 = arith.subf %145, %146 : vector<8x1xf32>
    %148 = vector.broadcast %147 : vector<8x1xf32> to vector<8x16xf32>
    %149 = vector.broadcast %11 : vector<1x16xf32> to vector<8x16xf32>
    %150 = arith.mulf %148, %149 : vector<8x16xf32>
    %151 = vector.broadcast %144 : vector<8x1xf32> to vector<8x16xf32>
    %152 = arith.addf %151, %150 : vector<8x16xf32>
    %153 = arith.mulf %131, %143 : vector<8x16xf32>
    %154 = arith.mulf %134, %152 : vector<8x16xf32>
    %155 = arith.subf %153, %154 : vector<8x16xf32>
    %156 = arith.mulf %131, %152 : vector<8x16xf32>
    %157 = arith.mulf %134, %143 : vector<8x16xf32>
    %158 = arith.addf %156, %157 : vector<8x16xf32>
    %159 = vector.extract_strided_slice %87 {offsets = [0, 3], sizes = [8, 1], strides = [1, 1]} : vector<8x4xf32> to vector<8x1xf32>
    %160 = vector.extract_strided_slice %91 {offsets = [0, 3], sizes = [8, 1], strides = [1, 1]} : vector<8x4xf32> to vector<8x1xf32>
    %161 = vector.extract_strided_slice %87 {offsets = [0, 3], sizes = [8, 1], strides = [1, 1]} : vector<8x4xf32> to vector<8x1xf32>
    %162 = arith.subf %160, %161 : vector<8x1xf32>
    %163 = vector.broadcast %162 : vector<8x1xf32> to vector<8x16xf32>
    %164 = vector.broadcast %12 : vector<1x16xf32> to vector<8x16xf32>
    %165 = arith.mulf %163, %164 : vector<8x16xf32>
    %166 = vector.broadcast %159 : vector<8x1xf32> to vector<8x16xf32>
    %167 = arith.addf %166, %165 : vector<8x16xf32>
    %168 = vector.extract_strided_slice %90 {offsets = [0, 3], sizes = [8, 1], strides = [1, 1]} : vector<8x4xf32> to vector<8x1xf32>
    %169 = vector.extract_strided_slice %92 {offsets = [0, 3], sizes = [8, 1], strides = [1, 1]} : vector<8x4xf32> to vector<8x1xf32>
    %170 = vector.extract_strided_slice %90 {offsets = [0, 3], sizes = [8, 1], strides = [1, 1]} : vector<8x4xf32> to vector<8x1xf32>
    %171 = arith.subf %169, %170 : vector<8x1xf32>
    %172 = vector.broadcast %171 : vector<8x1xf32> to vector<8x16xf32>
    %173 = vector.broadcast %12 : vector<1x16xf32> to vector<8x16xf32>
    %174 = arith.mulf %172, %173 : vector<8x16xf32>
    %175 = vector.broadcast %168 : vector<8x1xf32> to vector<8x16xf32>
    %176 = arith.addf %175, %174 : vector<8x16xf32>
    %177 = arith.mulf %155, %167 : vector<8x16xf32>
    %178 = arith.mulf %158, %176 : vector<8x16xf32>
    %179 = arith.subf %177, %178 : vector<8x16xf32>
    %180 = arith.mulf %155, %176 : vector<8x16xf32>
    %181 = arith.mulf %158, %167 : vector<8x16xf32>
    %182 = arith.addf %180, %181 : vector<8x16xf32>
    %cst_40 = arith.constant dense<0.000000e+00> : vector<8x32xf32>
    %183 = tpu.matmul %179, %4, %cst_40 {dimension_numbers = #tpu.dot_dimension_numbers<[1], [0], [0], [1], [0, 0, 1, 1], [], []>} : vector<8x16xf32>, vector<16x32xf32>, vector<8x32xf32> -> vector<8x32xf32>
    %cst_41 = arith.constant dense<0.000000e+00> : vector<8x32xf32>
    %184 = tpu.matmul %182, %5, %cst_41 {dimension_numbers = #tpu.dot_dimension_numbers<[1], [0], [0], [1], [0, 0, 1, 1], [], []>} : vector<8x16xf32>, vector<16x32xf32>, vector<8x32xf32> -> vector<8x32xf32>
    %185 = arith.addf %183, %184 : vector<8x32xf32>
    %186 = arith.mulf %185, %185 : vector<8x32xf32>
    %cst_42 = arith.constant dense<0.000000e+00> : vector<8x128xf32>
    %187 = tpu.matmul %186, %3, %cst_42 {dimension_numbers = #tpu.dot_dimension_numbers<[1], [0], [0], [1], [0, 0, 1, 1], [], []>} : vector<8x32xf32>, vector<32x128xf32>, vector<8x128xf32> -> vector<8x128xf32>
    %188 = vector.extract_strided_slice %40 {offsets = [0, 0], sizes = [8, 128], strides = [1, 1]} : vector<64x128xf32> to vector<8x128xf32>
    %189 = vector.extract_strided_slice %43 {offsets = [0, 0], sizes = [8, 128], strides = [1, 1]} : vector<8x132xf32> to vector<8x128xf32>
    %190 = arith.addf %188, %189 : vector<8x128xf32>
    %191 = arith.addf %190, %187 : vector<8x128xf32>
    %192 = tpu.concatenate %42, %33 in 1 : vector<8x32xf32>, vector<8x96xf32> -> vector<8x128xf32>
    %193 = arith.addf %191, %192 : vector<8x128xf32>
    %194 = vector.broadcast %23 : vector<1x128xf32> to vector<8x128xf32>
    %195 = arith.mulf %193, %194 : vector<8x128xf32>
    %196 = math.tanh %195 : vector<8x128xf32>
    %197 = vector.broadcast %26 : vector<1x128xf32> to vector<8x128xf32>
    %198 = arith.mulf %196, %197 : vector<8x128xf32>
    %199 = vector.broadcast %32 : vector<1x128xf32> to vector<8x128xf32>
    %200 = arith.addf %198, %199 : vector<8x128xf32>
    %201 = vector.extract_strided_slice %200 {offsets = [0, 0], sizes = [8, 32], strides = [1, 1]} : vector<8x128xf32> to vector<8x32xf32>
    %202 = vector.extract_strided_slice %200 {offsets = [0, 32], sizes = [8, 32], strides = [1, 1]} : vector<8x128xf32> to vector<8x32xf32>
    %203 = vector.extract_strided_slice %200 {offsets = [0, 64], sizes = [8, 32], strides = [1, 1]} : vector<8x128xf32> to vector<8x32xf32>
    %204 = vector.extract_strided_slice %200 {offsets = [0, 96], sizes = [8, 32], strides = [1, 1]} : vector<8x128xf32> to vector<8x32xf32>
    %205 = arith.mulf %201, %42 : vector<8x32xf32>
    %206 = arith.mulf %202, %203 : vector<8x32xf32>
    %207 = arith.addf %205, %206 : vector<8x32xf32>
    %208 = math.tanh %207 : vector<8x32xf32>
    %209 = arith.mulf %204, %208 : vector<8x32xf32>
    %c0_43 = arith.constant 0 : index
    %c0_44 = arith.constant 0 : index
    %c0_45 = arith.constant 0 : index
    %210 = vector.load %arg2[%c0_43, %c0_44, %c0_45] : memref<8x8x32xf32, #tpu.memory_space<vmem>>, vector<1x8x32xf32>
    %211 = vector.shape_cast %210 : vector<1x8x32xf32> to vector<8x32xf32>
    %212 = vector.shape_cast %209 : vector<8x32xf32> to vector<1x8x32xf32>
    tpu.vector_store %arg2[%c0_43, %c0_44, %c0_45], %212 {strides = array<i32>} : memref<8x8x32xf32, #tpu.memory_space<vmem>>, vector<1x8x32xf32>,
    %cst_46 = arith.constant dense<0.000000e+00> : vector<8x132xf32>
    %213 = tpu.matmul %209, %0, %cst_46 {dimension_numbers = #tpu.dot_dimension_numbers<[1], [0], [0], [1], [0, 0, 1, 1], [], []>} : vector<8x32xf32>, vector<32x132xf32>, vector<8x132xf32> -> vector<8x132xf32>
    %214 = vector.extract_strided_slice %37 {offsets = [8, 0], sizes = [8, 4], strides = [1, 1]} : vector<64x4xf32> to vector<8x4xf32>
    %215 = vector.extract_strided_slice %213 {offsets = [0, 128], sizes = [8, 4], strides = [1, 1]} : vector<8x132xf32> to vector<8x4xf32>
    %216 = arith.addf %214, %215 : vector<8x4xf32>
    %217 = arith.mulf %216, %216 : vector<8x4xf32>
    %cst_47 = arith.constant 1.000000e+00 : f32
    %218 = vector.broadcast %cst_47 : f32 to vector<8x4xf32>
    %219 = arith.addf %218, %217 : vector<8x4xf32>
    %220 = math.rsqrt %219 : vector<8x4xf32>
    %cst_48 = arith.constant 1.000000e+00 : f32
    %221 = vector.broadcast %cst_48 : f32 to vector<8x4xf32>
    %222 = arith.addf %221, %220 : vector<8x4xf32>
    %cst_49 = arith.constant 5.000000e-01 : f32
    %223 = vector.broadcast %cst_49 : f32 to vector<8x4xf32>
    %224 = arith.mulf %222, %223 : vector<8x4xf32>
    %225 = math.sqrt %224 : vector<8x4xf32>
    %cst_50 = arith.constant 0.000000e+00 : f32
    %226 = vector.broadcast %cst_50 : f32 to vector<8x4xf32>
    %227 = arith.cmpf oge, %216, %226 : vector<8x4xf32>
    %cst_51 = arith.constant 1.000000e+00 : f32
    %cst_52 = arith.constant -1.000000e+00 : f32
    %228 = vector.broadcast %cst_51 : f32 to vector<8x4xf32>
    %229 = vector.broadcast %cst_52 : f32 to vector<8x4xf32>
    %230 = arith.select %227, %228, %229 : vector<8x4xi1>, vector<8x4xf32>
    %cst_53 = arith.constant 1.000000e+00 : f32
    %231 = vector.broadcast %cst_53 : f32 to vector<8x4xf32>
    %232 = arith.subf %231, %220 : vector<8x4xf32>
    %cst_54 = arith.constant 5.000000e-01 : f32
    %233 = vector.broadcast %cst_54 : f32 to vector<8x4xf32>
    %234 = arith.mulf %232, %233 : vector<8x4xf32>
    %235 = math.sqrt %234 : vector<8x4xf32>
    %236 = arith.mulf %230, %235 : vector<8x4xf32>
    %237 = arith.mulf %217, %217 : vector<8x4xf32>
    %cst_55 = arith.constant 1.000000e+00 : f32
    %238 = vector.broadcast %cst_55 : f32 to vector<8x4xf32>
    %239 = arith.addf %238, %237 : vector<8x4xf32>
    %240 = math.rsqrt %239 : vector<8x4xf32>
    %cst_56 = arith.constant 1.000000e+00 : f32
    %241 = vector.broadcast %cst_56 : f32 to vector<8x4xf32>
    %242 = arith.addf %241, %240 : vector<8x4xf32>
    %cst_57 = arith.constant 5.000000e-01 : f32
    %243 = vector.broadcast %cst_57 : f32 to vector<8x4xf32>
    %244 = arith.mulf %242, %243 : vector<8x4xf32>
    %245 = math.sqrt %244 : vector<8x4xf32>
    %cst_58 = arith.constant 1.000000e+00 : f32
    %246 = vector.broadcast %cst_58 : f32 to vector<8x4xf32>
    %247 = arith.subf %246, %240 : vector<8x4xf32>
    %cst_59 = arith.constant 5.000000e-01 : f32
    %248 = vector.broadcast %cst_59 : f32 to vector<8x4xf32>
    %249 = arith.mulf %247, %248 : vector<8x4xf32>
    %250 = math.sqrt %249 : vector<8x4xf32>
    %251 = arith.subf %225, %236 : vector<8x4xf32>
    %cst_60 = arith.constant 0.707106769 : f32
    %252 = vector.broadcast %cst_60 : f32 to vector<8x4xf32>
    %253 = arith.mulf %251, %252 : vector<8x4xf32>
    %254 = arith.addf %225, %236 : vector<8x4xf32>
    %cst_61 = arith.constant 0.707106769 : f32
    %255 = vector.broadcast %cst_61 : f32 to vector<8x4xf32>
    %256 = arith.mulf %254, %255 : vector<8x4xf32>
    %257 = arith.mulf %253, %245 : vector<8x4xf32>
    %258 = arith.mulf %253, %250 : vector<8x4xf32>
    %cst_62 = arith.constant 0.000000e+00 : f32
    %259 = vector.broadcast %cst_62 : f32 to vector<8x4xf32>
    %260 = arith.subf %259, %258 : vector<8x4xf32>
    %261 = arith.mulf %256, %245 : vector<8x4xf32>
    %262 = arith.mulf %256, %250 : vector<8x4xf32>
    %263 = vector.extract_strided_slice %257 {offsets = [0, 0], sizes = [8, 1], strides = [1, 1]} : vector<8x4xf32> to vector<8x1xf32>
    %264 = vector.extract_strided_slice %261 {offsets = [0, 0], sizes = [8, 1], strides = [1, 1]} : vector<8x4xf32> to vector<8x1xf32>
    %265 = vector.extract_strided_slice %257 {offsets = [0, 0], sizes = [8, 1], strides = [1, 1]} : vector<8x4xf32> to vector<8x1xf32>
    %266 = arith.subf %264, %265 : vector<8x1xf32>
    %267 = vector.broadcast %266 : vector<8x1xf32> to vector<8x16xf32>
    %268 = vector.broadcast %9 : vector<1x16xf32> to vector<8x16xf32>
    %269 = arith.mulf %267, %268 : vector<8x16xf32>
    %270 = vector.broadcast %263 : vector<8x1xf32> to vector<8x16xf32>
    %271 = arith.addf %270, %269 : vector<8x16xf32>
    %272 = vector.extract_strided_slice %260 {offsets = [0, 0], sizes = [8, 1], strides = [1, 1]} : vector<8x4xf32> to vector<8x1xf32>
    %273 = vector.extract_strided_slice %262 {offsets = [0, 0], sizes = [8, 1], strides = [1, 1]} : vector<8x4xf32> to vector<8x1xf32>
    %274 = vector.extract_strided_slice %260 {offsets = [0, 0], sizes = [8, 1], strides = [1, 1]} : vector<8x4xf32> to vector<8x1xf32>
    %275 = arith.subf %273, %274 : vector<8x1xf32>
    %276 = vector.broadcast %275 : vector<8x1xf32> to vector<8x16xf32>
    %277 = vector.broadcast %9 : vector<1x16xf32> to vector<8x16xf32>
    %278 = arith.mulf %276, %277 : vector<8x16xf32>
    %279 = vector.broadcast %272 : vector<8x1xf32> to vector<8x16xf32>
    %280 = arith.addf %279, %278 : vector<8x16xf32>
    %281 = vector.extract_strided_slice %257 {offsets = [0, 1], sizes = [8, 1], strides = [1, 1]} : vector<8x4xf32> to vector<8x1xf32>
    %282 = vector.extract_strided_slice %261 {offsets = [0, 1], sizes = [8, 1], strides = [1, 1]} : vector<8x4xf32> to vector<8x1xf32>
    %283 = vector.extract_strided_slice %257 {offsets = [0, 1], sizes = [8, 1], strides = [1, 1]} : vector<8x4xf32> to vector<8x1xf32>
    %284 = arith.subf %282, %283 : vector<8x1xf32>
    %285 = vector.broadcast %284 : vector<8x1xf32> to vector<8x16xf32>
    %286 = vector.broadcast %10 : vector<1x16xf32> to vector<8x16xf32>
    %287 = arith.mulf %285, %286 : vector<8x16xf32>
    %288 = vector.broadcast %281 : vector<8x1xf32> to vector<8x16xf32>
    %289 = arith.addf %288, %287 : vector<8x16xf32>
    %290 = vector.extract_strided_slice %260 {offsets = [0, 1], sizes = [8, 1], strides = [1, 1]} : vector<8x4xf32> to vector<8x1xf32>
    %291 = vector.extract_strided_slice %262 {offsets = [0, 1], sizes = [8, 1], strides = [1, 1]} : vector<8x4xf32> to vector<8x1xf32>
    %292 = vector.extract_strided_slice %260 {offsets = [0, 1], sizes = [8, 1], strides = [1, 1]} : vector<8x4xf32> to vector<8x1xf32>
    %293 = arith.subf %291, %292 : vector<8x1xf32>
    %294 = vector.broadcast %293 : vector<8x1xf32> to vector<8x16xf32>
    %295 = vector.broadcast %10 : vector<1x16xf32> to vector<8x16xf32>
    %296 = arith.mulf %294, %295 : vector<8x16xf32>
    %297 = vector.broadcast %290 : vector<8x1xf32> to vector<8x16xf32>
    %298 = arith.addf %297, %296 : vector<8x16xf32>
    %299 = arith.mulf %271, %289 : vector<8x16xf32>
    %300 = arith.mulf %280, %298 : vector<8x16xf32>
    %301 = arith.subf %299, %300 : vector<8x16xf32>
    %302 = arith.mulf %271, %298 : vector<8x16xf32>
    %303 = arith.mulf %280, %289 : vector<8x16xf32>
    %304 = arith.addf %302, %303 : vector<8x16xf32>
    %305 = vector.extract_strided_slice %257 {offsets = [0, 2], sizes = [8, 1], strides = [1, 1]} : vector<8x4xf32> to vector<8x1xf32>
    %306 = vector.extract_strided_slice %261 {offsets = [0, 2], sizes = [8, 1], strides = [1, 1]} : vector<8x4xf32> to vector<8x1xf32>
    %307 = vector.extract_strided_slice %257 {offsets = [0, 2], sizes = [8, 1], strides = [1, 1]} : vector<8x4xf32> to vector<8x1xf32>
    %308 = arith.subf %306, %307 : vector<8x1xf32>
    %309 = vector.broadcast %308 : vector<8x1xf32> to vector<8x16xf32>
    %310 = vector.broadcast %11 : vector<1x16xf32> to vector<8x16xf32>
    %311 = arith.mulf %309, %310 : vector<8x16xf32>
    %312 = vector.broadcast %305 : vector<8x1xf32> to vector<8x16xf32>
    %313 = arith.addf %312, %311 : vector<8x16xf32>
    %314 = vector.extract_strided_slice %260 {offsets = [0, 2], sizes = [8, 1], strides = [1, 1]} : vector<8x4xf32> to vector<8x1xf32>
    %315 = vector.extract_strided_slice %262 {offsets = [0, 2], sizes = [8, 1], strides = [1, 1]} : vector<8x4xf32> to vector<8x1xf32>
    %316 = vector.extract_strided_slice %260 {offsets = [0, 2], sizes = [8, 1], strides = [1, 1]} : vector<8x4xf32> to vector<8x1xf32>
    %317 = arith.subf %315, %316 : vector<8x1xf32>
    %318 = vector.broadcast %317 : vector<8x1xf32> to vector<8x16xf32>
    %319 = vector.broadcast %11 : vector<1x16xf32> to vector<8x16xf32>
    %320 = arith.mulf %318, %319 : vector<8x16xf32>
    %321 = vector.broadcast %314 : vector<8x1xf32> to vector<8x16xf32>
    %322 = arith.addf %321, %320 : vector<8x16xf32>
    %323 = arith.mulf %301, %313 : vector<8x16xf32>
    %324 = arith.mulf %304, %322 : vector<8x16xf32>
    %325 = arith.subf %323, %324 : vector<8x16xf32>
    %326 = arith.mulf %301, %322 : vector<8x16xf32>
    %327 = arith.mulf %304, %313 : vector<8x16xf32>
    %328 = arith.addf %326, %327 : vector<8x16xf32>
    %329 = vector.extract_strided_slice %257 {offsets = [0, 3], sizes = [8, 1], strides = [1, 1]} : vector<8x4xf32> to vector<8x1xf32>
    %330 = vector.extract_strided_slice %261 {offsets = [0, 3], sizes = [8, 1], strides = [1, 1]} : vector<8x4xf32> to vector<8x1xf32>
    %331 = vector.extract_strided_slice %257 {offsets = [0, 3], sizes = [8, 1], strides = [1, 1]} : vector<8x4xf32> to vector<8x1xf32>
    %332 = arith.subf %330, %331 : vector<8x1xf32>
    %333 = vector.broadcast %332 : vector<8x1xf32> to vector<8x16xf32>
    %334 = vector.broadcast %12 : vector<1x16xf32> to vector<8x16xf32>
    %335 = arith.mulf %333, %334 : vector<8x16xf32>
    %336 = vector.broadcast %329 : vector<8x1xf32> to vector<8x16xf32>
    %337 = arith.addf %336, %335 : vector<8x16xf32>
    %338 = vector.extract_strided_slice %260 {offsets = [0, 3], sizes = [8, 1], strides = [1, 1]} : vector<8x4xf32> to vector<8x1xf32>
    %339 = vector.extract_strided_slice %262 {offsets = [0, 3], sizes = [8, 1], strides = [1, 1]} : vector<8x4xf32> to vector<8x1xf32>
    %340 = vector.extract_strided_slice %260 {offsets = [0, 3], sizes = [8, 1], strides = [1, 1]} : vector<8x4xf32> to vector<8x1xf32>
    %341 = arith.subf %339, %340 : vector<8x1xf32>
    %342 = vector.broadcast %341 : vector<8x1xf32> to vector<8x16xf32>
    %343 = vector.broadcast %12 : vector<1x16xf32> to vector<8x16xf32>
    %344 = arith.mulf %342, %343 : vector<8x16xf32>
    %345 = vector.broadcast %338 : vector<8x1xf32> to vector<8x16xf32>
    %346 = arith.addf %345, %344 : vector<8x16xf32>
    %347 = arith.mulf %325, %337 : vector<8x16xf32>
    %348 = arith.mulf %328, %346 : vector<8x16xf32>
    %349 = arith.subf %347, %348 : vector<8x16xf32>
    %350 = arith.mulf %325, %346 : vector<8x16xf32>
    %351 = arith.mulf %328, %337 : vector<8x16xf32>
    %352 = arith.addf %350, %351 : vector<8x16xf32>
    %cst_63 = arith.constant dense<0.000000e+00> : vector<8x32xf32>
    %353 = tpu.matmul %349, %4, %cst_63 {dimension_numbers = #tpu.dot_dimension_numbers<[1], [0], [0], [1], [0, 0, 1, 1], [], []>} : vector<8x16xf32>, vector<16x32xf32>, vector<8x32xf32> -> vector<8x32xf32>
    %cst_64 = arith.constant dense<0.000000e+00> : vector<8x32xf32>
    %354 = tpu.matmul %352, %5, %cst_64 {dimension_numbers = #tpu.dot_dimension_numbers<[1], [0], [0], [1], [0, 0, 1, 1], [], []>} : vector<8x16xf32>, vector<16x32xf32>, vector<8x32xf32> -> vector<8x32xf32>
    %355 = arith.addf %353, %354 : vector<8x32xf32>
    %356 = arith.mulf %355, %355 : vector<8x32xf32>
    %cst_65 = arith.constant dense<0.000000e+00> : vector<8x128xf32>
    %357 = tpu.matmul %356, %3, %cst_65 {dimension_numbers = #tpu.dot_dimension_numbers<[1], [0], [0], [1], [0, 0, 1, 1], [], []>} : vector<8x32xf32>, vector<32x128xf32>, vector<8x128xf32> -> vector<8x128xf32>
    %358 = vector.extract_strided_slice %40 {offsets = [8, 0], sizes = [8, 128], strides = [1, 1]} : vector<64x128xf32> to vector<8x128xf32>
    %359 = vector.extract_strided_slice %213 {offsets = [0, 0], sizes = [8, 128], strides = [1, 1]} : vector<8x132xf32> to vector<8x128xf32>
    %360 = arith.addf %358, %359 : vector<8x128xf32>
    %361 = arith.addf %360, %357 : vector<8x128xf32>
    %362 = tpu.concatenate %207, %33 in 1 : vector<8x32xf32>, vector<8x96xf32> -> vector<8x128xf32>
    %363 = arith.addf %361, %362 : vector<8x128xf32>
    %364 = vector.broadcast %23 : vector<1x128xf32> to vector<8x128xf32>
    %365 = arith.mulf %363, %364 : vector<8x128xf32>
    %366 = math.tanh %365 : vector<8x128xf32>
    %367 = vector.broadcast %26 : vector<1x128xf32> to vector<8x128xf32>
    %368 = arith.mulf %366, %367 : vector<8x128xf32>
    %369 = vector.broadcast %32 : vector<1x128xf32> to vector<8x128xf32>
    %370 = arith.addf %368, %369 : vector<8x128xf32>
    %371 = vector.extract_strided_slice %370 {offsets = [0, 0], sizes = [8, 32], strides = [1, 1]} : vector<8x128xf32> to vector<8x32xf32>
    %372 = vector.extract_strided_slice %370 {offsets = [0, 32], sizes = [8, 32], strides = [1, 1]} : vector<8x128xf32> to vector<8x32xf32>
    %373 = vector.extract_strided_slice %370 {offsets = [0, 64], sizes = [8, 32], strides = [1, 1]} : vector<8x128xf32> to vector<8x32xf32>
    %374 = vector.extract_strided_slice %370 {offsets = [0, 96], sizes = [8, 32], strides = [1, 1]} : vector<8x128xf32> to vector<8x32xf32>
    %375 = arith.mulf %371, %207 : vector<8x32xf32>
    %376 = arith.mulf %372, %373 : vector<8x32xf32>
    %377 = arith.addf %375, %376 : vector<8x32xf32>
    %378 = math.tanh %377 : vector<8x32xf32>
    %379 = arith.mulf %374, %378 : vector<8x32xf32>
    %c1 = arith.constant 1 : index
    %c0_66 = arith.constant 0 : index
    %c0_67 = arith.constant 0 : index
    %380 = vector.load %arg2[%c1, %c0_66, %c0_67] : memref<8x8x32xf32, #tpu.memory_space<vmem>>, vector<1x8x32xf32>
    %381 = vector.shape_cast %380 : vector<1x8x32xf32> to vector<8x32xf32>
    %382 = vector.shape_cast %379 : vector<8x32xf32> to vector<1x8x32xf32>
    tpu.vector_store %arg2[%c1, %c0_66, %c0_67], %382 {strides = array<i32>} : memref<8x8x32xf32, #tpu.memory_space<vmem>>, vector<1x8x32xf32>,
    %cst_68 = arith.constant dense<0.000000e+00> : vector<8x132xf32>
    %383 = tpu.matmul %379, %0, %cst_68 {dimension_numbers = #tpu.dot_dimension_numbers<[1], [0], [0], [1], [0, 0, 1, 1], [], []>} : vector<8x32xf32>, vector<32x132xf32>, vector<8x132xf32> -> vector<8x132xf32>
    %384 = vector.extract_strided_slice %37 {offsets = [16, 0], sizes = [8, 4], strides = [1, 1]} : vector<64x4xf32> to vector<8x4xf32>
    %385 = vector.extract_strided_slice %383 {offsets = [0, 128], sizes = [8, 4], strides = [1, 1]} : vector<8x132xf32> to vector<8x4xf32>
    %386 = arith.addf %384, %385 : vector<8x4xf32>
    %387 = arith.mulf %386, %386 : vector<8x4xf32>
    %cst_69 = arith.constant 1.000000e+00 : f32
    %388 = vector.broadcast %cst_69 : f32 to vector<8x4xf32>
    %389 = arith.addf %388, %387 : vector<8x4xf32>
    %390 = math.rsqrt %389 : vector<8x4xf32>
    %cst_70 = arith.constant 1.000000e+00 : f32
    %391 = vector.broadcast %cst_70 : f32 to vector<8x4xf32>
    %392 = arith.addf %391, %390 : vector<8x4xf32>
    %cst_71 = arith.constant 5.000000e-01 : f32
    %393 = vector.broadcast %cst_71 : f32 to vector<8x4xf32>
    %394 = arith.mulf %392, %393 : vector<8x4xf32>
    %395 = math.sqrt %394 : vector<8x4xf32>
    %cst_72 = arith.constant 0.000000e+00 : f32
    %396 = vector.broadcast %cst_72 : f32 to vector<8x4xf32>
    %397 = arith.cmpf oge, %386, %396 : vector<8x4xf32>
    %cst_73 = arith.constant 1.000000e+00 : f32
    %cst_74 = arith.constant -1.000000e+00 : f32
    %398 = vector.broadcast %cst_73 : f32 to vector<8x4xf32>
    %399 = vector.broadcast %cst_74 : f32 to vector<8x4xf32>
    %400 = arith.select %397, %398, %399 : vector<8x4xi1>, vector<8x4xf32>
    %cst_75 = arith.constant 1.000000e+00 : f32
    %401 = vector.broadcast %cst_75 : f32 to vector<8x4xf32>
    %402 = arith.subf %401, %390 : vector<8x4xf32>
    %cst_76 = arith.constant 5.000000e-01 : f32
    %403 = vector.broadcast %cst_76 : f32 to vector<8x4xf32>
    %404 = arith.mulf %402, %403 : vector<8x4xf32>
    %405 = math.sqrt %404 : vector<8x4xf32>
    %406 = arith.mulf %400, %405 : vector<8x4xf32>
    %407 = arith.mulf %387, %387 : vector<8x4xf32>
    %cst_77 = arith.constant 1.000000e+00 : f32
    %408 = vector.broadcast %cst_77 : f32 to vector<8x4xf32>
    %409 = arith.addf %408, %407 : vector<8x4xf32>
    %410 = math.rsqrt %409 : vector<8x4xf32>
    %cst_78 = arith.constant 1.000000e+00 : f32
    %411 = vector.broadcast %cst_78 : f32 to vector<8x4xf32>
    %412 = arith.addf %411, %410 : vector<8x4xf32>
    %cst_79 = arith.constant 5.000000e-01 : f32
    %413 = vector.broadcast %cst_79 : f32 to vector<8x4xf32>
    %414 = arith.mulf %412, %413 : vector<8x4xf32>
    %415 = math.sqrt %414 : vector<8x4xf32>
    %cst_80 = arith.constant 1.000000e+00 : f32
    %416 = vector.broadcast %cst_80 : f32 to vector<8x4xf32>
    %417 = arith.subf %416, %410 : vector<8x4xf32>
    %cst_81 = arith.constant 5.000000e-01 : f32
    %418 = vector.broadcast %cst_81 : f32 to vector<8x4xf32>
    %419 = arith.mulf %417, %418 : vector<8x4xf32>
    %420 = math.sqrt %419 : vector<8x4xf32>
    %421 = arith.subf %395, %406 : vector<8x4xf32>
    %cst_82 = arith.constant 0.707106769 : f32
    %422 = vector.broadcast %cst_82 : f32 to vector<8x4xf32>
    %423 = arith.mulf %421, %422 : vector<8x4xf32>
    %424 = arith.addf %395, %406 : vector<8x4xf32>
    %cst_83 = arith.constant 0.707106769 : f32
    %425 = vector.broadcast %cst_83 : f32 to vector<8x4xf32>
    %426 = arith.mulf %424, %425 : vector<8x4xf32>
    %427 = arith.mulf %423, %415 : vector<8x4xf32>
    %428 = arith.mulf %423, %420 : vector<8x4xf32>
    %cst_84 = arith.constant 0.000000e+00 : f32
    %429 = vector.broadcast %cst_84 : f32 to vector<8x4xf32>
    %430 = arith.subf %429, %428 : vector<8x4xf32>
    %431 = arith.mulf %426, %415 : vector<8x4xf32>
    %432 = arith.mulf %426, %420 : vector<8x4xf32>
    %433 = vector.extract_strided_slice %427 {offsets = [0, 0], sizes = [8, 1], strides = [1, 1]} : vector<8x4xf32> to vector<8x1xf32>
    %434 = vector.extract_strided_slice %431 {offsets = [0, 0], sizes = [8, 1], strides = [1, 1]} : vector<8x4xf32> to vector<8x1xf32>
    %435 = vector.extract_strided_slice %427 {offsets = [0, 0], sizes = [8, 1], strides = [1, 1]} : vector<8x4xf32> to vector<8x1xf32>
    %436 = arith.subf %434, %435 : vector<8x1xf32>
    %437 = vector.broadcast %436 : vector<8x1xf32> to vector<8x16xf32>
    %438 = vector.broadcast %9 : vector<1x16xf32> to vector<8x16xf32>
    %439 = arith.mulf %437, %438 : vector<8x16xf32>
    %440 = vector.broadcast %433 : vector<8x1xf32> to vector<8x16xf32>
    %441 = arith.addf %440, %439 : vector<8x16xf32>
    %442 = vector.extract_strided_slice %430 {offsets = [0, 0], sizes = [8, 1], strides = [1, 1]} : vector<8x4xf32> to vector<8x1xf32>
    %443 = vector.extract_strided_slice %432 {offsets = [0, 0], sizes = [8, 1], strides = [1, 1]} : vector<8x4xf32> to vector<8x1xf32>
    %444 = vector.extract_strided_slice %430 {offsets = [0, 0], sizes = [8, 1], strides = [1, 1]} : vector<8x4xf32> to vector<8x1xf32>
    %445 = arith.subf %443, %444 : vector<8x1xf32>
    %446 = vector.broadcast %445 : vector<8x1xf32> to vector<8x16xf32>
    %447 = vector.broadcast %9 : vector<1x16xf32> to vector<8x16xf32>
    %448 = arith.mulf %446, %447 : vector<8x16xf32>
    %449 = vector.broadcast %442 : vector<8x1xf32> to vector<8x16xf32>
    %450 = arith.addf %449, %448 : vector<8x16xf32>
    %451 = vector.extract_strided_slice %427 {offsets = [0, 1], sizes = [8, 1], strides = [1, 1]} : vector<8x4xf32> to vector<8x1xf32>
    %452 = vector.extract_strided_slice %431 {offsets = [0, 1], sizes = [8, 1], strides = [1, 1]} : vector<8x4xf32> to vector<8x1xf32>
    %453 = vector.extract_strided_slice %427 {offsets = [0, 1], sizes = [8, 1], strides = [1, 1]} : vector<8x4xf32> to vector<8x1xf32>
    %454 = arith.subf %452, %453 : vector<8x1xf32>
    %455 = vector.broadcast %454 : vector<8x1xf32> to vector<8x16xf32>
    %456 = vector.broadcast %10 : vector<1x16xf32> to vector<8x16xf32>
    %457 = arith.mulf %455, %456 : vector<8x16xf32>
    %458 = vector.broadcast %451 : vector<8x1xf32> to vector<8x16xf32>
    %459 = arith.addf %458, %457 : vector<8x16xf32>
    %460 = vector.extract_strided_slice %430 {offsets = [0, 1], sizes = [8, 1], strides = [1, 1]} : vector<8x4xf32> to vector<8x1xf32>
    %461 = vector.extract_strided_slice %432 {offsets = [0, 1], sizes = [8, 1], strides = [1, 1]} : vector<8x4xf32> to vector<8x1xf32>
    %462 = vector.extract_strided_slice %430 {offsets = [0, 1], sizes = [8, 1], strides = [1, 1]} : vector<8x4xf32> to vector<8x1xf32>
    %463 = arith.subf %461, %462 : vector<8x1xf32>
    %464 = vector.broadcast %463 : vector<8x1xf32> to vector<8x16xf32>
    %465 = vector.broadcast %10 : vector<1x16xf32> to vector<8x16xf32>
    %466 = arith.mulf %464, %465 : vector<8x16xf32>
    %467 = vector.broadcast %460 : vector<8x1xf32> to vector<8x16xf32>
    %468 = arith.addf %467, %466 : vector<8x16xf32>
    %469 = arith.mulf %441, %459 : vector<8x16xf32>
    %470 = arith.mulf %450, %468 : vector<8x16xf32>
    %471 = arith.subf %469, %470 : vector<8x16xf32>
    %472 = arith.mulf %441, %468 : vector<8x16xf32>
    %473 = arith.mulf %450, %459 : vector<8x16xf32>
    %474 = arith.addf %472, %473 : vector<8x16xf32>
    %475 = vector.extract_strided_slice %427 {offsets = [0, 2], sizes = [8, 1], strides = [1, 1]} : vector<8x4xf32> to vector<8x1xf32>
    %476 = vector.extract_strided_slice %431 {offsets = [0, 2], sizes = [8, 1], strides = [1, 1]} : vector<8x4xf32> to vector<8x1xf32>
    %477 = vector.extract_strided_slice %427 {offsets = [0, 2], sizes = [8, 1], strides = [1, 1]} : vector<8x4xf32> to vector<8x1xf32>
    %478 = arith.subf %476, %477 : vector<8x1xf32>
    %479 = vector.broadcast %478 : vector<8x1xf32> to vector<8x16xf32>
    %480 = vector.broadcast %11 : vector<1x16xf32> to vector<8x16xf32>
    %481 = arith.mulf %479, %480 : vector<8x16xf32>
    %482 = vector.broadcast %475 : vector<8x1xf32> to vector<8x16xf32>
    %483 = arith.addf %482, %481 : vector<8x16xf32>
    %484 = vector.extract_strided_slice %430 {offsets = [0, 2], sizes = [8, 1], strides = [1, 1]} : vector<8x4xf32> to vector<8x1xf32>
    %485 = vector.extract_strided_slice %432 {offsets = [0, 2], sizes = [8, 1], strides = [1, 1]} : vector<8x4xf32> to vector<8x1xf32>
    %486 = vector.extract_strided_slice %430 {offsets = [0, 2], sizes = [8, 1], strides = [1, 1]} : vector<8x4xf32> to vector<8x1xf32>
    %487 = arith.subf %485, %486 : vector<8x1xf32>
    %488 = vector.broadcast %487 : vector<8x1xf32> to vector<8x16xf32>
    %489 = vector.broadcast %11 : vector<1x16xf32> to vector<8x16xf32>
    %490 = arith.mulf %488, %489 : vector<8x16xf32>
    %491 = vector.broadcast %484 : vector<8x1xf32> to vector<8x16xf32>
    %492 = arith.addf %491, %490 : vector<8x16xf32>
    %493 = arith.mulf %471, %483 : vector<8x16xf32>
    %494 = arith.mulf %474, %492 : vector<8x16xf32>
    %495 = arith.subf %493, %494 : vector<8x16xf32>
    %496 = arith.mulf %471, %492 : vector<8x16xf32>
    %497 = arith.mulf %474, %483 : vector<8x16xf32>
    %498 = arith.addf %496, %497 : vector<8x16xf32>
    %499 = vector.extract_strided_slice %427 {offsets = [0, 3], sizes = [8, 1], strides = [1, 1]} : vector<8x4xf32> to vector<8x1xf32>
    %500 = vector.extract_strided_slice %431 {offsets = [0, 3], sizes = [8, 1], strides = [1, 1]} : vector<8x4xf32> to vector<8x1xf32>
    %501 = vector.extract_strided_slice %427 {offsets = [0, 3], sizes = [8, 1], strides = [1, 1]} : vector<8x4xf32> to vector<8x1xf32>
    %502 = arith.subf %500, %501 : vector<8x1xf32>
    %503 = vector.broadcast %502 : vector<8x1xf32> to vector<8x16xf32>
    %504 = vector.broadcast %12 : vector<1x16xf32> to vector<8x16xf32>
    %505 = arith.mulf %503, %504 : vector<8x16xf32>
    %506 = vector.broadcast %499 : vector<8x1xf32> to vector<8x16xf32>
    %507 = arith.addf %506, %505 : vector<8x16xf32>
    %508 = vector.extract_strided_slice %430 {offsets = [0, 3], sizes = [8, 1], strides = [1, 1]} : vector<8x4xf32> to vector<8x1xf32>
    %509 = vector.extract_strided_slice %432 {offsets = [0, 3], sizes = [8, 1], strides = [1, 1]} : vector<8x4xf32> to vector<8x1xf32>
    %510 = vector.extract_strided_slice %430 {offsets = [0, 3], sizes = [8, 1], strides = [1, 1]} : vector<8x4xf32> to vector<8x1xf32>
    %511 = arith.subf %509, %510 : vector<8x1xf32>
    %512 = vector.broadcast %511 : vector<8x1xf32> to vector<8x16xf32>
    %513 = vector.broadcast %12 : vector<1x16xf32> to vector<8x16xf32>
    %514 = arith.mulf %512, %513 : vector<8x16xf32>
    %515 = vector.broadcast %508 : vector<8x1xf32> to vector<8x16xf32>
    %516 = arith.addf %515, %514 : vector<8x16xf32>
    %517 = arith.mulf %495, %507 : vector<8x16xf32>
    %518 = arith.mulf %498, %516 : vector<8x16xf32>
    %519 = arith.subf %517, %518 : vector<8x16xf32>
    %520 = arith.mulf %495, %516 : vector<8x16xf32>
    %521 = arith.mulf %498, %507 : vector<8x16xf32>
    %522 = arith.addf %520, %521 : vector<8x16xf32>
    %cst_85 = arith.constant dense<0.000000e+00> : vector<8x32xf32>
    %523 = tpu.matmul %519, %4, %cst_85 {dimension_numbers = #tpu.dot_dimension_numbers<[1], [0], [0], [1], [0, 0, 1, 1], [], []>} : vector<8x16xf32>, vector<16x32xf32>, vector<8x32xf32> -> vector<8x32xf32>
    %cst_86 = arith.constant dense<0.000000e+00> : vector<8x32xf32>
    %524 = tpu.matmul %522, %5, %cst_86 {dimension_numbers = #tpu.dot_dimension_numbers<[1], [0], [0], [1], [0, 0, 1, 1], [], []>} : vector<8x16xf32>, vector<16x32xf32>, vector<8x32xf32> -> vector<8x32xf32>
    %525 = arith.addf %523, %524 : vector<8x32xf32>
    %526 = arith.mulf %525, %525 : vector<8x32xf32>
    %cst_87 = arith.constant dense<0.000000e+00> : vector<8x128xf32>
    %527 = tpu.matmul %526, %3, %cst_87 {dimension_numbers = #tpu.dot_dimension_numbers<[1], [0], [0], [1], [0, 0, 1, 1], [], []>} : vector<8x32xf32>, vector<32x128xf32>, vector<8x128xf32> -> vector<8x128xf32>
    %528 = vector.extract_strided_slice %40 {offsets = [16, 0], sizes = [8, 128], strides = [1, 1]} : vector<64x128xf32> to vector<8x128xf32>
    %529 = vector.extract_strided_slice %383 {offsets = [0, 0], sizes = [8, 128], strides = [1, 1]} : vector<8x132xf32> to vector<8x128xf32>
    %530 = arith.addf %528, %529 : vector<8x128xf32>
    %531 = arith.addf %530, %527 : vector<8x128xf32>
    %532 = tpu.concatenate %377, %33 in 1 : vector<8x32xf32>, vector<8x96xf32> -> vector<8x128xf32>
    %533 = arith.addf %531, %532 : vector<8x128xf32>
    %534 = vector.broadcast %23 : vector<1x128xf32> to vector<8x128xf32>
    %535 = arith.mulf %533, %534 : vector<8x128xf32>
    %536 = math.tanh %535 : vector<8x128xf32>
    %537 = vector.broadcast %26 : vector<1x128xf32> to vector<8x128xf32>
    %538 = arith.mulf %536, %537 : vector<8x128xf32>
    %539 = vector.broadcast %32 : vector<1x128xf32> to vector<8x128xf32>
    %540 = arith.addf %538, %539 : vector<8x128xf32>
    %541 = vector.extract_strided_slice %540 {offsets = [0, 0], sizes = [8, 32], strides = [1, 1]} : vector<8x128xf32> to vector<8x32xf32>
    %542 = vector.extract_strided_slice %540 {offsets = [0, 32], sizes = [8, 32], strides = [1, 1]} : vector<8x128xf32> to vector<8x32xf32>
    %543 = vector.extract_strided_slice %540 {offsets = [0, 64], sizes = [8, 32], strides = [1, 1]} : vector<8x128xf32> to vector<8x32xf32>
    %544 = vector.extract_strided_slice %540 {offsets = [0, 96], sizes = [8, 32], strides = [1, 1]} : vector<8x128xf32> to vector<8x32xf32>
    %545 = arith.mulf %541, %377 : vector<8x32xf32>
    %546 = arith.mulf %542, %543 : vector<8x32xf32>
    %547 = arith.addf %545, %546 : vector<8x32xf32>
    %548 = math.tanh %547 : vector<8x32xf32>
    %549 = arith.mulf %544, %548 : vector<8x32xf32>
    %c2 = arith.constant 2 : index
    %c0_88 = arith.constant 0 : index
    %c0_89 = arith.constant 0 : index
    %550 = vector.load %arg2[%c2, %c0_88, %c0_89] : memref<8x8x32xf32, #tpu.memory_space<vmem>>, vector<1x8x32xf32>
    %551 = vector.shape_cast %550 : vector<1x8x32xf32> to vector<8x32xf32>
    %552 = vector.shape_cast %549 : vector<8x32xf32> to vector<1x8x32xf32>
    tpu.vector_store %arg2[%c2, %c0_88, %c0_89], %552 {strides = array<i32>} : memref<8x8x32xf32, #tpu.memory_space<vmem>>, vector<1x8x32xf32>,
    %cst_90 = arith.constant dense<0.000000e+00> : vector<8x132xf32>
    %553 = tpu.matmul %549, %0, %cst_90 {dimension_numbers = #tpu.dot_dimension_numbers<[1], [0], [0], [1], [0, 0, 1, 1], [], []>} : vector<8x32xf32>, vector<32x132xf32>, vector<8x132xf32> -> vector<8x132xf32>
    %554 = vector.extract_strided_slice %37 {offsets = [24, 0], sizes = [8, 4], strides = [1, 1]} : vector<64x4xf32> to vector<8x4xf32>
    %555 = vector.extract_strided_slice %553 {offsets = [0, 128], sizes = [8, 4], strides = [1, 1]} : vector<8x132xf32> to vector<8x4xf32>
    %556 = arith.addf %554, %555 : vector<8x4xf32>
    %557 = arith.mulf %556, %556 : vector<8x4xf32>
    %cst_91 = arith.constant 1.000000e+00 : f32
    %558 = vector.broadcast %cst_91 : f32 to vector<8x4xf32>
    %559 = arith.addf %558, %557 : vector<8x4xf32>
    %560 = math.rsqrt %559 : vector<8x4xf32>
    %cst_92 = arith.constant 1.000000e+00 : f32
    %561 = vector.broadcast %cst_92 : f32 to vector<8x4xf32>
    %562 = arith.addf %561, %560 : vector<8x4xf32>
    %cst_93 = arith.constant 5.000000e-01 : f32
    %563 = vector.broadcast %cst_93 : f32 to vector<8x4xf32>
    %564 = arith.mulf %562, %563 : vector<8x4xf32>
    %565 = math.sqrt %564 : vector<8x4xf32>
    %cst_94 = arith.constant 0.000000e+00 : f32
    %566 = vector.broadcast %cst_94 : f32 to vector<8x4xf32>
    %567 = arith.cmpf oge, %556, %566 : vector<8x4xf32>
    %cst_95 = arith.constant 1.000000e+00 : f32
    %cst_96 = arith.constant -1.000000e+00 : f32
    %568 = vector.broadcast %cst_95 : f32 to vector<8x4xf32>
    %569 = vector.broadcast %cst_96 : f32 to vector<8x4xf32>
    %570 = arith.select %567, %568, %569 : vector<8x4xi1>, vector<8x4xf32>
    %cst_97 = arith.constant 1.000000e+00 : f32
    %571 = vector.broadcast %cst_97 : f32 to vector<8x4xf32>
    %572 = arith.subf %571, %560 : vector<8x4xf32>
    %cst_98 = arith.constant 5.000000e-01 : f32
    %573 = vector.broadcast %cst_98 : f32 to vector<8x4xf32>
    %574 = arith.mulf %572, %573 : vector<8x4xf32>
    %575 = math.sqrt %574 : vector<8x4xf32>
    %576 = arith.mulf %570, %575 : vector<8x4xf32>
    %577 = arith.mulf %557, %557 : vector<8x4xf32>
    %cst_99 = arith.constant 1.000000e+00 : f32
    %578 = vector.broadcast %cst_99 : f32 to vector<8x4xf32>
    %579 = arith.addf %578, %577 : vector<8x4xf32>
    %580 = math.rsqrt %579 : vector<8x4xf32>
    %cst_100 = arith.constant 1.000000e+00 : f32
    %581 = vector.broadcast %cst_100 : f32 to vector<8x4xf32>
    %582 = arith.addf %581, %580 : vector<8x4xf32>
    %cst_101 = arith.constant 5.000000e-01 : f32
    %583 = vector.broadcast %cst_101 : f32 to vector<8x4xf32>
    %584 = arith.mulf %582, %583 : vector<8x4xf32>
    %585 = math.sqrt %584 : vector<8x4xf32>
    %cst_102 = arith.constant 1.000000e+00 : f32
    %586 = vector.broadcast %cst_102 : f32 to vector<8x4xf32>
    %587 = arith.subf %586, %580 : vector<8x4xf32>
    %cst_103 = arith.constant 5.000000e-01 : f32
    %588 = vector.broadcast %cst_103 : f32 to vector<8x4xf32>
    %589 = arith.mulf %587, %588 : vector<8x4xf32>
    %590 = math.sqrt %589 : vector<8x4xf32>
    %591 = arith.subf %565, %576 : vector<8x4xf32>
    %cst_104 = arith.constant 0.707106769 : f32
    %592 = vector.broadcast %cst_104 : f32 to vector<8x4xf32>
    %593 = arith.mulf %591, %592 : vector<8x4xf32>
    %594 = arith.addf %565, %576 : vector<8x4xf32>
    %cst_105 = arith.constant 0.707106769 : f32
    %595 = vector.broadcast %cst_105 : f32 to vector<8x4xf32>
    %596 = arith.mulf %594, %595 : vector<8x4xf32>
    %597 = arith.mulf %593, %585 : vector<8x4xf32>
    %598 = arith.mulf %593, %590 : vector<8x4xf32>
    %cst_106 = arith.constant 0.000000e+00 : f32
    %599 = vector.broadcast %cst_106 : f32 to vector<8x4xf32>
    %600 = arith.subf %599, %598 : vector<8x4xf32>
    %601 = arith.mulf %596, %585 : vector<8x4xf32>
    %602 = arith.mulf %596, %590 : vector<8x4xf32>
    %603 = vector.extract_strided_slice %597 {offsets = [0, 0], sizes = [8, 1], strides = [1, 1]} : vector<8x4xf32> to vector<8x1xf32>
    %604 = vector.extract_strided_slice %601 {offsets = [0, 0], sizes = [8, 1], strides = [1, 1]} : vector<8x4xf32> to vector<8x1xf32>
    %605 = vector.extract_strided_slice %597 {offsets = [0, 0], sizes = [8, 1], strides = [1, 1]} : vector<8x4xf32> to vector<8x1xf32>
    %606 = arith.subf %604, %605 : vector<8x1xf32>
    %607 = vector.broadcast %606 : vector<8x1xf32> to vector<8x16xf32>
    %608 = vector.broadcast %9 : vector<1x16xf32> to vector<8x16xf32>
    %609 = arith.mulf %607, %608 : vector<8x16xf32>
    %610 = vector.broadcast %603 : vector<8x1xf32> to vector<8x16xf32>
    %611 = arith.addf %610, %609 : vector<8x16xf32>
    %612 = vector.extract_strided_slice %600 {offsets = [0, 0], sizes = [8, 1], strides = [1, 1]} : vector<8x4xf32> to vector<8x1xf32>
    %613 = vector.extract_strided_slice %602 {offsets = [0, 0], sizes = [8, 1], strides = [1, 1]} : vector<8x4xf32> to vector<8x1xf32>
    %614 = vector.extract_strided_slice %600 {offsets = [0, 0], sizes = [8, 1], strides = [1, 1]} : vector<8x4xf32> to vector<8x1xf32>
    %615 = arith.subf %613, %614 : vector<8x1xf32>
    %616 = vector.broadcast %615 : vector<8x1xf32> to vector<8x16xf32>
    %617 = vector.broadcast %9 : vector<1x16xf32> to vector<8x16xf32>
    %618 = arith.mulf %616, %617 : vector<8x16xf32>
    %619 = vector.broadcast %612 : vector<8x1xf32> to vector<8x16xf32>
    %620 = arith.addf %619, %618 : vector<8x16xf32>
    %621 = vector.extract_strided_slice %597 {offsets = [0, 1], sizes = [8, 1], strides = [1, 1]} : vector<8x4xf32> to vector<8x1xf32>
    %622 = vector.extract_strided_slice %601 {offsets = [0, 1], sizes = [8, 1], strides = [1, 1]} : vector<8x4xf32> to vector<8x1xf32>
    %623 = vector.extract_strided_slice %597 {offsets = [0, 1], sizes = [8, 1], strides = [1, 1]} : vector<8x4xf32> to vector<8x1xf32>
    %624 = arith.subf %622, %623 : vector<8x1xf32>
    %625 = vector.broadcast %624 : vector<8x1xf32> to vector<8x16xf32>
    %626 = vector.broadcast %10 : vector<1x16xf32> to vector<8x16xf32>
    %627 = arith.mulf %625, %626 : vector<8x16xf32>
    %628 = vector.broadcast %621 : vector<8x1xf32> to vector<8x16xf32>
    %629 = arith.addf %628, %627 : vector<8x16xf32>
    %630 = vector.extract_strided_slice %600 {offsets = [0, 1], sizes = [8, 1], strides = [1, 1]} : vector<8x4xf32> to vector<8x1xf32>
    %631 = vector.extract_strided_slice %602 {offsets = [0, 1], sizes = [8, 1], strides = [1, 1]} : vector<8x4xf32> to vector<8x1xf32>
    %632 = vector.extract_strided_slice %600 {offsets = [0, 1], sizes = [8, 1], strides = [1, 1]} : vector<8x4xf32> to vector<8x1xf32>
    %633 = arith.subf %631, %632 : vector<8x1xf32>
    %634 = vector.broadcast %633 : vector<8x1xf32> to vector<8x16xf32>
    %635 = vector.broadcast %10 : vector<1x16xf32> to vector<8x16xf32>
    %636 = arith.mulf %634, %635 : vector<8x16xf32>
    %637 = vector.broadcast %630 : vector<8x1xf32> to vector<8x16xf32>
    %638 = arith.addf %637, %636 : vector<8x16xf32>
    %639 = arith.mulf %611, %629 : vector<8x16xf32>
    %640 = arith.mulf %620, %638 : vector<8x16xf32>
    %641 = arith.subf %639, %640 : vector<8x16xf32>
    %642 = arith.mulf %611, %638 : vector<8x16xf32>
    %643 = arith.mulf %620, %629 : vector<8x16xf32>
    %644 = arith.addf %642, %643 : vector<8x16xf32>
    %645 = vector.extract_strided_slice %597 {offsets = [0, 2], sizes = [8, 1], strides = [1, 1]} : vector<8x4xf32> to vector<8x1xf32>
    %646 = vector.extract_strided_slice %601 {offsets = [0, 2], sizes = [8, 1], strides = [1, 1]} : vector<8x4xf32> to vector<8x1xf32>
    %647 = vector.extract_strided_slice %597 {offsets = [0, 2], sizes = [8, 1], strides = [1, 1]} : vector<8x4xf32> to vector<8x1xf32>
    %648 = arith.subf %646, %647 : vector<8x1xf32>
    %649 = vector.broadcast %648 : vector<8x1xf32> to vector<8x16xf32>
    %650 = vector.broadcast %11 : vector<1x16xf32> to vector<8x16xf32>
    %651 = arith.mulf %649, %650 : vector<8x16xf32>
    %652 = vector.broadcast %645 : vector<8x1xf32> to vector<8x16xf32>
    %653 = arith.addf %652, %651 : vector<8x16xf32>
    %654 = vector.extract_strided_slice %600 {offsets = [0, 2], sizes = [8, 1], strides = [1, 1]} : vector<8x4xf32> to vector<8x1xf32>
    %655 = vector.extract_strided_slice %602 {offsets = [0, 2], sizes = [8, 1], strides = [1, 1]} : vector<8x4xf32> to vector<8x1xf32>
    %656 = vector.extract_strided_slice %600 {offsets = [0, 2], sizes = [8, 1], strides = [1, 1]} : vector<8x4xf32> to vector<8x1xf32>
    %657 = arith.subf %655, %656 : vector<8x1xf32>
    %658 = vector.broadcast %657 : vector<8x1xf32> to vector<8x16xf32>
    %659 = vector.broadcast %11 : vector<1x16xf32> to vector<8x16xf32>
    %660 = arith.mulf %658, %659 : vector<8x16xf32>
    %661 = vector.broadcast %654 : vector<8x1xf32> to vector<8x16xf32>
    %662 = arith.addf %661, %660 : vector<8x16xf32>
    %663 = arith.mulf %641, %653 : vector<8x16xf32>
    %664 = arith.mulf %644, %662 : vector<8x16xf32>
    %665 = arith.subf %663, %664 : vector<8x16xf32>
    %666 = arith.mulf %641, %662 : vector<8x16xf32>
    %667 = arith.mulf %644, %653 : vector<8x16xf32>
    %668 = arith.addf %666, %667 : vector<8x16xf32>
    %669 = vector.extract_strided_slice %597 {offsets = [0, 3], sizes = [8, 1], strides = [1, 1]} : vector<8x4xf32> to vector<8x1xf32>
    %670 = vector.extract_strided_slice %601 {offsets = [0, 3], sizes = [8, 1], strides = [1, 1]} : vector<8x4xf32> to vector<8x1xf32>
    %671 = vector.extract_strided_slice %597 {offsets = [0, 3], sizes = [8, 1], strides = [1, 1]} : vector<8x4xf32> to vector<8x1xf32>
    %672 = arith.subf %670, %671 : vector<8x1xf32>
    %673 = vector.broadcast %672 : vector<8x1xf32> to vector<8x16xf32>
    %674 = vector.broadcast %12 : vector<1x16xf32> to vector<8x16xf32>
    %675 = arith.mulf %673, %674 : vector<8x16xf32>
    %676 = vector.broadcast %669 : vector<8x1xf32> to vector<8x16xf32>
    %677 = arith.addf %676, %675 : vector<8x16xf32>
    %678 = vector.extract_strided_slice %600 {offsets = [0, 3], sizes = [8, 1], strides = [1, 1]} : vector<8x4xf32> to vector<8x1xf32>
    %679 = vector.extract_strided_slice %602 {offsets = [0, 3], sizes = [8, 1], strides = [1, 1]} : vector<8x4xf32> to vector<8x1xf32>
    %680 = vector.extract_strided_slice %600 {offsets = [0, 3], sizes = [8, 1], strides = [1, 1]} : vector<8x4xf32> to vector<8x1xf32>
    %681 = arith.subf %679, %680 : vector<8x1xf32>
    %682 = vector.broadcast %681 : vector<8x1xf32> to vector<8x16xf32>
    %683 = vector.broadcast %12 : vector<1x16xf32> to vector<8x16xf32>
    %684 = arith.mulf %682, %683 : vector<8x16xf32>
    %685 = vector.broadcast %678 : vector<8x1xf32> to vector<8x16xf32>
    %686 = arith.addf %685, %684 : vector<8x16xf32>
    %687 = arith.mulf %665, %677 : vector<8x16xf32>
    %688 = arith.mulf %668, %686 : vector<8x16xf32>
    %689 = arith.subf %687, %688 : vector<8x16xf32>
    %690 = arith.mulf %665, %686 : vector<8x16xf32>
    %691 = arith.mulf %668, %677 : vector<8x16xf32>
    %692 = arith.addf %690, %691 : vector<8x16xf32>
    %cst_107 = arith.constant dense<0.000000e+00> : vector<8x32xf32>
    %693 = tpu.matmul %689, %4, %cst_107 {dimension_numbers = #tpu.dot_dimension_numbers<[1], [0], [0], [1], [0, 0, 1, 1], [], []>} : vector<8x16xf32>, vector<16x32xf32>, vector<8x32xf32> -> vector<8x32xf32>
    %cst_108 = arith.constant dense<0.000000e+00> : vector<8x32xf32>
    %694 = tpu.matmul %692, %5, %cst_108 {dimension_numbers = #tpu.dot_dimension_numbers<[1], [0], [0], [1], [0, 0, 1, 1], [], []>} : vector<8x16xf32>, vector<16x32xf32>, vector<8x32xf32> -> vector<8x32xf32>
    %695 = arith.addf %693, %694 : vector<8x32xf32>
    %696 = arith.mulf %695, %695 : vector<8x32xf32>
    %cst_109 = arith.constant dense<0.000000e+00> : vector<8x128xf32>
    %697 = tpu.matmul %696, %3, %cst_109 {dimension_numbers = #tpu.dot_dimension_numbers<[1], [0], [0], [1], [0, 0, 1, 1], [], []>} : vector<8x32xf32>, vector<32x128xf32>, vector<8x128xf32> -> vector<8x128xf32>
    %698 = vector.extract_strided_slice %40 {offsets = [24, 0], sizes = [8, 128], strides = [1, 1]} : vector<64x128xf32> to vector<8x128xf32>
    %699 = vector.extract_strided_slice %553 {offsets = [0, 0], sizes = [8, 128], strides = [1, 1]} : vector<8x132xf32> to vector<8x128xf32>
    %700 = arith.addf %698, %699 : vector<8x128xf32>
    %701 = arith.addf %700, %697 : vector<8x128xf32>
    %702 = tpu.concatenate %547, %33 in 1 : vector<8x32xf32>, vector<8x96xf32> -> vector<8x128xf32>
    %703 = arith.addf %701, %702 : vector<8x128xf32>
    %704 = vector.broadcast %23 : vector<1x128xf32> to vector<8x128xf32>
    %705 = arith.mulf %703, %704 : vector<8x128xf32>
    %706 = math.tanh %705 : vector<8x128xf32>
    %707 = vector.broadcast %26 : vector<1x128xf32> to vector<8x128xf32>
    %708 = arith.mulf %706, %707 : vector<8x128xf32>
    %709 = vector.broadcast %32 : vector<1x128xf32> to vector<8x128xf32>
    %710 = arith.addf %708, %709 : vector<8x128xf32>
    %711 = vector.extract_strided_slice %710 {offsets = [0, 0], sizes = [8, 32], strides = [1, 1]} : vector<8x128xf32> to vector<8x32xf32>
    %712 = vector.extract_strided_slice %710 {offsets = [0, 32], sizes = [8, 32], strides = [1, 1]} : vector<8x128xf32> to vector<8x32xf32>
    %713 = vector.extract_strided_slice %710 {offsets = [0, 64], sizes = [8, 32], strides = [1, 1]} : vector<8x128xf32> to vector<8x32xf32>
    %714 = vector.extract_strided_slice %710 {offsets = [0, 96], sizes = [8, 32], strides = [1, 1]} : vector<8x128xf32> to vector<8x32xf32>
    %715 = arith.mulf %711, %547 : vector<8x32xf32>
    %716 = arith.mulf %712, %713 : vector<8x32xf32>
    %717 = arith.addf %715, %716 : vector<8x32xf32>
    %718 = math.tanh %717 : vector<8x32xf32>
    %719 = arith.mulf %714, %718 : vector<8x32xf32>
    %c3 = arith.constant 3 : index
    %c0_110 = arith.constant 0 : index
    %c0_111 = arith.constant 0 : index
    %720 = vector.load %arg2[%c3, %c0_110, %c0_111] : memref<8x8x32xf32, #tpu.memory_space<vmem>>, vector<1x8x32xf32>
    %721 = vector.shape_cast %720 : vector<1x8x32xf32> to vector<8x32xf32>
    %722 = vector.shape_cast %719 : vector<8x32xf32> to vector<1x8x32xf32>
    tpu.vector_store %arg2[%c3, %c0_110, %c0_111], %722 {strides = array<i32>} : memref<8x8x32xf32, #tpu.memory_space<vmem>>, vector<1x8x32xf32>,
    %cst_112 = arith.constant dense<0.000000e+00> : vector<8x132xf32>
    %723 = tpu.matmul %719, %0, %cst_112 {dimension_numbers = #tpu.dot_dimension_numbers<[1], [0], [0], [1], [0, 0, 1, 1], [], []>} : vector<8x32xf32>, vector<32x132xf32>, vector<8x132xf32> -> vector<8x132xf32>
    %724 = vector.extract_strided_slice %37 {offsets = [32, 0], sizes = [8, 4], strides = [1, 1]} : vector<64x4xf32> to vector<8x4xf32>
    %725 = vector.extract_strided_slice %723 {offsets = [0, 128], sizes = [8, 4], strides = [1, 1]} : vector<8x132xf32> to vector<8x4xf32>
    %726 = arith.addf %724, %725 : vector<8x4xf32>
    %727 = arith.mulf %726, %726 : vector<8x4xf32>
    %cst_113 = arith.constant 1.000000e+00 : f32
    %728 = vector.broadcast %cst_113 : f32 to vector<8x4xf32>
    %729 = arith.addf %728, %727 : vector<8x4xf32>
    %730 = math.rsqrt %729 : vector<8x4xf32>
    %cst_114 = arith.constant 1.000000e+00 : f32
    %731 = vector.broadcast %cst_114 : f32 to vector<8x4xf32>
    %732 = arith.addf %731, %730 : vector<8x4xf32>
    %cst_115 = arith.constant 5.000000e-01 : f32
    %733 = vector.broadcast %cst_115 : f32 to vector<8x4xf32>
    %734 = arith.mulf %732, %733 : vector<8x4xf32>
    %735 = math.sqrt %734 : vector<8x4xf32>
    %cst_116 = arith.constant 0.000000e+00 : f32
    %736 = vector.broadcast %cst_116 : f32 to vector<8x4xf32>
    %737 = arith.cmpf oge, %726, %736 : vector<8x4xf32>
    %cst_117 = arith.constant 1.000000e+00 : f32
    %cst_118 = arith.constant -1.000000e+00 : f32
    %738 = vector.broadcast %cst_117 : f32 to vector<8x4xf32>
    %739 = vector.broadcast %cst_118 : f32 to vector<8x4xf32>
    %740 = arith.select %737, %738, %739 : vector<8x4xi1>, vector<8x4xf32>
    %cst_119 = arith.constant 1.000000e+00 : f32
    %741 = vector.broadcast %cst_119 : f32 to vector<8x4xf32>
    %742 = arith.subf %741, %730 : vector<8x4xf32>
    %cst_120 = arith.constant 5.000000e-01 : f32
    %743 = vector.broadcast %cst_120 : f32 to vector<8x4xf32>
    %744 = arith.mulf %742, %743 : vector<8x4xf32>
    %745 = math.sqrt %744 : vector<8x4xf32>
    %746 = arith.mulf %740, %745 : vector<8x4xf32>
    %747 = arith.mulf %727, %727 : vector<8x4xf32>
    %cst_121 = arith.constant 1.000000e+00 : f32
    %748 = vector.broadcast %cst_121 : f32 to vector<8x4xf32>
    %749 = arith.addf %748, %747 : vector<8x4xf32>
    %750 = math.rsqrt %749 : vector<8x4xf32>
    %cst_122 = arith.constant 1.000000e+00 : f32
    %751 = vector.broadcast %cst_122 : f32 to vector<8x4xf32>
    %752 = arith.addf %751, %750 : vector<8x4xf32>
    %cst_123 = arith.constant 5.000000e-01 : f32
    %753 = vector.broadcast %cst_123 : f32 to vector<8x4xf32>
    %754 = arith.mulf %752, %753 : vector<8x4xf32>
    %755 = math.sqrt %754 : vector<8x4xf32>
    %cst_124 = arith.constant 1.000000e+00 : f32
    %756 = vector.broadcast %cst_124 : f32 to vector<8x4xf32>
    %757 = arith.subf %756, %750 : vector<8x4xf32>
    %cst_125 = arith.constant 5.000000e-01 : f32
    %758 = vector.broadcast %cst_125 : f32 to vector<8x4xf32>
    %759 = arith.mulf %757, %758 : vector<8x4xf32>
    %760 = math.sqrt %759 : vector<8x4xf32>
    %761 = arith.subf %735, %746 : vector<8x4xf32>
    %cst_126 = arith.constant 0.707106769 : f32
    %762 = vector.broadcast %cst_126 : f32 to vector<8x4xf32>
    %763 = arith.mulf %761, %762 : vector<8x4xf32>
    %764 = arith.addf %735, %746 : vector<8x4xf32>
    %cst_127 = arith.constant 0.707106769 : f32
    %765 = vector.broadcast %cst_127 : f32 to vector<8x4xf32>
    %766 = arith.mulf %764, %765 : vector<8x4xf32>
    %767 = arith.mulf %763, %755 : vector<8x4xf32>
    %768 = arith.mulf %763, %760 : vector<8x4xf32>
    %cst_128 = arith.constant 0.000000e+00 : f32
    %769 = vector.broadcast %cst_128 : f32 to vector<8x4xf32>
    %770 = arith.subf %769, %768 : vector<8x4xf32>
    %771 = arith.mulf %766, %755 : vector<8x4xf32>
    %772 = arith.mulf %766, %760 : vector<8x4xf32>
    %773 = vector.extract_strided_slice %767 {offsets = [0, 0], sizes = [8, 1], strides = [1, 1]} : vector<8x4xf32> to vector<8x1xf32>
    %774 = vector.extract_strided_slice %771 {offsets = [0, 0], sizes = [8, 1], strides = [1, 1]} : vector<8x4xf32> to vector<8x1xf32>
    %775 = vector.extract_strided_slice %767 {offsets = [0, 0], sizes = [8, 1], strides = [1, 1]} : vector<8x4xf32> to vector<8x1xf32>
    %776 = arith.subf %774, %775 : vector<8x1xf32>
    %777 = vector.broadcast %776 : vector<8x1xf32> to vector<8x16xf32>
    %778 = vector.broadcast %9 : vector<1x16xf32> to vector<8x16xf32>
    %779 = arith.mulf %777, %778 : vector<8x16xf32>
    %780 = vector.broadcast %773 : vector<8x1xf32> to vector<8x16xf32>
    %781 = arith.addf %780, %779 : vector<8x16xf32>
    %782 = vector.extract_strided_slice %770 {offsets = [0, 0], sizes = [8, 1], strides = [1, 1]} : vector<8x4xf32> to vector<8x1xf32>
    %783 = vector.extract_strided_slice %772 {offsets = [0, 0], sizes = [8, 1], strides = [1, 1]} : vector<8x4xf32> to vector<8x1xf32>
    %784 = vector.extract_strided_slice %770 {offsets = [0, 0], sizes = [8, 1], strides = [1, 1]} : vector<8x4xf32> to vector<8x1xf32>
    %785 = arith.subf %783, %784 : vector<8x1xf32>
    %786 = vector.broadcast %785 : vector<8x1xf32> to vector<8x16xf32>
    %787 = vector.broadcast %9 : vector<1x16xf32> to vector<8x16xf32>
    %788 = arith.mulf %786, %787 : vector<8x16xf32>
    %789 = vector.broadcast %782 : vector<8x1xf32> to vector<8x16xf32>
    %790 = arith.addf %789, %788 : vector<8x16xf32>
    %791 = vector.extract_strided_slice %767 {offsets = [0, 1], sizes = [8, 1], strides = [1, 1]} : vector<8x4xf32> to vector<8x1xf32>
    %792 = vector.extract_strided_slice %771 {offsets = [0, 1], sizes = [8, 1], strides = [1, 1]} : vector<8x4xf32> to vector<8x1xf32>
    %793 = vector.extract_strided_slice %767 {offsets = [0, 1], sizes = [8, 1], strides = [1, 1]} : vector<8x4xf32> to vector<8x1xf32>
    %794 = arith.subf %792, %793 : vector<8x1xf32>
    %795 = vector.broadcast %794 : vector<8x1xf32> to vector<8x16xf32>
    %796 = vector.broadcast %10 : vector<1x16xf32> to vector<8x16xf32>
    %797 = arith.mulf %795, %796 : vector<8x16xf32>
    %798 = vector.broadcast %791 : vector<8x1xf32> to vector<8x16xf32>
    %799 = arith.addf %798, %797 : vector<8x16xf32>
    %800 = vector.extract_strided_slice %770 {offsets = [0, 1], sizes = [8, 1], strides = [1, 1]} : vector<8x4xf32> to vector<8x1xf32>
    %801 = vector.extract_strided_slice %772 {offsets = [0, 1], sizes = [8, 1], strides = [1, 1]} : vector<8x4xf32> to vector<8x1xf32>
    %802 = vector.extract_strided_slice %770 {offsets = [0, 1], sizes = [8, 1], strides = [1, 1]} : vector<8x4xf32> to vector<8x1xf32>
    %803 = arith.subf %801, %802 : vector<8x1xf32>
    %804 = vector.broadcast %803 : vector<8x1xf32> to vector<8x16xf32>
    %805 = vector.broadcast %10 : vector<1x16xf32> to vector<8x16xf32>
    %806 = arith.mulf %804, %805 : vector<8x16xf32>
    %807 = vector.broadcast %800 : vector<8x1xf32> to vector<8x16xf32>
    %808 = arith.addf %807, %806 : vector<8x16xf32>
    %809 = arith.mulf %781, %799 : vector<8x16xf32>
    %810 = arith.mulf %790, %808 : vector<8x16xf32>
    %811 = arith.subf %809, %810 : vector<8x16xf32>
    %812 = arith.mulf %781, %808 : vector<8x16xf32>
    %813 = arith.mulf %790, %799 : vector<8x16xf32>
    %814 = arith.addf %812, %813 : vector<8x16xf32>
    %815 = vector.extract_strided_slice %767 {offsets = [0, 2], sizes = [8, 1], strides = [1, 1]} : vector<8x4xf32> to vector<8x1xf32>
    %816 = vector.extract_strided_slice %771 {offsets = [0, 2], sizes = [8, 1], strides = [1, 1]} : vector<8x4xf32> to vector<8x1xf32>
    %817 = vector.extract_strided_slice %767 {offsets = [0, 2], sizes = [8, 1], strides = [1, 1]} : vector<8x4xf32> to vector<8x1xf32>
    %818 = arith.subf %816, %817 : vector<8x1xf32>
    %819 = vector.broadcast %818 : vector<8x1xf32> to vector<8x16xf32>
    %820 = vector.broadcast %11 : vector<1x16xf32> to vector<8x16xf32>
    %821 = arith.mulf %819, %820 : vector<8x16xf32>
    %822 = vector.broadcast %815 : vector<8x1xf32> to vector<8x16xf32>
    %823 = arith.addf %822, %821 : vector<8x16xf32>
    %824 = vector.extract_strided_slice %770 {offsets = [0, 2], sizes = [8, 1], strides = [1, 1]} : vector<8x4xf32> to vector<8x1xf32>
    %825 = vector.extract_strided_slice %772 {offsets = [0, 2], sizes = [8, 1], strides = [1, 1]} : vector<8x4xf32> to vector<8x1xf32>
    %826 = vector.extract_strided_slice %770 {offsets = [0, 2], sizes = [8, 1], strides = [1, 1]} : vector<8x4xf32> to vector<8x1xf32>
    %827 = arith.subf %825, %826 : vector<8x1xf32>
    %828 = vector.broadcast %827 : vector<8x1xf32> to vector<8x16xf32>
    %829 = vector.broadcast %11 : vector<1x16xf32> to vector<8x16xf32>
    %830 = arith.mulf %828, %829 : vector<8x16xf32>
    %831 = vector.broadcast %824 : vector<8x1xf32> to vector<8x16xf32>
    %832 = arith.addf %831, %830 : vector<8x16xf32>
    %833 = arith.mulf %811, %823 : vector<8x16xf32>
    %834 = arith.mulf %814, %832 : vector<8x16xf32>
    %835 = arith.subf %833, %834 : vector<8x16xf32>
    %836 = arith.mulf %811, %832 : vector<8x16xf32>
    %837 = arith.mulf %814, %823 : vector<8x16xf32>
    %838 = arith.addf %836, %837 : vector<8x16xf32>
    %839 = vector.extract_strided_slice %767 {offsets = [0, 3], sizes = [8, 1], strides = [1, 1]} : vector<8x4xf32> to vector<8x1xf32>
    %840 = vector.extract_strided_slice %771 {offsets = [0, 3], sizes = [8, 1], strides = [1, 1]} : vector<8x4xf32> to vector<8x1xf32>
    %841 = vector.extract_strided_slice %767 {offsets = [0, 3], sizes = [8, 1], strides = [1, 1]} : vector<8x4xf32> to vector<8x1xf32>
    %842 = arith.subf %840, %841 : vector<8x1xf32>
    %843 = vector.broadcast %842 : vector<8x1xf32> to vector<8x16xf32>
    %844 = vector.broadcast %12 : vector<1x16xf32> to vector<8x16xf32>
    %845 = arith.mulf %843, %844 : vector<8x16xf32>
    %846 = vector.broadcast %839 : vector<8x1xf32> to vector<8x16xf32>
    %847 = arith.addf %846, %845 : vector<8x16xf32>
    %848 = vector.extract_strided_slice %770 {offsets = [0, 3], sizes = [8, 1], strides = [1, 1]} : vector<8x4xf32> to vector<8x1xf32>
    %849 = vector.extract_strided_slice %772 {offsets = [0, 3], sizes = [8, 1], strides = [1, 1]} : vector<8x4xf32> to vector<8x1xf32>
    %850 = vector.extract_strided_slice %770 {offsets = [0, 3], sizes = [8, 1], strides = [1, 1]} : vector<8x4xf32> to vector<8x1xf32>
    %851 = arith.subf %849, %850 : vector<8x1xf32>
    %852 = vector.broadcast %851 : vector<8x1xf32> to vector<8x16xf32>
    %853 = vector.broadcast %12 : vector<1x16xf32> to vector<8x16xf32>
    %854 = arith.mulf %852, %853 : vector<8x16xf32>
    %855 = vector.broadcast %848 : vector<8x1xf32> to vector<8x16xf32>
    %856 = arith.addf %855, %854 : vector<8x16xf32>
    %857 = arith.mulf %835, %847 : vector<8x16xf32>
    %858 = arith.mulf %838, %856 : vector<8x16xf32>
    %859 = arith.subf %857, %858 : vector<8x16xf32>
    %860 = arith.mulf %835, %856 : vector<8x16xf32>
    %861 = arith.mulf %838, %847 : vector<8x16xf32>
    %862 = arith.addf %860, %861 : vector<8x16xf32>
    %cst_129 = arith.constant dense<0.000000e+00> : vector<8x32xf32>
    %863 = tpu.matmul %859, %4, %cst_129 {dimension_numbers = #tpu.dot_dimension_numbers<[1], [0], [0], [1], [0, 0, 1, 1], [], []>} : vector<8x16xf32>, vector<16x32xf32>, vector<8x32xf32> -> vector<8x32xf32>
    %cst_130 = arith.constant dense<0.000000e+00> : vector<8x32xf32>
    %864 = tpu.matmul %862, %5, %cst_130 {dimension_numbers = #tpu.dot_dimension_numbers<[1], [0], [0], [1], [0, 0, 1, 1], [], []>} : vector<8x16xf32>, vector<16x32xf32>, vector<8x32xf32> -> vector<8x32xf32>
    %865 = arith.addf %863, %864 : vector<8x32xf32>
    %866 = arith.mulf %865, %865 : vector<8x32xf32>
    %cst_131 = arith.constant dense<0.000000e+00> : vector<8x128xf32>
    %867 = tpu.matmul %866, %3, %cst_131 {dimension_numbers = #tpu.dot_dimension_numbers<[1], [0], [0], [1], [0, 0, 1, 1], [], []>} : vector<8x32xf32>, vector<32x128xf32>, vector<8x128xf32> -> vector<8x128xf32>
    %868 = vector.extract_strided_slice %40 {offsets = [32, 0], sizes = [8, 128], strides = [1, 1]} : vector<64x128xf32> to vector<8x128xf32>
    %869 = vector.extract_strided_slice %723 {offsets = [0, 0], sizes = [8, 128], strides = [1, 1]} : vector<8x132xf32> to vector<8x128xf32>
    %870 = arith.addf %868, %869 : vector<8x128xf32>
    %871 = arith.addf %870, %867 : vector<8x128xf32>
    %872 = tpu.concatenate %717, %33 in 1 : vector<8x32xf32>, vector<8x96xf32> -> vector<8x128xf32>
    %873 = arith.addf %871, %872 : vector<8x128xf32>
    %874 = vector.broadcast %23 : vector<1x128xf32> to vector<8x128xf32>
    %875 = arith.mulf %873, %874 : vector<8x128xf32>
    %876 = math.tanh %875 : vector<8x128xf32>
    %877 = vector.broadcast %26 : vector<1x128xf32> to vector<8x128xf32>
    %878 = arith.mulf %876, %877 : vector<8x128xf32>
    %879 = vector.broadcast %32 : vector<1x128xf32> to vector<8x128xf32>
    %880 = arith.addf %878, %879 : vector<8x128xf32>
    %881 = vector.extract_strided_slice %880 {offsets = [0, 0], sizes = [8, 32], strides = [1, 1]} : vector<8x128xf32> to vector<8x32xf32>
    %882 = vector.extract_strided_slice %880 {offsets = [0, 32], sizes = [8, 32], strides = [1, 1]} : vector<8x128xf32> to vector<8x32xf32>
    %883 = vector.extract_strided_slice %880 {offsets = [0, 64], sizes = [8, 32], strides = [1, 1]} : vector<8x128xf32> to vector<8x32xf32>
    %884 = vector.extract_strided_slice %880 {offsets = [0, 96], sizes = [8, 32], strides = [1, 1]} : vector<8x128xf32> to vector<8x32xf32>
    %885 = arith.mulf %881, %717 : vector<8x32xf32>
    %886 = arith.mulf %882, %883 : vector<8x32xf32>
    %887 = arith.addf %885, %886 : vector<8x32xf32>
    %888 = math.tanh %887 : vector<8x32xf32>
    %889 = arith.mulf %884, %888 : vector<8x32xf32>
    %c4 = arith.constant 4 : index
    %c0_132 = arith.constant 0 : index
    %c0_133 = arith.constant 0 : index
    %890 = vector.load %arg2[%c4, %c0_132, %c0_133] : memref<8x8x32xf32, #tpu.memory_space<vmem>>, vector<1x8x32xf32>
    %891 = vector.shape_cast %890 : vector<1x8x32xf32> to vector<8x32xf32>
    %892 = vector.shape_cast %889 : vector<8x32xf32> to vector<1x8x32xf32>
    tpu.vector_store %arg2[%c4, %c0_132, %c0_133], %892 {strides = array<i32>} : memref<8x8x32xf32, #tpu.memory_space<vmem>>, vector<1x8x32xf32>,
    %cst_134 = arith.constant dense<0.000000e+00> : vector<8x132xf32>
    %893 = tpu.matmul %889, %0, %cst_134 {dimension_numbers = #tpu.dot_dimension_numbers<[1], [0], [0], [1], [0, 0, 1, 1], [], []>} : vector<8x32xf32>, vector<32x132xf32>, vector<8x132xf32> -> vector<8x132xf32>
    %894 = vector.extract_strided_slice %37 {offsets = [40, 0], sizes = [8, 4], strides = [1, 1]} : vector<64x4xf32> to vector<8x4xf32>
    %895 = vector.extract_strided_slice %893 {offsets = [0, 128], sizes = [8, 4], strides = [1, 1]} : vector<8x132xf32> to vector<8x4xf32>
    %896 = arith.addf %894, %895 : vector<8x4xf32>
    %897 = arith.mulf %896, %896 : vector<8x4xf32>
    %cst_135 = arith.constant 1.000000e+00 : f32
    %898 = vector.broadcast %cst_135 : f32 to vector<8x4xf32>
    %899 = arith.addf %898, %897 : vector<8x4xf32>
    %900 = math.rsqrt %899 : vector<8x4xf32>
    %cst_136 = arith.constant 1.000000e+00 : f32
    %901 = vector.broadcast %cst_136 : f32 to vector<8x4xf32>
    %902 = arith.addf %901, %900 : vector<8x4xf32>
    %cst_137 = arith.constant 5.000000e-01 : f32
    %903 = vector.broadcast %cst_137 : f32 to vector<8x4xf32>
    %904 = arith.mulf %902, %903 : vector<8x4xf32>
    %905 = math.sqrt %904 : vector<8x4xf32>
    %cst_138 = arith.constant 0.000000e+00 : f32
    %906 = vector.broadcast %cst_138 : f32 to vector<8x4xf32>
    %907 = arith.cmpf oge, %896, %906 : vector<8x4xf32>
    %cst_139 = arith.constant 1.000000e+00 : f32
    %cst_140 = arith.constant -1.000000e+00 : f32
    %908 = vector.broadcast %cst_139 : f32 to vector<8x4xf32>
    %909 = vector.broadcast %cst_140 : f32 to vector<8x4xf32>
    %910 = arith.select %907, %908, %909 : vector<8x4xi1>, vector<8x4xf32>
    %cst_141 = arith.constant 1.000000e+00 : f32
    %911 = vector.broadcast %cst_141 : f32 to vector<8x4xf32>
    %912 = arith.subf %911, %900 : vector<8x4xf32>
    %cst_142 = arith.constant 5.000000e-01 : f32
    %913 = vector.broadcast %cst_142 : f32 to vector<8x4xf32>
    %914 = arith.mulf %912, %913 : vector<8x4xf32>
    %915 = math.sqrt %914 : vector<8x4xf32>
    %916 = arith.mulf %910, %915 : vector<8x4xf32>
    %917 = arith.mulf %897, %897 : vector<8x4xf32>
    %cst_143 = arith.constant 1.000000e+00 : f32
    %918 = vector.broadcast %cst_143 : f32 to vector<8x4xf32>
    %919 = arith.addf %918, %917 : vector<8x4xf32>
    %920 = math.rsqrt %919 : vector<8x4xf32>
    %cst_144 = arith.constant 1.000000e+00 : f32
    %921 = vector.broadcast %cst_144 : f32 to vector<8x4xf32>
    %922 = arith.addf %921, %920 : vector<8x4xf32>
    %cst_145 = arith.constant 5.000000e-01 : f32
    %923 = vector.broadcast %cst_145 : f32 to vector<8x4xf32>
    %924 = arith.mulf %922, %923 : vector<8x4xf32>
    %925 = math.sqrt %924 : vector<8x4xf32>
    %cst_146 = arith.constant 1.000000e+00 : f32
    %926 = vector.broadcast %cst_146 : f32 to vector<8x4xf32>
    %927 = arith.subf %926, %920 : vector<8x4xf32>
    %cst_147 = arith.constant 5.000000e-01 : f32
    %928 = vector.broadcast %cst_147 : f32 to vector<8x4xf32>
    %929 = arith.mulf %927, %928 : vector<8x4xf32>
    %930 = math.sqrt %929 : vector<8x4xf32>
    %931 = arith.subf %905, %916 : vector<8x4xf32>
    %cst_148 = arith.constant 0.707106769 : f32
    %932 = vector.broadcast %cst_148 : f32 to vector<8x4xf32>
    %933 = arith.mulf %931, %932 : vector<8x4xf32>
    %934 = arith.addf %905, %916 : vector<8x4xf32>
    %cst_149 = arith.constant 0.707106769 : f32
    %935 = vector.broadcast %cst_149 : f32 to vector<8x4xf32>
    %936 = arith.mulf %934, %935 : vector<8x4xf32>
    %937 = arith.mulf %933, %925 : vector<8x4xf32>
    %938 = arith.mulf %933, %930 : vector<8x4xf32>
    %cst_150 = arith.constant 0.000000e+00 : f32
    %939 = vector.broadcast %cst_150 : f32 to vector<8x4xf32>
    %940 = arith.subf %939, %938 : vector<8x4xf32>
    %941 = arith.mulf %936, %925 : vector<8x4xf32>
    %942 = arith.mulf %936, %930 : vector<8x4xf32>
    %943 = vector.extract_strided_slice %937 {offsets = [0, 0], sizes = [8, 1], strides = [1, 1]} : vector<8x4xf32> to vector<8x1xf32>
    %944 = vector.extract_strided_slice %941 {offsets = [0, 0], sizes = [8, 1], strides = [1, 1]} : vector<8x4xf32> to vector<8x1xf32>
    %945 = vector.extract_strided_slice %937 {offsets = [0, 0], sizes = [8, 1], strides = [1, 1]} : vector<8x4xf32> to vector<8x1xf32>
    %946 = arith.subf %944, %945 : vector<8x1xf32>
    %947 = vector.broadcast %946 : vector<8x1xf32> to vector<8x16xf32>
    %948 = vector.broadcast %9 : vector<1x16xf32> to vector<8x16xf32>
    %949 = arith.mulf %947, %948 : vector<8x16xf32>
    %950 = vector.broadcast %943 : vector<8x1xf32> to vector<8x16xf32>
    %951 = arith.addf %950, %949 : vector<8x16xf32>
    %952 = vector.extract_strided_slice %940 {offsets = [0, 0], sizes = [8, 1], strides = [1, 1]} : vector<8x4xf32> to vector<8x1xf32>
    %953 = vector.extract_strided_slice %942 {offsets = [0, 0], sizes = [8, 1], strides = [1, 1]} : vector<8x4xf32> to vector<8x1xf32>
    %954 = vector.extract_strided_slice %940 {offsets = [0, 0], sizes = [8, 1], strides = [1, 1]} : vector<8x4xf32> to vector<8x1xf32>
    %955 = arith.subf %953, %954 : vector<8x1xf32>
    %956 = vector.broadcast %955 : vector<8x1xf32> to vector<8x16xf32>
    %957 = vector.broadcast %9 : vector<1x16xf32> to vector<8x16xf32>
    %958 = arith.mulf %956, %957 : vector<8x16xf32>
    %959 = vector.broadcast %952 : vector<8x1xf32> to vector<8x16xf32>
    %960 = arith.addf %959, %958 : vector<8x16xf32>
    %961 = vector.extract_strided_slice %937 {offsets = [0, 1], sizes = [8, 1], strides = [1, 1]} : vector<8x4xf32> to vector<8x1xf32>
    %962 = vector.extract_strided_slice %941 {offsets = [0, 1], sizes = [8, 1], strides = [1, 1]} : vector<8x4xf32> to vector<8x1xf32>
    %963 = vector.extract_strided_slice %937 {offsets = [0, 1], sizes = [8, 1], strides = [1, 1]} : vector<8x4xf32> to vector<8x1xf32>
    %964 = arith.subf %962, %963 : vector<8x1xf32>
    %965 = vector.broadcast %964 : vector<8x1xf32> to vector<8x16xf32>
    %966 = vector.broadcast %10 : vector<1x16xf32> to vector<8x16xf32>
    %967 = arith.mulf %965, %966 : vector<8x16xf32>
    %968 = vector.broadcast %961 : vector<8x1xf32> to vector<8x16xf32>
    %969 = arith.addf %968, %967 : vector<8x16xf32>
    %970 = vector.extract_strided_slice %940 {offsets = [0, 1], sizes = [8, 1], strides = [1, 1]} : vector<8x4xf32> to vector<8x1xf32>
    %971 = vector.extract_strided_slice %942 {offsets = [0, 1], sizes = [8, 1], strides = [1, 1]} : vector<8x4xf32> to vector<8x1xf32>
    %972 = vector.extract_strided_slice %940 {offsets = [0, 1], sizes = [8, 1], strides = [1, 1]} : vector<8x4xf32> to vector<8x1xf32>
    %973 = arith.subf %971, %972 : vector<8x1xf32>
    %974 = vector.broadcast %973 : vector<8x1xf32> to vector<8x16xf32>
    %975 = vector.broadcast %10 : vector<1x16xf32> to vector<8x16xf32>
    %976 = arith.mulf %974, %975 : vector<8x16xf32>
    %977 = vector.broadcast %970 : vector<8x1xf32> to vector<8x16xf32>
    %978 = arith.addf %977, %976 : vector<8x16xf32>
    %979 = arith.mulf %951, %969 : vector<8x16xf32>
    %980 = arith.mulf %960, %978 : vector<8x16xf32>
    %981 = arith.subf %979, %980 : vector<8x16xf32>
    %982 = arith.mulf %951, %978 : vector<8x16xf32>
    %983 = arith.mulf %960, %969 : vector<8x16xf32>
    %984 = arith.addf %982, %983 : vector<8x16xf32>
    %985 = vector.extract_strided_slice %937 {offsets = [0, 2], sizes = [8, 1], strides = [1, 1]} : vector<8x4xf32> to vector<8x1xf32>
    %986 = vector.extract_strided_slice %941 {offsets = [0, 2], sizes = [8, 1], strides = [1, 1]} : vector<8x4xf32> to vector<8x1xf32>
    %987 = vector.extract_strided_slice %937 {offsets = [0, 2], sizes = [8, 1], strides = [1, 1]} : vector<8x4xf32> to vector<8x1xf32>
    %988 = arith.subf %986, %987 : vector<8x1xf32>
    %989 = vector.broadcast %988 : vector<8x1xf32> to vector<8x16xf32>
    %990 = vector.broadcast %11 : vector<1x16xf32> to vector<8x16xf32>
    %991 = arith.mulf %989, %990 : vector<8x16xf32>
    %992 = vector.broadcast %985 : vector<8x1xf32> to vector<8x16xf32>
    %993 = arith.addf %992, %991 : vector<8x16xf32>
    %994 = vector.extract_strided_slice %940 {offsets = [0, 2], sizes = [8, 1], strides = [1, 1]} : vector<8x4xf32> to vector<8x1xf32>
    %995 = vector.extract_strided_slice %942 {offsets = [0, 2], sizes = [8, 1], strides = [1, 1]} : vector<8x4xf32> to vector<8x1xf32>
    %996 = vector.extract_strided_slice %940 {offsets = [0, 2], sizes = [8, 1], strides = [1, 1]} : vector<8x4xf32> to vector<8x1xf32>
    %997 = arith.subf %995, %996 : vector<8x1xf32>
    %998 = vector.broadcast %997 : vector<8x1xf32> to vector<8x16xf32>
    %999 = vector.broadcast %11 : vector<1x16xf32> to vector<8x16xf32>
    %1000 = arith.mulf %998, %999 : vector<8x16xf32>
    %1001 = vector.broadcast %994 : vector<8x1xf32> to vector<8x16xf32>
    %1002 = arith.addf %1001, %1000 : vector<8x16xf32>
    %1003 = arith.mulf %981, %993 : vector<8x16xf32>
    %1004 = arith.mulf %984, %1002 : vector<8x16xf32>
    %1005 = arith.subf %1003, %1004 : vector<8x16xf32>
    %1006 = arith.mulf %981, %1002 : vector<8x16xf32>
    %1007 = arith.mulf %984, %993 : vector<8x16xf32>
    %1008 = arith.addf %1006, %1007 : vector<8x16xf32>
    %1009 = vector.extract_strided_slice %937 {offsets = [0, 3], sizes = [8, 1], strides = [1, 1]} : vector<8x4xf32> to vector<8x1xf32>
    %1010 = vector.extract_strided_slice %941 {offsets = [0, 3], sizes = [8, 1], strides = [1, 1]} : vector<8x4xf32> to vector<8x1xf32>
    %1011 = vector.extract_strided_slice %937 {offsets = [0, 3], sizes = [8, 1], strides = [1, 1]} : vector<8x4xf32> to vector<8x1xf32>
    %1012 = arith.subf %1010, %1011 : vector<8x1xf32>
    %1013 = vector.broadcast %1012 : vector<8x1xf32> to vector<8x16xf32>
    %1014 = vector.broadcast %12 : vector<1x16xf32> to vector<8x16xf32>
    %1015 = arith.mulf %1013, %1014 : vector<8x16xf32>
    %1016 = vector.broadcast %1009 : vector<8x1xf32> to vector<8x16xf32>
    %1017 = arith.addf %1016, %1015 : vector<8x16xf32>
    %1018 = vector.extract_strided_slice %940 {offsets = [0, 3], sizes = [8, 1], strides = [1, 1]} : vector<8x4xf32> to vector<8x1xf32>
    %1019 = vector.extract_strided_slice %942 {offsets = [0, 3], sizes = [8, 1], strides = [1, 1]} : vector<8x4xf32> to vector<8x1xf32>
    %1020 = vector.extract_strided_slice %940 {offsets = [0, 3], sizes = [8, 1], strides = [1, 1]} : vector<8x4xf32> to vector<8x1xf32>
    %1021 = arith.subf %1019, %1020 : vector<8x1xf32>
    %1022 = vector.broadcast %1021 : vector<8x1xf32> to vector<8x16xf32>
    %1023 = vector.broadcast %12 : vector<1x16xf32> to vector<8x16xf32>
    %1024 = arith.mulf %1022, %1023 : vector<8x16xf32>
    %1025 = vector.broadcast %1018 : vector<8x1xf32> to vector<8x16xf32>
    %1026 = arith.addf %1025, %1024 : vector<8x16xf32>
    %1027 = arith.mulf %1005, %1017 : vector<8x16xf32>
    %1028 = arith.mulf %1008, %1026 : vector<8x16xf32>
    %1029 = arith.subf %1027, %1028 : vector<8x16xf32>
    %1030 = arith.mulf %1005, %1026 : vector<8x16xf32>
    %1031 = arith.mulf %1008, %1017 : vector<8x16xf32>
    %1032 = arith.addf %1030, %1031 : vector<8x16xf32>
    %cst_151 = arith.constant dense<0.000000e+00> : vector<8x32xf32>
    %1033 = tpu.matmul %1029, %4, %cst_151 {dimension_numbers = #tpu.dot_dimension_numbers<[1], [0], [0], [1], [0, 0, 1, 1], [], []>} : vector<8x16xf32>, vector<16x32xf32>, vector<8x32xf32> -> vector<8x32xf32>
    %cst_152 = arith.constant dense<0.000000e+00> : vector<8x32xf32>
    %1034 = tpu.matmul %1032, %5, %cst_152 {dimension_numbers = #tpu.dot_dimension_numbers<[1], [0], [0], [1], [0, 0, 1, 1], [], []>} : vector<8x16xf32>, vector<16x32xf32>, vector<8x32xf32> -> vector<8x32xf32>
    %1035 = arith.addf %1033, %1034 : vector<8x32xf32>
    %1036 = arith.mulf %1035, %1035 : vector<8x32xf32>
    %cst_153 = arith.constant dense<0.000000e+00> : vector<8x128xf32>
    %1037 = tpu.matmul %1036, %3, %cst_153 {dimension_numbers = #tpu.dot_dimension_numbers<[1], [0], [0], [1], [0, 0, 1, 1], [], []>} : vector<8x32xf32>, vector<32x128xf32>, vector<8x128xf32> -> vector<8x128xf32>
    %1038 = vector.extract_strided_slice %40 {offsets = [40, 0], sizes = [8, 128], strides = [1, 1]} : vector<64x128xf32> to vector<8x128xf32>
    %1039 = vector.extract_strided_slice %893 {offsets = [0, 0], sizes = [8, 128], strides = [1, 1]} : vector<8x132xf32> to vector<8x128xf32>
    %1040 = arith.addf %1038, %1039 : vector<8x128xf32>
    %1041 = arith.addf %1040, %1037 : vector<8x128xf32>
    %1042 = tpu.concatenate %887, %33 in 1 : vector<8x32xf32>, vector<8x96xf32> -> vector<8x128xf32>
    %1043 = arith.addf %1041, %1042 : vector<8x128xf32>
    %1044 = vector.broadcast %23 : vector<1x128xf32> to vector<8x128xf32>
    %1045 = arith.mulf %1043, %1044 : vector<8x128xf32>
    %1046 = math.tanh %1045 : vector<8x128xf32>
    %1047 = vector.broadcast %26 : vector<1x128xf32> to vector<8x128xf32>
    %1048 = arith.mulf %1046, %1047 : vector<8x128xf32>
    %1049 = vector.broadcast %32 : vector<1x128xf32> to vector<8x128xf32>
    %1050 = arith.addf %1048, %1049 : vector<8x128xf32>
    %1051 = vector.extract_strided_slice %1050 {offsets = [0, 0], sizes = [8, 32], strides = [1, 1]} : vector<8x128xf32> to vector<8x32xf32>
    %1052 = vector.extract_strided_slice %1050 {offsets = [0, 32], sizes = [8, 32], strides = [1, 1]} : vector<8x128xf32> to vector<8x32xf32>
    %1053 = vector.extract_strided_slice %1050 {offsets = [0, 64], sizes = [8, 32], strides = [1, 1]} : vector<8x128xf32> to vector<8x32xf32>
    %1054 = vector.extract_strided_slice %1050 {offsets = [0, 96], sizes = [8, 32], strides = [1, 1]} : vector<8x128xf32> to vector<8x32xf32>
    %1055 = arith.mulf %1051, %887 : vector<8x32xf32>
    %1056 = arith.mulf %1052, %1053 : vector<8x32xf32>
    %1057 = arith.addf %1055, %1056 : vector<8x32xf32>
    %1058 = math.tanh %1057 : vector<8x32xf32>
    %1059 = arith.mulf %1054, %1058 : vector<8x32xf32>
    %c5 = arith.constant 5 : index
    %c0_154 = arith.constant 0 : index
    %c0_155 = arith.constant 0 : index
    %1060 = vector.load %arg2[%c5, %c0_154, %c0_155] : memref<8x8x32xf32, #tpu.memory_space<vmem>>, vector<1x8x32xf32>
    %1061 = vector.shape_cast %1060 : vector<1x8x32xf32> to vector<8x32xf32>
    %1062 = vector.shape_cast %1059 : vector<8x32xf32> to vector<1x8x32xf32>
    tpu.vector_store %arg2[%c5, %c0_154, %c0_155], %1062 {strides = array<i32>} : memref<8x8x32xf32, #tpu.memory_space<vmem>>, vector<1x8x32xf32>,
    %cst_156 = arith.constant dense<0.000000e+00> : vector<8x132xf32>
    %1063 = tpu.matmul %1059, %0, %cst_156 {dimension_numbers = #tpu.dot_dimension_numbers<[1], [0], [0], [1], [0, 0, 1, 1], [], []>} : vector<8x32xf32>, vector<32x132xf32>, vector<8x132xf32> -> vector<8x132xf32>
    %1064 = vector.extract_strided_slice %37 {offsets = [48, 0], sizes = [8, 4], strides = [1, 1]} : vector<64x4xf32> to vector<8x4xf32>
    %1065 = vector.extract_strided_slice %1063 {offsets = [0, 128], sizes = [8, 4], strides = [1, 1]} : vector<8x132xf32> to vector<8x4xf32>
    %1066 = arith.addf %1064, %1065 : vector<8x4xf32>
    %1067 = arith.mulf %1066, %1066 : vector<8x4xf32>
    %cst_157 = arith.constant 1.000000e+00 : f32
    %1068 = vector.broadcast %cst_157 : f32 to vector<8x4xf32>
    %1069 = arith.addf %1068, %1067 : vector<8x4xf32>
    %1070 = math.rsqrt %1069 : vector<8x4xf32>
    %cst_158 = arith.constant 1.000000e+00 : f32
    %1071 = vector.broadcast %cst_158 : f32 to vector<8x4xf32>
    %1072 = arith.addf %1071, %1070 : vector<8x4xf32>
    %cst_159 = arith.constant 5.000000e-01 : f32
    %1073 = vector.broadcast %cst_159 : f32 to vector<8x4xf32>
    %1074 = arith.mulf %1072, %1073 : vector<8x4xf32>
    %1075 = math.sqrt %1074 : vector<8x4xf32>
    %cst_160 = arith.constant 0.000000e+00 : f32
    %1076 = vector.broadcast %cst_160 : f32 to vector<8x4xf32>
    %1077 = arith.cmpf oge, %1066, %1076 : vector<8x4xf32>
    %cst_161 = arith.constant 1.000000e+00 : f32
    %cst_162 = arith.constant -1.000000e+00 : f32
    %1078 = vector.broadcast %cst_161 : f32 to vector<8x4xf32>
    %1079 = vector.broadcast %cst_162 : f32 to vector<8x4xf32>
    %1080 = arith.select %1077, %1078, %1079 : vector<8x4xi1>, vector<8x4xf32>
    %cst_163 = arith.constant 1.000000e+00 : f32
    %1081 = vector.broadcast %cst_163 : f32 to vector<8x4xf32>
    %1082 = arith.subf %1081, %1070 : vector<8x4xf32>
    %cst_164 = arith.constant 5.000000e-01 : f32
    %1083 = vector.broadcast %cst_164 : f32 to vector<8x4xf32>
    %1084 = arith.mulf %1082, %1083 : vector<8x4xf32>
    %1085 = math.sqrt %1084 : vector<8x4xf32>
    %1086 = arith.mulf %1080, %1085 : vector<8x4xf32>
    %1087 = arith.mulf %1067, %1067 : vector<8x4xf32>
    %cst_165 = arith.constant 1.000000e+00 : f32
    %1088 = vector.broadcast %cst_165 : f32 to vector<8x4xf32>
    %1089 = arith.addf %1088, %1087 : vector<8x4xf32>
    %1090 = math.rsqrt %1089 : vector<8x4xf32>
    %cst_166 = arith.constant 1.000000e+00 : f32
    %1091 = vector.broadcast %cst_166 : f32 to vector<8x4xf32>
    %1092 = arith.addf %1091, %1090 : vector<8x4xf32>
    %cst_167 = arith.constant 5.000000e-01 : f32
    %1093 = vector.broadcast %cst_167 : f32 to vector<8x4xf32>
    %1094 = arith.mulf %1092, %1093 : vector<8x4xf32>
    %1095 = math.sqrt %1094 : vector<8x4xf32>
    %cst_168 = arith.constant 1.000000e+00 : f32
    %1096 = vector.broadcast %cst_168 : f32 to vector<8x4xf32>
    %1097 = arith.subf %1096, %1090 : vector<8x4xf32>
    %cst_169 = arith.constant 5.000000e-01 : f32
    %1098 = vector.broadcast %cst_169 : f32 to vector<8x4xf32>
    %1099 = arith.mulf %1097, %1098 : vector<8x4xf32>
    %1100 = math.sqrt %1099 : vector<8x4xf32>
    %1101 = arith.subf %1075, %1086 : vector<8x4xf32>
    %cst_170 = arith.constant 0.707106769 : f32
    %1102 = vector.broadcast %cst_170 : f32 to vector<8x4xf32>
    %1103 = arith.mulf %1101, %1102 : vector<8x4xf32>
    %1104 = arith.addf %1075, %1086 : vector<8x4xf32>
    %cst_171 = arith.constant 0.707106769 : f32
    %1105 = vector.broadcast %cst_171 : f32 to vector<8x4xf32>
    %1106 = arith.mulf %1104, %1105 : vector<8x4xf32>
    %1107 = arith.mulf %1103, %1095 : vector<8x4xf32>
    %1108 = arith.mulf %1103, %1100 : vector<8x4xf32>
    %cst_172 = arith.constant 0.000000e+00 : f32
    %1109 = vector.broadcast %cst_172 : f32 to vector<8x4xf32>
    %1110 = arith.subf %1109, %1108 : vector<8x4xf32>
    %1111 = arith.mulf %1106, %1095 : vector<8x4xf32>
    %1112 = arith.mulf %1106, %1100 : vector<8x4xf32>
    %1113 = vector.extract_strided_slice %1107 {offsets = [0, 0], sizes = [8, 1], strides = [1, 1]} : vector<8x4xf32> to vector<8x1xf32>
    %1114 = vector.extract_strided_slice %1111 {offsets = [0, 0], sizes = [8, 1], strides = [1, 1]} : vector<8x4xf32> to vector<8x1xf32>
    %1115 = vector.extract_strided_slice %1107 {offsets = [0, 0], sizes = [8, 1], strides = [1, 1]} : vector<8x4xf32> to vector<8x1xf32>
    %1116 = arith.subf %1114, %1115 : vector<8x1xf32>
    %1117 = vector.broadcast %1116 : vector<8x1xf32> to vector<8x16xf32>
    %1118 = vector.broadcast %9 : vector<1x16xf32> to vector<8x16xf32>
    %1119 = arith.mulf %1117, %1118 : vector<8x16xf32>
    %1120 = vector.broadcast %1113 : vector<8x1xf32> to vector<8x16xf32>
    %1121 = arith.addf %1120, %1119 : vector<8x16xf32>
    %1122 = vector.extract_strided_slice %1110 {offsets = [0, 0], sizes = [8, 1], strides = [1, 1]} : vector<8x4xf32> to vector<8x1xf32>
    %1123 = vector.extract_strided_slice %1112 {offsets = [0, 0], sizes = [8, 1], strides = [1, 1]} : vector<8x4xf32> to vector<8x1xf32>
    %1124 = vector.extract_strided_slice %1110 {offsets = [0, 0], sizes = [8, 1], strides = [1, 1]} : vector<8x4xf32> to vector<8x1xf32>
    %1125 = arith.subf %1123, %1124 : vector<8x1xf32>
    %1126 = vector.broadcast %1125 : vector<8x1xf32> to vector<8x16xf32>
    %1127 = vector.broadcast %9 : vector<1x16xf32> to vector<8x16xf32>
    %1128 = arith.mulf %1126, %1127 : vector<8x16xf32>
    %1129 = vector.broadcast %1122 : vector<8x1xf32> to vector<8x16xf32>
    %1130 = arith.addf %1129, %1128 : vector<8x16xf32>
    %1131 = vector.extract_strided_slice %1107 {offsets = [0, 1], sizes = [8, 1], strides = [1, 1]} : vector<8x4xf32> to vector<8x1xf32>
    %1132 = vector.extract_strided_slice %1111 {offsets = [0, 1], sizes = [8, 1], strides = [1, 1]} : vector<8x4xf32> to vector<8x1xf32>
    %1133 = vector.extract_strided_slice %1107 {offsets = [0, 1], sizes = [8, 1], strides = [1, 1]} : vector<8x4xf32> to vector<8x1xf32>
    %1134 = arith.subf %1132, %1133 : vector<8x1xf32>
    %1135 = vector.broadcast %1134 : vector<8x1xf32> to vector<8x16xf32>
    %1136 = vector.broadcast %10 : vector<1x16xf32> to vector<8x16xf32>
    %1137 = arith.mulf %1135, %1136 : vector<8x16xf32>
    %1138 = vector.broadcast %1131 : vector<8x1xf32> to vector<8x16xf32>
    %1139 = arith.addf %1138, %1137 : vector<8x16xf32>
    %1140 = vector.extract_strided_slice %1110 {offsets = [0, 1], sizes = [8, 1], strides = [1, 1]} : vector<8x4xf32> to vector<8x1xf32>
    %1141 = vector.extract_strided_slice %1112 {offsets = [0, 1], sizes = [8, 1], strides = [1, 1]} : vector<8x4xf32> to vector<8x1xf32>
    %1142 = vector.extract_strided_slice %1110 {offsets = [0, 1], sizes = [8, 1], strides = [1, 1]} : vector<8x4xf32> to vector<8x1xf32>
    %1143 = arith.subf %1141, %1142 : vector<8x1xf32>
    %1144 = vector.broadcast %1143 : vector<8x1xf32> to vector<8x16xf32>
    %1145 = vector.broadcast %10 : vector<1x16xf32> to vector<8x16xf32>
    %1146 = arith.mulf %1144, %1145 : vector<8x16xf32>
    %1147 = vector.broadcast %1140 : vector<8x1xf32> to vector<8x16xf32>
    %1148 = arith.addf %1147, %1146 : vector<8x16xf32>
    %1149 = arith.mulf %1121, %1139 : vector<8x16xf32>
    %1150 = arith.mulf %1130, %1148 : vector<8x16xf32>
    %1151 = arith.subf %1149, %1150 : vector<8x16xf32>
    %1152 = arith.mulf %1121, %1148 : vector<8x16xf32>
    %1153 = arith.mulf %1130, %1139 : vector<8x16xf32>
    %1154 = arith.addf %1152, %1153 : vector<8x16xf32>
    %1155 = vector.extract_strided_slice %1107 {offsets = [0, 2], sizes = [8, 1], strides = [1, 1]} : vector<8x4xf32> to vector<8x1xf32>
    %1156 = vector.extract_strided_slice %1111 {offsets = [0, 2], sizes = [8, 1], strides = [1, 1]} : vector<8x4xf32> to vector<8x1xf32>
    %1157 = vector.extract_strided_slice %1107 {offsets = [0, 2], sizes = [8, 1], strides = [1, 1]} : vector<8x4xf32> to vector<8x1xf32>
    %1158 = arith.subf %1156, %1157 : vector<8x1xf32>
    %1159 = vector.broadcast %1158 : vector<8x1xf32> to vector<8x16xf32>
    %1160 = vector.broadcast %11 : vector<1x16xf32> to vector<8x16xf32>
    %1161 = arith.mulf %1159, %1160 : vector<8x16xf32>
    %1162 = vector.broadcast %1155 : vector<8x1xf32> to vector<8x16xf32>
    %1163 = arith.addf %1162, %1161 : vector<8x16xf32>
    %1164 = vector.extract_strided_slice %1110 {offsets = [0, 2], sizes = [8, 1], strides = [1, 1]} : vector<8x4xf32> to vector<8x1xf32>
    %1165 = vector.extract_strided_slice %1112 {offsets = [0, 2], sizes = [8, 1], strides = [1, 1]} : vector<8x4xf32> to vector<8x1xf32>
    %1166 = vector.extract_strided_slice %1110 {offsets = [0, 2], sizes = [8, 1], strides = [1, 1]} : vector<8x4xf32> to vector<8x1xf32>
    %1167 = arith.subf %1165, %1166 : vector<8x1xf32>
    %1168 = vector.broadcast %1167 : vector<8x1xf32> to vector<8x16xf32>
    %1169 = vector.broadcast %11 : vector<1x16xf32> to vector<8x16xf32>
    %1170 = arith.mulf %1168, %1169 : vector<8x16xf32>
    %1171 = vector.broadcast %1164 : vector<8x1xf32> to vector<8x16xf32>
    %1172 = arith.addf %1171, %1170 : vector<8x16xf32>
    %1173 = arith.mulf %1151, %1163 : vector<8x16xf32>
    %1174 = arith.mulf %1154, %1172 : vector<8x16xf32>
    %1175 = arith.subf %1173, %1174 : vector<8x16xf32>
    %1176 = arith.mulf %1151, %1172 : vector<8x16xf32>
    %1177 = arith.mulf %1154, %1163 : vector<8x16xf32>
    %1178 = arith.addf %1176, %1177 : vector<8x16xf32>
    %1179 = vector.extract_strided_slice %1107 {offsets = [0, 3], sizes = [8, 1], strides = [1, 1]} : vector<8x4xf32> to vector<8x1xf32>
    %1180 = vector.extract_strided_slice %1111 {offsets = [0, 3], sizes = [8, 1], strides = [1, 1]} : vector<8x4xf32> to vector<8x1xf32>
    %1181 = vector.extract_strided_slice %1107 {offsets = [0, 3], sizes = [8, 1], strides = [1, 1]} : vector<8x4xf32> to vector<8x1xf32>
    %1182 = arith.subf %1180, %1181 : vector<8x1xf32>
    %1183 = vector.broadcast %1182 : vector<8x1xf32> to vector<8x16xf32>
    %1184 = vector.broadcast %12 : vector<1x16xf32> to vector<8x16xf32>
    %1185 = arith.mulf %1183, %1184 : vector<8x16xf32>
    %1186 = vector.broadcast %1179 : vector<8x1xf32> to vector<8x16xf32>
    %1187 = arith.addf %1186, %1185 : vector<8x16xf32>
    %1188 = vector.extract_strided_slice %1110 {offsets = [0, 3], sizes = [8, 1], strides = [1, 1]} : vector<8x4xf32> to vector<8x1xf32>
    %1189 = vector.extract_strided_slice %1112 {offsets = [0, 3], sizes = [8, 1], strides = [1, 1]} : vector<8x4xf32> to vector<8x1xf32>
    %1190 = vector.extract_strided_slice %1110 {offsets = [0, 3], sizes = [8, 1], strides = [1, 1]} : vector<8x4xf32> to vector<8x1xf32>
    %1191 = arith.subf %1189, %1190 : vector<8x1xf32>
    %1192 = vector.broadcast %1191 : vector<8x1xf32> to vector<8x16xf32>
    %1193 = vector.broadcast %12 : vector<1x16xf32> to vector<8x16xf32>
    %1194 = arith.mulf %1192, %1193 : vector<8x16xf32>
    %1195 = vector.broadcast %1188 : vector<8x1xf32> to vector<8x16xf32>
    %1196 = arith.addf %1195, %1194 : vector<8x16xf32>
    %1197 = arith.mulf %1175, %1187 : vector<8x16xf32>
    %1198 = arith.mulf %1178, %1196 : vector<8x16xf32>
    %1199 = arith.subf %1197, %1198 : vector<8x16xf32>
    %1200 = arith.mulf %1175, %1196 : vector<8x16xf32>
    %1201 = arith.mulf %1178, %1187 : vector<8x16xf32>
    %1202 = arith.addf %1200, %1201 : vector<8x16xf32>
    %cst_173 = arith.constant dense<0.000000e+00> : vector<8x32xf32>
    %1203 = tpu.matmul %1199, %4, %cst_173 {dimension_numbers = #tpu.dot_dimension_numbers<[1], [0], [0], [1], [0, 0, 1, 1], [], []>} : vector<8x16xf32>, vector<16x32xf32>, vector<8x32xf32> -> vector<8x32xf32>
    %cst_174 = arith.constant dense<0.000000e+00> : vector<8x32xf32>
    %1204 = tpu.matmul %1202, %5, %cst_174 {dimension_numbers = #tpu.dot_dimension_numbers<[1], [0], [0], [1], [0, 0, 1, 1], [], []>} : vector<8x16xf32>, vector<16x32xf32>, vector<8x32xf32> -> vector<8x32xf32>
    %1205 = arith.addf %1203, %1204 : vector<8x32xf32>
    %1206 = arith.mulf %1205, %1205 : vector<8x32xf32>
    %cst_175 = arith.constant dense<0.000000e+00> : vector<8x128xf32>
    %1207 = tpu.matmul %1206, %3, %cst_175 {dimension_numbers = #tpu.dot_dimension_numbers<[1], [0], [0], [1], [0, 0, 1, 1], [], []>} : vector<8x32xf32>, vector<32x128xf32>, vector<8x128xf32> -> vector<8x128xf32>
    %1208 = vector.extract_strided_slice %40 {offsets = [48, 0], sizes = [8, 128], strides = [1, 1]} : vector<64x128xf32> to vector<8x128xf32>
    %1209 = vector.extract_strided_slice %1063 {offsets = [0, 0], sizes = [8, 128], strides = [1, 1]} : vector<8x132xf32> to vector<8x128xf32>
    %1210 = arith.addf %1208, %1209 : vector<8x128xf32>
    %1211 = arith.addf %1210, %1207 : vector<8x128xf32>
    %1212 = tpu.concatenate %1057, %33 in 1 : vector<8x32xf32>, vector<8x96xf32> -> vector<8x128xf32>
    %1213 = arith.addf %1211, %1212 : vector<8x128xf32>
    %1214 = vector.broadcast %23 : vector<1x128xf32> to vector<8x128xf32>
    %1215 = arith.mulf %1213, %1214 : vector<8x128xf32>
    %1216 = math.tanh %1215 : vector<8x128xf32>
    %1217 = vector.broadcast %26 : vector<1x128xf32> to vector<8x128xf32>
    %1218 = arith.mulf %1216, %1217 : vector<8x128xf32>
    %1219 = vector.broadcast %32 : vector<1x128xf32> to vector<8x128xf32>
    %1220 = arith.addf %1218, %1219 : vector<8x128xf32>
    %1221 = vector.extract_strided_slice %1220 {offsets = [0, 0], sizes = [8, 32], strides = [1, 1]} : vector<8x128xf32> to vector<8x32xf32>
    %1222 = vector.extract_strided_slice %1220 {offsets = [0, 32], sizes = [8, 32], strides = [1, 1]} : vector<8x128xf32> to vector<8x32xf32>
    %1223 = vector.extract_strided_slice %1220 {offsets = [0, 64], sizes = [8, 32], strides = [1, 1]} : vector<8x128xf32> to vector<8x32xf32>
    %1224 = vector.extract_strided_slice %1220 {offsets = [0, 96], sizes = [8, 32], strides = [1, 1]} : vector<8x128xf32> to vector<8x32xf32>
    %1225 = arith.mulf %1221, %1057 : vector<8x32xf32>
    %1226 = arith.mulf %1222, %1223 : vector<8x32xf32>
    %1227 = arith.addf %1225, %1226 : vector<8x32xf32>
    %1228 = math.tanh %1227 : vector<8x32xf32>
    %1229 = arith.mulf %1224, %1228 : vector<8x32xf32>
    %c6 = arith.constant 6 : index
    %c0_176 = arith.constant 0 : index
    %c0_177 = arith.constant 0 : index
    %1230 = vector.load %arg2[%c6, %c0_176, %c0_177] : memref<8x8x32xf32, #tpu.memory_space<vmem>>, vector<1x8x32xf32>
    %1231 = vector.shape_cast %1230 : vector<1x8x32xf32> to vector<8x32xf32>
    %1232 = vector.shape_cast %1229 : vector<8x32xf32> to vector<1x8x32xf32>
    tpu.vector_store %arg2[%c6, %c0_176, %c0_177], %1232 {strides = array<i32>} : memref<8x8x32xf32, #tpu.memory_space<vmem>>, vector<1x8x32xf32>,
    %cst_178 = arith.constant dense<0.000000e+00> : vector<8x132xf32>
    %1233 = tpu.matmul %1229, %0, %cst_178 {dimension_numbers = #tpu.dot_dimension_numbers<[1], [0], [0], [1], [0, 0, 1, 1], [], []>} : vector<8x32xf32>, vector<32x132xf32>, vector<8x132xf32> -> vector<8x132xf32>
    %1234 = vector.extract_strided_slice %37 {offsets = [56, 0], sizes = [8, 4], strides = [1, 1]} : vector<64x4xf32> to vector<8x4xf32>
    %1235 = vector.extract_strided_slice %1233 {offsets = [0, 128], sizes = [8, 4], strides = [1, 1]} : vector<8x132xf32> to vector<8x4xf32>
    %1236 = arith.addf %1234, %1235 : vector<8x4xf32>
    %1237 = arith.mulf %1236, %1236 : vector<8x4xf32>
    %cst_179 = arith.constant 1.000000e+00 : f32
    %1238 = vector.broadcast %cst_179 : f32 to vector<8x4xf32>
    %1239 = arith.addf %1238, %1237 : vector<8x4xf32>
    %1240 = math.rsqrt %1239 : vector<8x4xf32>
    %cst_180 = arith.constant 1.000000e+00 : f32
    %1241 = vector.broadcast %cst_180 : f32 to vector<8x4xf32>
    %1242 = arith.addf %1241, %1240 : vector<8x4xf32>
    %cst_181 = arith.constant 5.000000e-01 : f32
    %1243 = vector.broadcast %cst_181 : f32 to vector<8x4xf32>
    %1244 = arith.mulf %1242, %1243 : vector<8x4xf32>
    %1245 = math.sqrt %1244 : vector<8x4xf32>
    %cst_182 = arith.constant 0.000000e+00 : f32
    %1246 = vector.broadcast %cst_182 : f32 to vector<8x4xf32>
    %1247 = arith.cmpf oge, %1236, %1246 : vector<8x4xf32>
    %cst_183 = arith.constant 1.000000e+00 : f32
    %cst_184 = arith.constant -1.000000e+00 : f32
    %1248 = vector.broadcast %cst_183 : f32 to vector<8x4xf32>
    %1249 = vector.broadcast %cst_184 : f32 to vector<8x4xf32>
    %1250 = arith.select %1247, %1248, %1249 : vector<8x4xi1>, vector<8x4xf32>
    %cst_185 = arith.constant 1.000000e+00 : f32
    %1251 = vector.broadcast %cst_185 : f32 to vector<8x4xf32>
    %1252 = arith.subf %1251, %1240 : vector<8x4xf32>
    %cst_186 = arith.constant 5.000000e-01 : f32
    %1253 = vector.broadcast %cst_186 : f32 to vector<8x4xf32>
    %1254 = arith.mulf %1252, %1253 : vector<8x4xf32>
    %1255 = math.sqrt %1254 : vector<8x4xf32>
    %1256 = arith.mulf %1250, %1255 : vector<8x4xf32>
    %1257 = arith.mulf %1237, %1237 : vector<8x4xf32>
    %cst_187 = arith.constant 1.000000e+00 : f32
    %1258 = vector.broadcast %cst_187 : f32 to vector<8x4xf32>
    %1259 = arith.addf %1258, %1257 : vector<8x4xf32>
    %1260 = math.rsqrt %1259 : vector<8x4xf32>
    %cst_188 = arith.constant 1.000000e+00 : f32
    %1261 = vector.broadcast %cst_188 : f32 to vector<8x4xf32>
    %1262 = arith.addf %1261, %1260 : vector<8x4xf32>
    %cst_189 = arith.constant 5.000000e-01 : f32
    %1263 = vector.broadcast %cst_189 : f32 to vector<8x4xf32>
    %1264 = arith.mulf %1262, %1263 : vector<8x4xf32>
    %1265 = math.sqrt %1264 : vector<8x4xf32>
    %cst_190 = arith.constant 1.000000e+00 : f32
    %1266 = vector.broadcast %cst_190 : f32 to vector<8x4xf32>
    %1267 = arith.subf %1266, %1260 : vector<8x4xf32>
    %cst_191 = arith.constant 5.000000e-01 : f32
    %1268 = vector.broadcast %cst_191 : f32 to vector<8x4xf32>
    %1269 = arith.mulf %1267, %1268 : vector<8x4xf32>
    %1270 = math.sqrt %1269 : vector<8x4xf32>
    %1271 = arith.subf %1245, %1256 : vector<8x4xf32>
    %cst_192 = arith.constant 0.707106769 : f32
    %1272 = vector.broadcast %cst_192 : f32 to vector<8x4xf32>
    %1273 = arith.mulf %1271, %1272 : vector<8x4xf32>
    %1274 = arith.addf %1245, %1256 : vector<8x4xf32>
    %cst_193 = arith.constant 0.707106769 : f32
    %1275 = vector.broadcast %cst_193 : f32 to vector<8x4xf32>
    %1276 = arith.mulf %1274, %1275 : vector<8x4xf32>
    %1277 = arith.mulf %1273, %1265 : vector<8x4xf32>
    %1278 = arith.mulf %1273, %1270 : vector<8x4xf32>
    %cst_194 = arith.constant 0.000000e+00 : f32
    %1279 = vector.broadcast %cst_194 : f32 to vector<8x4xf32>
    %1280 = arith.subf %1279, %1278 : vector<8x4xf32>
    %1281 = arith.mulf %1276, %1265 : vector<8x4xf32>
    %1282 = arith.mulf %1276, %1270 : vector<8x4xf32>
    %1283 = vector.extract_strided_slice %1277 {offsets = [0, 0], sizes = [8, 1], strides = [1, 1]} : vector<8x4xf32> to vector<8x1xf32>
    %1284 = vector.extract_strided_slice %1281 {offsets = [0, 0], sizes = [8, 1], strides = [1, 1]} : vector<8x4xf32> to vector<8x1xf32>
    %1285 = vector.extract_strided_slice %1277 {offsets = [0, 0], sizes = [8, 1], strides = [1, 1]} : vector<8x4xf32> to vector<8x1xf32>
    %1286 = arith.subf %1284, %1285 : vector<8x1xf32>
    %1287 = vector.broadcast %1286 : vector<8x1xf32> to vector<8x16xf32>
    %1288 = vector.broadcast %9 : vector<1x16xf32> to vector<8x16xf32>
    %1289 = arith.mulf %1287, %1288 : vector<8x16xf32>
    %1290 = vector.broadcast %1283 : vector<8x1xf32> to vector<8x16xf32>
    %1291 = arith.addf %1290, %1289 : vector<8x16xf32>
    %1292 = vector.extract_strided_slice %1280 {offsets = [0, 0], sizes = [8, 1], strides = [1, 1]} : vector<8x4xf32> to vector<8x1xf32>
    %1293 = vector.extract_strided_slice %1282 {offsets = [0, 0], sizes = [8, 1], strides = [1, 1]} : vector<8x4xf32> to vector<8x1xf32>
    %1294 = vector.extract_strided_slice %1280 {offsets = [0, 0], sizes = [8, 1], strides = [1, 1]} : vector<8x4xf32> to vector<8x1xf32>
    %1295 = arith.subf %1293, %1294 : vector<8x1xf32>
    %1296 = vector.broadcast %1295 : vector<8x1xf32> to vector<8x16xf32>
    %1297 = vector.broadcast %9 : vector<1x16xf32> to vector<8x16xf32>
    %1298 = arith.mulf %1296, %1297 : vector<8x16xf32>
    %1299 = vector.broadcast %1292 : vector<8x1xf32> to vector<8x16xf32>
    %1300 = arith.addf %1299, %1298 : vector<8x16xf32>
    %1301 = vector.extract_strided_slice %1277 {offsets = [0, 1], sizes = [8, 1], strides = [1, 1]} : vector<8x4xf32> to vector<8x1xf32>
    %1302 = vector.extract_strided_slice %1281 {offsets = [0, 1], sizes = [8, 1], strides = [1, 1]} : vector<8x4xf32> to vector<8x1xf32>
    %1303 = vector.extract_strided_slice %1277 {offsets = [0, 1], sizes = [8, 1], strides = [1, 1]} : vector<8x4xf32> to vector<8x1xf32>
    %1304 = arith.subf %1302, %1303 : vector<8x1xf32>
    %1305 = vector.broadcast %1304 : vector<8x1xf32> to vector<8x16xf32>
    %1306 = vector.broadcast %10 : vector<1x16xf32> to vector<8x16xf32>
    %1307 = arith.mulf %1305, %1306 : vector<8x16xf32>
    %1308 = vector.broadcast %1301 : vector<8x1xf32> to vector<8x16xf32>
    %1309 = arith.addf %1308, %1307 : vector<8x16xf32>
    %1310 = vector.extract_strided_slice %1280 {offsets = [0, 1], sizes = [8, 1], strides = [1, 1]} : vector<8x4xf32> to vector<8x1xf32>
    %1311 = vector.extract_strided_slice %1282 {offsets = [0, 1], sizes = [8, 1], strides = [1, 1]} : vector<8x4xf32> to vector<8x1xf32>
    %1312 = vector.extract_strided_slice %1280 {offsets = [0, 1], sizes = [8, 1], strides = [1, 1]} : vector<8x4xf32> to vector<8x1xf32>
    %1313 = arith.subf %1311, %1312 : vector<8x1xf32>
    %1314 = vector.broadcast %1313 : vector<8x1xf32> to vector<8x16xf32>
    %1315 = vector.broadcast %10 : vector<1x16xf32> to vector<8x16xf32>
    %1316 = arith.mulf %1314, %1315 : vector<8x16xf32>
    %1317 = vector.broadcast %1310 : vector<8x1xf32> to vector<8x16xf32>
    %1318 = arith.addf %1317, %1316 : vector<8x16xf32>
    %1319 = arith.mulf %1291, %1309 : vector<8x16xf32>
    %1320 = arith.mulf %1300, %1318 : vector<8x16xf32>
    %1321 = arith.subf %1319, %1320 : vector<8x16xf32>
    %1322 = arith.mulf %1291, %1318 : vector<8x16xf32>
    %1323 = arith.mulf %1300, %1309 : vector<8x16xf32>
    %1324 = arith.addf %1322, %1323 : vector<8x16xf32>
    %1325 = vector.extract_strided_slice %1277 {offsets = [0, 2], sizes = [8, 1], strides = [1, 1]} : vector<8x4xf32> to vector<8x1xf32>
    %1326 = vector.extract_strided_slice %1281 {offsets = [0, 2], sizes = [8, 1], strides = [1, 1]} : vector<8x4xf32> to vector<8x1xf32>
    %1327 = vector.extract_strided_slice %1277 {offsets = [0, 2], sizes = [8, 1], strides = [1, 1]} : vector<8x4xf32> to vector<8x1xf32>
    %1328 = arith.subf %1326, %1327 : vector<8x1xf32>
    %1329 = vector.broadcast %1328 : vector<8x1xf32> to vector<8x16xf32>
    %1330 = vector.broadcast %11 : vector<1x16xf32> to vector<8x16xf32>
    %1331 = arith.mulf %1329, %1330 : vector<8x16xf32>
    %1332 = vector.broadcast %1325 : vector<8x1xf32> to vector<8x16xf32>
    %1333 = arith.addf %1332, %1331 : vector<8x16xf32>
    %1334 = vector.extract_strided_slice %1280 {offsets = [0, 2], sizes = [8, 1], strides = [1, 1]} : vector<8x4xf32> to vector<8x1xf32>
    %1335 = vector.extract_strided_slice %1282 {offsets = [0, 2], sizes = [8, 1], strides = [1, 1]} : vector<8x4xf32> to vector<8x1xf32>
    %1336 = vector.extract_strided_slice %1280 {offsets = [0, 2], sizes = [8, 1], strides = [1, 1]} : vector<8x4xf32> to vector<8x1xf32>
    %1337 = arith.subf %1335, %1336 : vector<8x1xf32>
    %1338 = vector.broadcast %1337 : vector<8x1xf32> to vector<8x16xf32>
    %1339 = vector.broadcast %11 : vector<1x16xf32> to vector<8x16xf32>
    %1340 = arith.mulf %1338, %1339 : vector<8x16xf32>
    %1341 = vector.broadcast %1334 : vector<8x1xf32> to vector<8x16xf32>
    %1342 = arith.addf %1341, %1340 : vector<8x16xf32>
    %1343 = arith.mulf %1321, %1333 : vector<8x16xf32>
    %1344 = arith.mulf %1324, %1342 : vector<8x16xf32>
    %1345 = arith.subf %1343, %1344 : vector<8x16xf32>
    %1346 = arith.mulf %1321, %1342 : vector<8x16xf32>
    %1347 = arith.mulf %1324, %1333 : vector<8x16xf32>
    %1348 = arith.addf %1346, %1347 : vector<8x16xf32>
    %1349 = vector.extract_strided_slice %1277 {offsets = [0, 3], sizes = [8, 1], strides = [1, 1]} : vector<8x4xf32> to vector<8x1xf32>
    %1350 = vector.extract_strided_slice %1281 {offsets = [0, 3], sizes = [8, 1], strides = [1, 1]} : vector<8x4xf32> to vector<8x1xf32>
    %1351 = vector.extract_strided_slice %1277 {offsets = [0, 3], sizes = [8, 1], strides = [1, 1]} : vector<8x4xf32> to vector<8x1xf32>
    %1352 = arith.subf %1350, %1351 : vector<8x1xf32>
    %1353 = vector.broadcast %1352 : vector<8x1xf32> to vector<8x16xf32>
    %1354 = vector.broadcast %12 : vector<1x16xf32> to vector<8x16xf32>
    %1355 = arith.mulf %1353, %1354 : vector<8x16xf32>
    %1356 = vector.broadcast %1349 : vector<8x1xf32> to vector<8x16xf32>
    %1357 = arith.addf %1356, %1355 : vector<8x16xf32>
    %1358 = vector.extract_strided_slice %1280 {offsets = [0, 3], sizes = [8, 1], strides = [1, 1]} : vector<8x4xf32> to vector<8x1xf32>
    %1359 = vector.extract_strided_slice %1282 {offsets = [0, 3], sizes = [8, 1], strides = [1, 1]} : vector<8x4xf32> to vector<8x1xf32>
    %1360 = vector.extract_strided_slice %1280 {offsets = [0, 3], sizes = [8, 1], strides = [1, 1]} : vector<8x4xf32> to vector<8x1xf32>
    %1361 = arith.subf %1359, %1360 : vector<8x1xf32>
    %1362 = vector.broadcast %1361 : vector<8x1xf32> to vector<8x16xf32>
    %1363 = vector.broadcast %12 : vector<1x16xf32> to vector<8x16xf32>
    %1364 = arith.mulf %1362, %1363 : vector<8x16xf32>
    %1365 = vector.broadcast %1358 : vector<8x1xf32> to vector<8x16xf32>
    %1366 = arith.addf %1365, %1364 : vector<8x16xf32>
    %1367 = arith.mulf %1345, %1357 : vector<8x16xf32>
    %1368 = arith.mulf %1348, %1366 : vector<8x16xf32>
    %1369 = arith.subf %1367, %1368 : vector<8x16xf32>
    %1370 = arith.mulf %1345, %1366 : vector<8x16xf32>
    %1371 = arith.mulf %1348, %1357 : vector<8x16xf32>
    %1372 = arith.addf %1370, %1371 : vector<8x16xf32>
    %cst_195 = arith.constant dense<0.000000e+00> : vector<8x32xf32>
    %1373 = tpu.matmul %1369, %4, %cst_195 {dimension_numbers = #tpu.dot_dimension_numbers<[1], [0], [0], [1], [0, 0, 1, 1], [], []>} : vector<8x16xf32>, vector<16x32xf32>, vector<8x32xf32> -> vector<8x32xf32>
    %cst_196 = arith.constant dense<0.000000e+00> : vector<8x32xf32>
    %1374 = tpu.matmul %1372, %5, %cst_196 {dimension_numbers = #tpu.dot_dimension_numbers<[1], [0], [0], [1], [0, 0, 1, 1], [], []>} : vector<8x16xf32>, vector<16x32xf32>, vector<8x32xf32> -> vector<8x32xf32>
    %1375 = arith.addf %1373, %1374 : vector<8x32xf32>
    %1376 = arith.mulf %1375, %1375 : vector<8x32xf32>
    %cst_197 = arith.constant dense<0.000000e+00> : vector<8x128xf32>
    %1377 = tpu.matmul %1376, %3, %cst_197 {dimension_numbers = #tpu.dot_dimension_numbers<[1], [0], [0], [1], [0, 0, 1, 1], [], []>} : vector<8x32xf32>, vector<32x128xf32>, vector<8x128xf32> -> vector<8x128xf32>
    %1378 = vector.extract_strided_slice %40 {offsets = [56, 0], sizes = [8, 128], strides = [1, 1]} : vector<64x128xf32> to vector<8x128xf32>
    %1379 = vector.extract_strided_slice %1233 {offsets = [0, 0], sizes = [8, 128], strides = [1, 1]} : vector<8x132xf32> to vector<8x128xf32>
    %1380 = arith.addf %1378, %1379 : vector<8x128xf32>
    %1381 = arith.addf %1380, %1377 : vector<8x128xf32>
    %1382 = tpu.concatenate %1227, %33 in 1 : vector<8x32xf32>, vector<8x96xf32> -> vector<8x128xf32>
    %1383 = arith.addf %1381, %1382 : vector<8x128xf32>
    %1384 = vector.broadcast %23 : vector<1x128xf32> to vector<8x128xf32>
    %1385 = arith.mulf %1383, %1384 : vector<8x128xf32>
    %1386 = math.tanh %1385 : vector<8x128xf32>
    %1387 = vector.broadcast %26 : vector<1x128xf32> to vector<8x128xf32>
    %1388 = arith.mulf %1386, %1387 : vector<8x128xf32>
    %1389 = vector.broadcast %32 : vector<1x128xf32> to vector<8x128xf32>
    %1390 = arith.addf %1388, %1389 : vector<8x128xf32>
    %1391 = vector.extract_strided_slice %1390 {offsets = [0, 0], sizes = [8, 32], strides = [1, 1]} : vector<8x128xf32> to vector<8x32xf32>
    %1392 = vector.extract_strided_slice %1390 {offsets = [0, 32], sizes = [8, 32], strides = [1, 1]} : vector<8x128xf32> to vector<8x32xf32>
    %1393 = vector.extract_strided_slice %1390 {offsets = [0, 64], sizes = [8, 32], strides = [1, 1]} : vector<8x128xf32> to vector<8x32xf32>
    %1394 = vector.extract_strided_slice %1390 {offsets = [0, 96], sizes = [8, 32], strides = [1, 1]} : vector<8x128xf32> to vector<8x32xf32>
    %1395 = arith.mulf %1391, %1227 : vector<8x32xf32>
    %1396 = arith.mulf %1392, %1393 : vector<8x32xf32>
    %1397 = arith.addf %1395, %1396 : vector<8x32xf32>
    %1398 = math.tanh %1397 : vector<8x32xf32>
    %1399 = arith.mulf %1394, %1398 : vector<8x32xf32>
    %c7 = arith.constant 7 : index
    %c0_198 = arith.constant 0 : index
    %c0_199 = arith.constant 0 : index
    %1400 = vector.load %arg2[%c7, %c0_198, %c0_199] : memref<8x8x32xf32, #tpu.memory_space<vmem>>, vector<1x8x32xf32>
    %1401 = vector.shape_cast %1400 : vector<1x8x32xf32> to vector<8x32xf32>
    %1402 = vector.shape_cast %1399 : vector<8x32xf32> to vector<1x8x32xf32>
    tpu.vector_store %arg2[%c7, %c0_198, %c0_199], %1402 {strides = array<i32>} : memref<8x8x32xf32, #tpu.memory_space<vmem>>, vector<1x8x32xf32>,
    %c0_200 = arith.constant 0 : index
    %c0_201 = arith.constant 0 : index
    %1403 = vector.load %arg3[%c0_200, %c0_201] : memref<8x32xf32, #tpu.memory_space<vmem>>, vector<8x32xf32>
    tpu.vector_store %arg3[%c0_200, %c0_201], %1399 {strides = array<i32>} : memref<8x32xf32, #tpu.memory_space<vmem>>, vector<8x32xf32>,
    %c0_202 = arith.constant 0 : index
    %c0_203 = arith.constant 0 : index
    %1404 = vector.load %arg4[%c0_202, %c0_203] : memref<8x32xf32, #tpu.memory_space<vmem>>, vector<8x32xf32>
    tpu.vector_store %arg4[%c0_202, %c0_203], %1397 {strides = array<i32>} : memref<8x32xf32, #tpu.memory_space<vmem>>, vector<8x32xf32>,
    return
  }
}

</mosaic_0001>

<llo_original>
// kernel: tpu_custom_call.1
$region0: #{tpu_custom_call.1}
  #allocation0 [shape = 'u32[]', space=smem, size = 0x4, offset = 0x4, fixed_abs, tag = 'smem constant byte address 0x4 - core index']
  #allocation1 [shape = 'u32[144,128]{1,0:T(1,128)}', space=vmem, size = 0x12000, scoped, tag = 'internal scratch']
  %s0 = inlined_call_operand.vmem [shape: f32[64,16], index: 0, kind: input, shape index: {}]
  %s1 = inlined_call_operand.vmem [shape: f32[144,132], index: 1, kind: input, shape index: {}]
  %s2 = inlined_call_operand.hbm [shape: f32[8,8,32], index: 2, kind: output, shape index: {0}]
  %s3 = inlined_call_operand.hbm [shape: f32[8,32], index: 3, kind: output, shape index: {1}]
  %s4 = inlined_call_operand.hbm [shape: f32[8,32], index: 4, kind: output, shape index: {2}]
  %5 = xla_tuple %s2, %s3, %s4
  %s6 = sld [smem:[#allocation0]]
  $region34: #{tpu_custom_call.1} parent=0
    _
  %s8 = ssub.s32 1, %s6
  %s9 = scalar_select 0, %s8, %s6
  $region1: #{tpu_custom_call.1} parent=0
    #allocation2 [shape = 'u8[32768]{0}', space=vmem, size = 0x8000, scoped, tag = 'output window, operand 0, single buffered']
    #allocation3 [shape = 's32[1]{0}', space=sflag, size = 0x4, scoped, tag = 'scoped memory for tpu_custom_call.1']
    #allocation4 [shape = 'u8[4096]{0}', space=vmem, size = 0x1000, scoped, tag = 'output window, operand 1, single buffered']
    #allocation5 [shape = 's32[1]{0}', space=sflag, size = 0x4, scoped, tag = 'scoped memory for tpu_custom_call.1']
    #allocation6 [shape = 'u8[4096]{0}', space=vmem, size = 0x1000, scoped, tag = 'output window, operand 2, single buffered']
    %10 = vsyncpa [#allocation3], 0
    %11 = vsyncpa [#allocation5], 0
    // Predicated region
    $region2: #{tpu_custom_call.1} parent=1 // pred_check
      _
    $region3: #{tpu_custom_call.1} parent=1 // pred_check_branch
      %13 = sbr.rel (0) target = $region5
    $region4: #{tpu_custom_call.1} parent=1 // pred_region
      _
    $region5: #{tpu_custom_call.1} parent=1 // pred_fallthru
      _
    // Predicated region
    $region6: #{tpu_custom_call.1} parent=1 // pred_check
      _
    $region7: #{tpu_custom_call.1} parent=1 // pred_check_branch
      %15 = sbr.rel (0) target = $region9
    $region8: #{tpu_custom_call.1} parent=1 // pred_region
      _
    $region9: #{tpu_custom_call.1} parent=1 // pred_fallthru
      _
    %v16 = vld [vmem:[%s1] sm:$0xff]
    %v17 = vld [vmem:[%s1 + $0x8] sm:$0xff]
    %v18 = vld [vmem:[%s1 + $0x10] sm:$0xff]
    %v19 = vld [vmem:[%s1 + $0x18] sm:$0xff]
    %v20 = vld [vmem:[%s1 + $0x20] sm:$0xff]
    %v21 = vld [vmem:[%s1 + $0x28] sm:$0xff]
    %v22 = vld [vmem:[%s1 + $0x30] sm:$0xff]
    %v23 = vld [vmem:[%s1 + $0x38] sm:$0xff]
    %v24 = vld [vmem:[%s1 + $0x40] sm:$0xf]
    %v25 = vld [vmem:[%s1 + $0x50] ss:$0 sm:$0xff]
    %v26 = vld [vmem:[%s1 + $0x60] sm:$0xff]
    %v27 = vld [vmem:[%s1 + $0x70] sm:$0xff]
    %v28 = vld [vmem:[%s1 + $0x80] sm:$0xff]
    %v29 = vld [vmem:[%s1 + $0x90] sm:$0xff]
    %v30 = vld [vmem:[%s1 + $0xa0] sm:$0xff]
    %v31 = vld [vmem:[%s1 + $0xb0] sm:$0xff]
    %v32 = vld [vmem:[%s1 + $0xc0] sm:$0xff]
    %v33 = vld [vmem:[%s1 + $0xd0] sm:$0xff]
    %v34 = vld [vmem:[%s1 + $0xe0] sm:$0xff]
    %v35 = vld [vmem:[%s1 + $0xf0] sm:$0xff]
    %v36 = vld [vmem:[%s1 + $0x100] ss:$0 sm:$0xff]
    %v37 = vld [vmem:[%s1 + $0x110] sm:$0xf]
    %v38 = vlaneseq
    %v39 = vand.u32 %v38, 127
    %vm40 = vcmp.lt.s32.totalorder %v39, 32
    %vm41 = vcmp.ge.s32.totalorder %v39, 64
    %vm42 = vcmp.lt.s32.totalorder %v39, 96
    %vm43 = vmand %vm41, %vm42
    %v44 = vsel %vm43, 1.0, 0.5
    %v45 = vsel %vm40, 0.45, %v44
    %v46 = vsel %vm43, 0.0, 0.5
    %v47 = vsel %vm40, 0.45, %v46
    %v48 = vld [vmem:[%s0] sm:$0xff]
    %v49 = vld [vmem:[%s0 + $0x8] sm:$0xff]
    %v50 = vld [vmem:[%s0 + $0x10] sm:$0xff]
    %v51 = vld [vmem:[%s0 + $0x18] sm:$0xff]
    %v52 = vld [vmem:[%s0 + $0x20] sm:$0xff]
    %v53 = vld [vmem:[%s0 + $0x28] sm:$0xff]
    %v54 = vld [vmem:[%s0 + $0x30] sm:$0xff]
    %v55 = vld [vmem:[%s0 + $0x38] sm:$0xff]
    %vm56 = vcmask 130048
    %v58 = vsel %vm56, %v48, 0
    %v61 = vsel %vm56, %v49, 0
    %v64 = vsel %vm56, %v50, 0
    %v67 = vsel %vm56, %v51, 0
    %v70 = vsel %vm56, %v52, 0
    %v73 = vsel %vm56, %v53, 0
    %v76 = vsel %vm56, %v54, 0
    %v79 = vsel %vm56, %v55, 0
    %81 = vmatprep.subr.mxu0 0.0
    %82 = vmatpush1.msra.mxu0 0.0
    %83 = vmatprep.subr.mxu0 0.0
    %84 = vmatpush1.msra.mxu0 0.0
    %85 = vmatprep.subr.mxu0 0.0
    %86 = vmatpush1.msra.mxu0 0.0
    %87 = vmatprep.subr.mxu0 0.0
    %88 = vmatpush1.msra.mxu0 0.0
    %89 = vmatprep.subr.mxu0 0.0
    %90 = vmatpush1.msra.mxu0 0.0
    %91 = vmatprep.subr.mxu0 0.0
    %92 = vmatpush1.msra.mxu0 0.0
    %93 = vmatprep.subr.mxu0 0.0
    %94 = vmatpush1.msra.mxu0 0.0
    %95 = vmatprep.subr.mxu0 0.0
    %96 = vmatpush1.msra.mxu0 0.0
    %97 = vmatprep.subr.mxu0 0.0
    %98 = vmatpush1.msra.mxu0 0.0
    %99 = vmatprep.subr.mxu0 0.0
    %100 = vmatpush1.msra.mxu0 0.0
    %101 = vmatprep.subr.mxu0 0.0
    %102 = vmatpush1.msra.mxu0 0.0
    %103 = vmatprep.subr.mxu0 0.0
    %104 = vmatpush1.msra.mxu0 0.0
    %105 = vmatprep.subr.mxu0 0.0
    %106 = vmatpush1.msra.mxu0 0.0
    %107 = vmatprep.subr.mxu0 0.0
    %108 = vmatpush1.msra.mxu0 0.0
    %109 = vmatprep.subr.mxu0 0.0
    %110 = vmatpush1.msra.mxu0 %v35
    %111 = vmatprep.subr.mxu0 0.0
    %112 = vmatpush1.msra.mxu0 %v34
    %113 = vmatprep.subr.mxu0 0.0
    %114 = vmatpush2.msra.mxu0 0.0
    %115 = vmatprep.subr.mxu0 0.0
    %116 = vmatpush2.msra.mxu0 0.0
    %117 = vmatprep.subr.mxu0 0.0
    %118 = vmatpush2.msra.mxu0 0.0
    %119 = vmatprep.subr.mxu0 0.0
    %120 = vmatpush2.msra.mxu0 0.0
    %121 = vmatprep.subr.mxu0 0.0
    %122 = vmatpush2.msra.mxu0 0.0
    %123 = vmatprep.subr.mxu0 0.0
    %124 = vmatpush2.msra.mxu0 0.0
    %125 = vmatprep.subr.mxu0 0.0
    %126 = vmatpush2.msra.mxu0 0.0
    %127 = vmatprep.subr.mxu0 0.0
    %128 = vmatpush2.msra.mxu0 0.0
    %129 = vmatprep.subr.mxu0 0.0
    %130 = vmatpush2.msra.mxu0 0.0
    %131 = vmatprep.subr.mxu0 0.0
    %132 = vmatpush2.msra.mxu0 0.0
    %133 = vmatprep.subr.mxu0 0.0
    %134 = vmatpush2.msra.mxu0 0.0
    %135 = vmatprep.subr.mxu0 0.0
    %136 = vmatpush2.msra.mxu0 0.0
    %137 = vmatprep.subr.mxu0 0.0
    %138 = vmatpush2.msra.mxu0 0.0
    %139 = vmatprep.subr.mxu0 0.0
    %140 = vmatpush2.msra.mxu0 0.0
    %141 = vmatprep.subr.mxu0 0.0
    %142 = vmatpush2.msra.mxu0 0.0
    %143 = vmatprep.subr.mxu0 0.0
    %144 = vmatpush2.msra.mxu0 0.0
    %145 = vmatprep.mubr.f32.mxu0 0.0
    %146 = vmatmul.mubr.f32.gmra.mxu0 %v58
    %v147 = vpop.f32.mrf.mxu0
    %v148 = vadd.f32 %v36, %v147
    %v149 = vpop.f32.mrf.mxu0
    %150 = vmatprep.mubr.f32.mxu0 0.0
    %151 = vmatmul.mubr.f32.gmra.mxu0 %v61
    %v152 = vpop.f32.mrf.mxu0
    %v153 = vadd.f32 %v36, %v152
    %v154 = vpop.f32.mrf.mxu0
    %155 = vmatprep.mubr.f32.mxu0 0.0
    %156 = vmatmul.mubr.f32.gmra.mxu0 %v64
    %v157 = vpop.f32.mrf.mxu0
    %v158 = vadd.f32 %v36, %v157
    %v159 = vpop.f32.mrf.mxu0
    %160 = vmatprep.mubr.f32.mxu0 0.0
    %161 = vmatmul.mubr.f32.gmra.mxu0 %v67
    %v162 = vpop.f32.mrf.mxu0
    %v163 = vadd.f32 %v36, %v162
    %v164 = vpop.f32.mrf.mxu0
    %165 = vmatprep.mubr.f32.mxu0 0.0
    %166 = vmatmul.mubr.f32.gmra.mxu0 %v70
    %v167 = vpop.f32.mrf.mxu0
    %v168 = vadd.f32 %v36, %v167
    %v169 = vpop.f32.mrf.mxu0
    %170 = vmatprep.mubr.f32.mxu0 0.0
    %171 = vmatmul.mubr.f32.gmra.mxu0 %v73
    %v172 = vpop.f32.mrf.mxu0
    %v173 = vadd.f32 %v36, %v172
    %v174 = vpop.f32.mrf.mxu0
    %175 = vmatprep.mubr.f32.mxu0 0.0
    %176 = vmatmul.mubr.f32.gmra.mxu0 %v76
    %v177 = vpop.f32.mrf.mxu0
    %v178 = vadd.f32 %v36, %v177
    %v179 = vpop.f32.mrf.mxu0
    %180 = vmatprep.mubr.f32.mxu0 0.0
    %181 = vmatmul.mubr.f32.gmra.mxu0 %v79
    %v182 = vpop.f32.mrf.mxu0
    %v183 = vadd.f32 %v36, %v182
    %v184 = vpop.f32.mrf.mxu0
    %185 = vdwg.mxu0
    %vm186 = vcmask 31744
    %v188 = vsel %vm186, %v148, 0
    %v191 = vsel %vm186, %v153, 0
    %v194 = vsel %vm186, %v158, 0
    %v197 = vsel %vm186, %v163, 0
    %v200 = vsel %vm186, %v168, 0
    %v203 = vsel %vm186, %v173, 0
    %v206 = vsel %vm186, %v178, 0
    %v209 = vsel %vm186, %v183, 0
    %vm211 = vcmask 1043456
    %v213 = vsel %vm211, %v24, 0
    %215 = vmatprep.subr.mxu0 0.0
    %216 = vmatpush1.msra.mxu0 0.0
    %217 = vmatprep.subr.mxu0 0.0
    %218 = vmatpush1.msra.mxu0 0.0
    %219 = vmatprep.subr.mxu0 0.0
    %220 = vmatpush1.msra.mxu0 0.0
    %221 = vmatprep.subr.mxu0 0.0
    %222 = vmatpush1.msra.mxu0 0.0
    %223 = vmatprep.subr.mxu0 0.0
    %224 = vmatpush1.msra.mxu0 0.0
    %225 = vmatprep.subr.mxu0 0.0
    %226 = vmatpush1.msra.mxu0 0.0
    %227 = vmatprep.subr.mxu0 0.0
    %228 = vmatpush1.msra.mxu0 0.0
    %229 = vmatprep.subr.mxu0 0.0
    %230 = vmatpush1.msra.mxu0 0.0
    %231 = vmatprep.subr.mxu0 0.0
    %232 = vmatpush1.msra.mxu0 0.0
    %233 = vmatprep.subr.mxu0 0.0
    %234 = vmatpush1.msra.mxu0 0.0
    %235 = vmatprep.subr.mxu0 0.0
    %236 = vmatpush1.msra.mxu0 0.0
    %237 = vmatprep.subr.mxu0 0.0
    %238 = vmatpush1.msra.mxu0 0.0
    %239 = vmatprep.subr.mxu0 0.0
    %240 = vmatpush1.msra.mxu0 0.0
    %241 = vmatprep.subr.mxu0 0.0
    %242 = vmatpush1.msra.mxu0 0.0
    %243 = vmatprep.subr.mxu0 0.0
    %244 = vmatpush1.msra.mxu0 0.0
    %245 = vmatprep.subr.mxu0 0.0
    %246 = vmatpush1.msra.mxu0 %v213
    %247 = vmatprep.subr.mxu0 0.0
    %248 = vmatpush2.msra.mxu0 0.0
    %249 = vmatprep.subr.mxu0 0.0
    %250 = vmatpush2.msra.mxu0 0.0
    %251 = vmatprep.subr.mxu0 0.0
    %252 = vmatpush2.msra.mxu0 0.0
    %253 = vmatprep.subr.mxu0 0.0
    %254 = vmatpush2.msra.mxu0 0.0
    %255 = vmatprep.subr.mxu0 0.0
    %256 = vmatpush2.msra.mxu0 0.0
    %257 = vmatprep.subr.mxu0 0.0
    %258 = vmatpush2.msra.mxu0 0.0
    %259 = vmatprep.subr.mxu0 0.0
    %260 = vmatpush2.msra.mxu0 0.0
    %261 = vmatprep.subr.mxu0 0.0
    %262 = vmatpush2.msra.mxu0 0.0
    %263 = vmatprep.subr.mxu0 0.0
    %264 = vmatpush2.msra.mxu0 0.0
    %265 = vmatprep.subr.mxu0 0.0
    %266 = vmatpush2.msra.mxu0 0.0
    %267 = vmatprep.subr.mxu0 0.0
    %268 = vmatpush2.msra.mxu0 0.0
    %269 = vmatprep.subr.mxu0 0.0
    %270 = vmatpush2.msra.mxu0 0.0
    %271 = vmatprep.subr.mxu0 0.0
    %272 = vmatpush2.msra.mxu0 0.0
    %273 = vmatprep.subr.mxu0 0.0
    %274 = vmatpush2.msra.mxu0 0.0
    %275 = vmatprep.subr.mxu0 0.0
    %276 = vmatpush2.msra.mxu0 0.0
    %277 = vmatprep.subr.mxu0 0.0
    %278 = vmatpush2.msra.mxu0 0.0
    %279 = vmatprep.mubr.f32.mxu0 0.0
    %280 = vmatmul.mubr.f32.gmra.mxu0 %v188
    %v281 = vpop.f32.mrf.mxu0
    %v282 = vadd.f32 %v25, %v281
    %v283 = vpop.f32.mrf.mxu0
    %284 = vmatprep.mubr.f32.mxu0 0.0
    %285 = vmatmul.mubr.f32.gmra.mxu0 %v191
    %v286 = vpop.f32.mrf.mxu0
    %v287 = vadd.f32 %v25, %v286
    %v288 = vpop.f32.mrf.mxu0
    %289 = vmatprep.mubr.f32.mxu0 0.0
    %290 = vmatmul.mubr.f32.gmra.mxu0 %v194
    %v291 = vpop.f32.mrf.mxu0
    %v292 = vadd.f32 %v25, %v291
    %v293 = vpop.f32.mrf.mxu0
    %294 = vmatprep.mubr.f32.mxu0 0.0
    %295 = vmatmul.mubr.f32.gmra.mxu0 %v197
    %v296 = vpop.f32.mrf.mxu0
    %v297 = vadd.f32 %v25, %v296
    %v298 = vpop.f32.mrf.mxu0
    %299 = vmatprep.mubr.f32.mxu0 0.0
    %300 = vmatmul.mubr.f32.gmra.mxu0 %v200
    %v301 = vpop.f32.mrf.mxu0
    %v302 = vadd.f32 %v25, %v301
    %v303 = vpop.f32.mrf.mxu0
    %304 = vmatprep.mubr.f32.mxu0 0.0
    %305 = vmatmul.mubr.f32.gmra.mxu0 %v203
    %v306 = vpop.f32.mrf.mxu0
    %v307 = vadd.f32 %v25, %v306
    %v308 = vpop.f32.mrf.mxu0
    %309 = vmatprep.mubr.f32.mxu0 0.0
    %310 = vmatmul.mubr.f32.gmra.mxu0 %v206
    %v311 = vpop.f32.mrf.mxu0
    %v312 = vadd.f32 %v25, %v311
    %v313 = vpop.f32.mrf.mxu0
    %314 = vmatprep.mubr.f32.mxu0 0.0
    %315 = vmatmul.mubr.f32.gmra.mxu0 %v209
    %v316 = vpop.f32.mrf.mxu0
    %v317 = vadd.f32 %v25, %v316
    %v318 = vpop.f32.mrf.mxu0
    %319 = vdwg.mxu0
    %vm320 = vcmask 261120
    %v322 = vsel %vm320, 0.0, 0
    %324 = vmatprep.subr.mxu0 0.0
    %325 = vmatpush1.msra.mxu0 0.0
    %326 = vmatprep.subr.mxu0 0.0
    %327 = vmatpush1.msra.mxu0 0.0
    %328 = vmatprep.subr.mxu0 0.0
    %329 = vmatpush1.msra.mxu0 0.0
    %330 = vmatprep.subr.mxu0 0.0
    %331 = vmatpush1.msra.mxu0 0.0
    %332 = vmatprep.subr.mxu0 0.0
    %333 = vmatpush1.msra.mxu0 0.0
    %334 = vmatprep.subr.mxu0 0.0
    %335 = vmatpush1.msra.mxu0 0.0
    %336 = vmatprep.subr.mxu0 0.0
    %337 = vmatpush1.msra.mxu0 0.0
    %338 = vmatprep.subr.mxu0 0.0
    %339 = vmatpush1.msra.mxu0 0.0
    %340 = vmatprep.subr.mxu0 0.0
    %341 = vmatpush1.msra.mxu0 0.0
    %342 = vmatprep.subr.mxu0 0.0
    %343 = vmatpush1.msra.mxu0 0.0
    %344 = vmatprep.subr.mxu0 0.0
    %345 = vmatpush1.msra.mxu0 0.0
    %346 = vmatprep.subr.mxu0 0.0
    %347 = vmatpush1.msra.mxu0 0.0
    %348 = vmatprep.subr.mxu0 %v23
    %349 = vmatpush1.msra.mxu0 %v22
    %350 = vmatprep.subr.mxu0 %v21
    %351 = vmatpush1.msra.mxu0 %v20
    %352 = vmatprep.subr.mxu0 %v19
    %353 = vmatpush1.msra.mxu0 %v18
    %354 = vmatprep.subr.mxu0 %v17
    %355 = vmatpush1.msra.mxu0 %v16
    %356 = vmatprep.subr.mxu0 0.0
    %357 = vmatpush2.msra.mxu0 0.0
    %358 = vmatprep.subr.mxu0 0.0
    %359 = vmatpush2.msra.mxu0 0.0
    %360 = vmatprep.subr.mxu0 0.0
    %361 = vmatpush2.msra.mxu0 0.0
    %362 = vmatprep.subr.mxu0 0.0
    %363 = vmatpush2.msra.mxu0 0.0
    %364 = vmatprep.subr.mxu0 0.0
    %365 = vmatpush2.msra.mxu0 0.0
    %366 = vmatprep.subr.mxu0 0.0
    %367 = vmatpush2.msra.mxu0 0.0
    %368 = vmatprep.subr.mxu0 0.0
    %369 = vmatpush2.msra.mxu0 0.0
    %370 = vmatprep.subr.mxu0 0.0
    %371 = vmatpush2.msra.mxu0 0.0
    %372 = vmatprep.subr.mxu0 0.0
    %373 = vmatpush2.msra.mxu0 0.0
    %374 = vmatprep.subr.mxu0 0.0
    %375 = vmatpush2.msra.mxu0 0.0
    %376 = vmatprep.subr.mxu0 0.0
    %377 = vmatpush2.msra.mxu0 0.0
    %378 = vmatprep.subr.mxu0 0.0
    %379 = vmatpush2.msra.mxu0 0.0
    %380 = vmatprep.subr.mxu0 0.0
    %381 = vmatpush2.msra.mxu0 0.0
    %382 = vmatprep.subr.mxu0 0.0
    %383 = vmatpush2.msra.mxu0 0.0
    %384 = vmatprep.subr.mxu0 0.0
    %385 = vmatpush2.msra.mxu0 0.0
    %386 = vmatprep.subr.mxu0 0.0
    %387 = vmatpush2.msra.mxu0 0.0
    %388 = vmatprep.mubr.f32.mxu0 0.0
    %389 = vmatmul.mubr.f32.gmra.mxu0 %v322
    %v390 = vpop.f32.mrf.mxu0
    %v391 = vadd.f32 0.0, %v390
    %v392 = vpop.f32.mrf.mxu0
    %v393 = vadd.f32 0.0, %v392
    %394 = vdwg.mxu0
    %v395 = vadd.f32 %v148, %v393
    %v396 = vmul.f32 %v395, %v395
    %v397 = vadd.f32 %v396, 1.0
    %v398 = vrsqrt.pop %v397
    %v399 = vadd.f32 %v398, 1.0
    %v400 = vmul.f32 %v399, 0.5
    %v401 = vrsqrt.pop %v400
    %v402 = vmul.f32 %v400, %v401
    %vm403 = vcmp.eq.f32.partialorder %v400, inf
    %v404 = vsel %vm403, %v400, %v402
    %vm405 = vcmp.eq.f32.partialorder %v400, 0.0
    %v406 = vand.u32 %v400, 2147483648
    %v407 = vsel %vm405, %v406, %v404
    %vm408 = vcmp.ge.f32.partialorder %v395, 0.0
    %v409 = vsel %vm408, 1.0, -1.0
    %v410 = vsub.f32 1.0, %v398
    %v411 = vmul.f32 %v410, 0.5
    %v412 = vrsqrt.pop %v411
    %v413 = vmul.f32 %v411, %v412
    %vm414 = vcmp.eq.f32.partialorder %v411, inf
    %v415 = vsel %vm414, %v411, %v413
    %vm416 = vcmp.eq.f32.partialorder %v411, 0.0
    %v417 = vand.u32 %v411, 2147483648
    %v418 = vsel %vm416, %v417, %v415
    %v419 = vmul.f32 %v409, %v418
    %v420 = vmul.f32 %v396, %v396
    %v421 = vadd.f32 %v420, 1.0
    %v422 = vrsqrt.pop %v421
    %v423 = vadd.f32 %v422, 1.0
    %v424 = vmul.f32 %v423, 0.5
    %v425 = vrsqrt.pop %v424
    %v426 = vmul.f32 %v424, %v425
    %vm427 = vcmp.eq.f32.partialorder %v424, inf
    %v428 = vsel %vm427, %v424, %v426
    %vm429 = vcmp.eq.f32.partialorder %v424, 0.0
    %v430 = vand.u32 %v424, 2147483648
    %v431 = vsel %vm429, %v430, %v428
    %v432 = vsub.f32 1.0, %v422
    %v433 = vmul.f32 %v432, 0.5
    %v434 = vrsqrt.pop %v433
    %v435 = vmul.f32 %v433, %v434
    %vm436 = vcmp.eq.f32.partialorder %v433, inf
    %v437 = vsel %vm436, %v433, %v435
    %vm438 = vcmp.eq.f32.partialorder %v433, 0.0
    %v439 = vand.u32 %v433, 2147483648
    %v440 = vsel %vm438, %v439, %v437
    %v441 = vsub.f32 %v407, %v419
    %v442 = vmul.f32 %v441, 0.70710677
    %v443 = vadd.f32 %v407, %v419
    %v444 = vmul.f32 %v443, 0.70710677
    %v445 = vmul.f32 %v442, %v431
    %v446 = vmul.f32 %v442, %v440
    %v447 = vsub.f32 0.0, %v446
    %v448 = vmul.f32 %v444, %v431
    %v449 = vmul.f32 %v444, %v440
    %v450 = vsub.f32 %v448, %v445
    %452 = vset.pattern.permute.xlu0 0
    %453 = vperm.xlu0 %452, %v450
    %v454 = vpop.permute.xlu0 %453
    %v456 = vlaneseq
    %v457 = vshrl.u32 %v456, 7
    %v458 = vsub.s32 0, %v457
    %v459 = vrot.slane %v37, %v458
    %v460 = vmul.f32 %v454, %v459
    %462 = vset.pattern.permute.xlu0 0
    %463 = vperm.xlu0 %462, %v445
    %v464 = vpop.permute.xlu0 %463
    %v466 = vadd.f32 %v464, %v460
    %v467 = vsub.f32 %v449, %v447
    %469 = vset.pattern.permute.xlu0 0
    %470 = vperm.xlu0 %469, %v467
    %v471 = vpop.permute.xlu0 %470
    %v473 = vmul.f32 %v471, %v459
    %475 = vset.pattern.permute.xlu0 0
    %476 = vperm.xlu0 %475, %v447
    %v477 = vpop.permute.xlu0 %476
    %v479 = vadd.f32 %v477, %v473
    %480 = vset.pattern.permute.xlu0 1
    %481 = vperm.xlu0 %480, %v450
    %v482 = vpop.permute.xlu0 %481
    %v484 = vlaneseq
    %v485 = vshrl.u32 %v484, 7
    %v486 = vsub.s32 1, %v485
    %v487 = vrot.slane %v37, %v486
    %v488 = vmul.f32 %v482, %v487
    %489 = vset.pattern.permute.xlu0 1
    %490 = vperm.xlu0 %489, %v445
    %v491 = vpop.permute.xlu0 %490
    %v493 = vadd.f32 %v491, %v488
    %494 = vset.pattern.permute.xlu0 1
    %495 = vperm.xlu0 %494, %v467
    %v496 = vpop.permute.xlu0 %495
    %v498 = vmul.f32 %v496, %v487
    %499 = vset.pattern.permute.xlu0 1
    %500 = vperm.xlu0 %499, %v447
    %v501 = vpop.permute.xlu0 %500
    %v503 = vadd.f32 %v501, %v498
    %v504 = vmul.f32 %v466, %v493
    %v505 = vmul.f32 %v479, %v503
    %v506 = vsub.f32 %v504, %v505
    %v507 = vmul.f32 %v466, %v503
    %v508 = vmul.f32 %v479, %v493
    %v509 = vadd.f32 %v507, %v508
    %510 = vset.pattern.permute.xlu0 2
    %511 = vperm.xlu0 %510, %v450
    %v512 = vpop.permute.xlu0 %511
    %v514 = vlaneseq
    %v515 = vshrl.u32 %v514, 7
    %v516 = vsub.s32 2, %v515
    %v517 = vrot.slane %v37, %v516
    %v518 = vmul.f32 %v512, %v517
    %519 = vset.pattern.permute.xlu0 2
    %520 = vperm.xlu0 %519, %v445
    %v521 = vpop.permute.xlu0 %520
    %v523 = vadd.f32 %v521, %v518
    %524 = vset.pattern.permute.xlu0 2
    %525 = vperm.xlu0 %524, %v467
    %v526 = vpop.permute.xlu0 %525
    %v528 = vmul.f32 %v526, %v517
    %529 = vset.pattern.permute.xlu0 2
    %530 = vperm.xlu0 %529, %v447
    %v531 = vpop.permute.xlu0 %530
    %v533 = vadd.f32 %v531, %v528
    %v534 = vmul.f32 %v506, %v523
    %v535 = vmul.f32 %v509, %v533
    %v536 = vsub.f32 %v534, %v535
    %v537 = vmul.f32 %v506, %v533
    %v538 = vmul.f32 %v509, %v523
    %v539 = vadd.f32 %v537, %v538
    %540 = vset.pattern.permute.xlu0 3
    %541 = vperm.xlu0 %540, %v450
    %v542 = vpop.permute.xlu0 %541
    %v544 = vlaneseq
    %v545 = vshrl.u32 %v544, 7
    %v546 = vsub.s32 3, %v545
    %v547 = vrot.slane %v37, %v546
    %v548 = vmul.f32 %v542, %v547
    %549 = vset.pattern.permute.xlu0 3
    %550 = vperm.xlu0 %549, %v445
    %v551 = vpop.permute.xlu0 %550
    %v553 = vadd.f32 %v551, %v548
    %554 = vset.pattern.permute.xlu0 3
    %555 = vperm.xlu0 %554, %v467
    %v556 = vpop.permute.xlu0 %555
    %v558 = vmul.f32 %v556, %v547
    %559 = vset.pattern.permute.xlu0 3
    %560 = vperm.xlu0 %559, %v447
    %v561 = vpop.permute.xlu0 %560
    %v563 = vadd.f32 %v561, %v558
    %v564 = vmul.f32 %v536, %v553
    %v565 = vmul.f32 %v539, %v563
    %v566 = vsub.f32 %v564, %v565
    %v567 = vmul.f32 %v536, %v563
    %v568 = vmul.f32 %v539, %v553
    %v569 = vadd.f32 %v567, %v568
    %v571 = vsel %vm56, %v569, 0
    %573 = vmatprep.subr.mxu0 0.0
    %574 = vmatpush1.msra.mxu0 0.0
    %575 = vmatprep.subr.mxu0 0.0
    %576 = vmatpush1.msra.mxu0 0.0
    %577 = vmatprep.subr.mxu0 0.0
    %578 = vmatpush1.msra.mxu0 0.0
    %579 = vmatprep.subr.mxu0 0.0
    %580 = vmatpush1.msra.mxu0 0.0
    %581 = vmatprep.subr.mxu0 0.0
    %582 = vmatpush1.msra.mxu0 0.0
    %583 = vmatprep.subr.mxu0 0.0
    %584 = vmatpush1.msra.mxu0 0.0
    %585 = vmatprep.subr.mxu0 0.0
    %586 = vmatpush1.msra.mxu0 0.0
    %587 = vmatprep.subr.mxu0 0.0
    %588 = vmatpush1.msra.mxu0 0.0
    %589 = vmatprep.subr.mxu0 0.0
    %590 = vmatpush1.msra.mxu0 0.0
    %591 = vmatprep.subr.mxu0 0.0
    %592 = vmatpush1.msra.mxu0 0.0
    %593 = vmatprep.subr.mxu0 0.0
    %594 = vmatpush1.msra.mxu0 0.0
    %595 = vmatprep.subr.mxu0 0.0
    %596 = vmatpush1.msra.mxu0 0.0
    %597 = vmatprep.subr.mxu0 0.0
    %598 = vmatpush1.msra.mxu0 0.0
    %599 = vmatprep.subr.mxu0 0.0
    %600 = vmatpush1.msra.mxu0 0.0
    %601 = vmatprep.subr.mxu0 0.0
    %602 = vmatpush1.msra.mxu0 %v33
    %603 = vmatprep.subr.mxu0 0.0
    %604 = vmatpush1.msra.mxu0 %v32
    %605 = vmatprep.subr.mxu0 0.0
    %606 = vmatpush2.msra.mxu0 0.0
    %607 = vmatprep.subr.mxu0 0.0
    %608 = vmatpush2.msra.mxu0 0.0
    %609 = vmatprep.subr.mxu0 0.0
    %610 = vmatpush2.msra.mxu0 0.0
    %611 = vmatprep.subr.mxu0 0.0
    %612 = vmatpush2.msra.mxu0 0.0
    %613 = vmatprep.subr.mxu0 0.0
    %614 = vmatpush2.msra.mxu0 0.0
    %615 = vmatprep.subr.mxu0 0.0
    %616 = vmatpush2.msra.mxu0 0.0
    %617 = vmatprep.subr.mxu0 0.0
    %618 = vmatpush2.msra.mxu0 0.0
    %619 = vmatprep.subr.mxu0 0.0
    %620 = vmatpush2.msra.mxu0 0.0
    %621 = vmatprep.subr.mxu0 0.0
    %622 = vmatpush2.msra.mxu0 0.0
    %623 = vmatprep.subr.mxu0 0.0
    %624 = vmatpush2.msra.mxu0 0.0
    %625 = vmatprep.subr.mxu0 0.0
    %626 = vmatpush2.msra.mxu0 0.0
    %627 = vmatprep.subr.mxu0 0.0
    %628 = vmatpush2.msra.mxu0 0.0
    %629 = vmatprep.subr.mxu0 0.0
    %630 = vmatpush2.msra.mxu0 0.0
    %631 = vmatprep.subr.mxu0 0.0
    %632 = vmatpush2.msra.mxu0 0.0
    %633 = vmatprep.subr.mxu0 0.0
    %634 = vmatpush2.msra.mxu0 0.0
    %635 = vmatprep.subr.mxu0 0.0
    %636 = vmatpush2.msra.mxu0 0.0
    %637 = vmatprep.mubr.f32.mxu0 0.0
    %638 = vmatmul.mubr.f32.gmra.mxu0 %v571
    %v639 = vpop.f32.mrf.mxu0
    %v640 = vadd.f32 0.0, %v639
    %v641 = vpop.f32.mrf.mxu0
    %642 = vdwg.mxu0
    %v644 = vsel %vm56, %v566, 0
    %646 = vmatprep.subr.mxu0 0.0
    %647 = vmatpush1.msra.mxu0 0.0
    %648 = vmatprep.subr.mxu0 0.0
    %649 = vmatpush1.msra.mxu0 0.0
    %650 = vmatprep.subr.mxu0 0.0
    %651 = vmatpush1.msra.mxu0 0.0
    %652 = vmatprep.subr.mxu0 0.0
    %653 = vmatpush1.msra.mxu0 0.0
    %654 = vmatprep.subr.mxu0 0.0
    %655 = vmatpush1.msra.mxu0 0.0
    %656 = vmatprep.subr.mxu0 0.0
    %657 = vmatpush1.msra.mxu0 0.0
    %658 = vmatprep.subr.mxu0 0.0
    %659 = vmatpush1.msra.mxu0 0.0
    %660 = vmatprep.subr.mxu0 0.0
    %661 = vmatpush1.msra.mxu0 0.0
    %662 = vmatprep.subr.mxu0 0.0
    %663 = vmatpush1.msra.mxu0 0.0
    %664 = vmatprep.subr.mxu0 0.0
    %665 = vmatpush1.msra.mxu0 0.0
    %666 = vmatprep.subr.mxu0 0.0
    %667 = vmatpush1.msra.mxu0 0.0
    %668 = vmatprep.subr.mxu0 0.0
    %669 = vmatpush1.msra.mxu0 0.0
    %670 = vmatprep.subr.mxu0 0.0
    %671 = vmatpush1.msra.mxu0 0.0
    %672 = vmatprep.subr.mxu0 0.0
    %673 = vmatpush1.msra.mxu0 0.0
    %674 = vmatprep.subr.mxu0 0.0
    %675 = vmatpush1.msra.mxu0 %v31
    %676 = vmatprep.subr.mxu0 0.0
    %677 = vmatpush1.msra.mxu0 %v30
    %678 = vmatprep.subr.mxu0 0.0
    %679 = vmatpush2.msra.mxu0 0.0
    %680 = vmatprep.subr.mxu0 0.0
    %681 = vmatpush2.msra.mxu0 0.0
    %682 = vmatprep.subr.mxu0 0.0
    %683 = vmatpush2.msra.mxu0 0.0
    %684 = vmatprep.subr.mxu0 0.0
    %685 = vmatpush2.msra.mxu0 0.0
    %686 = vmatprep.subr.mxu0 0.0
    %687 = vmatpush2.msra.mxu0 0.0
    %688 = vmatprep.subr.mxu0 0.0
    %689 = vmatpush2.msra.mxu0 0.0
    %690 = vmatprep.subr.mxu0 0.0
    %691 = vmatpush2.msra.mxu0 0.0
    %692 = vmatprep.subr.mxu0 0.0
    %693 = vmatpush2.msra.mxu0 0.0
    %694 = vmatprep.subr.mxu0 0.0
    %695 = vmatpush2.msra.mxu0 0.0
    %696 = vmatprep.subr.mxu0 0.0
    %697 = vmatpush2.msra.mxu0 0.0
    %698 = vmatprep.subr.mxu0 0.0
    %699 = vmatpush2.msra.mxu0 0.0
    %700 = vmatprep.subr.mxu0 0.0
    %701 = vmatpush2.msra.mxu0 0.0
    %702 = vmatprep.subr.mxu0 0.0
    %703 = vmatpush2.msra.mxu0 0.0
    %704 = vmatprep.subr.mxu0 0.0
    %705 = vmatpush2.msra.mxu0 0.0
    %706 = vmatprep.subr.mxu0 0.0
    %707 = vmatpush2.msra.mxu0 0.0
    %708 = vmatprep.subr.mxu0 0.0
    %709 = vmatpush2.msra.mxu0 0.0
    %710 = vmatprep.mubr.f32.mxu0 0.0
    %711 = vmatmul.mubr.f32.gmra.mxu0 %v644
    %v712 = vpop.f32.mrf.mxu0
    %v713 = vadd.f32 %v640, %v712
    %v714 = vpop.f32.mrf.mxu0
    %715 = vdwg.mxu0
    %v716 = vmul.f32 %v713, %v713
    %v718 = vsel %vm320, %v716, 0
    %720 = vmatprep.subr.mxu0 0.0
    %721 = vmatpush1.msra.mxu0 0.0
    %722 = vmatprep.subr.mxu0 0.0
    %723 = vmatpush1.msra.mxu0 0.0
    %724 = vmatprep.subr.mxu0 0.0
    %725 = vmatpush1.msra.mxu0 0.0
    %726 = vmatprep.subr.mxu0 0.0
    %727 = vmatpush1.msra.mxu0 0.0
    %728 = vmatprep.subr.mxu0 0.0
    %729 = vmatpush1.msra.mxu0 0.0
    %730 = vmatprep.subr.mxu0 0.0
    %731 = vmatpush1.msra.mxu0 0.0
    %732 = vmatprep.subr.mxu0 0.0
    %733 = vmatpush1.msra.mxu0 0.0
    %734 = vmatprep.subr.mxu0 0.0
    %735 = vmatpush1.msra.mxu0 0.0
    %736 = vmatprep.subr.mxu0 0.0
    %737 = vmatpush1.msra.mxu0 0.0
    %738 = vmatprep.subr.mxu0 0.0
    %739 = vmatpush1.msra.mxu0 0.0
    %740 = vmatprep.subr.mxu0 0.0
    %741 = vmatpush1.msra.mxu0 0.0
    %742 = vmatprep.subr.mxu0 0.0
    %743 = vmatpush1.msra.mxu0 0.0
    %744 = vmatprep.subr.mxu0 0.0
    %745 = vmatpush1.msra.mxu0 %v29
    %746 = vmatprep.subr.mxu0 0.0
    %747 = vmatpush1.msra.mxu0 %v28
    %748 = vmatprep.subr.mxu0 0.0
    %749 = vmatpush1.msra.mxu0 %v27
    %750 = vmatprep.subr.mxu0 0.0
    %751 = vmatpush1.msra.mxu0 %v26
    %752 = vmatprep.subr.mxu0 0.0
    %753 = vmatpush2.msra.mxu0 0.0
    %754 = vmatprep.subr.mxu0 0.0
    %755 = vmatpush2.msra.mxu0 0.0
    %756 = vmatprep.subr.mxu0 0.0
    %757 = vmatpush2.msra.mxu0 0.0
    %758 = vmatprep.subr.mxu0 0.0
    %759 = vmatpush2.msra.mxu0 0.0
    %760 = vmatprep.subr.mxu0 0.0
    %761 = vmatpush2.msra.mxu0 0.0
    %762 = vmatprep.subr.mxu0 0.0
    %763 = vmatpush2.msra.mxu0 0.0
    %764 = vmatprep.subr.mxu0 0.0
    %765 = vmatpush2.msra.mxu0 0.0
    %766 = vmatprep.subr.mxu0 0.0
    %767 = vmatpush2.msra.mxu0 0.0
    %768 = vmatprep.subr.mxu0 0.0
    %769 = vmatpush2.msra.mxu0 0.0
    %770 = vmatprep.subr.mxu0 0.0
    %771 = vmatpush2.msra.mxu0 0.0
    %772 = vmatprep.subr.mxu0 0.0
    %773 = vmatpush2.msra.mxu0 0.0
    %774 = vmatprep.subr.mxu0 0.0
    %775 = vmatpush2.msra.mxu0 0.0
    %776 = vmatprep.subr.mxu0 0.0
    %777 = vmatpush2.msra.mxu0 0.0
    %778 = vmatprep.subr.mxu0 0.0
    %779 = vmatpush2.msra.mxu0 0.0
    %780 = vmatprep.subr.mxu0 0.0
    %781 = vmatpush2.msra.mxu0 0.0
    %782 = vmatprep.subr.mxu0 0.0
    %783 = vmatpush2.msra.mxu0 0.0
    %784 = vmatprep.mubr.f32.mxu0 0.0
    %785 = vmatmul.mubr.f32.gmra.mxu0 %v718
    %v786 = vpop.f32.mrf.mxu0
    %v787 = vadd.f32 0.0, %v786
    %v788 = vpop.f32.mrf.mxu0
    %789 = vdwg.mxu0
    %v790 = vadd.f32 %v282, %v391
    %v791 = vadd.f32 %v790, %v787
    %v792 = vadd.f32 %v791, 0.0
    %v793 = vmul.f32 %v792, %v44
    %v794 = vtanh.pop %v793
    %v795 = vmul.f32 %v794, %v45
    %v796 = vadd.f32 %v795, %v47
    %v797 = vmul.f32 %v796, 0.0
    %799 = vrot.lane.b32.xlu0 %v796, 96
    %v800 = vpop.permute.xlu0 %799
    %v802 = vmul.f32 %v796, %v800
    %804 = vrot.lane.b32.xlu0 %v802, 96
    %v805 = vpop.permute.xlu0 %804
    %v807 = vadd.f32 %v797, %v805
    %v808 = vtanh.pop %v807
    %810 = vrot.lane.b32.xlu0 %v808, 96
    %v811 = vpop.permute.xlu0 %810
    %v813 = vmul.f32 %v796, %v811
    %815 = vrot.lane.b32.xlu0 %v813, 32
    %v816 = vpop.permute.xlu0 %815
    %818 = vst.msk [vmem:[#allocation2] sm:$0xff] %vm320, %v816
    %v819 = vsel %vm320, %v816, 0
    %821 = vmatprep.subr.mxu0 0.0
    %822 = vmatpush1.msra.mxu0 0.0
    %823 = vmatprep.subr.mxu0 0.0
    %824 = vmatpush1.msra.mxu0 0.0
    %825 = vmatprep.subr.mxu0 0.0
    %826 = vmatpush1.msra.mxu0 0.0
    %827 = vmatprep.subr.mxu0 0.0
    %828 = vmatpush1.msra.mxu0 0.0
    %829 = vmatprep.subr.mxu0 0.0
    %830 = vmatpush1.msra.mxu0 0.0
    %831 = vmatprep.subr.mxu0 0.0
    %832 = vmatpush1.msra.mxu0 0.0
    %833 = vmatprep.subr.mxu0 0.0
    %834 = vmatpush1.msra.mxu0 0.0
    %835 = vmatprep.subr.mxu0 0.0
    %836 = vmatpush1.msra.mxu0 0.0
    %837 = vmatprep.subr.mxu0 0.0
    %838 = vmatpush1.msra.mxu0 0.0
    %839 = vmatprep.subr.mxu0 0.0
    %840 = vmatpush1.msra.mxu0 0.0
    %841 = vmatprep.subr.mxu0 0.0
    %842 = vmatpush1.msra.mxu0 0.0
    %843 = vmatprep.subr.mxu0 0.0
    %844 = vmatpush1.msra.mxu0 0.0
    %845 = vmatprep.subr.mxu0 %v23
    %846 = vmatpush1.msra.mxu0 %v22
    %847 = vmatprep.subr.mxu0 %v21
    %848 = vmatpush1.msra.mxu0 %v20
    %849 = vmatprep.subr.mxu0 %v19
    %850 = vmatpush1.msra.mxu0 %v18
    %851 = vmatprep.subr.mxu0 %v17
    %852 = vmatpush1.msra.mxu0 %v16
    %853 = vmatprep.subr.mxu0 0.0
    %854 = vmatpush2.msra.mxu0 0.0
    %855 = vmatprep.subr.mxu0 0.0
    %856 = vmatpush2.msra.mxu0 0.0
    %857 = vmatprep.subr.mxu0 0.0
    %858 = vmatpush2.msra.mxu0 0.0
    %859 = vmatprep.subr.mxu0 0.0
    %860 = vmatpush2.msra.mxu0 0.0
    %861 = vmatprep.subr.mxu0 0.0
    %862 = vmatpush2.msra.mxu0 0.0
    %863 = vmatprep.subr.mxu0 0.0
    %864 = vmatpush2.msra.mxu0 0.0
    %865 = vmatprep.subr.mxu0 0.0
    %866 = vmatpush2.msra.mxu0 0.0
    %867 = vmatprep.subr.mxu0 0.0
    %868 = vmatpush2.msra.mxu0 0.0
    %869 = vmatprep.subr.mxu0 0.0
    %870 = vmatpush2.msra.mxu0 0.0
    %871 = vmatprep.subr.mxu0 0.0
    %872 = vmatpush2.msra.mxu0 0.0
    %873 = vmatprep.subr.mxu0 0.0
    %874 = vmatpush2.msra.mxu0 0.0
    %875 = vmatprep.subr.mxu0 0.0
    %876 = vmatpush2.msra.mxu0 0.0
    %877 = vmatprep.subr.mxu0 0.0
    %878 = vmatpush2.msra.mxu0 0.0
    %879 = vmatprep.subr.mxu0 0.0
    %880 = vmatpush2.msra.mxu0 0.0
    %881 = vmatprep.subr.mxu0 0.0
    %882 = vmatpush2.msra.mxu0 0.0
    %883 = vmatprep.subr.mxu0 0.0
    %884 = vmatpush2.msra.mxu0 0.0
    %885 = vmatprep.mubr.f32.mxu0 0.0
    %886 = vmatmul.mubr.f32.gmra.mxu0 %v819
    %v887 = vpop.f32.mrf.mxu0
    %v888 = vadd.f32 0.0, %v887
    %v889 = vpop.f32.mrf.mxu0
    %v890 = vadd.f32 0.0, %v889
    %891 = vdwg.mxu0
    %v892 = vadd.f32 %v153, %v890
    %v893 = vmul.f32 %v892, %v892
    %v894 = vadd.f32 %v893, 1.0
    %v895 = vrsqrt.pop %v894
    %v896 = vadd.f32 %v895, 1.0
    %v897 = vmul.f32 %v896, 0.5
    %v898 = vrsqrt.pop %v897
    %v899 = vmul.f32 %v897, %v898
    %vm900 = vcmp.eq.f32.partialorder %v897, inf
    %v901 = vsel %vm900, %v897, %v899
    %vm902 = vcmp.eq.f32.partialorder %v897, 0.0
    %v903 = vand.u32 %v897, 2147483648
    %v904 = vsel %vm902, %v903, %v901
    %vm905 = vcmp.ge.f32.partialorder %v892, 0.0
    %v906 = vsel %vm905, 1.0, -1.0
    %v907 = vsub.f32 1.0, %v895
    %v908 = vmul.f32 %v907, 0.5
    %v909 = vrsqrt.pop %v908
    %v910 = vmul.f32 %v908, %v909
    %vm911 = vcmp.eq.f32.partialorder %v908, inf
    %v912 = vsel %vm911, %v908, %v910
    %vm913 = vcmp.eq.f32.partialorder %v908, 0.0
    %v914 = vand.u32 %v908, 2147483648
    %v915 = vsel %vm913, %v914, %v912
    %v916 = vmul.f32 %v906, %v915
    %v917 = vmul.f32 %v893, %v893
    %v918 = vadd.f32 %v917, 1.0
    %v919 = vrsqrt.pop %v918
    %v920 = vadd.f32 %v919, 1.0
    %v921 = vmul.f32 %v920, 0.5
    %v922 = vrsqrt.pop %v921
    %v923 = vmul.f32 %v921, %v922
    %vm924 = vcmp.eq.f32.partialorder %v921, inf
    %v925 = vsel %vm924, %v921, %v923
    %vm926 = vcmp.eq.f32.partialorder %v921, 0.0
    %v927 = vand.u32 %v921, 2147483648
    %v928 = vsel %vm926, %v927, %v925
    %v929 = vsub.f32 1.0, %v919
    %v930 = vmul.f32 %v929, 0.5
    %v931 = vrsqrt.pop %v930
    %v932 = vmul.f32 %v930, %v931
    %vm933 = vcmp.eq.f32.partialorder %v930, inf
    %v934 = vsel %vm933, %v930, %v932
    %vm935 = vcmp.eq.f32.partialorder %v930, 0.0
    %v936 = vand.u32 %v930, 2147483648
    %v937 = vsel %vm935, %v936, %v934
    %v938 = vsub.f32 %v904, %v916
    %v939 = vmul.f32 %v938, 0.70710677
    %v940 = vadd.f32 %v904, %v916
    %v941 = vmul.f32 %v940, 0.70710677
    %v942 = vmul.f32 %v939, %v928
    %v943 = vmul.f32 %v939, %v937
    %v944 = vsub.f32 0.0, %v943
    %v945 = vmul.f32 %v941, %v928
    %v946 = vmul.f32 %v941, %v937
    %v947 = vsub.f32 %v945, %v942
    %949 = vset.pattern.permute.xlu0 0
    %950 = vperm.xlu0 %949, %v947
    %v951 = vpop.permute.xlu0 %950
    %v953 = vmul.f32 %v951, %v459
    %955 = vset.pattern.permute.xlu0 0
    %956 = vperm.xlu0 %955, %v942
    %v957 = vpop.permute.xlu0 %956
    %v959 = vadd.f32 %v957, %v953
    %v960 = vsub.f32 %v946, %v944
    %962 = vset.pattern.permute.xlu0 0
    %963 = vperm.xlu0 %962, %v960
    %v964 = vpop.permute.xlu0 %963
    %v966 = vmul.f32 %v964, %v459
    %968 = vset.pattern.permute.xlu0 0
    %969 = vperm.xlu0 %968, %v944
    %v970 = vpop.permute.xlu0 %969
    %v972 = vadd.f32 %v970, %v966
    %973 = vset.pattern.permute.xlu0 1
    %974 = vperm.xlu0 %973, %v947
    %v975 = vpop.permute.xlu0 %974
    %v977 = vmul.f32 %v975, %v487
    %978 = vset.pattern.permute.xlu0 1
    %979 = vperm.xlu0 %978, %v942
    %v980 = vpop.permute.xlu0 %979
    %v982 = vadd.f32 %v980, %v977
    %983 = vset.pattern.permute.xlu0 1
    %984 = vperm.xlu0 %983, %v960
    %v985 = vpop.permute.xlu0 %984
    %v987 = vmul.f32 %v985, %v487
    %988 = vset.pattern.permute.xlu0 1
    %989 = vperm.xlu0 %988, %v944
    %v990 = vpop.permute.xlu0 %989
    %v992 = vadd.f32 %v990, %v987
    %v993 = vmul.f32 %v959, %v982
    %v994 = vmul.f32 %v972, %v992
    %v995 = vsub.f32 %v993, %v994
    %v996 = vmul.f32 %v959, %v992
    %v997 = vmul.f32 %v972, %v982
    %v998 = vadd.f32 %v996, %v997
    %999 = vset.pattern.permute.xlu0 2
    %1000 = vperm.xlu0 %999, %v947
    %v1001 = vpop.permute.xlu0 %1000
    %v1003 = vmul.f32 %v1001, %v517
    %1004 = vset.pattern.permute.xlu0 2
    %1005 = vperm.xlu0 %1004, %v942
    %v1006 = vpop.permute.xlu0 %1005
    %v1008 = vadd.f32 %v1006, %v1003
    %1009 = vset.pattern.permute.xlu0 2
    %1010 = vperm.xlu0 %1009, %v960
    %v1011 = vpop.permute.xlu0 %1010
    %v1013 = vmul.f32 %v1011, %v517
    %1014 = vset.pattern.permute.xlu0 2
    %1015 = vperm.xlu0 %1014, %v944
    %v1016 = vpop.permute.xlu0 %1015
    %v1018 = vadd.f32 %v1016, %v1013
    %v1019 = vmul.f32 %v995, %v1008
    %v1020 = vmul.f32 %v998, %v1018
    %v1021 = vsub.f32 %v1019, %v1020
    %v1022 = vmul.f32 %v995, %v1018
    %v1023 = vmul.f32 %v998, %v1008
    %v1024 = vadd.f32 %v1022, %v1023
    %1025 = vset.pattern.permute.xlu0 3
    %1026 = vperm.xlu0 %1025, %v947
    %v1027 = vpop.permute.xlu0 %1026
    %v1029 = vmul.f32 %v1027, %v547
    %1030 = vset.pattern.permute.xlu0 3
    %1031 = vperm.xlu0 %1030, %v942
    %v1032 = vpop.permute.xlu0 %1031
    %v1034 = vadd.f32 %v1032, %v1029
    %1035 = vset.pattern.permute.xlu0 3
    %1036 = vperm.xlu0 %1035, %v960
    %v1037 = vpop.permute.xlu0 %1036
    %v1039 = vmul.f32 %v1037, %v547
    %1040 = vset.pattern.permute.xlu0 3
    %1041 = vperm.xlu0 %1040, %v944
    %v1042 = vpop.permute.xlu0 %1041
    %v1044 = vadd.f32 %v1042, %v1039
    %v1045 = vmul.f32 %v1021, %v1034
    %v1046 = vmul.f32 %v1024, %v1044
    %v1047 = vsub.f32 %v1045, %v1046
    %v1048 = vmul.f32 %v1021, %v1044
    %v1049 = vmul.f32 %v1024, %v1034
    %v1050 = vadd.f32 %v1048, %v1049
    %v1052 = vsel %vm56, %v1050, 0
    %1054 = vmatprep.subr.mxu0 0.0
    %1055 = vmatpush1.msra.mxu0 0.0
    %1056 = vmatprep.subr.mxu0 0.0
    %1057 = vmatpush1.msra.mxu0 0.0
    %1058 = vmatprep.subr.mxu0 0.0
    %1059 = vmatpush1.msra.mxu0 0.0
    %1060 = vmatprep.subr.mxu0 0.0
    %1061 = vmatpush1.msra.mxu0 0.0
    %1062 = vmatprep.subr.mxu0 0.0
    %1063 = vmatpush1.msra.mxu0 0.0
    %1064 = vmatprep.subr.mxu0 0.0
    %1065 = vmatpush1.msra.mxu0 0.0
    %1066 = vmatprep.subr.mxu0 0.0
    %1067 = vmatpush1.msra.mxu0 0.0
    %1068 = vmatprep.subr.mxu0 0.0
    %1069 = vmatpush1.msra.mxu0 0.0
    %1070 = vmatprep.subr.mxu0 0.0
    %1071 = vmatpush1.msra.mxu0 0.0
    %1072 = vmatprep.subr.mxu0 0.0
    %1073 = vmatpush1.msra.mxu0 0.0
    %1074 = vmatprep.subr.mxu0 0.0
    %1075 = vmatpush1.msra.mxu0 0.0
    %1076 = vmatprep.subr.mxu0 0.0
    %1077 = vmatpush1.msra.mxu0 0.0
    %1078 = vmatprep.subr.mxu0 0.0
    %1079 = vmatpush1.msra.mxu0 0.0
    %1080 = vmatprep.subr.mxu0 0.0
    %1081 = vmatpush1.msra.mxu0 0.0
    %1082 = vmatprep.subr.mxu0 0.0
    %1083 = vmatpush1.msra.mxu0 %v33
    %1084 = vmatprep.subr.mxu0 0.0
    %1085 = vmatpush1.msra.mxu0 %v32
    %1086 = vmatprep.subr.mxu0 0.0
    %1087 = vmatpush2.msra.mxu0 0.0
    %1088 = vmatprep.subr.mxu0 0.0
    %1089 = vmatpush2.msra.mxu0 0.0
    %1090 = vmatprep.subr.mxu0 0.0
    %1091 = vmatpush2.msra.mxu0 0.0
    %1092 = vmatprep.subr.mxu0 0.0
    %1093 = vmatpush2.msra.mxu0 0.0
    %1094 = vmatprep.subr.mxu0 0.0
    %1095 = vmatpush2.msra.mxu0 0.0
    %1096 = vmatprep.subr.mxu0 0.0
    %1097 = vmatpush2.msra.mxu0 0.0
    %1098 = vmatprep.subr.mxu0 0.0
    %1099 = vmatpush2.msra.mxu0 0.0
    %1100 = vmatprep.subr.mxu0 0.0
    %1101 = vmatpush2.msra.mxu0 0.0
    %1102 = vmatprep.subr.mxu0 0.0
    %1103 = vmatpush2.msra.mxu0 0.0
    %1104 = vmatprep.subr.mxu0 0.0
    %1105 = vmatpush2.msra.mxu0 0.0
    %1106 = vmatprep.subr.mxu0 0.0
    %1107 = vmatpush2.msra.mxu0 0.0
    %1108 = vmatprep.subr.mxu0 0.0
    %1109 = vmatpush2.msra.mxu0 0.0
    %1110 = vmatprep.subr.mxu0 0.0
    %1111 = vmatpush2.msra.mxu0 0.0
    %1112 = vmatprep.subr.mxu0 0.0
    %1113 = vmatpush2.msra.mxu0 0.0
    %1114 = vmatprep.subr.mxu0 0.0
    %1115 = vmatpush2.msra.mxu0 0.0
    %1116 = vmatprep.subr.mxu0 0.0
    %1117 = vmatpush2.msra.mxu0 0.0
    %1118 = vmatprep.mubr.f32.mxu0 0.0
    %1119 = vmatmul.mubr.f32.gmra.mxu0 %v1052
    %v1120 = vpop.f32.mrf.mxu0
    %v1121 = vadd.f32 0.0, %v1120
    %v1122 = vpop.f32.mrf.mxu0
    %1123 = vdwg.mxu0
    %v1125 = vsel %vm56, %v1047, 0
    %1127 = vmatprep.subr.mxu0 0.0
    %1128 = vmatpush1.msra.mxu0 0.0
    %1129 = vmatprep.subr.mxu0 0.0
    %1130 = vmatpush1.msra.mxu0 0.0
    %1131 = vmatprep.subr.mxu0 0.0
    %1132 = vmatpush1.msra.mxu0 0.0
    %1133 = vmatprep.subr.mxu0 0.0
    %1134 = vmatpush1.msra.mxu0 0.0
    %1135 = vmatprep.subr.mxu0 0.0
    %1136 = vmatpush1.msra.mxu0 0.0
    %1137 = vmatprep.subr.mxu0 0.0
    %1138 = vmatpush1.msra.mxu0 0.0
    %1139 = vmatprep.subr.mxu0 0.0
    %1140 = vmatpush1.msra.mxu0 0.0
    %1141 = vmatprep.subr.mxu0 0.0
    %1142 = vmatpush1.msra.mxu0 0.0
    %1143 = vmatprep.subr.mxu0 0.0
    %1144 = vmatpush1.msra.mxu0 0.0
    %1145 = vmatprep.subr.mxu0 0.0
    %1146 = vmatpush1.msra.mxu0 0.0
    %1147 = vmatprep.subr.mxu0 0.0
    %1148 = vmatpush1.msra.mxu0 0.0
    %1149 = vmatprep.subr.mxu0 0.0
    %1150 = vmatpush1.msra.mxu0 0.0
    %1151 = vmatprep.subr.mxu0 0.0
    %1152 = vmatpush1.msra.mxu0 0.0
    %1153 = vmatprep.subr.mxu0 0.0
    %1154 = vmatpush1.msra.mxu0 0.0
    %1155 = vmatprep.subr.mxu0 0.0
    %1156 = vmatpush1.msra.mxu0 %v31
    %1157 = vmatprep.subr.mxu0 0.0
    %1158 = vmatpush1.msra.mxu0 %v30
    %1159 = vmatprep.subr.mxu0 0.0
    %1160 = vmatpush2.msra.mxu0 0.0
    %1161 = vmatprep.subr.mxu0 0.0
    %1162 = vmatpush2.msra.mxu0 0.0
    %1163 = vmatprep.subr.mxu0 0.0
    %1164 = vmatpush2.msra.mxu0 0.0
    %1165 = vmatprep.subr.mxu0 0.0
    %1166 = vmatpush2.msra.mxu0 0.0
    %1167 = vmatprep.subr.mxu0 0.0
    %1168 = vmatpush2.msra.mxu0 0.0
    %1169 = vmatprep.subr.mxu0 0.0
    %1170 = vmatpush2.msra.mxu0 0.0
    %1171 = vmatprep.subr.mxu0 0.0
    %1172 = vmatpush2.msra.mxu0 0.0
    %1173 = vmatprep.subr.mxu0 0.0
    %1174 = vmatpush2.msra.mxu0 0.0
    %1175 = vmatprep.subr.mxu0 0.0
    %1176 = vmatpush2.msra.mxu0 0.0
    %1177 = vmatprep.subr.mxu0 0.0
    %1178 = vmatpush2.msra.mxu0 0.0
    %1179 = vmatprep.subr.mxu0 0.0
    %1180 = vmatpush2.msra.mxu0 0.0
    %1181 = vmatprep.subr.mxu0 0.0
    %1182 = vmatpush2.msra.mxu0 0.0
    %1183 = vmatprep.subr.mxu0 0.0
    %1184 = vmatpush2.msra.mxu0 0.0
    %1185 = vmatprep.subr.mxu0 0.0
    %1186 = vmatpush2.msra.mxu0 0.0
    %1187 = vmatprep.subr.mxu0 0.0
    %1188 = vmatpush2.msra.mxu0 0.0
    %1189 = vmatprep.subr.mxu0 0.0
    %1190 = vmatpush2.msra.mxu0 0.0
    %1191 = vmatprep.mubr.f32.mxu0 0.0
    %1192 = vmatmul.mubr.f32.gmra.mxu0 %v1125
    %v1193 = vpop.f32.mrf.mxu0
    %v1194 = vadd.f32 %v1121, %v1193
    %v1195 = vpop.f32.mrf.mxu0
    %1196 = vdwg.mxu0
    %v1197 = vmul.f32 %v1194, %v1194
    %v1199 = vsel %vm320, %v1197, 0
    %1201 = vmatprep.subr.mxu0 0.0
    %1202 = vmatpush1.msra.mxu0 0.0
    %1203 = vmatprep.subr.mxu0 0.0
    %1204 = vmatpush1.msra.mxu0 0.0
    %1205 = vmatprep.subr.mxu0 0.0
    %1206 = vmatpush1.msra.mxu0 0.0
    %1207 = vmatprep.subr.mxu0 0.0
    %1208 = vmatpush1.msra.mxu0 0.0
    %1209 = vmatprep.subr.mxu0 0.0
    %1210 = vmatpush1.msra.mxu0 0.0
    %1211 = vmatprep.subr.mxu0 0.0
    %1212 = vmatpush1.msra.mxu0 0.0
    %1213 = vmatprep.subr.mxu0 0.0
    %1214 = vmatpush1.msra.mxu0 0.0
    %1215 = vmatprep.subr.mxu0 0.0
    %1216 = vmatpush1.msra.mxu0 0.0
    %1217 = vmatprep.subr.mxu0 0.0
    %1218 = vmatpush1.msra.mxu0 0.0
    %1219 = vmatprep.subr.mxu0 0.0
    %1220 = vmatpush1.msra.mxu0 0.0
    %1221 = vmatprep.subr.mxu0 0.0
    %1222 = vmatpush1.msra.mxu0 0.0
    %1223 = vmatprep.subr.mxu0 0.0
    %1224 = vmatpush1.msra.mxu0 0.0
    %1225 = vmatprep.subr.mxu0 0.0
    %1226 = vmatpush1.msra.mxu0 %v29
    %1227 = vmatprep.subr.mxu0 0.0
    %1228 = vmatpush1.msra.mxu0 %v28
    %1229 = vmatprep.subr.mxu0 0.0
    %1230 = vmatpush1.msra.mxu0 %v27
    %1231 = vmatprep.subr.mxu0 0.0
    %1232 = vmatpush1.msra.mxu0 %v26
    %1233 = vmatprep.subr.mxu0 0.0
    %1234 = vmatpush2.msra.mxu0 0.0
    %1235 = vmatprep.subr.mxu0 0.0
    %1236 = vmatpush2.msra.mxu0 0.0
    %1237 = vmatprep.subr.mxu0 0.0
    %1238 = vmatpush2.msra.mxu0 0.0
    %1239 = vmatprep.subr.mxu0 0.0
    %1240 = vmatpush2.msra.mxu0 0.0
    %1241 = vmatprep.subr.mxu0 0.0
    %1242 = vmatpush2.msra.mxu0 0.0
    %1243 = vmatprep.subr.mxu0 0.0
    %1244 = vmatpush2.msra.mxu0 0.0
    %1245 = vmatprep.subr.mxu0 0.0
    %1246 = vmatpush2.msra.mxu0 0.0
    %1247 = vmatprep.subr.mxu0 0.0
    %1248 = vmatpush2.msra.mxu0 0.0
    %1249 = vmatprep.subr.mxu0 0.0
    %1250 = vmatpush2.msra.mxu0 0.0
    %1251 = vmatprep.subr.mxu0 0.0
    %1252 = vmatpush2.msra.mxu0 0.0
    %1253 = vmatprep.subr.mxu0 0.0
    %1254 = vmatpush2.msra.mxu0 0.0
    %1255 = vmatprep.subr.mxu0 0.0
    %1256 = vmatpush2.msra.mxu0 0.0
    %1257 = vmatprep.subr.mxu0 0.0
    %1258 = vmatpush2.msra.mxu0 0.0
    %1259 = vmatprep.subr.mxu0 0.0
    %1260 = vmatpush2.msra.mxu0 0.0
    %1261 = vmatprep.subr.mxu0 0.0
    %1262 = vmatpush2.msra.mxu0 0.0
    %1263 = vmatprep.subr.mxu0 0.0
    %1264 = vmatpush2.msra.mxu0 0.0
    %1265 = vmatprep.mubr.f32.mxu0 0.0
    %1266 = vmatmul.mubr.f32.gmra.mxu0 %v1199
    %v1267 = vpop.f32.mrf.mxu0
    %v1268 = vadd.f32 0.0, %v1267
    %v1269 = vpop.f32.mrf.mxu0
    %1270 = vdwg.mxu0
    %v1271 = vadd.f32 %v287, %v888
    %v1272 = vadd.f32 %v1271, %v1268
    %v1273 = vsel %vm320, %v807, 0.0
    %v1274 = vadd.f32 %v1272, %v1273
    %v1275 = vmul.f32 %v1274, %v44
    %v1276 = vtanh.pop %v1275
    %v1277 = vmul.f32 %v1276, %v45
    %v1278 = vadd.f32 %v1277, %v47
    %v1279 = vmul.f32 %v1278, %v807
    %1281 = vrot.lane.b32.xlu0 %v1278, 96
    %v1282 = vpop.permute.xlu0 %1281
    %v1284 = vmul.f32 %v1278, %v1282
    %1286 = vrot.lane.b32.xlu0 %v1284, 96
    %v1287 = vpop.permute.xlu0 %1286
    %v1289 = vadd.f32 %v1279, %v1287
    %v1290 = vtanh.pop %v1289
    %1292 = vrot.lane.b32.xlu0 %v1290, 96
    %v1293 = vpop.permute.xlu0 %1292
    %v1295 = vmul.f32 %v1278, %v1293
    %1297 = vrot.lane.b32.xlu0 %v1295, 32
    %v1298 = vpop.permute.xlu0 %1297
    %s1300 = scalar_lea.vmem [#allocation2], 8
    %1301 = vst.msk [vmem:[%s1300] sm:$0xff] %vm320, %v1298
    %v1302 = vsel %vm320, %v1298, 0
    %1304 = vmatprep.subr.mxu0 0.0
    %1305 = vmatpush1.msra.mxu0 0.0
    %1306 = vmatprep.subr.mxu0 0.0
    %1307 = vmatpush1.msra.mxu0 0.0
    %1308 = vmatprep.subr.mxu0 0.0
    %1309 = vmatpush1.msra.mxu0 0.0
    %1310 = vmatprep.subr.mxu0 0.0
    %1311 = vmatpush1.msra.mxu0 0.0
    %1312 = vmatprep.subr.mxu0 0.0
    %1313 = vmatpush1.msra.mxu0 0.0
    %1314 = vmatprep.subr.mxu0 0.0
    %1315 = vmatpush1.msra.mxu0 0.0
    %1316 = vmatprep.subr.mxu0 0.0
    %1317 = vmatpush1.msra.mxu0 0.0
    %1318 = vmatprep.subr.mxu0 0.0
    %1319 = vmatpush1.msra.mxu0 0.0
    %1320 = vmatprep.subr.mxu0 0.0
    %1321 = vmatpush1.msra.mxu0 0.0
    %1322 = vmatprep.subr.mxu0 0.0
    %1323 = vmatpush1.msra.mxu0 0.0
    %1324 = vmatprep.subr.mxu0 0.0
    %1325 = vmatpush1.msra.mxu0 0.0
    %1326 = vmatprep.subr.mxu0 0.0
    %1327 = vmatpush1.msra.mxu0 0.0
    %1328 = vmatprep.subr.mxu0 %v23
    %1329 = vmatpush1.msra.mxu0 %v22
    %1330 = vmatprep.subr.mxu0 %v21
    %1331 = vmatpush1.msra.mxu0 %v20
    %1332 = vmatprep.subr.mxu0 %v19
    %1333 = vmatpush1.msra.mxu0 %v18
    %1334 = vmatprep.subr.mxu0 %v17
    %1335 = vmatpush1.msra.mxu0 %v16
    %1336 = vmatprep.subr.mxu0 0.0
    %1337 = vmatpush2.msra.mxu0 0.0
    %1338 = vmatprep.subr.mxu0 0.0
    %1339 = vmatpush2.msra.mxu0 0.0
    %1340 = vmatprep.subr.mxu0 0.0
    %1341 = vmatpush2.msra.mxu0 0.0
    %1342 = vmatprep.subr.mxu0 0.0
    %1343 = vmatpush2.msra.mxu0 0.0
    %1344 = vmatprep.subr.mxu0 0.0
    %1345 = vmatpush2.msra.mxu0 0.0
    %1346 = vmatprep.subr.mxu0 0.0
    %1347 = vmatpush2.msra.mxu0 0.0
    %1348 = vmatprep.subr.mxu0 0.0
    %1349 = vmatpush2.msra.mxu0 0.0
    %1350 = vmatprep.subr.mxu0 0.0
    %1351 = vmatpush2.msra.mxu0 0.0
    %1352 = vmatprep.subr.mxu0 0.0
    %1353 = vmatpush2.msra.mxu0 0.0
    %1354 = vmatprep.subr.mxu0 0.0
    %1355 = vmatpush2.msra.mxu0 0.0
    %1356 = vmatprep.subr.mxu0 0.0
    %1357 = vmatpush2.msra.mxu0 0.0
    %1358 = vmatprep.subr.mxu0 0.0
    %1359 = vmatpush2.msra.mxu0 0.0
    %1360 = vmatprep.subr.mxu0 0.0
    %1361 = vmatpush2.msra.mxu0 0.0
    %1362 = vmatprep.subr.mxu0 0.0
    %1363 = vmatpush2.msra.mxu0 0.0
    %1364 = vmatprep.subr.mxu0 0.0
    %1365 = vmatpush2.msra.mxu0 0.0
    %1366 = vmatprep.subr.mxu0 0.0
    %1367 = vmatpush2.msra.mxu0 0.0
    %1368 = vmatprep.mubr.f32.mxu0 0.0
    %1369 = vmatmul.mubr.f32.gmra.mxu0 %v1302
    %v1370 = vpop.f32.mrf.mxu0
    %v1371 = vadd.f32 0.0, %v1370
    %v1372 = vpop.f32.mrf.mxu0
    %v1373 = vadd.f32 0.0, %v1372
    %1374 = vdwg.mxu0
    %v1375 = vadd.f32 %v158, %v1373
    %v1376 = vmul.f32 %v1375, %v1375
    %v1377 = vadd.f32 %v1376, 1.0
    %v1378 = vrsqrt.pop %v1377
    %v1379 = vadd.f32 %v1378, 1.0
    %v1380 = vmul.f32 %v1379, 0.5
    %v1381 = vrsqrt.pop %v1380
    %v1382 = vmul.f32 %v1380, %v1381
    %vm1383 = vcmp.eq.f32.partialorder %v1380, inf
    %v1384 = vsel %vm1383, %v1380, %v1382
    %vm1385 = vcmp.eq.f32.partialorder %v1380, 0.0
    %v1386 = vand.u32 %v1380, 2147483648
    %v1387 = vsel %vm1385, %v1386, %v1384
    %vm1388 = vcmp.ge.f32.partialorder %v1375, 0.0
    %v1389 = vsel %vm1388, 1.0, -1.0
    %v1390 = vsub.f32 1.0, %v1378
    %v1391 = vmul.f32 %v1390, 0.5
    %v1392 = vrsqrt.pop %v1391
    %v1393 = vmul.f32 %v1391, %v1392
    %vm1394 = vcmp.eq.f32.partialorder %v1391, inf
    %v1395 = vsel %vm1394, %v1391, %v1393
    %vm1396 = vcmp.eq.f32.partialorder %v1391, 0.0
    %v1397 = vand.u32 %v1391, 2147483648
    %v1398 = vsel %vm1396, %v1397, %v1395
    %v1399 = vmul.f32 %v1389, %v1398
    %v1400 = vmul.f32 %v1376, %v1376
    %v1401 = vadd.f32 %v1400, 1.0
    %v1402 = vrsqrt.pop %v1401
    %v1403 = vadd.f32 %v1402, 1.0
    %v1404 = vmul.f32 %v1403, 0.5
    %v1405 = vrsqrt.pop %v1404
    %v1406 = vmul.f32 %v1404, %v1405
    %vm1407 = vcmp.eq.f32.partialorder %v1404, inf
    %v1408 = vsel %vm1407, %v1404, %v1406
    %vm1409 = vcmp.eq.f32.partialorder %v1404, 0.0
    %v1410 = vand.u32 %v1404, 2147483648
    %v1411 = vsel %vm1409, %v1410, %v1408
    %v1412 = vsub.f32 1.0, %v1402
    %v1413 = vmul.f32 %v1412, 0.5
    %v1414 = vrsqrt.pop %v1413
    %v1415 = vmul.f32 %v1413, %v1414
    %vm1416 = vcmp.eq.f32.partialorder %v1413, inf
    %v1417 = vsel %vm1416, %v1413, %v1415
    %vm1418 = vcmp.eq.f32.partialorder %v1413, 0.0
    %v1419 = vand.u32 %v1413, 2147483648
    %v1420 = vsel %vm1418, %v1419, %v1417
    %v1421 = vsub.f32 %v1387, %v1399
    %v1422 = vmul.f32 %v1421, 0.70710677
    %v1423 = vadd.f32 %v1387, %v1399
    %v1424 = vmul.f32 %v1423, 0.70710677
    %v1425 = vmul.f32 %v1422, %v1411
    %v1426 = vmul.f32 %v1422, %v1420
    %v1427 = vsub.f32 0.0, %v1426
    %v1428 = vmul.f32 %v1424, %v1411
    %v1429 = vmul.f32 %v1424, %v1420
    %v1430 = vsub.f32 %v1428, %v1425
    %1432 = vset.pattern.permute.xlu0 0
    %1433 = vperm.xlu0 %1432, %v1430
    %v1434 = vpop.permute.xlu0 %1433
    %v1436 = vmul.f32 %v1434, %v459
    %1438 = vset.pattern.permute.xlu0 0
    %1439 = vperm.xlu0 %1438, %v1425
    %v1440 = vpop.permute.xlu0 %1439
    %v1442 = vadd.f32 %v1440, %v1436
    %v1443 = vsub.f32 %v1429, %v1427
    %1445 = vset.pattern.permute.xlu0 0
    %1446 = vperm.xlu0 %1445, %v1443
    %v1447 = vpop.permute.xlu0 %1446
    %v1449 = vmul.f32 %v1447, %v459
    %1451 = vset.pattern.permute.xlu0 0
    %1452 = vperm.xlu0 %1451, %v1427
    %v1453 = vpop.permute.xlu0 %1452
    %v1455 = vadd.f32 %v1453, %v1449
    %1456 = vset.pattern.permute.xlu0 1
    %1457 = vperm.xlu0 %1456, %v1430
    %v1458 = vpop.permute.xlu0 %1457
    %v1460 = vmul.f32 %v1458, %v487
    %1461 = vset.pattern.permute.xlu0 1
    %1462 = vperm.xlu0 %1461, %v1425
    %v1463 = vpop.permute.xlu0 %1462
    %v1465 = vadd.f32 %v1463, %v1460
    %1466 = vset.pattern.permute.xlu0 1
    %1467 = vperm.xlu0 %1466, %v1443
    %v1468 = vpop.permute.xlu0 %1467
    %v1470 = vmul.f32 %v1468, %v487
    %1471 = vset.pattern.permute.xlu0 1
    %1472 = vperm.xlu0 %1471, %v1427
    %v1473 = vpop.permute.xlu0 %1472
    %v1475 = vadd.f32 %v1473, %v1470
    %v1476 = vmul.f32 %v1442, %v1465
    %v1477 = vmul.f32 %v1455, %v1475
    %v1478 = vsub.f32 %v1476, %v1477
    %v1479 = vmul.f32 %v1442, %v1475
    %v1480 = vmul.f32 %v1455, %v1465
    %v1481 = vadd.f32 %v1479, %v1480
    %1482 = vset.pattern.permute.xlu0 2
    %1483 = vperm.xlu0 %1482, %v1430
    %v1484 = vpop.permute.xlu0 %1483
    %v1486 = vmul.f32 %v1484, %v517
    %1487 = vset.pattern.permute.xlu0 2
    %1488 = vperm.xlu0 %1487, %v1425
    %v1489 = vpop.permute.xlu0 %1488
    %v1491 = vadd.f32 %v1489, %v1486
    %1492 = vset.pattern.permute.xlu0 2
    %1493 = vperm.xlu0 %1492, %v1443
    %v1494 = vpop.permute.xlu0 %1493
    %v1496 = vmul.f32 %v1494, %v517
    %1497 = vset.pattern.permute.xlu0 2
    %1498 = vperm.xlu0 %1497, %v1427
    %v1499 = vpop.permute.xlu0 %1498
    %v1501 = vadd.f32 %v1499, %v1496
    %v1502 = vmul.f32 %v1478, %v1491
    %v1503 = vmul.f32 %v1481, %v1501
    %v1504 = vsub.f32 %v1502, %v1503
    %v1505 = vmul.f32 %v1478, %v1501
    %v1506 = vmul.f32 %v1481, %v1491
    %v1507 = vadd.f32 %v1505, %v1506
    %1508 = vset.pattern.permute.xlu0 3
    %1509 = vperm.xlu0 %1508, %v1430
    %v1510 = vpop.permute.xlu0 %1509
    %v1512 = vmul.f32 %v1510, %v547
    %1513 = vset.pattern.permute.xlu0 3
    %1514 = vperm.xlu0 %1513, %v1425
    %v1515 = vpop.permute.xlu0 %1514
    %v1517 = vadd.f32 %v1515, %v1512
    %1518 = vset.pattern.permute.xlu0 3
    %1519 = vperm.xlu0 %1518, %v1443
    %v1520 = vpop.permute.xlu0 %1519
    %v1522 = vmul.f32 %v1520, %v547
    %1523 = vset.pattern.permute.xlu0 3
    %1524 = vperm.xlu0 %1523, %v1427
    %v1525 = vpop.permute.xlu0 %1524
    %v1527 = vadd.f32 %v1525, %v1522
    %v1528 = vmul.f32 %v1504, %v1517
    %v1529 = vmul.f32 %v1507, %v1527
    %v1530 = vsub.f32 %v1528, %v1529
    %v1531 = vmul.f32 %v1504, %v1527
    %v1532 = vmul.f32 %v1507, %v1517
    %v1533 = vadd.f32 %v1531, %v1532
    %v1535 = vsel %vm56, %v1533, 0
    %1537 = vmatprep.subr.mxu0 0.0
    %1538 = vmatpush1.msra.mxu0 0.0
    %1539 = vmatprep.subr.mxu0 0.0
    %1540 = vmatpush1.msra.mxu0 0.0
    %1541 = vmatprep.subr.mxu0 0.0
    %1542 = vmatpush1.msra.mxu0 0.0
    %1543 = vmatprep.subr.mxu0 0.0
    %1544 = vmatpush1.msra.mxu0 0.0
    %1545 = vmatprep.subr.mxu0 0.0
    %1546 = vmatpush1.msra.mxu0 0.0
    %1547 = vmatprep.subr.mxu0 0.0
    %1548 = vmatpush1.msra.mxu0 0.0
    %1549 = vmatprep.subr.mxu0 0.0
    %1550 = vmatpush1.msra.mxu0 0.0
    %1551 = vmatprep.subr.mxu0 0.0
    %1552 = vmatpush1.msra.mxu0 0.0
    %1553 = vmatprep.subr.mxu0 0.0
    %1554 = vmatpush1.msra.mxu0 0.0
    %1555 = vmatprep.subr.mxu0 0.0
    %1556 = vmatpush1.msra.mxu0 0.0
    %1557 = vmatprep.subr.mxu0 0.0
    %1558 = vmatpush1.msra.mxu0 0.0
    %1559 = vmatprep.subr.mxu0 0.0
    %1560 = vmatpush1.msra.mxu0 0.0
    %1561 = vmatprep.subr.mxu0 0.0
    %1562 = vmatpush1.msra.mxu0 0.0
    %1563 = vmatprep.subr.mxu0 0.0
    %1564 = vmatpush1.msra.mxu0 0.0
    %1565 = vmatprep.subr.mxu0 0.0
    %1566 = vmatpush1.msra.mxu0 %v33
    %1567 = vmatprep.subr.mxu0 0.0
    %1568 = vmatpush1.msra.mxu0 %v32
    %1569 = vmatprep.subr.mxu0 0.0
    %1570 = vmatpush2.msra.mxu0 0.0
    %1571 = vmatprep.subr.mxu0 0.0
    %1572 = vmatpush2.msra.mxu0 0.0
    %1573 = vmatprep.subr.mxu0 0.0
    %1574 = vmatpush2.msra.mxu0 0.0
    %1575 = vmatprep.subr.mxu0 0.0
    %1576 = vmatpush2.msra.mxu0 0.0
    %1577 = vmatprep.subr.mxu0 0.0
    %1578 = vmatpush2.msra.mxu0 0.0
    %1579 = vmatprep.subr.mxu0 0.0
    %1580 = vmatpush2.msra.mxu0 0.0
    %1581 = vmatprep.subr.mxu0 0.0
    %1582 = vmatpush2.msra.mxu0 0.0
    %1583 = vmatprep.subr.mxu0 0.0
    %1584 = vmatpush2.msra.mxu0 0.0
    %1585 = vmatprep.subr.mxu0 0.0
    %1586 = vmatpush2.msra.mxu0 0.0
    %1587 = vmatprep.subr.mxu0 0.0
    %1588 = vmatpush2.msra.mxu0 0.0
    %1589 = vmatprep.subr.mxu0 0.0
    %1590 = vmatpush2.msra.mxu0 0.0
    %1591 = vmatprep.subr.mxu0 0.0
    %1592 = vmatpush2.msra.mxu0 0.0
    %1593 = vmatprep.subr.mxu0 0.0
    %1594 = vmatpush2.msra.mxu0 0.0
    %1595 = vmatprep.subr.mxu0 0.0
    %1596 = vmatpush2.msra.mxu0 0.0
    %1597 = vmatprep.subr.mxu0 0.0
    %1598 = vmatpush2.msra.mxu0 0.0
    %1599 = vmatprep.subr.mxu0 0.0
    %1600 = vmatpush2.msra.mxu0 0.0
    %1601 = vmatprep.mubr.f32.mxu0 0.0
    %1602 = vmatmul.mubr.f32.gmra.mxu0 %v1535
    %v1603 = vpop.f32.mrf.mxu0
    %v1604 = vadd.f32 0.0, %v1603
    %v1605 = vpop.f32.mrf.mxu0
    %1606 = vdwg.mxu0
    %v1608 = vsel %vm56, %v1530, 0
    %1610 = vmatprep.subr.mxu0 0.0
    %1611 = vmatpush1.msra.mxu0 0.0
    %1612 = vmatprep.subr.mxu0 0.0
    %1613 = vmatpush1.msra.mxu0 0.0
    %1614 = vmatprep.subr.mxu0 0.0
    %1615 = vmatpush1.msra.mxu0 0.0
    %1616 = vmatprep.subr.mxu0 0.0
    %1617 = vmatpush1.msra.mxu0 0.0
    %1618 = vmatprep.subr.mxu0 0.0
    %1619 = vmatpush1.msra.mxu0 0.0
    %1620 = vmatprep.subr.mxu0 0.0
    %1621 = vmatpush1.msra.mxu0 0.0
    %1622 = vmatprep.subr.mxu0 0.0
    %1623 = vmatpush1.msra.mxu0 0.0
    %1624 = vmatprep.subr.mxu0 0.0
    %1625 = vmatpush1.msra.mxu0 0.0
    %1626 = vmatprep.subr.mxu0 0.0
    %1627 = vmatpush1.msra.mxu0 0.0
    %1628 = vmatprep.subr.mxu0 0.0
    %1629 = vmatpush1.msra.mxu0 0.0
    %1630 = vmatprep.subr.mxu0 0.0
    %1631 = vmatpush1.msra.mxu0 0.0
    %1632 = vmatprep.subr.mxu0 0.0
    %1633 = vmatpush1.msra.mxu0 0.0
    %1634 = vmatprep.subr.mxu0 0.0
    %1635 = vmatpush1.msra.mxu0 0.0
    %1636 = vmatprep.subr.mxu0 0.0
    %1637 = vmatpush1.msra.mxu0 0.0
    %1638 = vmatprep.subr.mxu0 0.0
    %1639 = vmatpush1.msra.mxu0 %v31
    %1640 = vmatprep.subr.mxu0 0.0
    %1641 = vmatpush1.msra.mxu0 %v30
    %1642 = vmatprep.subr.mxu0 0.0
    %1643 = vmatpush2.msra.mxu0 0.0
    %1644 = vmatprep.subr.mxu0 0.0
    %1645 = vmatpush2.msra.mxu0 0.0
    %1646 = vmatprep.subr.mxu0 0.0
    %1647 = vmatpush2.msra.mxu0 0.0
    %1648 = vmatprep.subr.mxu0 0.0
    %1649 = vmatpush2.msra.mxu0 0.0
    %1650 = vmatprep.subr.mxu0 0.0
    %1651 = vmatpush2.msra.mxu0 0.0
    %1652 = vmatprep.subr.mxu0 0.0
    %1653 = vmatpush2.msra.mxu0 0.0
    %1654 = vmatprep.subr.mxu0 0.0
    %1655 = vmatpush2.msra.mxu0 0.0
    %1656 = vmatprep.subr.mxu0 0.0
    %1657 = vmatpush2.msra.mxu0 0.0
    %1658 = vmatprep.subr.mxu0 0.0
    %1659 = vmatpush2.msra.mxu0 0.0
    %1660 = vmatprep.subr.mxu0 0.0
    %1661 = vmatpush2.msra.mxu0 0.0
    %1662 = vmatprep.subr.mxu0 0.0
    %1663 = vmatpush2.msra.mxu0 0.0
    %1664 = vmatprep.subr.mxu0 0.0
    %1665 = vmatpush2.msra.mxu0 0.0
    %1666 = vmatprep.subr.mxu0 0.0
    %1667 = vmatpush2.msra.mxu0 0.0
    %1668 = vmatprep.subr.mxu0 0.0
    %1669 = vmatpush2.msra.mxu0 0.0
    %1670 = vmatprep.subr.mxu0 0.0
    %1671 = vmatpush2.msra.mxu0 0.0
    %1672 = vmatprep.subr.mxu0 0.0
    %1673 = vmatpush2.msra.mxu0 0.0
    %1674 = vmatprep.mubr.f32.mxu0 0.0
    %1675 = vmatmul.mubr.f32.gmra.mxu0 %v1608
    %v1676 = vpop.f32.mrf.mxu0
    %v1677 = vadd.f32 %v1604, %v1676
    %v1678 = vpop.f32.mrf.mxu0
    %1679 = vdwg.mxu0
    %v1680 = vmul.f32 %v1677, %v1677
    %v1682 = vsel %vm320, %v1680, 0
    %1684 = vmatprep.subr.mxu0 0.0
    %1685 = vmatpush1.msra.mxu0 0.0
    %1686 = vmatprep.subr.mxu0 0.0
    %1687 = vmatpush1.msra.mxu0 0.0
    %1688 = vmatprep.subr.mxu0 0.0
    %1689 = vmatpush1.msra.mxu0 0.0
    %1690 = vmatprep.subr.mxu0 0.0
    %1691 = vmatpush1.msra.mxu0 0.0
    %1692 = vmatprep.subr.mxu0 0.0
    %1693 = vmatpush1.msra.mxu0 0.0
    %1694 = vmatprep.subr.mxu0 0.0
    %1695 = vmatpush1.msra.mxu0 0.0
    %1696 = vmatprep.subr.mxu0 0.0
    %1697 = vmatpush1.msra.mxu0 0.0
    %1698 = vmatprep.subr.mxu0 0.0
    %1699 = vmatpush1.msra.mxu0 0.0
    %1700 = vmatprep.subr.mxu0 0.0
    %1701 = vmatpush1.msra.mxu0 0.0
    %1702 = vmatprep.subr.mxu0 0.0
    %1703 = vmatpush1.msra.mxu0 0.0
    %1704 = vmatprep.subr.mxu0 0.0
    %1705 = vmatpush1.msra.mxu0 0.0
    %1706 = vmatprep.subr.mxu0 0.0
    %1707 = vmatpush1.msra.mxu0 0.0
    %1708 = vmatprep.subr.mxu0 0.0
    %1709 = vmatpush1.msra.mxu0 %v29
    %1710 = vmatprep.subr.mxu0 0.0
    %1711 = vmatpush1.msra.mxu0 %v28
    %1712 = vmatprep.subr.mxu0 0.0
    %1713 = vmatpush1.msra.mxu0 %v27
    %1714 = vmatprep.subr.mxu0 0.0
    %1715 = vmatpush1.msra.mxu0 %v26
    %1716 = vmatprep.subr.mxu0 0.0
    %1717 = vmatpush2.msra.mxu0 0.0
    %1718 = vmatprep.subr.mxu0 0.0
    %1719 = vmatpush2.msra.mxu0 0.0
    %1720 = vmatprep.subr.mxu0 0.0
    %1721 = vmatpush2.msra.mxu0 0.0
    %1722 = vmatprep.subr.mxu0 0.0
    %1723 = vmatpush2.msra.mxu0 0.0
    %1724 = vmatprep.subr.mxu0 0.0
    %1725 = vmatpush2.msra.mxu0 0.0
    %1726 = vmatprep.subr.mxu0 0.0
    %1727 = vmatpush2.msra.mxu0 0.0
    %1728 = vmatprep.subr.mxu0 0.0
    %1729 = vmatpush2.msra.mxu0 0.0
    %1730 = vmatprep.subr.mxu0 0.0
    %1731 = vmatpush2.msra.mxu0 0.0
    %1732 = vmatprep.subr.mxu0 0.0
    %1733 = vmatpush2.msra.mxu0 0.0
    %1734 = vmatprep.subr.mxu0 0.0
    %1735 = vmatpush2.msra.mxu0 0.0
    %1736 = vmatprep.subr.mxu0 0.0
    %1737 = vmatpush2.msra.mxu0 0.0
    %1738 = vmatprep.subr.mxu0 0.0
    %1739 = vmatpush2.msra.mxu0 0.0
    %1740 = vmatprep.subr.mxu0 0.0
    %1741 = vmatpush2.msra.mxu0 0.0
    %1742 = vmatprep.subr.mxu0 0.0
    %1743 = vmatpush2.msra.mxu0 0.0
    %1744 = vmatprep.subr.mxu0 0.0
    %1745 = vmatpush2.msra.mxu0 0.0
    %1746 = vmatprep.subr.mxu0 0.0
    %1747 = vmatpush2.msra.mxu0 0.0
    %1748 = vmatprep.mubr.f32.mxu0 0.0
    %1749 = vmatmul.mubr.f32.gmra.mxu0 %v1682
    %v1750 = vpop.f32.mrf.mxu0
    %v1751 = vadd.f32 0.0, %v1750
    %v1752 = vpop.f32.mrf.mxu0
    %1753 = vdwg.mxu0
    %v1754 = vadd.f32 %v292, %v1371
    %v1755 = vadd.f32 %v1754, %v1751
    %v1756 = vsel %vm320, %v1289, 0.0
    %v1757 = vadd.f32 %v1755, %v1756
    %v1758 = vmul.f32 %v1757, %v44
    %v1759 = vtanh.pop %v1758
    %v1760 = vmul.f32 %v1759, %v45
    %v1761 = vadd.f32 %v1760, %v47
    %v1762 = vmul.f32 %v1761, %v1289
    %1764 = vrot.lane.b32.xlu0 %v1761, 96
    %v1765 = vpop.permute.xlu0 %1764
    %v1767 = vmul.f32 %v1761, %v1765
    %1769 = vrot.lane.b32.xlu0 %v1767, 96
    %v1770 = vpop.permute.xlu0 %1769
    %v1772 = vadd.f32 %v1762, %v1770
    %v1773 = vtanh.pop %v1772
    %1775 = vrot.lane.b32.xlu0 %v1773, 96
    %v1776 = vpop.permute.xlu0 %1775
    %v1778 = vmul.f32 %v1761, %v1776
    %1780 = vrot.lane.b32.xlu0 %v1778, 32
    %v1781 = vpop.permute.xlu0 %1780
    %s1783 = scalar_lea.vmem [#allocation2], 16
    %1784 = vst.msk [vmem:[%s1783] sm:$0xff] %vm320, %v1781
    %v1785 = vsel %vm320, %v1781, 0
    %1787 = vmatprep.subr.mxu0 0.0
    %1788 = vmatpush1.msra.mxu0 0.0
    %1789 = vmatprep.subr.mxu0 0.0
    %1790 = vmatpush1.msra.mxu0 0.0
    %1791 = vmatprep.subr.mxu0 0.0
    %1792 = vmatpush1.msra.mxu0 0.0
    %1793 = vmatprep.subr.mxu0 0.0
    %1794 = vmatpush1.msra.mxu0 0.0
    %1795 = vmatprep.subr.mxu0 0.0
    %1796 = vmatpush1.msra.mxu0 0.0
    %1797 = vmatprep.subr.mxu0 0.0
    %1798 = vmatpush1.msra.mxu0 0.0
    %1799 = vmatprep.subr.mxu0 0.0
    %1800 = vmatpush1.msra.mxu0 0.0
    %1801 = vmatprep.subr.mxu0 0.0
    %1802 = vmatpush1.msra.mxu0 0.0
    %1803 = vmatprep.subr.mxu0 0.0
    %1804 = vmatpush1.msra.mxu0 0.0
    %1805 = vmatprep.subr.mxu0 0.0
    %1806 = vmatpush1.msra.mxu0 0.0
    %1807 = vmatprep.subr.mxu0 0.0
    %1808 = vmatpush1.msra.mxu0 0.0
    %1809 = vmatprep.subr.mxu0 0.0
    %1810 = vmatpush1.msra.mxu0 0.0
    %1811 = vmatprep.subr.mxu0 %v23
    %1812 = vmatpush1.msra.mxu0 %v22
    %1813 = vmatprep.subr.mxu0 %v21
    %1814 = vmatpush1.msra.mxu0 %v20
    %1815 = vmatprep.subr.mxu0 %v19
    %1816 = vmatpush1.msra.mxu0 %v18
    %1817 = vmatprep.subr.mxu0 %v17
    %1818 = vmatpush1.msra.mxu0 %v16
    %1819 = vmatprep.subr.mxu0 0.0
    %1820 = vmatpush2.msra.mxu0 0.0
    %1821 = vmatprep.subr.mxu0 0.0
    %1822 = vmatpush2.msra.mxu0 0.0
    %1823 = vmatprep.subr.mxu0 0.0
    %1824 = vmatpush2.msra.mxu0 0.0
    %1825 = vmatprep.subr.mxu0 0.0
    %1826 = vmatpush2.msra.mxu0 0.0
    %1827 = vmatprep.subr.mxu0 0.0
    %1828 = vmatpush2.msra.mxu0 0.0
    %1829 = vmatprep.subr.mxu0 0.0
    %1830 = vmatpush2.msra.mxu0 0.0
    %1831 = vmatprep.subr.mxu0 0.0
    %1832 = vmatpush2.msra.mxu0 0.0
    %1833 = vmatprep.subr.mxu0 0.0
    %1834 = vmatpush2.msra.mxu0 0.0
    %1835 = vmatprep.subr.mxu0 0.0
    %1836 = vmatpush2.msra.mxu0 0.0
    %1837 = vmatprep.subr.mxu0 0.0
    %1838 = vmatpush2.msra.mxu0 0.0
    %1839 = vmatprep.subr.mxu0 0.0
    %1840 = vmatpush2.msra.mxu0 0.0
    %1841 = vmatprep.subr.mxu0 0.0
    %1842 = vmatpush2.msra.mxu0 0.0
    %1843 = vmatprep.subr.mxu0 0.0
    %1844 = vmatpush2.msra.mxu0 0.0
    %1845 = vmatprep.subr.mxu0 0.0
    %1846 = vmatpush2.msra.mxu0 0.0
    %1847 = vmatprep.subr.mxu0 0.0
    %1848 = vmatpush2.msra.mxu0 0.0
    %1849 = vmatprep.subr.mxu0 0.0
    %1850 = vmatpush2.msra.mxu0 0.0
    %1851 = vmatprep.mubr.f32.mxu0 0.0
    %1852 = vmatmul.mubr.f32.gmra.mxu0 %v1785
    %v1853 = vpop.f32.mrf.mxu0
    %v1854 = vadd.f32 0.0, %v1853
    %v1855 = vpop.f32.mrf.mxu0
    %v1856 = vadd.f32 0.0, %v1855
    %1857 = vdwg.mxu0
    %v1858 = vadd.f32 %v163, %v1856
    %v1859 = vmul.f32 %v1858, %v1858
    %v1860 = vadd.f32 %v1859, 1.0
    %v1861 = vrsqrt.pop %v1860
    %v1862 = vadd.f32 %v1861, 1.0
    %v1863 = vmul.f32 %v1862, 0.5
    %v1864 = vrsqrt.pop %v1863
    %v1865 = vmul.f32 %v1863, %v1864
    %vm1866 = vcmp.eq.f32.partialorder %v1863, inf
    %v1867 = vsel %vm1866, %v1863, %v1865
    %vm1868 = vcmp.eq.f32.partialorder %v1863, 0.0
    %v1869 = vand.u32 %v1863, 2147483648
    %v1870 = vsel %vm1868, %v1869, %v1867
    %vm1871 = vcmp.ge.f32.partialorder %v1858, 0.0
    %v1872 = vsel %vm1871, 1.0, -1.0
    %v1873 = vsub.f32 1.0, %v1861
    %v1874 = vmul.f32 %v1873, 0.5
    %v1875 = vrsqrt.pop %v1874
    %v1876 = vmul.f32 %v1874, %v1875
    %vm1877 = vcmp.eq.f32.partialorder %v1874, inf
    %v1878 = vsel %vm1877, %v1874, %v1876
    %vm1879 = vcmp.eq.f32.partialorder %v1874, 0.0
    %v1880 = vand.u32 %v1874, 2147483648
    %v1881 = vsel %vm1879, %v1880, %v1878
    %v1882 = vmul.f32 %v1872, %v1881
    %v1883 = vmul.f32 %v1859, %v1859
    %v1884 = vadd.f32 %v1883, 1.0
    %v1885 = vrsqrt.pop %v1884
    %v1886 = vadd.f32 %v1885, 1.0
    %v1887 = vmul.f32 %v1886, 0.5
    %v1888 = vrsqrt.pop %v1887
    %v1889 = vmul.f32 %v1887, %v1888
    %vm1890 = vcmp.eq.f32.partialorder %v1887, inf
    %v1891 = vsel %vm1890, %v1887, %v1889
    %vm1892 = vcmp.eq.f32.partialorder %v1887, 0.0
    %v1893 = vand.u32 %v1887, 2147483648
    %v1894 = vsel %vm1892, %v1893, %v1891
    %v1895 = vsub.f32 1.0, %v1885
    %v1896 = vmul.f32 %v1895, 0.5
    %v1897 = vrsqrt.pop %v1896
    %v1898 = vmul.f32 %v1896, %v1897
    %vm1899 = vcmp.eq.f32.partialorder %v1896, inf
    %v1900 = vsel %vm1899, %v1896, %v1898
    %vm1901 = vcmp.eq.f32.partialorder %v1896, 0.0
    %v1902 = vand.u32 %v1896, 2147483648
    %v1903 = vsel %vm1901, %v1902, %v1900
    %v1904 = vsub.f32 %v1870, %v1882
    %v1905 = vmul.f32 %v1904, 0.70710677
    %v1906 = vadd.f32 %v1870, %v1882
    %v1907 = vmul.f32 %v1906, 0.70710677
    %v1908 = vmul.f32 %v1905, %v1894
    %v1909 = vmul.f32 %v1905, %v1903
    %v1910 = vsub.f32 0.0, %v1909
    %v1911 = vmul.f32 %v1907, %v1894
    %v1912 = vmul.f32 %v1907, %v1903
    %v1913 = vsub.f32 %v1911, %v1908
    %1915 = vset.pattern.permute.xlu0 0
    %1916 = vperm.xlu0 %1915, %v1913
    %v1917 = vpop.permute.xlu0 %1916
    %v1919 = vmul.f32 %v1917, %v459
    %1921 = vset.pattern.permute.xlu0 0
    %1922 = vperm.xlu0 %1921, %v1908
    %v1923 = vpop.permute.xlu0 %1922
    %v1925 = vadd.f32 %v1923, %v1919
    %v1926 = vsub.f32 %v1912, %v1910
    %1928 = vset.pattern.permute.xlu0 0
    %1929 = vperm.xlu0 %1928, %v1926
    %v1930 = vpop.permute.xlu0 %1929
    %v1932 = vmul.f32 %v1930, %v459
    %1934 = vset.pattern.permute.xlu0 0
    %1935 = vperm.xlu0 %1934, %v1910
    %v1936 = vpop.permute.xlu0 %1935
    %v1938 = vadd.f32 %v1936, %v1932
    %1939 = vset.pattern.permute.xlu0 1
    %1940 = vperm.xlu0 %1939, %v1913
    %v1941 = vpop.permute.xlu0 %1940
    %v1943 = vmul.f32 %v1941, %v487
    %1944 = vset.pattern.permute.xlu0 1
    %1945 = vperm.xlu0 %1944, %v1908
    %v1946 = vpop.permute.xlu0 %1945
    %v1948 = vadd.f32 %v1946, %v1943
    %1949 = vset.pattern.permute.xlu0 1
    %1950 = vperm.xlu0 %1949, %v1926
    %v1951 = vpop.permute.xlu0 %1950
    %v1953 = vmul.f32 %v1951, %v487
    %1954 = vset.pattern.permute.xlu0 1
    %1955 = vperm.xlu0 %1954, %v1910
    %v1956 = vpop.permute.xlu0 %1955
    %v1958 = vadd.f32 %v1956, %v1953
    %v1959 = vmul.f32 %v1925, %v1948
    %v1960 = vmul.f32 %v1938, %v1958
    %v1961 = vsub.f32 %v1959, %v1960
    %v1962 = vmul.f32 %v1925, %v1958
    %v1963 = vmul.f32 %v1938, %v1948
    %v1964 = vadd.f32 %v1962, %v1963
    %1965 = vset.pattern.permute.xlu0 2
    %1966 = vperm.xlu0 %1965, %v1913
    %v1967 = vpop.permute.xlu0 %1966
    %v1969 = vmul.f32 %v1967, %v517
    %1970 = vset.pattern.permute.xlu0 2
    %1971 = vperm.xlu0 %1970, %v1908
    %v1972 = vpop.permute.xlu0 %1971
    %v1974 = vadd.f32 %v1972, %v1969
    %1975 = vset.pattern.permute.xlu0 2
    %1976 = vperm.xlu0 %1975, %v1926
    %v1977 = vpop.permute.xlu0 %1976
    %v1979 = vmul.f32 %v1977, %v517
    %1980 = vset.pattern.permute.xlu0 2
    %1981 = vperm.xlu0 %1980, %v1910
    %v1982 = vpop.permute.xlu0 %1981
    %v1984 = vadd.f32 %v1982, %v1979
    %v1985 = vmul.f32 %v1961, %v1974
    %v1986 = vmul.f32 %v1964, %v1984
    %v1987 = vsub.f32 %v1985, %v1986
    %v1988 = vmul.f32 %v1961, %v1984
    %v1989 = vmul.f32 %v1964, %v1974
    %v1990 = vadd.f32 %v1988, %v1989
    %1991 = vset.pattern.permute.xlu0 3
    %1992 = vperm.xlu0 %1991, %v1913
    %v1993 = vpop.permute.xlu0 %1992
    %v1995 = vmul.f32 %v1993, %v547
    %1996 = vset.pattern.permute.xlu0 3
    %1997 = vperm.xlu0 %1996, %v1908
    %v1998 = vpop.permute.xlu0 %1997
    %v2000 = vadd.f32 %v1998, %v1995
    %2001 = vset.pattern.permute.xlu0 3
    %2002 = vperm.xlu0 %2001, %v1926
    %v2003 = vpop.permute.xlu0 %2002
    %v2005 = vmul.f32 %v2003, %v547
    %2006 = vset.pattern.permute.xlu0 3
    %2007 = vperm.xlu0 %2006, %v1910
    %v2008 = vpop.permute.xlu0 %2007
    %v2010 = vadd.f32 %v2008, %v2005
    %v2011 = vmul.f32 %v1987, %v2000
    %v2012 = vmul.f32 %v1990, %v2010
    %v2013 = vsub.f32 %v2011, %v2012
    %v2014 = vmul.f32 %v1987, %v2010
    %v2015 = vmul.f32 %v1990, %v2000
    %v2016 = vadd.f32 %v2014, %v2015
    %v2018 = vsel %vm56, %v2016, 0
    %2020 = vmatprep.subr.mxu0 0.0
    %2021 = vmatpush1.msra.mxu0 0.0
    %2022 = vmatprep.subr.mxu0 0.0
    %2023 = vmatpush1.msra.mxu0 0.0
    %2024 = vmatprep.subr.mxu0 0.0
    %2025 = vmatpush1.msra.mxu0 0.0
    %2026 = vmatprep.subr.mxu0 0.0
    %2027 = vmatpush1.msra.mxu0 0.0
    %2028 = vmatprep.subr.mxu0 0.0
    %2029 = vmatpush1.msra.mxu0 0.0
    %2030 = vmatprep.subr.mxu0 0.0
    %2031 = vmatpush1.msra.mxu0 0.0
    %2032 = vmatprep.subr.mxu0 0.0
    %2033 = vmatpush1.msra.mxu0 0.0
    %2034 = vmatprep.subr.mxu0 0.0
    %2035 = vmatpush1.msra.mxu0 0.0
    %2036 = vmatprep.subr.mxu0 0.0
    %2037 = vmatpush1.msra.mxu0 0.0
    %2038 = vmatprep.subr.mxu0 0.0
    %2039 = vmatpush1.msra.mxu0 0.0
    %2040 = vmatprep.subr.mxu0 0.0
    %2041 = vmatpush1.msra.mxu0 0.0
    %2042 = vmatprep.subr.mxu0 0.0
    %2043 = vmatpush1.msra.mxu0 0.0
    %2044 = vmatprep.subr.mxu0 0.0
    %2045 = vmatpush1.msra.mxu0 0.0
    %2046 = vmatprep.subr.mxu0 0.0
    %2047 = vmatpush1.msra.mxu0 0.0
    %2048 = vmatprep.subr.mxu0 0.0
    %2049 = vmatpush1.msra.mxu0 %v33
    %2050 = vmatprep.subr.mxu0 0.0
    %2051 = vmatpush1.msra.mxu0 %v32
    %2052 = vmatprep.subr.mxu0 0.0
    %2053 = vmatpush2.msra.mxu0 0.0
    %2054 = vmatprep.subr.mxu0 0.0
    %2055 = vmatpush2.msra.mxu0 0.0
    %2056 = vmatprep.subr.mxu0 0.0
    %2057 = vmatpush2.msra.mxu0 0.0
    %2058 = vmatprep.subr.mxu0 0.0
    %2059 = vmatpush2.msra.mxu0 0.0
    %2060 = vmatprep.subr.mxu0 0.0
    %2061 = vmatpush2.msra.mxu0 0.0
    %2062 = vmatprep.subr.mxu0 0.0
    %2063 = vmatpush2.msra.mxu0 0.0
    %2064 = vmatprep.subr.mxu0 0.0
    %2065 = vmatpush2.msra.mxu0 0.0
    %2066 = vmatprep.subr.mxu0 0.0
    %2067 = vmatpush2.msra.mxu0 0.0
    %2068 = vmatprep.subr.mxu0 0.0
    %2069 = vmatpush2.msra.mxu0 0.0
    %2070 = vmatprep.subr.mxu0 0.0
    %2071 = vmatpush2.msra.mxu0 0.0
    %2072 = vmatprep.subr.mxu0 0.0
    %2073 = vmatpush2.msra.mxu0 0.0
    %2074 = vmatprep.subr.mxu0 0.0
    %2075 = vmatpush2.msra.mxu0 0.0
    %2076 = vmatprep.subr.mxu0 0.0
    %2077 = vmatpush2.msra.mxu0 0.0
    %2078 = vmatprep.subr.mxu0 0.0
    %2079 = vmatpush2.msra.mxu0 0.0
    %2080 = vmatprep.subr.mxu0 0.0
    %2081 = vmatpush2.msra.mxu0 0.0
    %2082 = vmatprep.subr.mxu0 0.0
    %2083 = vmatpush2.msra.mxu0 0.0
    %2084 = vmatprep.mubr.f32.mxu0 0.0
    %2085 = vmatmul.mubr.f32.gmra.mxu0 %v2018
    %v2086 = vpop.f32.mrf.mxu0
    %v2087 = vadd.f32 0.0, %v2086
    %v2088 = vpop.f32.mrf.mxu0
    %2089 = vdwg.mxu0
    %v2091 = vsel %vm56, %v2013, 0
    %2093 = vmatprep.subr.mxu0 0.0
    %2094 = vmatpush1.msra.mxu0 0.0
    %2095 = vmatprep.subr.mxu0 0.0
    %2096 = vmatpush1.msra.mxu0 0.0
    %2097 = vmatprep.subr.mxu0 0.0
    %2098 = vmatpush1.msra.mxu0 0.0
    %2099 = vmatprep.subr.mxu0 0.0
    %2100 = vmatpush1.msra.mxu0 0.0
    %2101 = vmatprep.subr.mxu0 0.0
    %2102 = vmatpush1.msra.mxu0 0.0
    %2103 = vmatprep.subr.mxu0 0.0
    %2104 = vmatpush1.msra.mxu0 0.0
    %2105 = vmatprep.subr.mxu0 0.0
    %2106 = vmatpush1.msra.mxu0 0.0
    %2107 = vmatprep.subr.mxu0 0.0
    %2108 = vmatpush1.msra.mxu0 0.0
    %2109 = vmatprep.subr.mxu0 0.0
    %2110 = vmatpush1.msra.mxu0 0.0
    %2111 = vmatprep.subr.mxu0 0.0
    %2112 = vmatpush1.msra.mxu0 0.0
    %2113 = vmatprep.subr.mxu0 0.0
    %2114 = vmatpush1.msra.mxu0 0.0
    %2115 = vmatprep.subr.mxu0 0.0
    %2116 = vmatpush1.msra.mxu0 0.0
    %2117 = vmatprep.subr.mxu0 0.0
    %2118 = vmatpush1.msra.mxu0 0.0
    %2119 = vmatprep.subr.mxu0 0.0
    %2120 = vmatpush1.msra.mxu0 0.0
    %2121 = vmatprep.subr.mxu0 0.0
    %2122 = vmatpush1.msra.mxu0 %v31
    %2123 = vmatprep.subr.mxu0 0.0
    %2124 = vmatpush1.msra.mxu0 %v30
    %2125 = vmatprep.subr.mxu0 0.0
    %2126 = vmatpush2.msra.mxu0 0.0
    %2127 = vmatprep.subr.mxu0 0.0
    %2128 = vmatpush2.msra.mxu0 0.0
    %2129 = vmatprep.subr.mxu0 0.0
    %2130 = vmatpush2.msra.mxu0 0.0
    %2131 = vmatprep.subr.mxu0 0.0
    %2132 = vmatpush2.msra.mxu0 0.0
    %2133 = vmatprep.subr.mxu0 0.0
    %2134 = vmatpush2.msra.mxu0 0.0
    %2135 = vmatprep.subr.mxu0 0.0
    %2136 = vmatpush2.msra.mxu0 0.0
    %2137 = vmatprep.subr.mxu0 0.0
    %2138 = vmatpush2.msra.mxu0 0.0
    %2139 = vmatprep.subr.mxu0 0.0
    %2140 = vmatpush2.msra.mxu0 0.0
    %2141 = vmatprep.subr.mxu0 0.0
    %2142 = vmatpush2.msra.mxu0 0.0
    %2143 = vmatprep.subr.mxu0 0.0
    %2144 = vmatpush2.msra.mxu0 0.0
    %2145 = vmatprep.subr.mxu0 0.0
    %2146 = vmatpush2.msra.mxu0 0.0
    %2147 = vmatprep.subr.mxu0 0.0
    %2148 = vmatpush2.msra.mxu0 0.0
    %2149 = vmatprep.subr.mxu0 0.0
    %2150 = vmatpush2.msra.mxu0 0.0
    %2151 = vmatprep.subr.mxu0 0.0
    %2152 = vmatpush2.msra.mxu0 0.0
    %2153 = vmatprep.subr.mxu0 0.0
    %2154 = vmatpush2.msra.mxu0 0.0
    %2155 = vmatprep.subr.mxu0 0.0
    %2156 = vmatpush2.msra.mxu0 0.0
    %2157 = vmatprep.mubr.f32.mxu0 0.0
    %2158 = vmatmul.mubr.f32.gmra.mxu0 %v2091
    %v2159 = vpop.f32.mrf.mxu0
    %v2160 = vadd.f32 %v2087, %v2159
    %v2161 = vpop.f32.mrf.mxu0
    %2162 = vdwg.mxu0
    %v2163 = vmul.f32 %v2160, %v2160
    %v2165 = vsel %vm320, %v2163, 0
    %2167 = vmatprep.subr.mxu0 0.0
    %2168 = vmatpush1.msra.mxu0 0.0
    %2169 = vmatprep.subr.mxu0 0.0
    %2170 = vmatpush1.msra.mxu0 0.0
    %2171 = vmatprep.subr.mxu0 0.0
    %2172 = vmatpush1.msra.mxu0 0.0
    %2173 = vmatprep.subr.mxu0 0.0
    %2174 = vmatpush1.msra.mxu0 0.0
    %2175 = vmatprep.subr.mxu0 0.0
    %2176 = vmatpush1.msra.mxu0 0.0
    %2177 = vmatprep.subr.mxu0 0.0
    %2178 = vmatpush1.msra.mxu0 0.0
    %2179 = vmatprep.subr.mxu0 0.0
    %2180 = vmatpush1.msra.mxu0 0.0
    %2181 = vmatprep.subr.mxu0 0.0
    %2182 = vmatpush1.msra.mxu0 0.0
    %2183 = vmatprep.subr.mxu0 0.0
    %2184 = vmatpush1.msra.mxu0 0.0
    %2185 = vmatprep.subr.mxu0 0.0
    %2186 = vmatpush1.msra.mxu0 0.0
    %2187 = vmatprep.subr.mxu0 0.0
    %2188 = vmatpush1.msra.mxu0 0.0
    %2189 = vmatprep.subr.mxu0 0.0
    %2190 = vmatpush1.msra.mxu0 0.0
    %2191 = vmatprep.subr.mxu0 0.0
    %2192 = vmatpush1.msra.mxu0 %v29
    %2193 = vmatprep.subr.mxu0 0.0
    %2194 = vmatpush1.msra.mxu0 %v28
    %2195 = vmatprep.subr.mxu0 0.0
    %2196 = vmatpush1.msra.mxu0 %v27
    %2197 = vmatprep.subr.mxu0 0.0
    %2198 = vmatpush1.msra.mxu0 %v26
    %2199 = vmatprep.subr.mxu0 0.0
    %2200 = vmatpush2.msra.mxu0 0.0
    %2201 = vmatprep.subr.mxu0 0.0
    %2202 = vmatpush2.msra.mxu0 0.0
    %2203 = vmatprep.subr.mxu0 0.0
    %2204 = vmatpush2.msra.mxu0 0.0
    %2205 = vmatprep.subr.mxu0 0.0
    %2206 = vmatpush2.msra.mxu0 0.0
    %2207 = vmatprep.subr.mxu0 0.0
    %2208 = vmatpush2.msra.mxu0 0.0
    %2209 = vmatprep.subr.mxu0 0.0
    %2210 = vmatpush2.msra.mxu0 0.0
    %2211 = vmatprep.subr.mxu0 0.0
    %2212 = vmatpush2.msra.mxu0 0.0
    %2213 = vmatprep.subr.mxu0 0.0
    %2214 = vmatpush2.msra.mxu0 0.0
    %2215 = vmatprep.subr.mxu0 0.0
    %2216 = vmatpush2.msra.mxu0 0.0
    %2217 = vmatprep.subr.mxu0 0.0
    %2218 = vmatpush2.msra.mxu0 0.0
    %2219 = vmatprep.subr.mxu0 0.0
    %2220 = vmatpush2.msra.mxu0 0.0
    %2221 = vmatprep.subr.mxu0 0.0
    %2222 = vmatpush2.msra.mxu0 0.0
    %2223 = vmatprep.subr.mxu0 0.0
    %2224 = vmatpush2.msra.mxu0 0.0
    %2225 = vmatprep.subr.mxu0 0.0
    %2226 = vmatpush2.msra.mxu0 0.0
    %2227 = vmatprep.subr.mxu0 0.0
    %2228 = vmatpush2.msra.mxu0 0.0
    %2229 = vmatprep.subr.mxu0 0.0
    %2230 = vmatpush2.msra.mxu0 0.0
    %2231 = vmatprep.mubr.f32.mxu0 0.0
    %2232 = vmatmul.mubr.f32.gmra.mxu0 %v2165
    %v2233 = vpop.f32.mrf.mxu0
    %v2234 = vadd.f32 0.0, %v2233
    %v2235 = vpop.f32.mrf.mxu0
    %2236 = vdwg.mxu0
    %v2237 = vadd.f32 %v297, %v1854
    %v2238 = vadd.f32 %v2237, %v2234
    %v2239 = vsel %vm320, %v1772, 0.0
    %v2240 = vadd.f32 %v2238, %v2239
    %v2241 = vmul.f32 %v2240, %v44
    %v2242 = vtanh.pop %v2241
    %v2243 = vmul.f32 %v2242, %v45
    %v2244 = vadd.f32 %v2243, %v47
    %v2245 = vmul.f32 %v2244, %v1772
    %2247 = vrot.lane.b32.xlu0 %v2244, 96
    %v2248 = vpop.permute.xlu0 %2247
    %v2250 = vmul.f32 %v2244, %v2248
    %2252 = vrot.lane.b32.xlu0 %v2250, 96
    %v2253 = vpop.permute.xlu0 %2252
    %v2255 = vadd.f32 %v2245, %v2253
    %v2256 = vtanh.pop %v2255
    %2258 = vrot.lane.b32.xlu0 %v2256, 96
    %v2259 = vpop.permute.xlu0 %2258
    %v2261 = vmul.f32 %v2244, %v2259
    %2263 = vrot.lane.b32.xlu0 %v2261, 32
    %v2264 = vpop.permute.xlu0 %2263
    %s2266 = scalar_lea.vmem [#allocation2], 24
    %2267 = vst.msk [vmem:[%s2266] sm:$0xff] %vm320, %v2264
    %v2268 = vsel %vm320, %v2264, 0
    %2270 = vmatprep.subr.mxu0 0.0
    %2271 = vmatpush1.msra.mxu0 0.0
    %2272 = vmatprep.subr.mxu0 0.0
    %2273 = vmatpush1.msra.mxu0 0.0
    %2274 = vmatprep.subr.mxu0 0.0
    %2275 = vmatpush1.msra.mxu0 0.0
    %2276 = vmatprep.subr.mxu0 0.0
    %2277 = vmatpush1.msra.mxu0 0.0
    %2278 = vmatprep.subr.mxu0 0.0
    %2279 = vmatpush1.msra.mxu0 0.0
    %2280 = vmatprep.subr.mxu0 0.0
    %2281 = vmatpush1.msra.mxu0 0.0
    %2282 = vmatprep.subr.mxu0 0.0
    %2283 = vmatpush1.msra.mxu0 0.0
    %2284 = vmatprep.subr.mxu0 0.0
    %2285 = vmatpush1.msra.mxu0 0.0
    %2286 = vmatprep.subr.mxu0 0.0
    %2287 = vmatpush1.msra.mxu0 0.0
    %2288 = vmatprep.subr.mxu0 0.0
    %2289 = vmatpush1.msra.mxu0 0.0
    %2290 = vmatprep.subr.mxu0 0.0
    %2291 = vmatpush1.msra.mxu0 0.0
    %2292 = vmatprep.subr.mxu0 0.0
    %2293 = vmatpush1.msra.mxu0 0.0
    %2294 = vmatprep.subr.mxu0 %v23
    %2295 = vmatpush1.msra.mxu0 %v22
    %2296 = vmatprep.subr.mxu0 %v21
    %2297 = vmatpush1.msra.mxu0 %v20
    %2298 = vmatprep.subr.mxu0 %v19
    %2299 = vmatpush1.msra.mxu0 %v18
    %2300 = vmatprep.subr.mxu0 %v17
    %2301 = vmatpush1.msra.mxu0 %v16
    %2302 = vmatprep.subr.mxu0 0.0
    %2303 = vmatpush2.msra.mxu0 0.0
    %2304 = vmatprep.subr.mxu0 0.0
    %2305 = vmatpush2.msra.mxu0 0.0
    %2306 = vmatprep.subr.mxu0 0.0
    %2307 = vmatpush2.msra.mxu0 0.0
    %2308 = vmatprep.subr.mxu0 0.0
    %2309 = vmatpush2.msra.mxu0 0.0
    %2310 = vmatprep.subr.mxu0 0.0
    %2311 = vmatpush2.msra.mxu0 0.0
    %2312 = vmatprep.subr.mxu0 0.0
    %2313 = vmatpush2.msra.mxu0 0.0
    %2314 = vmatprep.subr.mxu0 0.0
    %2315 = vmatpush2.msra.mxu0 0.0
    %2316 = vmatprep.subr.mxu0 0.0
    %2317 = vmatpush2.msra.mxu0 0.0
    %2318 = vmatprep.subr.mxu0 0.0
    %2319 = vmatpush2.msra.mxu0 0.0
    %2320 = vmatprep.subr.mxu0 0.0
    %2321 = vmatpush2.msra.mxu0 0.0
    %2322 = vmatprep.subr.mxu0 0.0
    %2323 = vmatpush2.msra.mxu0 0.0
    %2324 = vmatprep.subr.mxu0 0.0
    %2325 = vmatpush2.msra.mxu0 0.0
    %2326 = vmatprep.subr.mxu0 0.0
    %2327 = vmatpush2.msra.mxu0 0.0
    %2328 = vmatprep.subr.mxu0 0.0
    %2329 = vmatpush2.msra.mxu0 0.0
    %2330 = vmatprep.subr.mxu0 0.0
    %2331 = vmatpush2.msra.mxu0 0.0
    %2332 = vmatprep.subr.mxu0 0.0
    %2333 = vmatpush2.msra.mxu0 0.0
    %2334 = vmatprep.mubr.f32.mxu0 0.0
    %2335 = vmatmul.mubr.f32.gmra.mxu0 %v2268
    %v2336 = vpop.f32.mrf.mxu0
    %v2337 = vadd.f32 0.0, %v2336
    %v2338 = vpop.f32.mrf.mxu0
    %v2339 = vadd.f32 0.0, %v2338
    %2340 = vdwg.mxu0
    %v2341 = vadd.f32 %v168, %v2339
    %v2342 = vmul.f32 %v2341, %v2341
    %v2343 = vadd.f32 %v2342, 1.0
    %v2344 = vrsqrt.pop %v2343
    %v2345 = vadd.f32 %v2344, 1.0
    %v2346 = vmul.f32 %v2345, 0.5
    %v2347 = vrsqrt.pop %v2346
    %v2348 = vmul.f32 %v2346, %v2347
    %vm2349 = vcmp.eq.f32.partialorder %v2346, inf
    %v2350 = vsel %vm2349, %v2346, %v2348
    %vm2351 = vcmp.eq.f32.partialorder %v2346, 0.0
    %v2352 = vand.u32 %v2346, 2147483648
    %v2353 = vsel %vm2351, %v2352, %v2350
    %vm2354 = vcmp.ge.f32.partialorder %v2341, 0.0
    %v2355 = vsel %vm2354, 1.0, -1.0
    %v2356 = vsub.f32 1.0, %v2344
    %v2357 = vmul.f32 %v2356, 0.5
    %v2358 = vrsqrt.pop %v2357
    %v2359 = vmul.f32 %v2357, %v2358
    %vm2360 = vcmp.eq.f32.partialorder %v2357, inf
    %v2361 = vsel %vm2360, %v2357, %v2359
    %vm2362 = vcmp.eq.f32.partialorder %v2357, 0.0
    %v2363 = vand.u32 %v2357, 2147483648
    %v2364 = vsel %vm2362, %v2363, %v2361
    %v2365 = vmul.f32 %v2355, %v2364
    %v2366 = vmul.f32 %v2342, %v2342
    %v2367 = vadd.f32 %v2366, 1.0
    %v2368 = vrsqrt.pop %v2367
    %v2369 = vadd.f32 %v2368, 1.0
    %v2370 = vmul.f32 %v2369, 0.5
    %v2371 = vrsqrt.pop %v2370
    %v2372 = vmul.f32 %v2370, %v2371
    %vm2373 = vcmp.eq.f32.partialorder %v2370, inf
    %v2374 = vsel %vm2373, %v2370, %v2372
    %vm2375 = vcmp.eq.f32.partialorder %v2370, 0.0
    %v2376 = vand.u32 %v2370, 2147483648
    %v2377 = vsel %vm2375, %v2376, %v2374
    %v2378 = vsub.f32 1.0, %v2368
    %v2379 = vmul.f32 %v2378, 0.5
    %v2380 = vrsqrt.pop %v2379
    %v2381 = vmul.f32 %v2379, %v2380
    %vm2382 = vcmp.eq.f32.partialorder %v2379, inf
    %v2383 = vsel %vm2382, %v2379, %v2381
    %vm2384 = vcmp.eq.f32.partialorder %v2379, 0.0
    %v2385 = vand.u32 %v2379, 2147483648
    %v2386 = vsel %vm2384, %v2385, %v2383
    %v2387 = vsub.f32 %v2353, %v2365
    %v2388 = vmul.f32 %v2387, 0.70710677
    %v2389 = vadd.f32 %v2353, %v2365
    %v2390 = vmul.f32 %v2389, 0.70710677
    %v2391 = vmul.f32 %v2388, %v2377
    %v2392 = vmul.f32 %v2388, %v2386
    %v2393 = vsub.f32 0.0, %v2392
    %v2394 = vmul.f32 %v2390, %v2377
    %v2395 = vmul.f32 %v2390, %v2386
    %v2396 = vsub.f32 %v2394, %v2391
    %2398 = vset.pattern.permute.xlu0 0
    %2399 = vperm.xlu0 %2398, %v2396
    %v2400 = vpop.permute.xlu0 %2399
    %v2402 = vmul.f32 %v2400, %v459
    %2404 = vset.pattern.permute.xlu0 0
    %2405 = vperm.xlu0 %2404, %v2391
    %v2406 = vpop.permute.xlu0 %2405
    %v2408 = vadd.f32 %v2406, %v2402
    %v2409 = vsub.f32 %v2395, %v2393
    %2411 = vset.pattern.permute.xlu0 0
    %2412 = vperm.xlu0 %2411, %v2409
    %v2413 = vpop.permute.xlu0 %2412
    %v2415 = vmul.f32 %v2413, %v459
    %2417 = vset.pattern.permute.xlu0 0
    %2418 = vperm.xlu0 %2417, %v2393
    %v2419 = vpop.permute.xlu0 %2418
    %v2421 = vadd.f32 %v2419, %v2415
    %2422 = vset.pattern.permute.xlu0 1
    %2423 = vperm.xlu0 %2422, %v2396
    %v2424 = vpop.permute.xlu0 %2423
    %v2426 = vmul.f32 %v2424, %v487
    %2427 = vset.pattern.permute.xlu0 1
    %2428 = vperm.xlu0 %2427, %v2391
    %v2429 = vpop.permute.xlu0 %2428
    %v2431 = vadd.f32 %v2429, %v2426
    %2432 = vset.pattern.permute.xlu0 1
    %2433 = vperm.xlu0 %2432, %v2409
    %v2434 = vpop.permute.xlu0 %2433
    %v2436 = vmul.f32 %v2434, %v487
    %2437 = vset.pattern.permute.xlu0 1
    %2438 = vperm.xlu0 %2437, %v2393
    %v2439 = vpop.permute.xlu0 %2438
    %v2441 = vadd.f32 %v2439, %v2436
    %v2442 = vmul.f32 %v2408, %v2431
    %v2443 = vmul.f32 %v2421, %v2441
    %v2444 = vsub.f32 %v2442, %v2443
    %v2445 = vmul.f32 %v2408, %v2441
    %v2446 = vmul.f32 %v2421, %v2431
    %v2447 = vadd.f32 %v2445, %v2446
    %2448 = vset.pattern.permute.xlu0 2
    %2449 = vperm.xlu0 %2448, %v2396
    %v2450 = vpop.permute.xlu0 %2449
    %v2452 = vmul.f32 %v2450, %v517
    %2453 = vset.pattern.permute.xlu0 2
    %2454 = vperm.xlu0 %2453, %v2391
    %v2455 = vpop.permute.xlu0 %2454
    %v2457 = vadd.f32 %v2455, %v2452
    %2458 = vset.pattern.permute.xlu0 2
    %2459 = vperm.xlu0 %2458, %v2409
    %v2460 = vpop.permute.xlu0 %2459
    %v2462 = vmul.f32 %v2460, %v517
    %2463 = vset.pattern.permute.xlu0 2
    %2464 = vperm.xlu0 %2463, %v2393
    %v2465 = vpop.permute.xlu0 %2464
    %v2467 = vadd.f32 %v2465, %v2462
    %v2468 = vmul.f32 %v2444, %v2457
    %v2469 = vmul.f32 %v2447, %v2467
    %v2470 = vsub.f32 %v2468, %v2469
    %v2471 = vmul.f32 %v2444, %v2467
    %v2472 = vmul.f32 %v2447, %v2457
    %v2473 = vadd.f32 %v2471, %v2472
    %2474 = vset.pattern.permute.xlu0 3
    %2475 = vperm.xlu0 %2474, %v2396
    %v2476 = vpop.permute.xlu0 %2475
    %v2478 = vmul.f32 %v2476, %v547
    %2479 = vset.pattern.permute.xlu0 3
    %2480 = vperm.xlu0 %2479, %v2391
    %v2481 = vpop.permute.xlu0 %2480
    %v2483 = vadd.f32 %v2481, %v2478
    %2484 = vset.pattern.permute.xlu0 3
    %2485 = vperm.xlu0 %2484, %v2409
    %v2486 = vpop.permute.xlu0 %2485
    %v2488 = vmul.f32 %v2486, %v547
    %2489 = vset.pattern.permute.xlu0 3
    %2490 = vperm.xlu0 %2489, %v2393
    %v2491 = vpop.permute.xlu0 %2490
    %v2493 = vadd.f32 %v2491, %v2488
    %v2494 = vmul.f32 %v2470, %v2483
    %v2495 = vmul.f32 %v2473, %v2493
    %v2496 = vsub.f32 %v2494, %v2495
    %v2497 = vmul.f32 %v2470, %v2493
    %v2498 = vmul.f32 %v2473, %v2483
    %v2499 = vadd.f32 %v2497, %v2498
    %v2501 = vsel %vm56, %v2499, 0
    %2503 = vmatprep.subr.mxu0 0.0
    %2504 = vmatpush1.msra.mxu0 0.0
    %2505 = vmatprep.subr.mxu0 0.0
    %2506 = vmatpush1.msra.mxu0 0.0
    %2507 = vmatprep.subr.mxu0 0.0
    %2508 = vmatpush1.msra.mxu0 0.0
    %2509 = vmatprep.subr.mxu0 0.0
    %2510 = vmatpush1.msra.mxu0 0.0
    %2511 = vmatprep.subr.mxu0 0.0
    %2512 = vmatpush1.msra.mxu0 0.0
    %2513 = vmatprep.subr.mxu0 0.0
    %2514 = vmatpush1.msra.mxu0 0.0
    %2515 = vmatprep.subr.mxu0 0.0
    %2516 = vmatpush1.msra.mxu0 0.0
    %2517 = vmatprep.subr.mxu0 0.0
    %2518 = vmatpush1.msra.mxu0 0.0
    %2519 = vmatprep.subr.mxu0 0.0
    %2520 = vmatpush1.msra.mxu0 0.0
    %2521 = vmatprep.subr.mxu0 0.0
    %2522 = vmatpush1.msra.mxu0 0.0
    %2523 = vmatprep.subr.mxu0 0.0
    %2524 = vmatpush1.msra.mxu0 0.0
    %2525 = vmatprep.subr.mxu0 0.0
    %2526 = vmatpush1.msra.mxu0 0.0
    %2527 = vmatprep.subr.mxu0 0.0
    %2528 = vmatpush1.msra.mxu0 0.0
    %2529 = vmatprep.subr.mxu0 0.0
    %2530 = vmatpush1.msra.mxu0 0.0
    %2531 = vmatprep.subr.mxu0 0.0
    %2532 = vmatpush1.msra.mxu0 %v33
    %2533 = vmatprep.subr.mxu0 0.0
    %2534 = vmatpush1.msra.mxu0 %v32
    %2535 = vmatprep.subr.mxu0 0.0
    %2536 = vmatpush2.msra.mxu0 0.0
    %2537 = vmatprep.subr.mxu0 0.0
    %2538 = vmatpush2.msra.mxu0 0.0
    %2539 = vmatprep.subr.mxu0 0.0
    %2540 = vmatpush2.msra.mxu0 0.0
    %2541 = vmatprep.subr.mxu0 0.0
    %2542 = vmatpush2.msra.mxu0 0.0
    %2543 = vmatprep.subr.mxu0 0.0
    %2544 = vmatpush2.msra.mxu0 0.0
    %2545 = vmatprep.subr.mxu0 0.0
    %2546 = vmatpush2.msra.mxu0 0.0
    %2547 = vmatprep.subr.mxu0 0.0
    %2548 = vmatpush2.msra.mxu0 0.0
    %2549 = vmatprep.subr.mxu0 0.0
    %2550 = vmatpush2.msra.mxu0 0.0
    %2551 = vmatprep.subr.mxu0 0.0
    %2552 = vmatpush2.msra.mxu0 0.0
    %2553 = vmatprep.subr.mxu0 0.0
    %2554 = vmatpush2.msra.mxu0 0.0
    %2555 = vmatprep.subr.mxu0 0.0
    %2556 = vmatpush2.msra.mxu0 0.0
    %2557 = vmatprep.subr.mxu0 0.0
    %2558 = vmatpush2.msra.mxu0 0.0
    %2559 = vmatprep.subr.mxu0 0.0
    %2560 = vmatpush2.msra.mxu0 0.0
    %2561 = vmatprep.subr.mxu0 0.0
    %2562 = vmatpush2.msra.mxu0 0.0
    %2563 = vmatprep.subr.mxu0 0.0
    %2564 = vmatpush2.msra.mxu0 0.0
    %2565 = vmatprep.subr.mxu0 0.0
    %2566 = vmatpush2.msra.mxu0 0.0
    %2567 = vmatprep.mubr.f32.mxu0 0.0
    %2568 = vmatmul.mubr.f32.gmra.mxu0 %v2501
    %v2569 = vpop.f32.mrf.mxu0
    %v2570 = vadd.f32 0.0, %v2569
    %v2571 = vpop.f32.mrf.mxu0
    %2572 = vdwg.mxu0
    %v2574 = vsel %vm56, %v2496, 0
    %2576 = vmatprep.subr.mxu0 0.0
    %2577 = vmatpush1.msra.mxu0 0.0
    %2578 = vmatprep.subr.mxu0 0.0
    %2579 = vmatpush1.msra.mxu0 0.0
    %2580 = vmatprep.subr.mxu0 0.0
    %2581 = vmatpush1.msra.mxu0 0.0
    %2582 = vmatprep.subr.mxu0 0.0
    %2583 = vmatpush1.msra.mxu0 0.0
    %2584 = vmatprep.subr.mxu0 0.0
    %2585 = vmatpush1.msra.mxu0 0.0
    %2586 = vmatprep.subr.mxu0 0.0
    %2587 = vmatpush1.msra.mxu0 0.0
    %2588 = vmatprep.subr.mxu0 0.0
    %2589 = vmatpush1.msra.mxu0 0.0
    %2590 = vmatprep.subr.mxu0 0.0
    %2591 = vmatpush1.msra.mxu0 0.0
    %2592 = vmatprep.subr.mxu0 0.0
    %2593 = vmatpush1.msra.mxu0 0.0
    %2594 = vmatprep.subr.mxu0 0.0
    %2595 = vmatpush1.msra.mxu0 0.0
    %2596 = vmatprep.subr.mxu0 0.0
    %2597 = vmatpush1.msra.mxu0 0.0
    %2598 = vmatprep.subr.mxu0 0.0
    %2599 = vmatpush1.msra.mxu0 0.0
    %2600 = vmatprep.subr.mxu0 0.0
    %2601 = vmatpush1.msra.mxu0 0.0
    %2602 = vmatprep.subr.mxu0 0.0
    %2603 = vmatpush1.msra.mxu0 0.0
    %2604 = vmatprep.subr.mxu0 0.0
    %2605 = vmatpush1.msra.mxu0 %v31
    %2606 = vmatprep.subr.mxu0 0.0
    %2607 = vmatpush1.msra.mxu0 %v30
    %2608 = vmatprep.subr.mxu0 0.0
    %2609 = vmatpush2.msra.mxu0 0.0
    %2610 = vmatprep.subr.mxu0 0.0
    %2611 = vmatpush2.msra.mxu0 0.0
    %2612 = vmatprep.subr.mxu0 0.0
    %2613 = vmatpush2.msra.mxu0 0.0
    %2614 = vmatprep.subr.mxu0 0.0
    %2615 = vmatpush2.msra.mxu0 0.0
    %2616 = vmatprep.subr.mxu0 0.0
    %2617 = vmatpush2.msra.mxu0 0.0
    %2618 = vmatprep.subr.mxu0 0.0
    %2619 = vmatpush2.msra.mxu0 0.0
    %2620 = vmatprep.subr.mxu0 0.0
    %2621 = vmatpush2.msra.mxu0 0.0
    %2622 = vmatprep.subr.mxu0 0.0
    %2623 = vmatpush2.msra.mxu0 0.0
    %2624 = vmatprep.subr.mxu0 0.0
    %2625 = vmatpush2.msra.mxu0 0.0
    %2626 = vmatprep.subr.mxu0 0.0
    %2627 = vmatpush2.msra.mxu0 0.0
    %2628 = vmatprep.subr.mxu0 0.0
    %2629 = vmatpush2.msra.mxu0 0.0
    %2630 = vmatprep.subr.mxu0 0.0
    %2631 = vmatpush2.msra.mxu0 0.0
    %2632 = vmatprep.subr.mxu0 0.0
    %2633 = vmatpush2.msra.mxu0 0.0
    %2634 = vmatprep.subr.mxu0 0.0
    %2635 = vmatpush2.msra.mxu0 0.0
    %2636 = vmatprep.subr.mxu0 0.0
    %2637 = vmatpush2.msra.mxu0 0.0
    %2638 = vmatprep.subr.mxu0 0.0
    %2639 = vmatpush2.msra.mxu0 0.0
    %2640 = vmatprep.mubr.f32.mxu0 0.0
    %2641 = vmatmul.mubr.f32.gmra.mxu0 %v2574
    %v2642 = vpop.f32.mrf.mxu0
    %v2643 = vadd.f32 %v2570, %v2642
    %v2644 = vpop.f32.mrf.mxu0
    %2645 = vdwg.mxu0
    %v2646 = vmul.f32 %v2643, %v2643
    %v2648 = vsel %vm320, %v2646, 0
    %2650 = vmatprep.subr.mxu0 0.0
    %2651 = vmatpush1.msra.mxu0 0.0
    %2652 = vmatprep.subr.mxu0 0.0
    %2653 = vmatpush1.msra.mxu0 0.0
    %2654 = vmatprep.subr.mxu0 0.0
    %2655 = vmatpush1.msra.mxu0 0.0
    %2656 = vmatprep.subr.mxu0 0.0
    %2657 = vmatpush1.msra.mxu0 0.0
    %2658 = vmatprep.subr.mxu0 0.0
    %2659 = vmatpush1.msra.mxu0 0.0
    %2660 = vmatprep.subr.mxu0 0.0
    %2661 = vmatpush1.msra.mxu0 0.0
    %2662 = vmatprep.subr.mxu0 0.0
    %2663 = vmatpush1.msra.mxu0 0.0
    %2664 = vmatprep.subr.mxu0 0.0
    %2665 = vmatpush1.msra.mxu0 0.0
    %2666 = vmatprep.subr.mxu0 0.0
    %2667 = vmatpush1.msra.mxu0 0.0
    %2668 = vmatprep.subr.mxu0 0.0
    %2669 = vmatpush1.msra.mxu0 0.0
    %2670 = vmatprep.subr.mxu0 0.0
    %2671 = vmatpush1.msra.mxu0 0.0
    %2672 = vmatprep.subr.mxu0 0.0
    %2673 = vmatpush1.msra.mxu0 0.0
    %2674 = vmatprep.subr.mxu0 0.0
    %2675 = vmatpush1.msra.mxu0 %v29
    %2676 = vmatprep.subr.mxu0 0.0
    %2677 = vmatpush1.msra.mxu0 %v28
    %2678 = vmatprep.subr.mxu0 0.0
    %2679 = vmatpush1.msra.mxu0 %v27
    %2680 = vmatprep.subr.mxu0 0.0
    %2681 = vmatpush1.msra.mxu0 %v26
    %2682 = vmatprep.subr.mxu0 0.0
    %2683 = vmatpush2.msra.mxu0 0.0
    %2684 = vmatprep.subr.mxu0 0.0
    %2685 = vmatpush2.msra.mxu0 0.0
    %2686 = vmatprep.subr.mxu0 0.0
    %2687 = vmatpush2.msra.mxu0 0.0
    %2688 = vmatprep.subr.mxu0 0.0
    %2689 = vmatpush2.msra.mxu0 0.0
    %2690 = vmatprep.subr.mxu0 0.0
    %2691 = vmatpush2.msra.mxu0 0.0
    %2692 = vmatprep.subr.mxu0 0.0
    %2693 = vmatpush2.msra.mxu0 0.0
    %2694 = vmatprep.subr.mxu0 0.0
    %2695 = vmatpush2.msra.mxu0 0.0
    %2696 = vmatprep.subr.mxu0 0.0
    %2697 = vmatpush2.msra.mxu0 0.0
    %2698 = vmatprep.subr.mxu0 0.0
    %2699 = vmatpush2.msra.mxu0 0.0
    %2700 = vmatprep.subr.mxu0 0.0
    %2701 = vmatpush2.msra.mxu0 0.0
    %2702 = vmatprep.subr.mxu0 0.0
    %2703 = vmatpush2.msra.mxu0 0.0
    %2704 = vmatprep.subr.mxu0 0.0
    %2705 = vmatpush2.msra.mxu0 0.0
    %2706 = vmatprep.subr.mxu0 0.0
    %2707 = vmatpush2.msra.mxu0 0.0
    %2708 = vmatprep.subr.mxu0 0.0
    %2709 = vmatpush2.msra.mxu0 0.0
    %2710 = vmatprep.subr.mxu0 0.0
    %2711 = vmatpush2.msra.mxu0 0.0
    %2712 = vmatprep.subr.mxu0 0.0
    %2713 = vmatpush2.msra.mxu0 0.0
    %2714 = vmatprep.mubr.f32.mxu0 0.0
    %2715 = vmatmul.mubr.f32.gmra.mxu0 %v2648
    %v2716 = vpop.f32.mrf.mxu0
    %v2717 = vadd.f32 0.0, %v2716
    %v2718 = vpop.f32.mrf.mxu0
    %2719 = vdwg.mxu0
    %v2720 = vadd.f32 %v302, %v2337
    %v2721 = vadd.f32 %v2720, %v2717
    %v2722 = vsel %vm320, %v2255, 0.0
    %v2723 = vadd.f32 %v2721, %v2722
    %v2724 = vmul.f32 %v2723, %v44
    %v2725 = vtanh.pop %v2724
    %v2726 = vmul.f32 %v2725, %v45
    %v2727 = vadd.f32 %v2726, %v47
    %v2728 = vmul.f32 %v2727, %v2255
    %2730 = vrot.lane.b32.xlu0 %v2727, 96
    %v2731 = vpop.permute.xlu0 %2730
    %v2733 = vmul.f32 %v2727, %v2731
    %2735 = vrot.lane.b32.xlu0 %v2733, 96
    %v2736 = vpop.permute.xlu0 %2735
    %v2738 = vadd.f32 %v2728, %v2736
    %v2739 = vtanh.pop %v2738
    %2741 = vrot.lane.b32.xlu0 %v2739, 96
    %v2742 = vpop.permute.xlu0 %2741
    %v2744 = vmul.f32 %v2727, %v2742
    %2746 = vrot.lane.b32.xlu0 %v2744, 32
    %v2747 = vpop.permute.xlu0 %2746
    %s2749 = scalar_lea.vmem [#allocation2], 32
    %2750 = vst.msk [vmem:[%s2749] sm:$0xff] %vm320, %v2747
    %v2751 = vsel %vm320, %v2747, 0
    %2753 = vmatprep.subr.mxu0 0.0
    %2754 = vmatpush1.msra.mxu0 0.0
    %2755 = vmatprep.subr.mxu0 0.0
    %2756 = vmatpush1.msra.mxu0 0.0
    %2757 = vmatprep.subr.mxu0 0.0
    %2758 = vmatpush1.msra.mxu0 0.0
    %2759 = vmatprep.subr.mxu0 0.0
    %2760 = vmatpush1.msra.mxu0 0.0
    %2761 = vmatprep.subr.mxu0 0.0
    %2762 = vmatpush1.msra.mxu0 0.0
    %2763 = vmatprep.subr.mxu0 0.0
    %2764 = vmatpush1.msra.mxu0 0.0
    %2765 = vmatprep.subr.mxu0 0.0
    %2766 = vmatpush1.msra.mxu0 0.0
    %2767 = vmatprep.subr.mxu0 0.0
    %2768 = vmatpush1.msra.mxu0 0.0
    %2769 = vmatprep.subr.mxu0 0.0
    %2770 = vmatpush1.msra.mxu0 0.0
    %2771 = vmatprep.subr.mxu0 0.0
    %2772 = vmatpush1.msra.mxu0 0.0
    %2773 = vmatprep.subr.mxu0 0.0
    %2774 = vmatpush1.msra.mxu0 0.0
    %2775 = vmatprep.subr.mxu0 0.0
    %2776 = vmatpush1.msra.mxu0 0.0
    %2777 = vmatprep.subr.mxu0 %v23
    %2778 = vmatpush1.msra.mxu0 %v22
    %2779 = vmatprep.subr.mxu0 %v21
    %2780 = vmatpush1.msra.mxu0 %v20
    %2781 = vmatprep.subr.mxu0 %v19
    %2782 = vmatpush1.msra.mxu0 %v18
    %2783 = vmatprep.subr.mxu0 %v17
    %2784 = vmatpush1.msra.mxu0 %v16
    %2785 = vmatprep.subr.mxu0 0.0
    %2786 = vmatpush2.msra.mxu0 0.0
    %2787 = vmatprep.subr.mxu0 0.0
    %2788 = vmatpush2.msra.mxu0 0.0
    %2789 = vmatprep.subr.mxu0 0.0
    %2790 = vmatpush2.msra.mxu0 0.0
    %2791 = vmatprep.subr.mxu0 0.0
    %2792 = vmatpush2.msra.mxu0 0.0
    %2793 = vmatprep.subr.mxu0 0.0
    %2794 = vmatpush2.msra.mxu0 0.0
    %2795 = vmatprep.subr.mxu0 0.0
    %2796 = vmatpush2.msra.mxu0 0.0
    %2797 = vmatprep.subr.mxu0 0.0
    %2798 = vmatpush2.msra.mxu0 0.0
    %2799 = vmatprep.subr.mxu0 0.0
    %2800 = vmatpush2.msra.mxu0 0.0
    %2801 = vmatprep.subr.mxu0 0.0
    %2802 = vmatpush2.msra.mxu0 0.0
    %2803 = vmatprep.subr.mxu0 0.0
    %2804 = vmatpush2.msra.mxu0 0.0
    %2805 = vmatprep.subr.mxu0 0.0
    %2806 = vmatpush2.msra.mxu0 0.0
    %2807 = vmatprep.subr.mxu0 0.0
    %2808 = vmatpush2.msra.mxu0 0.0
    %2809 = vmatprep.subr.mxu0 0.0
    %2810 = vmatpush2.msra.mxu0 0.0
    %2811 = vmatprep.subr.mxu0 0.0
    %2812 = vmatpush2.msra.mxu0 0.0
    %2813 = vmatprep.subr.mxu0 0.0
    %2814 = vmatpush2.msra.mxu0 0.0
    %2815 = vmatprep.subr.mxu0 0.0
    %2816 = vmatpush2.msra.mxu0 0.0
    %2817 = vmatprep.mubr.f32.mxu0 0.0
    %2818 = vmatmul.mubr.f32.gmra.mxu0 %v2751
    %v2819 = vpop.f32.mrf.mxu0
    %v2820 = vadd.f32 0.0, %v2819
    %v2821 = vpop.f32.mrf.mxu0
    %v2822 = vadd.f32 0.0, %v2821
    %2823 = vdwg.mxu0
    %v2824 = vadd.f32 %v173, %v2822
    %v2825 = vmul.f32 %v2824, %v2824
    %v2826 = vadd.f32 %v2825, 1.0
    %v2827 = vrsqrt.pop %v2826
    %v2828 = vadd.f32 %v2827, 1.0
    %v2829 = vmul.f32 %v2828, 0.5
    %v2830 = vrsqrt.pop %v2829
    %v2831 = vmul.f32 %v2829, %v2830
    %vm2832 = vcmp.eq.f32.partialorder %v2829, inf
    %v2833 = vsel %vm2832, %v2829, %v2831
    %vm2834 = vcmp.eq.f32.partialorder %v2829, 0.0
    %v2835 = vand.u32 %v2829, 2147483648
    %v2836 = vsel %vm2834, %v2835, %v2833
    %vm2837 = vcmp.ge.f32.partialorder %v2824, 0.0
    %v2838 = vsel %vm2837, 1.0, -1.0
    %v2839 = vsub.f32 1.0, %v2827
    %v2840 = vmul.f32 %v2839, 0.5
    %v2841 = vrsqrt.pop %v2840
    %v2842 = vmul.f32 %v2840, %v2841
    %vm2843 = vcmp.eq.f32.partialorder %v2840, inf
    %v2844 = vsel %vm2843, %v2840, %v2842
    %vm2845 = vcmp.eq.f32.partialorder %v2840, 0.0
    %v2846 = vand.u32 %v2840, 2147483648
    %v2847 = vsel %vm2845, %v2846, %v2844
    %v2848 = vmul.f32 %v2838, %v2847
    %v2849 = vmul.f32 %v2825, %v2825
    %v2850 = vadd.f32 %v2849, 1.0
    %v2851 = vrsqrt.pop %v2850
    %v2852 = vadd.f32 %v2851, 1.0
    %v2853 = vmul.f32 %v2852, 0.5
    %v2854 = vrsqrt.pop %v2853
    %v2855 = vmul.f32 %v2853, %v2854
    %vm2856 = vcmp.eq.f32.partialorder %v2853, inf
    %v2857 = vsel %vm2856, %v2853, %v2855
    %vm2858 = vcmp.eq.f32.partialorder %v2853, 0.0
    %v2859 = vand.u32 %v2853, 2147483648
    %v2860 = vsel %vm2858, %v2859, %v2857
    %v2861 = vsub.f32 1.0, %v2851
    %v2862 = vmul.f32 %v2861, 0.5
    %v2863 = vrsqrt.pop %v2862
    %v2864 = vmul.f32 %v2862, %v2863
    %vm2865 = vcmp.eq.f32.partialorder %v2862, inf
    %v2866 = vsel %vm2865, %v2862, %v2864
    %vm2867 = vcmp.eq.f32.partialorder %v2862, 0.0
    %v2868 = vand.u32 %v2862, 2147483648
    %v2869 = vsel %vm2867, %v2868, %v2866
    %v2870 = vsub.f32 %v2836, %v2848
    %v2871 = vmul.f32 %v2870, 0.70710677
    %v2872 = vadd.f32 %v2836, %v2848
    %v2873 = vmul.f32 %v2872, 0.70710677
    %v2874 = vmul.f32 %v2871, %v2860
    %v2875 = vmul.f32 %v2871, %v2869
    %v2876 = vsub.f32 0.0, %v2875
    %v2877 = vmul.f32 %v2873, %v2860
    %v2878 = vmul.f32 %v2873, %v2869
    %v2879 = vsub.f32 %v2877, %v2874
    %2881 = vset.pattern.permute.xlu0 0
    %2882 = vperm.xlu0 %2881, %v2879
    %v2883 = vpop.permute.xlu0 %2882
    %v2885 = vmul.f32 %v2883, %v459
    %2887 = vset.pattern.permute.xlu0 0
    %2888 = vperm.xlu0 %2887, %v2874
    %v2889 = vpop.permute.xlu0 %2888
    %v2891 = vadd.f32 %v2889, %v2885
    %v2892 = vsub.f32 %v2878, %v2876
    %2894 = vset.pattern.permute.xlu0 0
    %2895 = vperm.xlu0 %2894, %v2892
    %v2896 = vpop.permute.xlu0 %2895
    %v2898 = vmul.f32 %v2896, %v459
    %2900 = vset.pattern.permute.xlu0 0
    %2901 = vperm.xlu0 %2900, %v2876
    %v2902 = vpop.permute.xlu0 %2901
    %v2904 = vadd.f32 %v2902, %v2898
    %2905 = vset.pattern.permute.xlu0 1
    %2906 = vperm.xlu0 %2905, %v2879
    %v2907 = vpop.permute.xlu0 %2906
    %v2909 = vmul.f32 %v2907, %v487
    %2910 = vset.pattern.permute.xlu0 1
    %2911 = vperm.xlu0 %2910, %v2874
    %v2912 = vpop.permute.xlu0 %2911
    %v2914 = vadd.f32 %v2912, %v2909
    %2915 = vset.pattern.permute.xlu0 1
    %2916 = vperm.xlu0 %2915, %v2892
    %v2917 = vpop.permute.xlu0 %2916
    %v2919 = vmul.f32 %v2917, %v487
    %2920 = vset.pattern.permute.xlu0 1
    %2921 = vperm.xlu0 %2920, %v2876
    %v2922 = vpop.permute.xlu0 %2921
    %v2924 = vadd.f32 %v2922, %v2919
    %v2925 = vmul.f32 %v2891, %v2914
    %v2926 = vmul.f32 %v2904, %v2924
    %v2927 = vsub.f32 %v2925, %v2926
    %v2928 = vmul.f32 %v2891, %v2924
    %v2929 = vmul.f32 %v2904, %v2914
    %v2930 = vadd.f32 %v2928, %v2929
    %2931 = vset.pattern.permute.xlu0 2
    %2932 = vperm.xlu0 %2931, %v2879
    %v2933 = vpop.permute.xlu0 %2932
    %v2935 = vmul.f32 %v2933, %v517
    %2936 = vset.pattern.permute.xlu0 2
    %2937 = vperm.xlu0 %2936, %v2874
    %v2938 = vpop.permute.xlu0 %2937
    %v2940 = vadd.f32 %v2938, %v2935
    %2941 = vset.pattern.permute.xlu0 2
    %2942 = vperm.xlu0 %2941, %v2892
    %v2943 = vpop.permute.xlu0 %2942
    %v2945 = vmul.f32 %v2943, %v517
    %2946 = vset.pattern.permute.xlu0 2
    %2947 = vperm.xlu0 %2946, %v2876
    %v2948 = vpop.permute.xlu0 %2947
    %v2950 = vadd.f32 %v2948, %v2945
    %v2951 = vmul.f32 %v2927, %v2940
    %v2952 = vmul.f32 %v2930, %v2950
    %v2953 = vsub.f32 %v2951, %v2952
    %v2954 = vmul.f32 %v2927, %v2950
    %v2955 = vmul.f32 %v2930, %v2940
    %v2956 = vadd.f32 %v2954, %v2955
    %2957 = vset.pattern.permute.xlu0 3
    %2958 = vperm.xlu0 %2957, %v2879
    %v2959 = vpop.permute.xlu0 %2958
    %v2961 = vmul.f32 %v2959, %v547
    %2962 = vset.pattern.permute.xlu0 3
    %2963 = vperm.xlu0 %2962, %v2874
    %v2964 = vpop.permute.xlu0 %2963
    %v2966 = vadd.f32 %v2964, %v2961
    %2967 = vset.pattern.permute.xlu0 3
    %2968 = vperm.xlu0 %2967, %v2892
    %v2969 = vpop.permute.xlu0 %2968
    %v2971 = vmul.f32 %v2969, %v547
    %2972 = vset.pattern.permute.xlu0 3
    %2973 = vperm.xlu0 %2972, %v2876
    %v2974 = vpop.permute.xlu0 %2973
    %v2976 = vadd.f32 %v2974, %v2971
    %v2977 = vmul.f32 %v2953, %v2966
    %v2978 = vmul.f32 %v2956, %v2976
    %v2979 = vsub.f32 %v2977, %v2978
    %v2980 = vmul.f32 %v2953, %v2976
    %v2981 = vmul.f32 %v2956, %v2966
    %v2982 = vadd.f32 %v2980, %v2981
    %v2984 = vsel %vm56, %v2982, 0
    %2986 = vmatprep.subr.mxu0 0.0
    %2987 = vmatpush1.msra.mxu0 0.0
    %2988 = vmatprep.subr.mxu0 0.0
    %2989 = vmatpush1.msra.mxu0 0.0
    %2990 = vmatprep.subr.mxu0 0.0
    %2991 = vmatpush1.msra.mxu0 0.0
    %2992 = vmatprep.subr.mxu0 0.0
    %2993 = vmatpush1.msra.mxu0 0.0
    %2994 = vmatprep.subr.mxu0 0.0
    %2995 = vmatpush1.msra.mxu0 0.0
    %2996 = vmatprep.subr.mxu0 0.0
    %2997 = vmatpush1.msra.mxu0 0.0
    %2998 = vmatprep.subr.mxu0 0.0
    %2999 = vmatpush1.msra.mxu0 0.0
    %3000 = vmatprep.subr.mxu0 0.0
    %3001 = vmatpush1.msra.mxu0 0.0
    %3002 = vmatprep.subr.mxu0 0.0
    %3003 = vmatpush1.msra.mxu0 0.0
    %3004 = vmatprep.subr.mxu0 0.0
    %3005 = vmatpush1.msra.mxu0 0.0
    %3006 = vmatprep.subr.mxu0 0.0
    %3007 = vmatpush1.msra.mxu0 0.0
    %3008 = vmatprep.subr.mxu0 0.0
    %3009 = vmatpush1.msra.mxu0 0.0
    %3010 = vmatprep.subr.mxu0 0.0
    %3011 = vmatpush1.msra.mxu0 0.0
    %3012 = vmatprep.subr.mxu0 0.0
    %3013 = vmatpush1.msra.mxu0 0.0
    %3014 = vmatprep.subr.mxu0 0.0
    %3015 = vmatpush1.msra.mxu0 %v33
    %3016 = vmatprep.subr.mxu0 0.0
    %3017 = vmatpush1.msra.mxu0 %v32
    %3018 = vmatprep.subr.mxu0 0.0
    %3019 = vmatpush2.msra.mxu0 0.0
    %3020 = vmatprep.subr.mxu0 0.0
    %3021 = vmatpush2.msra.mxu0 0.0
    %3022 = vmatprep.subr.mxu0 0.0
    %3023 = vmatpush2.msra.mxu0 0.0
    %3024 = vmatprep.subr.mxu0 0.0
    %3025 = vmatpush2.msra.mxu0 0.0
    %3026 = vmatprep.subr.mxu0 0.0
    %3027 = vmatpush2.msra.mxu0 0.0
    %3028 = vmatprep.subr.mxu0 0.0
    %3029 = vmatpush2.msra.mxu0 0.0
    %3030 = vmatprep.subr.mxu0 0.0
    %3031 = vmatpush2.msra.mxu0 0.0
    %3032 = vmatprep.subr.mxu0 0.0
    %3033 = vmatpush2.msra.mxu0 0.0
    %3034 = vmatprep.subr.mxu0 0.0
    %3035 = vmatpush2.msra.mxu0 0.0
    %3036 = vmatprep.subr.mxu0 0.0
    %3037 = vmatpush2.msra.mxu0 0.0
    %3038 = vmatprep.subr.mxu0 0.0
    %3039 = vmatpush2.msra.mxu0 0.0
    %3040 = vmatprep.subr.mxu0 0.0
    %3041 = vmatpush2.msra.mxu0 0.0
    %3042 = vmatprep.subr.mxu0 0.0
    %3043 = vmatpush2.msra.mxu0 0.0
    %3044 = vmatprep.subr.mxu0 0.0
    %3045 = vmatpush2.msra.mxu0 0.0
    %3046 = vmatprep.subr.mxu0 0.0
    %3047 = vmatpush2.msra.mxu0 0.0
    %3048 = vmatprep.subr.mxu0 0.0
    %3049 = vmatpush2.msra.mxu0 0.0
    %3050 = vmatprep.mubr.f32.mxu0 0.0
    %3051 = vmatmul.mubr.f32.gmra.mxu0 %v2984
    %v3052 = vpop.f32.mrf.mxu0
    %v3053 = vadd.f32 0.0, %v3052
    %v3054 = vpop.f32.mrf.mxu0
    %3055 = vdwg.mxu0
    %v3057 = vsel %vm56, %v2979, 0
    %3059 = vmatprep.subr.mxu0 0.0
    %3060 = vmatpush1.msra.mxu0 0.0
    %3061 = vmatprep.subr.mxu0 0.0
    %3062 = vmatpush1.msra.mxu0 0.0
    %3063 = vmatprep.subr.mxu0 0.0
    %3064 = vmatpush1.msra.mxu0 0.0
    %3065 = vmatprep.subr.mxu0 0.0
    %3066 = vmatpush1.msra.mxu0 0.0
    %3067 = vmatprep.subr.mxu0 0.0
    %3068 = vmatpush1.msra.mxu0 0.0
    %3069 = vmatprep.subr.mxu0 0.0
    %3070 = vmatpush1.msra.mxu0 0.0
    %3071 = vmatprep.subr.mxu0 0.0
    %3072 = vmatpush1.msra.mxu0 0.0
    %3073 = vmatprep.subr.mxu0 0.0
    %3074 = vmatpush1.msra.mxu0 0.0
    %3075 = vmatprep.subr.mxu0 0.0
    %3076 = vmatpush1.msra.mxu0 0.0
    %3077 = vmatprep.subr.mxu0 0.0
    %3078 = vmatpush1.msra.mxu0 0.0
    %3079 = vmatprep.subr.mxu0 0.0
    %3080 = vmatpush1.msra.mxu0 0.0
    %3081 = vmatprep.subr.mxu0 0.0
    %3082 = vmatpush1.msra.mxu0 0.0
    %3083 = vmatprep.subr.mxu0 0.0
    %3084 = vmatpush1.msra.mxu0 0.0
    %3085 = vmatprep.subr.mxu0 0.0
    %3086 = vmatpush1.msra.mxu0 0.0
    %3087 = vmatprep.subr.mxu0 0.0
    %3088 = vmatpush1.msra.mxu0 %v31
    %3089 = vmatprep.subr.mxu0 0.0
    %3090 = vmatpush1.msra.mxu0 %v30
    %3091 = vmatprep.subr.mxu0 0.0
    %3092 = vmatpush2.msra.mxu0 0.0
    %3093 = vmatprep.subr.mxu0 0.0
    %3094 = vmatpush2.msra.mxu0 0.0
    %3095 = vmatprep.subr.mxu0 0.0
    %3096 = vmatpush2.msra.mxu0 0.0
    %3097 = vmatprep.subr.mxu0 0.0
    %3098 = vmatpush2.msra.mxu0 0.0
    %3099 = vmatprep.subr.mxu0 0.0
    %3100 = vmatpush2.msra.mxu0 0.0
    %3101 = vmatprep.subr.mxu0 0.0
    %3102 = vmatpush2.msra.mxu0 0.0
    %3103 = vmatprep.subr.mxu0 0.0
    %3104 = vmatpush2.msra.mxu0 0.0
    %3105 = vmatprep.subr.mxu0 0.0
    %3106 = vmatpush2.msra.mxu0 0.0
    %3107 = vmatprep.subr.mxu0 0.0
    %3108 = vmatpush2.msra.mxu0 0.0
    %3109 = vmatprep.subr.mxu0 0.0
    %3110 = vmatpush2.msra.mxu0 0.0
    %3111 = vmatprep.subr.mxu0 0.0
    %3112 = vmatpush2.msra.mxu0 0.0
    %3113 = vmatprep.subr.mxu0 0.0
    %3114 = vmatpush2.msra.mxu0 0.0
    %3115 = vmatprep.subr.mxu0 0.0
    %3116 = vmatpush2.msra.mxu0 0.0
    %3117 = vmatprep.subr.mxu0 0.0
    %3118 = vmatpush2.msra.mxu0 0.0
    %3119 = vmatprep.subr.mxu0 0.0
    %3120 = vmatpush2.msra.mxu0 0.0
    %3121 = vmatprep.subr.mxu0 0.0
    %3122 = vmatpush2.msra.mxu0 0.0
    %3123 = vmatprep.mubr.f32.mxu0 0.0
    %3124 = vmatmul.mubr.f32.gmra.mxu0 %v3057
    %v3125 = vpop.f32.mrf.mxu0
    %v3126 = vadd.f32 %v3053, %v3125
    %v3127 = vpop.f32.mrf.mxu0
    %3128 = vdwg.mxu0
    %v3129 = vmul.f32 %v3126, %v3126
    %v3131 = vsel %vm320, %v3129, 0
    %3133 = vmatprep.subr.mxu0 0.0
    %3134 = vmatpush1.msra.mxu0 0.0
    %3135 = vmatprep.subr.mxu0 0.0
    %3136 = vmatpush1.msra.mxu0 0.0
    %3137 = vmatprep.subr.mxu0 0.0
    %3138 = vmatpush1.msra.mxu0 0.0
    %3139 = vmatprep.subr.mxu0 0.0
    %3140 = vmatpush1.msra.mxu0 0.0
    %3141 = vmatprep.subr.mxu0 0.0
    %3142 = vmatpush1.msra.mxu0 0.0
    %3143 = vmatprep.subr.mxu0 0.0
    %3144 = vmatpush1.msra.mxu0 0.0
    %3145 = vmatprep.subr.mxu0 0.0
    %3146 = vmatpush1.msra.mxu0 0.0
    %3147 = vmatprep.subr.mxu0 0.0
    %3148 = vmatpush1.msra.mxu0 0.0
    %3149 = vmatprep.subr.mxu0 0.0
    %3150 = vmatpush1.msra.mxu0 0.0
    %3151 = vmatprep.subr.mxu0 0.0
    %3152 = vmatpush1.msra.mxu0 0.0
    %3153 = vmatprep.subr.mxu0 0.0
    %3154 = vmatpush1.msra.mxu0 0.0
    %3155 = vmatprep.subr.mxu0 0.0
    %3156 = vmatpush1.msra.mxu0 0.0
    %3157 = vmatprep.subr.mxu0 0.0
    %3158 = vmatpush1.msra.mxu0 %v29
    %3159 = vmatprep.subr.mxu0 0.0
    %3160 = vmatpush1.msra.mxu0 %v28
    %3161 = vmatprep.subr.mxu0 0.0
    %3162 = vmatpush1.msra.mxu0 %v27
    %3163 = vmatprep.subr.mxu0 0.0
    %3164 = vmatpush1.msra.mxu0 %v26
    %3165 = vmatprep.subr.mxu0 0.0
    %3166 = vmatpush2.msra.mxu0 0.0
    %3167 = vmatprep.subr.mxu0 0.0
    %3168 = vmatpush2.msra.mxu0 0.0
    %3169 = vmatprep.subr.mxu0 0.0
    %3170 = vmatpush2.msra.mxu0 0.0
    %3171 = vmatprep.subr.mxu0 0.0
    %3172 = vmatpush2.msra.mxu0 0.0
    %3173 = vmatprep.subr.mxu0 0.0
    %3174 = vmatpush2.msra.mxu0 0.0
    %3175 = vmatprep.subr.mxu0 0.0
    %3176 = vmatpush2.msra.mxu0 0.0
    %3177 = vmatprep.subr.mxu0 0.0
    %3178 = vmatpush2.msra.mxu0 0.0
    %3179 = vmatprep.subr.mxu0 0.0
    %3180 = vmatpush2.msra.mxu0 0.0
    %3181 = vmatprep.subr.mxu0 0.0
    %3182 = vmatpush2.msra.mxu0 0.0
    %3183 = vmatprep.subr.mxu0 0.0
    %3184 = vmatpush2.msra.mxu0 0.0
    %3185 = vmatprep.subr.mxu0 0.0
    %3186 = vmatpush2.msra.mxu0 0.0
    %3187 = vmatprep.subr.mxu0 0.0
    %3188 = vmatpush2.msra.mxu0 0.0
    %3189 = vmatprep.subr.mxu0 0.0
    %3190 = vmatpush2.msra.mxu0 0.0
    %3191 = vmatprep.subr.mxu0 0.0
    %3192 = vmatpush2.msra.mxu0 0.0
    %3193 = vmatprep.subr.mxu0 0.0
    %3194 = vmatpush2.msra.mxu0 0.0
    %3195 = vmatprep.subr.mxu0 0.0
    %3196 = vmatpush2.msra.mxu0 0.0
    %3197 = vmatprep.mubr.f32.mxu0 0.0
    %3198 = vmatmul.mubr.f32.gmra.mxu0 %v3131
    %v3199 = vpop.f32.mrf.mxu0
    %v3200 = vadd.f32 0.0, %v3199
    %v3201 = vpop.f32.mrf.mxu0
    %3202 = vdwg.mxu0
    %v3203 = vadd.f32 %v307, %v2820
    %v3204 = vadd.f32 %v3203, %v3200
    %v3205 = vsel %vm320, %v2738, 0.0
    %v3206 = vadd.f32 %v3204, %v3205
    %v3207 = vmul.f32 %v3206, %v44
    %v3208 = vtanh.pop %v3207
    %v3209 = vmul.f32 %v3208, %v45
    %v3210 = vadd.f32 %v3209, %v47
    %v3211 = vmul.f32 %v3210, %v2738
    %3213 = vrot.lane.b32.xlu0 %v3210, 96
    %v3214 = vpop.permute.xlu0 %3213
    %v3216 = vmul.f32 %v3210, %v3214
    %3218 = vrot.lane.b32.xlu0 %v3216, 96
    %v3219 = vpop.permute.xlu0 %3218
    %v3221 = vadd.f32 %v3211, %v3219
    %v3222 = vtanh.pop %v3221
    %3224 = vrot.lane.b32.xlu0 %v3222, 96
    %v3225 = vpop.permute.xlu0 %3224
    %v3227 = vmul.f32 %v3210, %v3225
    %3229 = vrot.lane.b32.xlu0 %v3227, 32
    %v3230 = vpop.permute.xlu0 %3229
    %s3232 = scalar_lea.vmem [#allocation2], 40
    %3233 = vst.msk [vmem:[%s3232] sm:$0xff] %vm320, %v3230
    %v3234 = vsel %vm320, %v3230, 0
    %3236 = vmatprep.subr.mxu0 0.0
    %3237 = vmatpush1.msra.mxu0 0.0
    %3238 = vmatprep.subr.mxu0 0.0
    %3239 = vmatpush1.msra.mxu0 0.0
    %3240 = vmatprep.subr.mxu0 0.0
    %3241 = vmatpush1.msra.mxu0 0.0
    %3242 = vmatprep.subr.mxu0 0.0
    %3243 = vmatpush1.msra.mxu0 0.0
    %3244 = vmatprep.subr.mxu0 0.0
    %3245 = vmatpush1.msra.mxu0 0.0
    %3246 = vmatprep.subr.mxu0 0.0
    %3247 = vmatpush1.msra.mxu0 0.0
    %3248 = vmatprep.subr.mxu0 0.0
    %3249 = vmatpush1.msra.mxu0 0.0
    %3250 = vmatprep.subr.mxu0 0.0
    %3251 = vmatpush1.msra.mxu0 0.0
    %3252 = vmatprep.subr.mxu0 0.0
    %3253 = vmatpush1.msra.mxu0 0.0
    %3254 = vmatprep.subr.mxu0 0.0
    %3255 = vmatpush1.msra.mxu0 0.0
    %3256 = vmatprep.subr.mxu0 0.0
    %3257 = vmatpush1.msra.mxu0 0.0
    %3258 = vmatprep.subr.mxu0 0.0
    %3259 = vmatpush1.msra.mxu0 0.0
    %3260 = vmatprep.subr.mxu0 %v23
    %3261 = vmatpush1.msra.mxu0 %v22
    %3262 = vmatprep.subr.mxu0 %v21
    %3263 = vmatpush1.msra.mxu0 %v20
    %3264 = vmatprep.subr.mxu0 %v19
    %3265 = vmatpush1.msra.mxu0 %v18
    %3266 = vmatprep.subr.mxu0 %v17
    %3267 = vmatpush1.msra.mxu0 %v16
    %3268 = vmatprep.subr.mxu0 0.0
    %3269 = vmatpush2.msra.mxu0 0.0
    %3270 = vmatprep.subr.mxu0 0.0
    %3271 = vmatpush2.msra.mxu0 0.0
    %3272 = vmatprep.subr.mxu0 0.0
    %3273 = vmatpush2.msra.mxu0 0.0
    %3274 = vmatprep.subr.mxu0 0.0
    %3275 = vmatpush2.msra.mxu0 0.0
    %3276 = vmatprep.subr.mxu0 0.0
    %3277 = vmatpush2.msra.mxu0 0.0
    %3278 = vmatprep.subr.mxu0 0.0
    %3279 = vmatpush2.msra.mxu0 0.0
    %3280 = vmatprep.subr.mxu0 0.0
    %3281 = vmatpush2.msra.mxu0 0.0
    %3282 = vmatprep.subr.mxu0 0.0
    %3283 = vmatpush2.msra.mxu0 0.0
    %3284 = vmatprep.subr.mxu0 0.0
    %3285 = vmatpush2.msra.mxu0 0.0
    %3286 = vmatprep.subr.mxu0 0.0
    %3287 = vmatpush2.msra.mxu0 0.0
    %3288 = vmatprep.subr.mxu0 0.0
    %3289 = vmatpush2.msra.mxu0 0.0
    %3290 = vmatprep.subr.mxu0 0.0
    %3291 = vmatpush2.msra.mxu0 0.0
    %3292 = vmatprep.subr.mxu0 0.0
    %3293 = vmatpush2.msra.mxu0 0.0
    %3294 = vmatprep.subr.mxu0 0.0
    %3295 = vmatpush2.msra.mxu0 0.0
    %3296 = vmatprep.subr.mxu0 0.0
    %3297 = vmatpush2.msra.mxu0 0.0
    %3298 = vmatprep.subr.mxu0 0.0
    %3299 = vmatpush2.msra.mxu0 0.0
    %3300 = vmatprep.mubr.f32.mxu0 0.0
    %3301 = vmatmul.mubr.f32.gmra.mxu0 %v3234
    %v3302 = vpop.f32.mrf.mxu0
    %v3303 = vadd.f32 0.0, %v3302
    %v3304 = vpop.f32.mrf.mxu0
    %v3305 = vadd.f32 0.0, %v3304
    %3306 = vdwg.mxu0
    %v3307 = vadd.f32 %v178, %v3305
    %v3308 = vmul.f32 %v3307, %v3307
    %v3309 = vadd.f32 %v3308, 1.0
    %v3310 = vrsqrt.pop %v3309
    %v3311 = vadd.f32 %v3310, 1.0
    %v3312 = vmul.f32 %v3311, 0.5
    %v3313 = vrsqrt.pop %v3312
    %v3314 = vmul.f32 %v3312, %v3313
    %vm3315 = vcmp.eq.f32.partialorder %v3312, inf
    %v3316 = vsel %vm3315, %v3312, %v3314
    %vm3317 = vcmp.eq.f32.partialorder %v3312, 0.0
    %v3318 = vand.u32 %v3312, 2147483648
    %v3319 = vsel %vm3317, %v3318, %v3316
    %vm3320 = vcmp.ge.f32.partialorder %v3307, 0.0
    %v3321 = vsel %vm3320, 1.0, -1.0
    %v3322 = vsub.f32 1.0, %v3310
    %v3323 = vmul.f32 %v3322, 0.5
    %v3324 = vrsqrt.pop %v3323
    %v3325 = vmul.f32 %v3323, %v3324
    %vm3326 = vcmp.eq.f32.partialorder %v3323, inf
    %v3327 = vsel %vm3326, %v3323, %v3325
    %vm3328 = vcmp.eq.f32.partialorder %v3323, 0.0
    %v3329 = vand.u32 %v3323, 2147483648
    %v3330 = vsel %vm3328, %v3329, %v3327
    %v3331 = vmul.f32 %v3321, %v3330
    %v3332 = vmul.f32 %v3308, %v3308
    %v3333 = vadd.f32 %v3332, 1.0
    %v3334 = vrsqrt.pop %v3333
    %v3335 = vadd.f32 %v3334, 1.0
    %v3336 = vmul.f32 %v3335, 0.5
    %v3337 = vrsqrt.pop %v3336
    %v3338 = vmul.f32 %v3336, %v3337
    %vm3339 = vcmp.eq.f32.partialorder %v3336, inf
    %v3340 = vsel %vm3339, %v3336, %v3338
    %vm3341 = vcmp.eq.f32.partialorder %v3336, 0.0
    %v3342 = vand.u32 %v3336, 2147483648
    %v3343 = vsel %vm3341, %v3342, %v3340
    %v3344 = vsub.f32 1.0, %v3334
    %v3345 = vmul.f32 %v3344, 0.5
    %v3346 = vrsqrt.pop %v3345
    %v3347 = vmul.f32 %v3345, %v3346
    %vm3348 = vcmp.eq.f32.partialorder %v3345, inf
    %v3349 = vsel %vm3348, %v3345, %v3347
    %vm3350 = vcmp.eq.f32.partialorder %v3345, 0.0
    %v3351 = vand.u32 %v3345, 2147483648
    %v3352 = vsel %vm3350, %v3351, %v3349
    %v3353 = vsub.f32 %v3319, %v3331
    %v3354 = vmul.f32 %v3353, 0.70710677
    %v3355 = vadd.f32 %v3319, %v3331
    %v3356 = vmul.f32 %v3355, 0.70710677
    %v3357 = vmul.f32 %v3354, %v3343
    %v3358 = vmul.f32 %v3354, %v3352
    %v3359 = vsub.f32 0.0, %v3358
    %v3360 = vmul.f32 %v3356, %v3343
    %v3361 = vmul.f32 %v3356, %v3352
    %v3362 = vsub.f32 %v3360, %v3357
    %3364 = vset.pattern.permute.xlu0 0
    %3365 = vperm.xlu0 %3364, %v3362
    %v3366 = vpop.permute.xlu0 %3365
    %v3368 = vmul.f32 %v3366, %v459
    %3370 = vset.pattern.permute.xlu0 0
    %3371 = vperm.xlu0 %3370, %v3357
    %v3372 = vpop.permute.xlu0 %3371
    %v3374 = vadd.f32 %v3372, %v3368
    %v3375 = vsub.f32 %v3361, %v3359
    %3377 = vset.pattern.permute.xlu0 0
    %3378 = vperm.xlu0 %3377, %v3375
    %v3379 = vpop.permute.xlu0 %3378
    %v3381 = vmul.f32 %v3379, %v459
    %3383 = vset.pattern.permute.xlu0 0
    %3384 = vperm.xlu0 %3383, %v3359
    %v3385 = vpop.permute.xlu0 %3384
    %v3387 = vadd.f32 %v3385, %v3381
    %3388 = vset.pattern.permute.xlu0 1
    %3389 = vperm.xlu0 %3388, %v3362
    %v3390 = vpop.permute.xlu0 %3389
    %v3392 = vmul.f32 %v3390, %v487
    %3393 = vset.pattern.permute.xlu0 1
    %3394 = vperm.xlu0 %3393, %v3357
    %v3395 = vpop.permute.xlu0 %3394
    %v3397 = vadd.f32 %v3395, %v3392
    %3398 = vset.pattern.permute.xlu0 1
    %3399 = vperm.xlu0 %3398, %v3375
    %v3400 = vpop.permute.xlu0 %3399
    %v3402 = vmul.f32 %v3400, %v487
    %3403 = vset.pattern.permute.xlu0 1
    %3404 = vperm.xlu0 %3403, %v3359
    %v3405 = vpop.permute.xlu0 %3404
    %v3407 = vadd.f32 %v3405, %v3402
    %v3408 = vmul.f32 %v3374, %v3397
    %v3409 = vmul.f32 %v3387, %v3407
    %v3410 = vsub.f32 %v3408, %v3409
    %v3411 = vmul.f32 %v3374, %v3407
    %v3412 = vmul.f32 %v3387, %v3397
    %v3413 = vadd.f32 %v3411, %v3412
    %3414 = vset.pattern.permute.xlu0 2
    %3415 = vperm.xlu0 %3414, %v3362
    %v3416 = vpop.permute.xlu0 %3415
    %v3418 = vmul.f32 %v3416, %v517
    %3419 = vset.pattern.permute.xlu0 2
    %3420 = vperm.xlu0 %3419, %v3357
    %v3421 = vpop.permute.xlu0 %3420
    %v3423 = vadd.f32 %v3421, %v3418
    %3424 = vset.pattern.permute.xlu0 2
    %3425 = vperm.xlu0 %3424, %v3375
    %v3426 = vpop.permute.xlu0 %3425
    %v3428 = vmul.f32 %v3426, %v517
    %3429 = vset.pattern.permute.xlu0 2
    %3430 = vperm.xlu0 %3429, %v3359
    %v3431 = vpop.permute.xlu0 %3430
    %v3433 = vadd.f32 %v3431, %v3428
    %v3434 = vmul.f32 %v3410, %v3423
    %v3435 = vmul.f32 %v3413, %v3433
    %v3436 = vsub.f32 %v3434, %v3435
    %v3437 = vmul.f32 %v3410, %v3433
    %v3438 = vmul.f32 %v3413, %v3423
    %v3439 = vadd.f32 %v3437, %v3438
    %3440 = vset.pattern.permute.xlu0 3
    %3441 = vperm.xlu0 %3440, %v3362
    %v3442 = vpop.permute.xlu0 %3441
    %v3444 = vmul.f32 %v3442, %v547
    %3445 = vset.pattern.permute.xlu0 3
    %3446 = vperm.xlu0 %3445, %v3357
    %v3447 = vpop.permute.xlu0 %3446
    %v3449 = vadd.f32 %v3447, %v3444
    %3450 = vset.pattern.permute.xlu0 3
    %3451 = vperm.xlu0 %3450, %v3375
    %v3452 = vpop.permute.xlu0 %3451
    %v3454 = vmul.f32 %v3452, %v547
    %3455 = vset.pattern.permute.xlu0 3
    %3456 = vperm.xlu0 %3455, %v3359
    %v3457 = vpop.permute.xlu0 %3456
    %v3459 = vadd.f32 %v3457, %v3454
    %v3460 = vmul.f32 %v3436, %v3449
    %v3461 = vmul.f32 %v3439, %v3459
    %v3462 = vsub.f32 %v3460, %v3461
    %v3463 = vmul.f32 %v3436, %v3459
    %v3464 = vmul.f32 %v3439, %v3449
    %v3465 = vadd.f32 %v3463, %v3464
    %v3467 = vsel %vm56, %v3465, 0
    %3469 = vmatprep.subr.mxu0 0.0
    %3470 = vmatpush1.msra.mxu0 0.0
    %3471 = vmatprep.subr.mxu0 0.0
    %3472 = vmatpush1.msra.mxu0 0.0
    %3473 = vmatprep.subr.mxu0 0.0
    %3474 = vmatpush1.msra.mxu0 0.0
    %3475 = vmatprep.subr.mxu0 0.0
    %3476 = vmatpush1.msra.mxu0 0.0
    %3477 = vmatprep.subr.mxu0 0.0
    %3478 = vmatpush1.msra.mxu0 0.0
    %3479 = vmatprep.subr.mxu0 0.0
    %3480 = vmatpush1.msra.mxu0 0.0
    %3481 = vmatprep.subr.mxu0 0.0
    %3482 = vmatpush1.msra.mxu0 0.0
    %3483 = vmatprep.subr.mxu0 0.0
    %3484 = vmatpush1.msra.mxu0 0.0
    %3485 = vmatprep.subr.mxu0 0.0
    %3486 = vmatpush1.msra.mxu0 0.0
    %3487 = vmatprep.subr.mxu0 0.0
    %3488 = vmatpush1.msra.mxu0 0.0
    %3489 = vmatprep.subr.mxu0 0.0
    %3490 = vmatpush1.msra.mxu0 0.0
    %3491 = vmatprep.subr.mxu0 0.0
    %3492 = vmatpush1.msra.mxu0 0.0
    %3493 = vmatprep.subr.mxu0 0.0
    %3494 = vmatpush1.msra.mxu0 0.0
    %3495 = vmatprep.subr.mxu0 0.0
    %3496 = vmatpush1.msra.mxu0 0.0
    %3497 = vmatprep.subr.mxu0 0.0
    %3498 = vmatpush1.msra.mxu0 %v33
    %3499 = vmatprep.subr.mxu0 0.0
    %3500 = vmatpush1.msra.mxu0 %v32
    %3501 = vmatprep.subr.mxu0 0.0
    %3502 = vmatpush2.msra.mxu0 0.0
    %3503 = vmatprep.subr.mxu0 0.0
    %3504 = vmatpush2.msra.mxu0 0.0
    %3505 = vmatprep.subr.mxu0 0.0
    %3506 = vmatpush2.msra.mxu0 0.0
    %3507 = vmatprep.subr.mxu0 0.0
    %3508 = vmatpush2.msra.mxu0 0.0
    %3509 = vmatprep.subr.mxu0 0.0
    %3510 = vmatpush2.msra.mxu0 0.0
    %3511 = vmatprep.subr.mxu0 0.0
    %3512 = vmatpush2.msra.mxu0 0.0
    %3513 = vmatprep.subr.mxu0 0.0
    %3514 = vmatpush2.msra.mxu0 0.0
    %3515 = vmatprep.subr.mxu0 0.0
    %3516 = vmatpush2.msra.mxu0 0.0
    %3517 = vmatprep.subr.mxu0 0.0
    %3518 = vmatpush2.msra.mxu0 0.0
    %3519 = vmatprep.subr.mxu0 0.0
    %3520 = vmatpush2.msra.mxu0 0.0
    %3521 = vmatprep.subr.mxu0 0.0
    %3522 = vmatpush2.msra.mxu0 0.0
    %3523 = vmatprep.subr.mxu0 0.0
    %3524 = vmatpush2.msra.mxu0 0.0
    %3525 = vmatprep.subr.mxu0 0.0
    %3526 = vmatpush2.msra.mxu0 0.0
    %3527 = vmatprep.subr.mxu0 0.0
    %3528 = vmatpush2.msra.mxu0 0.0
    %3529 = vmatprep.subr.mxu0 0.0
    %3530 = vmatpush2.msra.mxu0 0.0
    %3531 = vmatprep.subr.mxu0 0.0
    %3532 = vmatpush2.msra.mxu0 0.0
    %3533 = vmatprep.mubr.f32.mxu0 0.0
    %3534 = vmatmul.mubr.f32.gmra.mxu0 %v3467
    %v3535 = vpop.f32.mrf.mxu0
    %v3536 = vadd.f32 0.0, %v3535
    %v3537 = vpop.f32.mrf.mxu0
    %3538 = vdwg.mxu0
    %v3540 = vsel %vm56, %v3462, 0
    %3542 = vmatprep.subr.mxu0 0.0
    %3543 = vmatpush1.msra.mxu0 0.0
    %3544 = vmatprep.subr.mxu0 0.0
    %3545 = vmatpush1.msra.mxu0 0.0
    %3546 = vmatprep.subr.mxu0 0.0
    %3547 = vmatpush1.msra.mxu0 0.0
    %3548 = vmatprep.subr.mxu0 0.0
    %3549 = vmatpush1.msra.mxu0 0.0
    %3550 = vmatprep.subr.mxu0 0.0
    %3551 = vmatpush1.msra.mxu0 0.0
    %3552 = vmatprep.subr.mxu0 0.0
    %3553 = vmatpush1.msra.mxu0 0.0
    %3554 = vmatprep.subr.mxu0 0.0
    %3555 = vmatpush1.msra.mxu0 0.0
    %3556 = vmatprep.subr.mxu0 0.0
    %3557 = vmatpush1.msra.mxu0 0.0
    %3558 = vmatprep.subr.mxu0 0.0
    %3559 = vmatpush1.msra.mxu0 0.0
    %3560 = vmatprep.subr.mxu0 0.0
    %3561 = vmatpush1.msra.mxu0 0.0
    %3562 = vmatprep.subr.mxu0 0.0
    %3563 = vmatpush1.msra.mxu0 0.0
    %3564 = vmatprep.subr.mxu0 0.0
    %3565 = vmatpush1.msra.mxu0 0.0
    %3566 = vmatprep.subr.mxu0 0.0
    %3567 = vmatpush1.msra.mxu0 0.0
    %3568 = vmatprep.subr.mxu0 0.0
    %3569 = vmatpush1.msra.mxu0 0.0
    %3570 = vmatprep.subr.mxu0 0.0
    %3571 = vmatpush1.msra.mxu0 %v31
    %3572 = vmatprep.subr.mxu0 0.0
    %3573 = vmatpush1.msra.mxu0 %v30
    %3574 = vmatprep.subr.mxu0 0.0
    %3575 = vmatpush2.msra.mxu0 0.0
    %3576 = vmatprep.subr.mxu0 0.0
    %3577 = vmatpush2.msra.mxu0 0.0
    %3578 = vmatprep.subr.mxu0 0.0
    %3579 = vmatpush2.msra.mxu0 0.0
    %3580 = vmatprep.subr.mxu0 0.0
    %3581 = vmatpush2.msra.mxu0 0.0
    %3582 = vmatprep.subr.mxu0 0.0
    %3583 = vmatpush2.msra.mxu0 0.0
    %3584 = vmatprep.subr.mxu0 0.0
    %3585 = vmatpush2.msra.mxu0 0.0
    %3586 = vmatprep.subr.mxu0 0.0
    %3587 = vmatpush2.msra.mxu0 0.0
    %3588 = vmatprep.subr.mxu0 0.0
    %3589 = vmatpush2.msra.mxu0 0.0
    %3590 = vmatprep.subr.mxu0 0.0
    %3591 = vmatpush2.msra.mxu0 0.0
    %3592 = vmatprep.subr.mxu0 0.0
    %3593 = vmatpush2.msra.mxu0 0.0
    %3594 = vmatprep.subr.mxu0 0.0
    %3595 = vmatpush2.msra.mxu0 0.0
    %3596 = vmatprep.subr.mxu0 0.0
    %3597 = vmatpush2.msra.mxu0 0.0
    %3598 = vmatprep.subr.mxu0 0.0
    %3599 = vmatpush2.msra.mxu0 0.0
    %3600 = vmatprep.subr.mxu0 0.0
    %3601 = vmatpush2.msra.mxu0 0.0
    %3602 = vmatprep.subr.mxu0 0.0
    %3603 = vmatpush2.msra.mxu0 0.0
    %3604 = vmatprep.subr.mxu0 0.0
    %3605 = vmatpush2.msra.mxu0 0.0
    %3606 = vmatprep.mubr.f32.mxu0 0.0
    %3607 = vmatmul.mubr.f32.gmra.mxu0 %v3540
    %v3608 = vpop.f32.mrf.mxu0
    %v3609 = vadd.f32 %v3536, %v3608
    %v3610 = vpop.f32.mrf.mxu0
    %3611 = vdwg.mxu0
    %v3612 = vmul.f32 %v3609, %v3609
    %v3614 = vsel %vm320, %v3612, 0
    %3616 = vmatprep.subr.mxu0 0.0
    %3617 = vmatpush1.msra.mxu0 0.0
    %3618 = vmatprep.subr.mxu0 0.0
    %3619 = vmatpush1.msra.mxu0 0.0
    %3620 = vmatprep.subr.mxu0 0.0
    %3621 = vmatpush1.msra.mxu0 0.0
    %3622 = vmatprep.subr.mxu0 0.0
    %3623 = vmatpush1.msra.mxu0 0.0
    %3624 = vmatprep.subr.mxu0 0.0
    %3625 = vmatpush1.msra.mxu0 0.0
    %3626 = vmatprep.subr.mxu0 0.0
    %3627 = vmatpush1.msra.mxu0 0.0
    %3628 = vmatprep.subr.mxu0 0.0
    %3629 = vmatpush1.msra.mxu0 0.0
    %3630 = vmatprep.subr.mxu0 0.0
    %3631 = vmatpush1.msra.mxu0 0.0
    %3632 = vmatprep.subr.mxu0 0.0
    %3633 = vmatpush1.msra.mxu0 0.0
    %3634 = vmatprep.subr.mxu0 0.0
    %3635 = vmatpush1.msra.mxu0 0.0
    %3636 = vmatprep.subr.mxu0 0.0
    %3637 = vmatpush1.msra.mxu0 0.0
    %3638 = vmatprep.subr.mxu0 0.0
    %3639 = vmatpush1.msra.mxu0 0.0
    %3640 = vmatprep.subr.mxu0 0.0
    %3641 = vmatpush1.msra.mxu0 %v29
    %3642 = vmatprep.subr.mxu0 0.0
    %3643 = vmatpush1.msra.mxu0 %v28
    %3644 = vmatprep.subr.mxu0 0.0
    %3645 = vmatpush1.msra.mxu0 %v27
    %3646 = vmatprep.subr.mxu0 0.0
    %3647 = vmatpush1.msra.mxu0 %v26
    %3648 = vmatprep.subr.mxu0 0.0
    %3649 = vmatpush2.msra.mxu0 0.0
    %3650 = vmatprep.subr.mxu0 0.0
    %3651 = vmatpush2.msra.mxu0 0.0
    %3652 = vmatprep.subr.mxu0 0.0
    %3653 = vmatpush2.msra.mxu0 0.0
    %3654 = vmatprep.subr.mxu0 0.0
    %3655 = vmatpush2.msra.mxu0 0.0
    %3656 = vmatprep.subr.mxu0 0.0
    %3657 = vmatpush2.msra.mxu0 0.0
    %3658 = vmatprep.subr.mxu0 0.0
    %3659 = vmatpush2.msra.mxu0 0.0
    %3660 = vmatprep.subr.mxu0 0.0
    %3661 = vmatpush2.msra.mxu0 0.0
    %3662 = vmatprep.subr.mxu0 0.0
    %3663 = vmatpush2.msra.mxu0 0.0
    %3664 = vmatprep.subr.mxu0 0.0
    %3665 = vmatpush2.msra.mxu0 0.0
    %3666 = vmatprep.subr.mxu0 0.0
    %3667 = vmatpush2.msra.mxu0 0.0
    %3668 = vmatprep.subr.mxu0 0.0
    %3669 = vmatpush2.msra.mxu0 0.0
    %3670 = vmatprep.subr.mxu0 0.0
    %3671 = vmatpush2.msra.mxu0 0.0
    %3672 = vmatprep.subr.mxu0 0.0
    %3673 = vmatpush2.msra.mxu0 0.0
    %3674 = vmatprep.subr.mxu0 0.0
    %3675 = vmatpush2.msra.mxu0 0.0
    %3676 = vmatprep.subr.mxu0 0.0
    %3677 = vmatpush2.msra.mxu0 0.0
    %3678 = vmatprep.subr.mxu0 0.0
    %3679 = vmatpush2.msra.mxu0 0.0
    %3680 = vmatprep.mubr.f32.mxu0 0.0
    %3681 = vmatmul.mubr.f32.gmra.mxu0 %v3614
    %v3682 = vpop.f32.mrf.mxu0
    %v3683 = vadd.f32 0.0, %v3682
    %v3684 = vpop.f32.mrf.mxu0
    %3685 = vdwg.mxu0
    %v3686 = vadd.f32 %v312, %v3303
    %v3687 = vadd.f32 %v3686, %v3683
    %v3688 = vsel %vm320, %v3221, 0.0
    %v3689 = vadd.f32 %v3687, %v3688
    %v3690 = vmul.f32 %v3689, %v44
    %v3691 = vtanh.pop %v3690
    %v3692 = vmul.f32 %v3691, %v45
    %v3693 = vadd.f32 %v3692, %v47
    %v3694 = vmul.f32 %v3693, %v3221
    %3696 = vrot.lane.b32.xlu0 %v3693, 96
    %v3697 = vpop.permute.xlu0 %3696
    %v3699 = vmul.f32 %v3693, %v3697
    %3701 = vrot.lane.b32.xlu0 %v3699, 96
    %v3702 = vpop.permute.xlu0 %3701
    %v3704 = vadd.f32 %v3694, %v3702
    %v3705 = vtanh.pop %v3704
    %3707 = vrot.lane.b32.xlu0 %v3705, 96
    %v3708 = vpop.permute.xlu0 %3707
    %v3710 = vmul.f32 %v3693, %v3708
    %3712 = vrot.lane.b32.xlu0 %v3710, 32
    %v3713 = vpop.permute.xlu0 %3712
    %s3715 = scalar_lea.vmem [#allocation2], 48
    %3716 = vst.msk [vmem:[%s3715] sm:$0xff] %vm320, %v3713
    %v3717 = vsel %vm320, %v3713, 0
    %3719 = vmatprep.subr.mxu0 0.0
    %3720 = vmatpush1.msra.mxu0 0.0
    %3721 = vmatprep.subr.mxu0 0.0
    %3722 = vmatpush1.msra.mxu0 0.0
    %3723 = vmatprep.subr.mxu0 0.0
    %3724 = vmatpush1.msra.mxu0 0.0
    %3725 = vmatprep.subr.mxu0 0.0
    %3726 = vmatpush1.msra.mxu0 0.0
    %3727 = vmatprep.subr.mxu0 0.0
    %3728 = vmatpush1.msra.mxu0 0.0
    %3729 = vmatprep.subr.mxu0 0.0
    %3730 = vmatpush1.msra.mxu0 0.0
    %3731 = vmatprep.subr.mxu0 0.0
    %3732 = vmatpush1.msra.mxu0 0.0
    %3733 = vmatprep.subr.mxu0 0.0
    %3734 = vmatpush1.msra.mxu0 0.0
    %3735 = vmatprep.subr.mxu0 0.0
    %3736 = vmatpush1.msra.mxu0 0.0
    %3737 = vmatprep.subr.mxu0 0.0
    %3738 = vmatpush1.msra.mxu0 0.0
    %3739 = vmatprep.subr.mxu0 0.0
    %3740 = vmatpush1.msra.mxu0 0.0
    %3741 = vmatprep.subr.mxu0 0.0
    %3742 = vmatpush1.msra.mxu0 0.0
    %3743 = vmatprep.subr.mxu0 %v23
    %3744 = vmatpush1.msra.mxu0 %v22
    %3745 = vmatprep.subr.mxu0 %v21
    %3746 = vmatpush1.msra.mxu0 %v20
    %3747 = vmatprep.subr.mxu0 %v19
    %3748 = vmatpush1.msra.mxu0 %v18
    %3749 = vmatprep.subr.mxu0 %v17
    %3750 = vmatpush1.msra.mxu0 %v16
    %3751 = vmatprep.subr.mxu0 0.0
    %3752 = vmatpush2.msra.mxu0 0.0
    %3753 = vmatprep.subr.mxu0 0.0
    %3754 = vmatpush2.msra.mxu0 0.0
    %3755 = vmatprep.subr.mxu0 0.0
    %3756 = vmatpush2.msra.mxu0 0.0
    %3757 = vmatprep.subr.mxu0 0.0
    %3758 = vmatpush2.msra.mxu0 0.0
    %3759 = vmatprep.subr.mxu0 0.0
    %3760 = vmatpush2.msra.mxu0 0.0
    %3761 = vmatprep.subr.mxu0 0.0
    %3762 = vmatpush2.msra.mxu0 0.0
    %3763 = vmatprep.subr.mxu0 0.0
    %3764 = vmatpush2.msra.mxu0 0.0
    %3765 = vmatprep.subr.mxu0 0.0
    %3766 = vmatpush2.msra.mxu0 0.0
    %3767 = vmatprep.subr.mxu0 0.0
    %3768 = vmatpush2.msra.mxu0 0.0
    %3769 = vmatprep.subr.mxu0 0.0
    %3770 = vmatpush2.msra.mxu0 0.0
    %3771 = vmatprep.subr.mxu0 0.0
    %3772 = vmatpush2.msra.mxu0 0.0
    %3773 = vmatprep.subr.mxu0 0.0
    %3774 = vmatpush2.msra.mxu0 0.0
    %3775 = vmatprep.subr.mxu0 0.0
    %3776 = vmatpush2.msra.mxu0 0.0
    %3777 = vmatprep.subr.mxu0 0.0
    %3778 = vmatpush2.msra.mxu0 0.0
    %3779 = vmatprep.subr.mxu0 0.0
    %3780 = vmatpush2.msra.mxu0 0.0
    %3781 = vmatprep.subr.mxu0 0.0
    %3782 = vmatpush2.msra.mxu0 0.0
    %3783 = vmatprep.mubr.f32.mxu0 0.0
    %3784 = vmatmul.mubr.f32.gmra.mxu0 %v3717
    %v3785 = vpop.f32.mrf.mxu0
    %v3786 = vadd.f32 0.0, %v3785
    %v3787 = vpop.f32.mrf.mxu0
    %v3788 = vadd.f32 0.0, %v3787
    %3789 = vdwg.mxu0
    %v3790 = vadd.f32 %v183, %v3788
    %v3791 = vmul.f32 %v3790, %v3790
    %v3792 = vadd.f32 %v3791, 1.0
    %v3793 = vrsqrt.pop %v3792
    %v3794 = vadd.f32 %v3793, 1.0
    %v3795 = vmul.f32 %v3794, 0.5
    %v3796 = vrsqrt.pop %v3795
    %v3797 = vmul.f32 %v3795, %v3796
    %vm3798 = vcmp.eq.f32.partialorder %v3795, inf
    %v3799 = vsel %vm3798, %v3795, %v3797
    %vm3800 = vcmp.eq.f32.partialorder %v3795, 0.0
    %v3801 = vand.u32 %v3795, 2147483648
    %v3802 = vsel %vm3800, %v3801, %v3799
    %vm3803 = vcmp.ge.f32.partialorder %v3790, 0.0
    %v3804 = vsel %vm3803, 1.0, -1.0
    %v3805 = vsub.f32 1.0, %v3793
    %v3806 = vmul.f32 %v3805, 0.5
    %v3807 = vrsqrt.pop %v3806
    %v3808 = vmul.f32 %v3806, %v3807
    %vm3809 = vcmp.eq.f32.partialorder %v3806, inf
    %v3810 = vsel %vm3809, %v3806, %v3808
    %vm3811 = vcmp.eq.f32.partialorder %v3806, 0.0
    %v3812 = vand.u32 %v3806, 2147483648
    %v3813 = vsel %vm3811, %v3812, %v3810
    %v3814 = vmul.f32 %v3804, %v3813
    %v3815 = vmul.f32 %v3791, %v3791
    %v3816 = vadd.f32 %v3815, 1.0
    %v3817 = vrsqrt.pop %v3816
    %v3818 = vadd.f32 %v3817, 1.0
    %v3819 = vmul.f32 %v3818, 0.5
    %v3820 = vrsqrt.pop %v3819
    %v3821 = vmul.f32 %v3819, %v3820
    %vm3822 = vcmp.eq.f32.partialorder %v3819, inf
    %v3823 = vsel %vm3822, %v3819, %v3821
    %vm3824 = vcmp.eq.f32.partialorder %v3819, 0.0
    %v3825 = vand.u32 %v3819, 2147483648
    %v3826 = vsel %vm3824, %v3825, %v3823
    %v3827 = vsub.f32 1.0, %v3817
    %v3828 = vmul.f32 %v3827, 0.5
    %v3829 = vrsqrt.pop %v3828
    %v3830 = vmul.f32 %v3828, %v3829
    %vm3831 = vcmp.eq.f32.partialorder %v3828, inf
    %v3832 = vsel %vm3831, %v3828, %v3830
    %vm3833 = vcmp.eq.f32.partialorder %v3828, 0.0
    %v3834 = vand.u32 %v3828, 2147483648
    %v3835 = vsel %vm3833, %v3834, %v3832
    %v3836 = vsub.f32 %v3802, %v3814
    %v3837 = vmul.f32 %v3836, 0.70710677
    %v3838 = vadd.f32 %v3802, %v3814
    %v3839 = vmul.f32 %v3838, 0.70710677
    %v3840 = vmul.f32 %v3837, %v3826
    %v3841 = vmul.f32 %v3837, %v3835
    %v3842 = vsub.f32 0.0, %v3841
    %v3843 = vmul.f32 %v3839, %v3826
    %v3844 = vmul.f32 %v3839, %v3835
    %v3845 = vsub.f32 %v3843, %v3840
    %3847 = vset.pattern.permute.xlu0 0
    %3848 = vperm.xlu0 %3847, %v3845
    %v3849 = vpop.permute.xlu0 %3848
    %v3851 = vmul.f32 %v3849, %v459
    %3853 = vset.pattern.permute.xlu0 0
    %3854 = vperm.xlu0 %3853, %v3840
    %v3855 = vpop.permute.xlu0 %3854
    %v3857 = vadd.f32 %v3855, %v3851
    %v3858 = vsub.f32 %v3844, %v3842
    %3860 = vset.pattern.permute.xlu0 0
    %3861 = vperm.xlu0 %3860, %v3858
    %v3862 = vpop.permute.xlu0 %3861
    %v3864 = vmul.f32 %v3862, %v459
    %3866 = vset.pattern.permute.xlu0 0
    %3867 = vperm.xlu0 %3866, %v3842
    %v3868 = vpop.permute.xlu0 %3867
    %v3870 = vadd.f32 %v3868, %v3864
    %3871 = vset.pattern.permute.xlu0 1
    %3872 = vperm.xlu0 %3871, %v3845
    %v3873 = vpop.permute.xlu0 %3872
    %v3875 = vmul.f32 %v3873, %v487
    %3876 = vset.pattern.permute.xlu0 1
    %3877 = vperm.xlu0 %3876, %v3840
    %v3878 = vpop.permute.xlu0 %3877
    %v3880 = vadd.f32 %v3878, %v3875
    %3881 = vset.pattern.permute.xlu0 1
    %3882 = vperm.xlu0 %3881, %v3858
    %v3883 = vpop.permute.xlu0 %3882
    %v3885 = vmul.f32 %v3883, %v487
    %3886 = vset.pattern.permute.xlu0 1
    %3887 = vperm.xlu0 %3886, %v3842
    %v3888 = vpop.permute.xlu0 %3887
    %v3890 = vadd.f32 %v3888, %v3885
    %v3891 = vmul.f32 %v3857, %v3880
    %v3892 = vmul.f32 %v3870, %v3890
    %v3893 = vsub.f32 %v3891, %v3892
    %v3894 = vmul.f32 %v3857, %v3890
    %v3895 = vmul.f32 %v3870, %v3880
    %v3896 = vadd.f32 %v3894, %v3895
    %3897 = vset.pattern.permute.xlu0 2
    %3898 = vperm.xlu0 %3897, %v3845
    %v3899 = vpop.permute.xlu0 %3898
    %v3901 = vmul.f32 %v3899, %v517
    %3902 = vset.pattern.permute.xlu0 2
    %3903 = vperm.xlu0 %3902, %v3840
    %v3904 = vpop.permute.xlu0 %3903
    %v3906 = vadd.f32 %v3904, %v3901
    %3907 = vset.pattern.permute.xlu0 2
    %3908 = vperm.xlu0 %3907, %v3858
    %v3909 = vpop.permute.xlu0 %3908
    %v3911 = vmul.f32 %v3909, %v517
    %3912 = vset.pattern.permute.xlu0 2
    %3913 = vperm.xlu0 %3912, %v3842
    %v3914 = vpop.permute.xlu0 %3913
    %v3916 = vadd.f32 %v3914, %v3911
    %v3917 = vmul.f32 %v3893, %v3906
    %v3918 = vmul.f32 %v3896, %v3916
    %v3919 = vsub.f32 %v3917, %v3918
    %v3920 = vmul.f32 %v3893, %v3916
    %v3921 = vmul.f32 %v3896, %v3906
    %v3922 = vadd.f32 %v3920, %v3921
    %3923 = vset.pattern.permute.xlu0 3
    %3924 = vperm.xlu0 %3923, %v3845
    %v3925 = vpop.permute.xlu0 %3924
    %v3927 = vmul.f32 %v3925, %v547
    %3928 = vset.pattern.permute.xlu0 3
    %3929 = vperm.xlu0 %3928, %v3840
    %v3930 = vpop.permute.xlu0 %3929
    %v3932 = vadd.f32 %v3930, %v3927
    %3933 = vset.pattern.permute.xlu0 3
    %3934 = vperm.xlu0 %3933, %v3858
    %v3935 = vpop.permute.xlu0 %3934
    %v3937 = vmul.f32 %v3935, %v547
    %3938 = vset.pattern.permute.xlu0 3
    %3939 = vperm.xlu0 %3938, %v3842
    %v3940 = vpop.permute.xlu0 %3939
    %v3942 = vadd.f32 %v3940, %v3937
    %v3943 = vmul.f32 %v3919, %v3932
    %v3944 = vmul.f32 %v3922, %v3942
    %v3945 = vsub.f32 %v3943, %v3944
    %v3946 = vmul.f32 %v3919, %v3942
    %v3947 = vmul.f32 %v3922, %v3932
    %v3948 = vadd.f32 %v3946, %v3947
    %v3950 = vsel %vm56, %v3948, 0
    %3952 = vmatprep.subr.mxu0 0.0
    %3953 = vmatpush1.msra.mxu0 0.0
    %3954 = vmatprep.subr.mxu0 0.0
    %3955 = vmatpush1.msra.mxu0 0.0
    %3956 = vmatprep.subr.mxu0 0.0
    %3957 = vmatpush1.msra.mxu0 0.0
    %3958 = vmatprep.subr.mxu0 0.0
    %3959 = vmatpush1.msra.mxu0 0.0
    %3960 = vmatprep.subr.mxu0 0.0
    %3961 = vmatpush1.msra.mxu0 0.0
    %3962 = vmatprep.subr.mxu0 0.0
    %3963 = vmatpush1.msra.mxu0 0.0
    %3964 = vmatprep.subr.mxu0 0.0
    %3965 = vmatpush1.msra.mxu0 0.0
    %3966 = vmatprep.subr.mxu0 0.0
    %3967 = vmatpush1.msra.mxu0 0.0
    %3968 = vmatprep.subr.mxu0 0.0
    %3969 = vmatpush1.msra.mxu0 0.0
    %3970 = vmatprep.subr.mxu0 0.0
    %3971 = vmatpush1.msra.mxu0 0.0
    %3972 = vmatprep.subr.mxu0 0.0
    %3973 = vmatpush1.msra.mxu0 0.0
    %3974 = vmatprep.subr.mxu0 0.0
    %3975 = vmatpush1.msra.mxu0 0.0
    %3976 = vmatprep.subr.mxu0 0.0
    %3977 = vmatpush1.msra.mxu0 0.0
    %3978 = vmatprep.subr.mxu0 0.0
    %3979 = vmatpush1.msra.mxu0 0.0
    %3980 = vmatprep.subr.mxu0 0.0
    %3981 = vmatpush1.msra.mxu0 %v33
    %3982 = vmatprep.subr.mxu0 0.0
    %3983 = vmatpush1.msra.mxu0 %v32
    %3984 = vmatprep.subr.mxu0 0.0
    %3985 = vmatpush2.msra.mxu0 0.0
    %3986 = vmatprep.subr.mxu0 0.0
    %3987 = vmatpush2.msra.mxu0 0.0
    %3988 = vmatprep.subr.mxu0 0.0
    %3989 = vmatpush2.msra.mxu0 0.0
    %3990 = vmatprep.subr.mxu0 0.0
    %3991 = vmatpush2.msra.mxu0 0.0
    %3992 = vmatprep.subr.mxu0 0.0
    %3993 = vmatpush2.msra.mxu0 0.0
    %3994 = vmatprep.subr.mxu0 0.0
    %3995 = vmatpush2.msra.mxu0 0.0
    %3996 = vmatprep.subr.mxu0 0.0
    %3997 = vmatpush2.msra.mxu0 0.0
    %3998 = vmatprep.subr.mxu0 0.0
    %3999 = vmatpush2.msra.mxu0 0.0
    %4000 = vmatprep.subr.mxu0 0.0
    %4001 = vmatpush2.msra.mxu0 0.0
    %4002 = vmatprep.subr.mxu0 0.0
    %4003 = vmatpush2.msra.mxu0 0.0
    %4004 = vmatprep.subr.mxu0 0.0
    %4005 = vmatpush2.msra.mxu0 0.0
    %4006 = vmatprep.subr.mxu0 0.0
    %4007 = vmatpush2.msra.mxu0 0.0
    %4008 = vmatprep.subr.mxu0 0.0
    %4009 = vmatpush2.msra.mxu0 0.0
    %4010 = vmatprep.subr.mxu0 0.0
    %4011 = vmatpush2.msra.mxu0 0.0
    %4012 = vmatprep.subr.mxu0 0.0
    %4013 = vmatpush2.msra.mxu0 0.0
    %4014 = vmatprep.subr.mxu0 0.0
    %4015 = vmatpush2.msra.mxu0 0.0
    %4016 = vmatprep.mubr.f32.mxu0 0.0
    %4017 = vmatmul.mubr.f32.gmra.mxu0 %v3950
    %v4018 = vpop.f32.mrf.mxu0
    %v4019 = vadd.f32 0.0, %v4018
    %v4020 = vpop.f32.mrf.mxu0
    %4021 = vdwg.mxu0
    %v4023 = vsel %vm56, %v3945, 0
    %4025 = vmatprep.subr.mxu0 0.0
    %4026 = vmatpush1.msra.mxu0 0.0
    %4027 = vmatprep.subr.mxu0 0.0
    %4028 = vmatpush1.msra.mxu0 0.0
    %4029 = vmatprep.subr.mxu0 0.0
    %4030 = vmatpush1.msra.mxu0 0.0
    %4031 = vmatprep.subr.mxu0 0.0
    %4032 = vmatpush1.msra.mxu0 0.0
    %4033 = vmatprep.subr.mxu0 0.0
    %4034 = vmatpush1.msra.mxu0 0.0
    %4035 = vmatprep.subr.mxu0 0.0
    %4036 = vmatpush1.msra.mxu0 0.0
    %4037 = vmatprep.subr.mxu0 0.0
    %4038 = vmatpush1.msra.mxu0 0.0
    %4039 = vmatprep.subr.mxu0 0.0
    %4040 = vmatpush1.msra.mxu0 0.0
    %4041 = vmatprep.subr.mxu0 0.0
    %4042 = vmatpush1.msra.mxu0 0.0
    %4043 = vmatprep.subr.mxu0 0.0
    %4044 = vmatpush1.msra.mxu0 0.0
    %4045 = vmatprep.subr.mxu0 0.0
    %4046 = vmatpush1.msra.mxu0 0.0
    %4047 = vmatprep.subr.mxu0 0.0
    %4048 = vmatpush1.msra.mxu0 0.0
    %4049 = vmatprep.subr.mxu0 0.0
    %4050 = vmatpush1.msra.mxu0 0.0
    %4051 = vmatprep.subr.mxu0 0.0
    %4052 = vmatpush1.msra.mxu0 0.0
    %4053 = vmatprep.subr.mxu0 0.0
    %4054 = vmatpush1.msra.mxu0 %v31
    %4055 = vmatprep.subr.mxu0 0.0
    %4056 = vmatpush1.msra.mxu0 %v30
    %4057 = vmatprep.subr.mxu0 0.0
    %4058 = vmatpush2.msra.mxu0 0.0
    %4059 = vmatprep.subr.mxu0 0.0
    %4060 = vmatpush2.msra.mxu0 0.0
    %4061 = vmatprep.subr.mxu0 0.0
    %4062 = vmatpush2.msra.mxu0 0.0
    %4063 = vmatprep.subr.mxu0 0.0
    %4064 = vmatpush2.msra.mxu0 0.0
    %4065 = vmatprep.subr.mxu0 0.0
    %4066 = vmatpush2.msra.mxu0 0.0
    %4067 = vmatprep.subr.mxu0 0.0
    %4068 = vmatpush2.msra.mxu0 0.0
    %4069 = vmatprep.subr.mxu0 0.0
    %4070 = vmatpush2.msra.mxu0 0.0
    %4071 = vmatprep.subr.mxu0 0.0
    %4072 = vmatpush2.msra.mxu0 0.0
    %4073 = vmatprep.subr.mxu0 0.0
    %4074 = vmatpush2.msra.mxu0 0.0
    %4075 = vmatprep.subr.mxu0 0.0
    %4076 = vmatpush2.msra.mxu0 0.0
    %4077 = vmatprep.subr.mxu0 0.0
    %4078 = vmatpush2.msra.mxu0 0.0
    %4079 = vmatprep.subr.mxu0 0.0
    %4080 = vmatpush2.msra.mxu0 0.0
    %4081 = vmatprep.subr.mxu0 0.0
    %4082 = vmatpush2.msra.mxu0 0.0
    %4083 = vmatprep.subr.mxu0 0.0
    %4084 = vmatpush2.msra.mxu0 0.0
    %4085 = vmatprep.subr.mxu0 0.0
    %4086 = vmatpush2.msra.mxu0 0.0
    %4087 = vmatprep.subr.mxu0 0.0
    %4088 = vmatpush2.msra.mxu0 0.0
    %4089 = vmatprep.mubr.f32.mxu0 0.0
    %4090 = vmatmul.mubr.f32.gmra.mxu0 %v4023
    %v4091 = vpop.f32.mrf.mxu0
    %v4092 = vadd.f32 %v4019, %v4091
    %v4093 = vpop.f32.mrf.mxu0
    %4094 = vdwg.mxu0
    %v4095 = vmul.f32 %v4092, %v4092
    %v4097 = vsel %vm320, %v4095, 0
    %4099 = vmatprep.subr.mxu0 0.0
    %4100 = vmatpush1.msra.mxu0 0.0
    %4101 = vmatprep.subr.mxu0 0.0
    %4102 = vmatpush1.msra.mxu0 0.0
    %4103 = vmatprep.subr.mxu0 0.0
    %4104 = vmatpush1.msra.mxu0 0.0
    %4105 = vmatprep.subr.mxu0 0.0
    %4106 = vmatpush1.msra.mxu0 0.0
    %4107 = vmatprep.subr.mxu0 0.0
    %4108 = vmatpush1.msra.mxu0 0.0
    %4109 = vmatprep.subr.mxu0 0.0
    %4110 = vmatpush1.msra.mxu0 0.0
    %4111 = vmatprep.subr.mxu0 0.0
    %4112 = vmatpush1.msra.mxu0 0.0
    %4113 = vmatprep.subr.mxu0 0.0
    %4114 = vmatpush1.msra.mxu0 0.0
    %4115 = vmatprep.subr.mxu0 0.0
    %4116 = vmatpush1.msra.mxu0 0.0
    %4117 = vmatprep.subr.mxu0 0.0
    %4118 = vmatpush1.msra.mxu0 0.0
    %4119 = vmatprep.subr.mxu0 0.0
    %4120 = vmatpush1.msra.mxu0 0.0
    %4121 = vmatprep.subr.mxu0 0.0
    %4122 = vmatpush1.msra.mxu0 0.0
    %4123 = vmatprep.subr.mxu0 0.0
    %4124 = vmatpush1.msra.mxu0 %v29
    %4125 = vmatprep.subr.mxu0 0.0
    %4126 = vmatpush1.msra.mxu0 %v28
    %4127 = vmatprep.subr.mxu0 0.0
    %4128 = vmatpush1.msra.mxu0 %v27
    %4129 = vmatprep.subr.mxu0 0.0
    %4130 = vmatpush1.msra.mxu0 %v26
    %4131 = vmatprep.subr.mxu0 0.0
    %4132 = vmatpush2.msra.mxu0 0.0
    %4133 = vmatprep.subr.mxu0 0.0
    %4134 = vmatpush2.msra.mxu0 0.0
    %4135 = vmatprep.subr.mxu0 0.0
    %4136 = vmatpush2.msra.mxu0 0.0
    %4137 = vmatprep.subr.mxu0 0.0
    %4138 = vmatpush2.msra.mxu0 0.0
    %4139 = vmatprep.subr.mxu0 0.0
    %4140 = vmatpush2.msra.mxu0 0.0
    %4141 = vmatprep.subr.mxu0 0.0
    %4142 = vmatpush2.msra.mxu0 0.0
    %4143 = vmatprep.subr.mxu0 0.0
    %4144 = vmatpush2.msra.mxu0 0.0
    %4145 = vmatprep.subr.mxu0 0.0
    %4146 = vmatpush2.msra.mxu0 0.0
    %4147 = vmatprep.subr.mxu0 0.0
    %4148 = vmatpush2.msra.mxu0 0.0
    %4149 = vmatprep.subr.mxu0 0.0
    %4150 = vmatpush2.msra.mxu0 0.0
    %4151 = vmatprep.subr.mxu0 0.0
    %4152 = vmatpush2.msra.mxu0 0.0
    %4153 = vmatprep.subr.mxu0 0.0
    %4154 = vmatpush2.msra.mxu0 0.0
    %4155 = vmatprep.subr.mxu0 0.0
    %4156 = vmatpush2.msra.mxu0 0.0
    %4157 = vmatprep.subr.mxu0 0.0
    %4158 = vmatpush2.msra.mxu0 0.0
    %4159 = vmatprep.subr.mxu0 0.0
    %4160 = vmatpush2.msra.mxu0 0.0
    %4161 = vmatprep.subr.mxu0 0.0
    %4162 = vmatpush2.msra.mxu0 0.0
    %4163 = vmatprep.mubr.f32.mxu0 0.0
    %4164 = vmatmul.mubr.f32.gmra.mxu0 %v4097
    %v4165 = vpop.f32.mrf.mxu0
    %v4166 = vadd.f32 0.0, %v4165
    %v4167 = vpop.f32.mrf.mxu0
    %4168 = vdwg.mxu0
    %v4169 = vadd.f32 %v317, %v3786
    %v4170 = vadd.f32 %v4169, %v4166
    %v4171 = vsel %vm320, %v3704, 0.0
    %v4172 = vadd.f32 %v4170, %v4171
    %v4173 = vmul.f32 %v4172, %v44
    %v4174 = vtanh.pop %v4173
    %v4175 = vmul.f32 %v4174, %v45
    %v4176 = vadd.f32 %v4175, %v47
    %v4177 = vmul.f32 %v4176, %v3704
    %4179 = vrot.lane.b32.xlu0 %v4176, 96
    %v4180 = vpop.permute.xlu0 %4179
    %v4182 = vmul.f32 %v4176, %v4180
    %4184 = vrot.lane.b32.xlu0 %v4182, 96
    %v4185 = vpop.permute.xlu0 %4184
    %v4187 = vadd.f32 %v4177, %v4185
    %v4188 = vtanh.pop %v4187
    %4190 = vrot.lane.b32.xlu0 %v4188, 96
    %v4191 = vpop.permute.xlu0 %4190
    %v4193 = vmul.f32 %v4176, %v4191
    %4195 = vrot.lane.b32.xlu0 %v4193, 32
    %v4196 = vpop.permute.xlu0 %4195
    %s4198 = scalar_lea.vmem [#allocation2], 56
    %4199 = vst.msk [vmem:[%s4198] sm:$0xff] %vm320, %v4196
    %4200 = vst.msk [vmem:[#allocation4] sm:$0xff] %vm320, %v4196
    %4201 = vst.msk [vmem:[#allocation6] sm:$0xff] %vm320, %v4187
    // Predicated region
    $region10: #{tpu_custom_call.1} parent=1 // pred_check
      _
    $region11: #{tpu_custom_call.1} parent=1 // pred_check_branch
      %4203 = sbr.rel (0) target = $region13
    $region12: #{tpu_custom_call.1} parent=1 // pred_region
      %s4205 = ssub.s32 1024, 1024
      %4206 = vsyncadd [#allocation3], %s4205
      %s4207 = sshll.u32 [#allocation2], 4
      %s4208 = int_to_ptr.vmem [resolvable:$true] %s4207
      %4213 = dma.vmem_to_hbm [thread:$0]  %s4208, 1024, %s2, [#allocation3], 128, 128, 8
    $region13: #{tpu_custom_call.1} parent=1 // pred_fallthru
      _
    // Predicated region
    $region14: #{tpu_custom_call.1} parent=1 // pred_check
      _
    $region15: #{tpu_custom_call.1} parent=1 // pred_check_branch
      %4215 = sbr.rel (0) target = $region17
    $region16: #{tpu_custom_call.1} parent=1 // pred_region
      %s4217 = ssub.s32 128, 128
      %4218 = vsyncadd [#allocation5], %s4217
      %s4220 = sshll.u32 [#allocation4], 4
      %s4221 = int_to_ptr.vmem [resolvable:$true] %s4220
      %4223 = dma.vmem_to_hbm [thread:$0]  %s4221, 128, %s3, [#allocation5]
    $region17: #{tpu_custom_call.1} parent=1 // pred_fallthru
      _
    // Predicated region
    $region18: #{tpu_custom_call.1} parent=1 // pred_check
      _
    $region19: #{tpu_custom_call.1} parent=1 // pred_check_branch
      %4225 = sbr.rel (0) target = $region21
    $region20: #{tpu_custom_call.1} parent=1 // pred_region
      %s4227 = ssub.s32 128, 128
      %4228 = vsyncadd [#allocation5], %s4227
      %s4230 = sshll.u32 [#allocation6], 4
      %s4231 = int_to_ptr.vmem [resolvable:$true] %s4230
      %4233 = dma.vmem_to_hbm [thread:$0]  %s4231, 128, %s4, [#allocation5]
    $region21: #{tpu_custom_call.1} parent=1 // pred_fallthru
      _
    // Predicated region
    $region22: #{tpu_custom_call.1} parent=1 // pred_check
      _
    $region23: #{tpu_custom_call.1} parent=1 // pred_check_branch
      %4235 = sbr.rel (0) target = $region25
    $region24: #{tpu_custom_call.1} parent=1 // pred_region
      %4236 = dma.done [#allocation3], 1024
    $region25: #{tpu_custom_call.1} parent=1 // pred_fallthru
      _
    // Predicated region
    $region26: #{tpu_custom_call.1} parent=1 // pred_check
      _
    $region27: #{tpu_custom_call.1} parent=1 // pred_check_branch
      %4238 = sbr.rel (0) target = $region29
    $region28: #{tpu_custom_call.1} parent=1 // pred_region
      %4239 = dma.done [#allocation5], 128
    $region29: #{tpu_custom_call.1} parent=1 // pred_fallthru
      _
    // Predicated region
    $region30: #{tpu_custom_call.1} parent=1 // pred_check
      _
    $region31: #{tpu_custom_call.1} parent=1 // pred_check_branch
      %4241 = sbr.rel (0) target = $region33
    $region32: #{tpu_custom_call.1} parent=1 // pred_region
      %4242 = dma.done [#allocation5], 128
    $region33: #{tpu_custom_call.1} parent=1 // pred_fallthru
      _
    %4243 = vsyncpa [#allocation3], 1
    %4244 = vsyncpa [#allocation5], 1

</llo_original>
